<compile_context>
chip_gen: v7x
topology: tpu7x:2x2x1
jax: 0.10.0
libtpu: 0.0.40
codegen_flags: <defaults>
</compile_context>

<pallas_src>
import math
import functools

import jax
import jax.numpy as jnp
from jax.experimental import pallas as pl
from jax.experimental.pallas import tpu as pltpu


# -----------------------------------------------------------------------------
# Kernel: whole (small) problem in one invocation; batch folded into M.
# -----------------------------------------------------------------------------
def _mha_kernel(*refs, num_heads, causal, has_mask):
    if has_mask:
        (xq_ref, xk_ref, xv_ref, mask_ref,
         wq_ref, bq_ref, wk_ref, bk_ref, wv_ref, bv_ref,
         wo_ref, bo_ref, o_ref) = refs
    else:
        (xq_ref, xk_ref, xv_ref,
         wq_ref, bq_ref, wk_ref, bk_ref, wv_ref, bv_ref,
         wo_ref, bo_ref, o_ref) = refs
        mask_ref = None

    B, T, d_x = xq_ref.shape
    S = xk_ref.shape[1]
    d_model = wq_ref.shape[1]
    H = num_heads
    d_k = d_model // H

    # ---- lane-dense projections: one 2-D matmul each, M = B*L, K = d_x ------
    xq = xq_ref[...].reshape(B * T, d_x)
    xk = xk_ref[...].reshape(B * S, d_x)
    xv = xv_ref[...].reshape(B * S, d_x)

    # 1/sqrt(d_k) is already folded into wq/bq at init time.
    q = jnp.dot(xq, wq_ref[...], preferred_element_type=jnp.float32) + bq_ref[...]
    k = jnp.dot(xk, wk_ref[...], preferred_element_type=jnp.float32) + bk_ref[...]
    v = jnp.dot(xv, wv_ref[...], preferred_element_type=jnp.float32) + bv_ref[...]

    # ---- split heads only where the head axis is required (scores / probs) --
    q_h = q.reshape(B, T, H, d_k).transpose(0, 2, 1, 3).reshape(B * H, T, d_k)
    k_h = k.reshape(B, S, H, d_k).transpose(0, 2, 1, 3).reshape(B * H, S, d_k)
    v_h = v.reshape(B, S, H, d_k).transpose(0, 2, 1, 3).reshape(B * H, S, d_k)

    # Batched (leading batch dim) score matmul: (B*H, T, S), f32 accumulation.
    scores = jnp.einsum('btd,bsd->bts', q_h, k_h,
                        preferred_element_type=jnp.float32)

    neg = -jnp.finfo(jnp.float32).max  # same fill value as the PyTorch module
    if causal:
        # In-kernel causal mask: no HBM mask DMA, no O(T*S) mask tensor in HBM.
        row = jax.lax.broadcasted_iota(jnp.int32, (T, S), 0)
        col = jax.lax.broadcasted_iota(jnp.int32, (T, S), 1)
        keep = row >= col
        scores = jnp.where(keep[None, :, :], scores, neg)
    elif has_mask:
        # Arbitrary mask path: int8 (B, T, S), keep==nonzero.
        keep = mask_ref[...] != 0
        s4 = scores.reshape(B, H, T, S)
        s4 = jnp.where(keep[:, None, :, :], s4, neg)
        scores = s4.reshape(B * H, T, S)

    # Numerically-stable softmax over keys; divide via EUP reciprocal.
    m = jnp.max(scores, axis=-1, keepdims=True)
    p = jnp.exp(scores - m)
    denom = jnp.sum(p, axis=-1, keepdims=True)
    p = p * pl.reciprocal(denom, approx=True)

    # Per-head context, then merge heads back to a lane-dense (B*T, d_model)
    # slab so the output projection is a single K = d_model contraction.
    z = jnp.einsum('bts,bsd->btd', p, v_h, preferred_element_type=jnp.float32)
    z2 = z.reshape(B, H, T, d_k).transpose(0, 2, 1, 3).reshape(B * T, d_model)

    out = jnp.dot(z2, wo_ref[...], preferred_element_type=jnp.float32) + bo_ref[...]
    o_ref[...] = out.reshape(B, T, d_x).astype(o_ref.dtype)


# -----------------------------------------------------------------------------
# Wrapper
# -----------------------------------------------------------------------------
def multi_head_attention(q, k, v, params, *, num_heads, mask=None, causal=False):
    """Equivalent of MultiHeadAttention.forward(q, k, v, mask) in eval mode.

    mask:   optional (B, T, S) boolean/int mask (True/nonzero = attend),
            DMA'd to the kernel as int8.
    causal: generate the lower-triangular mask in-kernel instead (preferred
            over passing an explicit causal mask).
    """
    assert not (causal and mask is not None), "pass either `causal` or `mask`"
    B, T, d_x = q.shape
    S = k.shape[1]

    inputs = [q, k, v]
    if mask is not None:
        inputs.append((mask != 0).astype(jnp.int8))
    inputs += [params["wq"], params["bq"], params["wk"], params["bk"],
               params["wv"], params["bv"], params["wo"], params["bo"]]

    vmem = lambda: pl.BlockSpec(memory_space=pltpu.MemorySpace.VMEM)
    kern = functools.partial(_mha_kernel, num_heads=num_heads,
                             causal=causal, has_mask=mask is not None)

    return pl.pallas_call(
        kern,
        out_shape=jax.ShapeDtypeStruct((B, T, d_x), q.dtype),
        in_specs=[vmem() for _ in inputs],
        out_specs=vmem(),
    )(*inputs)


# -----------------------------------------------------------------------------
# Parameters: nn.Linear-style init.  Returns (kernel params, raw params).
# Kernel params have 1/sqrt(d_k) folded into wq/bq (one-time host transform).
# -----------------------------------------------------------------------------
def init_mha_params(key, d_x, d_model, num_heads):
    assert d_model % num_heads == 0
    d_k = d_model // num_heads
    ks = jax.random.split(key, 8)

    def linear(kw, kb, d_in, d_out):
        bound = 1.0 / math.sqrt(d_in)
        w = jax.random.uniform(kw, (d_in, d_out), jnp.float32, -bound, bound)
        b = jax.random.uniform(kb, (d_out,), jnp.float32, -bound, bound)
        return w, b

    wq, bq = linear(ks[0], ks[1], d_x, d_model)
    wk, bk = linear(ks[2], ks[3], d_x, d_model)
    wv, bv = linear(ks[4], ks[5], d_x, d_model)
    wo, bo = linear(ks[6], ks[7], d_model, d_x)

    raw = dict(wq=wq, bq=bq, wk=wk, bk=bk, wv=wv, bv=bv, wo=wo, bo=bo)

    scale = 1.0 / math.sqrt(d_k)
    kernel_params = dict(
        wq=wq * scale, bq=(bq * scale).reshape(1, d_model),
        wk=wk,         bk=bk.reshape(1, d_model),
        wv=wv,         bv=bv.reshape(1, d_model),
        wo=wo,         bo=bo.reshape(1, d_x),
    )
    return kernel_params, raw


# -----------------------------------------------------------------------------
# Plain-JAX f32 reference — mirrors the PyTorch module line by line.
# -----------------------------------------------------------------------------
def mha_reference(q_in, k_in, v_in, raw, num_heads, mask=None):
    B, T, _ = q_in.shape
    S = k_in.shape[1]
    d_model = raw["wq"].shape[1]
    H = num_heads
    d_k = d_model // H

    def lin(x, w, b):
        return x @ w + b

    q = lin(q_in, raw["wq"], raw["bq"]).reshape(B, T, H, d_k).transpose(0, 2, 1, 3)
    k = lin(k_in, raw["wk"], raw["bk"]).reshape(B, S, H, d_k).transpose(0, 2, 1, 3)
    v = lin(v_in, raw["wv"], raw["bv"]).reshape(B, S, H, d_k).transpose(0, 2, 1, 3)

    scores = jnp.einsum('bhtd,bhsd->bhts', q, k) / math.sqrt(d_k)
    if mask is not None:
        keep = (mask != 0)[:, None, :, :]
        scores = jnp.where(keep, scores, -jnp.finfo(scores.dtype).max)
    p = jax.nn.softmax(scores, axis=-1)          # dropout is identity in eval
    z = jnp.einsum('bhts,bhsd->bhtd', p, v)
    z = z.transpose(0, 2, 1, 3).reshape(B, T, d_model)
    return z @ raw["wo"] + raw["bo"]


# -----------------------------------------------------------------------------
# Main
# -----------------------------------------------------------------------------
if __name__ == "__main__":
    B, T, S = 2, 16, 16
    d_x, d_model, num_heads = 128, 128, 8       # lane-dense feature dims

    key = jax.random.PRNGKey(0)
    kq, kk, kv, kp = jax.random.split(key, 4)
    q_in = jax.random.normal(kq, (B, T, d_x), jnp.float32)
    k_in = jax.random.normal(kk, (B, S, d_x), jnp.float32)
    v_in = jax.random.normal(kv, (B, S, d_x), jnp.float32)

    params, raw = init_mha_params(kp, d_x, d_model, num_heads)

    causal_mask = jnp.broadcast_to(jnp.tril(jnp.ones((T, S), jnp.bool_)), (B, T, S))

    # 1) Causal attention, mask generated in-kernel (no mask DMA).
    out_c = jax.block_until_ready(
        multi_head_attention(q_in, k_in, v_in, params,
                             num_heads=num_heads, causal=True))
    assert out_c.shape == (B, T, d_x)
    ref_c = mha_reference(q_in, k_in, v_in, raw, num_heads, mask=causal_mask)
    err_c = float(jnp.max(jnp.abs(out_c - ref_c)))
    assert jnp.allclose(out_c, ref_c, atol=2e-3, rtol=2e-3), err_c

    # 2) Arbitrary-mask path (same causal mask passed explicitly from HBM).
    out_m = jax.block_until_ready(
        multi_head_attention(q_in, k_in, v_in, params,
                             num_heads=num_heads, mask=causal_mask))
    err_m = float(jnp.max(jnp.abs(out_m - ref_c)))
    assert jnp.allclose(out_m, ref_c, atol=2e-3, rtol=2e-3), err_m

    # 3) mask=None fast path.
    out_n = jax.block_until_ready(
        multi_head_attention(q_in, k_in, v_in, params, num_heads=num_heads))
    ref_n = mha_reference(q_in, k_in, v_in, raw, num_heads, mask=None)
    err_n = float(jnp.max(jnp.abs(out_n - ref_n)))
    assert jnp.allclose(out_n, ref_n, atol=2e-3, rtol=2e-3), err_n

    print("KERNEL_OK")
</pallas_src>

<mosaic_0001>
module attributes {stable_mosaic.version = 11 : i64} {
  func.func @_mha_kernel(%arg0: memref<2x16x128xf32, #tpu.memory_space<vmem>>, %arg1: memref<2x16x128xf32, #tpu.memory_space<vmem>>, %arg2: memref<2x16x128xf32, #tpu.memory_space<vmem>>, %arg3: memref<128x128xf32, #tpu.memory_space<vmem>>, %arg4: memref<1x128xf32, #tpu.memory_space<vmem>>, %arg5: memref<128x128xf32, #tpu.memory_space<vmem>>, %arg6: memref<1x128xf32, #tpu.memory_space<vmem>>, %arg7: memref<128x128xf32, #tpu.memory_space<vmem>>, %arg8: memref<1x128xf32, #tpu.memory_space<vmem>>, %arg9: memref<128x128xf32, #tpu.memory_space<vmem>>, %arg10: memref<1x128xf32, #tpu.memory_space<vmem>>, %arg11: memref<2x16x128xf32, #tpu.memory_space<vmem>>) attributes {dimension_semantics = [], scalar_prefetch = 0 : i64, scratch_operands = 0 : i64, tpu.core_type = #tpu.core_type<tc>} {
    %c0 = arith.constant 0 : index
    %c0_0 = arith.constant 0 : index
    %c0_1 = arith.constant 0 : index
    %0 = vector.load %arg0[%c0, %c0_0, %c0_1] : memref<2x16x128xf32, #tpu.memory_space<vmem>>, vector<2x16x128xf32>
    %1 = vector.shape_cast %0 : vector<2x16x128xf32> to vector<32x128xf32>
    %c0_2 = arith.constant 0 : index
    %c0_3 = arith.constant 0 : index
    %c0_4 = arith.constant 0 : index
    %2 = vector.load %arg1[%c0_2, %c0_3, %c0_4] : memref<2x16x128xf32, #tpu.memory_space<vmem>>, vector<2x16x128xf32>
    %3 = vector.shape_cast %2 : vector<2x16x128xf32> to vector<32x128xf32>
    %c0_5 = arith.constant 0 : index
    %c0_6 = arith.constant 0 : index
    %c0_7 = arith.constant 0 : index
    %4 = vector.load %arg2[%c0_5, %c0_6, %c0_7] : memref<2x16x128xf32, #tpu.memory_space<vmem>>, vector<2x16x128xf32>
    %5 = vector.shape_cast %4 : vector<2x16x128xf32> to vector<32x128xf32>
    %c0_8 = arith.constant 0 : index
    %c0_9 = arith.constant 0 : index
    %6 = vector.load %arg3[%c0_8, %c0_9] : memref<128x128xf32, #tpu.memory_space<vmem>>, vector<128x128xf32>
    %cst = arith.constant dense<0.000000e+00> : vector<32x128xf32>
    %7 = tpu.matmul %1, %6, %cst {dimension_numbers = #tpu.dot_dimension_numbers<[1], [0], [0], [1], [0, 0, 1, 1], [], []>} : vector<32x128xf32>, vector<128x128xf32>, vector<32x128xf32> -> vector<32x128xf32>
    %c0_10 = arith.constant 0 : index
    %c0_11 = arith.constant 0 : index
    %8 = vector.load %arg4[%c0_10, %c0_11] : memref<1x128xf32, #tpu.memory_space<vmem>>, vector<1x128xf32>
    %9 = vector.broadcast %8 : vector<1x128xf32> to vector<32x128xf32>
    %10 = arith.addf %7, %9 : vector<32x128xf32>
    %c0_12 = arith.constant 0 : index
    %c0_13 = arith.constant 0 : index
    %11 = vector.load %arg5[%c0_12, %c0_13] : memref<128x128xf32, #tpu.memory_space<vmem>>, vector<128x128xf32>
    %cst_14 = arith.constant dense<0.000000e+00> : vector<32x128xf32>
    %12 = tpu.matmul %3, %11, %cst_14 {dimension_numbers = #tpu.dot_dimension_numbers<[1], [0], [0], [1], [0, 0, 1, 1], [], []>} : vector<32x128xf32>, vector<128x128xf32>, vector<32x128xf32> -> vector<32x128xf32>
    %c0_15 = arith.constant 0 : index
    %c0_16 = arith.constant 0 : index
    %13 = vector.load %arg6[%c0_15, %c0_16] : memref<1x128xf32, #tpu.memory_space<vmem>>, vector<1x128xf32>
    %14 = vector.broadcast %13 : vector<1x128xf32> to vector<32x128xf32>
    %15 = arith.addf %12, %14 : vector<32x128xf32>
    %c0_17 = arith.constant 0 : index
    %c0_18 = arith.constant 0 : index
    %16 = vector.load %arg7[%c0_17, %c0_18] : memref<128x128xf32, #tpu.memory_space<vmem>>, vector<128x128xf32>
    %cst_19 = arith.constant dense<0.000000e+00> : vector<32x128xf32>
    %17 = tpu.matmul %5, %16, %cst_19 {dimension_numbers = #tpu.dot_dimension_numbers<[1], [0], [0], [1], [0, 0, 1, 1], [], []>} : vector<32x128xf32>, vector<128x128xf32>, vector<32x128xf32> -> vector<32x128xf32>
    %c0_20 = arith.constant 0 : index
    %c0_21 = arith.constant 0 : index
    %18 = vector.load %arg8[%c0_20, %c0_21] : memref<1x128xf32, #tpu.memory_space<vmem>>, vector<1x128xf32>
    %19 = vector.broadcast %18 : vector<1x128xf32> to vector<32x128xf32>
    %20 = arith.addf %17, %19 : vector<32x128xf32>
    %21 = vector.shape_cast %10 : vector<32x128xf32> to vector<2x16x8x16xf32>
    %22 = tpu.transpose %21, [0, 2, 1, 3] : vector<2x16x8x16xf32> -> vector<2x8x16x16xf32>
    %23 = vector.shape_cast %22 : vector<2x8x16x16xf32> to vector<16x16x16xf32>
    %24 = vector.shape_cast %15 : vector<32x128xf32> to vector<2x16x8x16xf32>
    %25 = tpu.transpose %24, [0, 2, 1, 3] : vector<2x16x8x16xf32> -> vector<2x8x16x16xf32>
    %26 = vector.shape_cast %25 : vector<2x8x16x16xf32> to vector<16x16x16xf32>
    %27 = vector.shape_cast %20 : vector<32x128xf32> to vector<2x16x8x16xf32>
    %28 = tpu.transpose %27, [0, 2, 1, 3] : vector<2x16x8x16xf32> -> vector<2x8x16x16xf32>
    %29 = vector.shape_cast %28 : vector<2x8x16x16xf32> to vector<16x16x16xf32>
    "tpu.trace_start"() <{level = 10 : i32, message = "btd,bsd->bts"}> : () -> ()
    %cst_22 = arith.constant dense<0.000000e+00> : vector<16x16x16xf32>
    %30 = tpu.matmul %23, %26, %cst_22 {dimension_numbers = #tpu.dot_dimension_numbers<[2], [2], [1], [1], [0, 0, 0, 1, 1, 1], [0], [0]>} : vector<16x16x16xf32>, vector<16x16x16xf32>, vector<16x16x16xf32> -> vector<16x16x16xf32>
    "tpu.trace_stop"() : () -> ()
    %31 = tpu.iota {dimensions = array<i32: 0>} : vector<16x16xi32>
    %32 = tpu.iota {dimensions = array<i32: 1>} : vector<16x16xi32>
    %33 = arith.cmpi sge, %31, %32 : vector<16x16xi32>
    %34 = vector.shape_cast %33 : vector<16x16xi1> to vector<1x16x16xi1>
    %cst_23 = arith.constant -3.40282347E+38 : f32
    %35 = vector.shape_cast %34 : vector<1x16x16xi1> to vector<1x16x16xi1>
    %36 = vector.broadcast %35 : vector<1x16x16xi1> to vector<16x16x16xi1>
    %37 = vector.broadcast %cst_23 : f32 to vector<16x16x16xf32>
    %38 = arith.select %36, %30, %37 : vector<16x16x16xi1>, vector<16x16x16xf32>
    %cst_24 = arith.constant dense<0xFF800000> : vector<16x16xf32>
    %39 = vector.multi_reduction <maximumf>, %38, %cst_24 [2] : vector<16x16x16xf32> to vector<16x16xf32>
    %40 = vector.shape_cast %39 : vector<16x16xf32> to vector<16x16x1xf32>
    %41 = vector.broadcast %40 : vector<16x16x1xf32> to vector<16x16x16xf32>
    %42 = arith.subf %38, %41 : vector<16x16x16xf32>
    %43 = math.exp %42 : vector<16x16x16xf32>
    %cst_25 = arith.constant dense<0.000000e+00> : vector<16x16xf32>
    %44 = vector.multi_reduction <add>, %43, %cst_25 [2] : vector<16x16x16xf32> to vector<16x16xf32>
    %45 = vector.shape_cast %44 : vector<16x16xf32> to vector<16x16x1xf32>
    %46 = tpu.reciprocal %45 {approx = true} : vector<16x16x1xf32> -> vector<16x16x1xf32>
    %47 = vector.broadcast %46 : vector<16x16x1xf32> to vector<16x16x16xf32>
    %48 = arith.mulf %43, %47 : vector<16x16x16xf32>
    "tpu.trace_start"() <{level = 10 : i32, message = "bts,bsd->btd"}> : () -> ()
    %cst_26 = arith.constant dense<0.000000e+00> : vector<16x16x16xf32>
    %49 = tpu.matmul %48, %29, %cst_26 {dimension_numbers = #tpu.dot_dimension_numbers<[2], [1], [1], [2], [0, 0, 0, 1, 1, 2], [0], [0]>} : vector<16x16x16xf32>, vector<16x16x16xf32>, vector<16x16x16xf32> -> vector<16x16x16xf32>
    "tpu.trace_stop"() : () -> ()
    %50 = vector.shape_cast %49 : vector<16x16x16xf32> to vector<2x8x16x16xf32>
    %51 = tpu.transpose %50, [0, 2, 1, 3] : vector<2x8x16x16xf32> -> vector<2x16x8x16xf32>
    %52 = vector.shape_cast %51 : vector<2x16x8x16xf32> to vector<32x128xf32>
    %c0_27 = arith.constant 0 : index
    %c0_28 = arith.constant 0 : index
    %53 = vector.load %arg9[%c0_27, %c0_28] : memref<128x128xf32, #tpu.memory_space<vmem>>, vector<128x128xf32>
    %cst_29 = arith.constant dense<0.000000e+00> : vector<32x128xf32>
    %54 = tpu.matmul %52, %53, %cst_29 {dimension_numbers = #tpu.dot_dimension_numbers<[1], [0], [0], [1], [0, 0, 1, 1], [], []>} : vector<32x128xf32>, vector<128x128xf32>, vector<32x128xf32> -> vector<32x128xf32>
    %c0_30 = arith.constant 0 : index
    %c0_31 = arith.constant 0 : index
    %55 = vector.load %arg10[%c0_30, %c0_31] : memref<1x128xf32, #tpu.memory_space<vmem>>, vector<1x128xf32>
    %56 = vector.broadcast %55 : vector<1x128xf32> to vector<32x128xf32>
    %57 = arith.addf %54, %56 : vector<32x128xf32>
    %58 = vector.shape_cast %57 : vector<32x128xf32> to vector<2x16x128xf32>
    %c0_32 = arith.constant 0 : index
    %c0_33 = arith.constant 0 : index
    %c0_34 = arith.constant 0 : index
    %59 = vector.load %arg11[%c0_32, %c0_33, %c0_34] : memref<2x16x128xf32, #tpu.memory_space<vmem>>, vector<2x16x128xf32>
    tpu.vector_store %arg11[%c0_32, %c0_33, %c0_34], %58 {strides = array<i32>} : memref<2x16x128xf32, #tpu.memory_space<vmem>>, vector<2x16x128xf32>,
    return
  }
}

</mosaic_0001>

<llo_original>
// kernel: tpu_custom_call.1
$region0: #{tpu_custom_call.1}
  #allocation0 [shape = 'u32[]', space=smem, size = 0x4, offset = 0x4, fixed_abs, tag = 'smem constant byte address 0x4 - core index']
  #allocation1 [shape = 'u32[144,128]{1,0:T(1,128)}', space=vmem, size = 0x12000, scoped, tag = 'internal scratch']
  %s0 = inlined_call_operand.hbm [shape: f32[2,16,128], index: 0, kind: input, shape index: {}]
  %s1 = inlined_call_operand.hbm [shape: f32[2,16,128], index: 1, kind: input, shape index: {}]
  %s2 = inlined_call_operand.hbm [shape: f32[2,16,128], index: 2, kind: input, shape index: {}]
  %s3 = inlined_call_operand.hbm [shape: f32[128,128], index: 3, kind: input, shape index: {}]
  %s4 = inlined_call_operand.vmem [shape: f32[1,128], index: 4, kind: input, shape index: {}]
  %s5 = inlined_call_operand.hbm [shape: f32[128,128], index: 5, kind: input, shape index: {}]
  %s6 = inlined_call_operand.vmem [shape: f32[1,128], index: 6, kind: input, shape index: {}]
  %s7 = inlined_call_operand.hbm [shape: f32[128,128], index: 7, kind: input, shape index: {}]
  %s8 = inlined_call_operand.vmem [shape: f32[1,128], index: 8, kind: input, shape index: {}]
  %s9 = inlined_call_operand.hbm [shape: f32[128,128], index: 9, kind: input, shape index: {}]
  %s10 = inlined_call_operand.vmem [shape: f32[1,128], index: 10, kind: input, shape index: {}]
  %s11 = inlined_call_operand.hbm [shape: f32[2,16,128], index: 11, kind: output, shape index: {}]
  %s12 = sld [smem:[#allocation0]]
  $region82: #{tpu_custom_call.1} parent=0
    _
  %s14 = ssub.s32 1, %s12
  %s15 = scalar_select 0, %s14, %s12
  $region1: #{tpu_custom_call.1} parent=0
    #allocation2 [shape = 'u8[16384]{0}', space=vmem, size = 0x4000, scoped, tag = 'input window, operand 0, single buffered']
    #allocation3 [shape = 's32[1]{0}', space=sflag, size = 0x4, scoped, tag = 'scoped memory for tpu_custom_call.1']
    #allocation4 [shape = 's32[1]{0}', space=sflag, size = 0x4, scoped, tag = 'scoped memory for tpu_custom_call.1']
    #allocation5 [shape = 'u8[16384]{0}', space=vmem, size = 0x4000, scoped, tag = 'input window, operand 1, single buffered']
    #allocation6 [shape = 's32[1]{0}', space=sflag, size = 0x4, scoped, tag = 'scoped memory for tpu_custom_call.1']
    #allocation7 [shape = 'u8[16384]{0}', space=vmem, size = 0x4000, scoped, tag = 'input window, operand 2, single buffered']
    #allocation8 [shape = 'u8[65536]{0}', space=vmem, size = 0x10000, scoped, tag = 'input window, operand 3, single buffered']
    #allocation9 [shape = 's32[1]{0}', space=sflag, size = 0x4, scoped, tag = 'scoped memory for tpu_custom_call.1']
    #allocation10 [shape = 'u8[65536]{0}', space=vmem, size = 0x10000, scoped, tag = 'input window, operand 5, single buffered']
    #allocation11 [shape = 'u8[65536]{0}', space=vmem, size = 0x10000, scoped, tag = 'input window, operand 7, single buffered']
    #allocation12 [shape = 's32[1]{0}', space=sflag, size = 0x4, scoped, tag = 'scoped memory for tpu_custom_call.1']
    #allocation13 [shape = 'u8[65536]{0}', space=vmem, size = 0x10000, scoped, tag = 'input window, operand 9, single buffered']
    #allocation14 [shape = 'u8[16384]{0}', space=vmem, size = 0x4000, scoped, tag = 'output window, operand 0, single buffered']
    %16 = vsyncpa [#allocation3], 0
    %17 = vsyncpa [#allocation6], 0
    %18 = vsyncpa [#allocation9], 0
    %19 = vsyncpa [#allocation12], 0
    %20 = vsyncpa [#allocation4], 0
    // Predicated region
    $region2: #{tpu_custom_call.1} parent=1 // pred_check
      _
    $region3: #{tpu_custom_call.1} parent=1 // pred_check_branch
      %22 = sbr.rel (0) target = $region5
    $region4: #{tpu_custom_call.1} parent=1 // pred_region
      %s24 = ssub.s32 512, 512
      %25 = vsyncadd [#allocation3], %s24
      %s26 = sshll.u32 [#allocation2], 4
      %s27 = int_to_ptr.vmem [resolvable:$true] %s26
      %32 = dma.hbm_to_vmem [thread:$0]  %s0, 512, %s27, [#allocation3], 128, 128, 8
    $region5: #{tpu_custom_call.1} parent=1 // pred_fallthru
      _
    // Predicated region
    $region6: #{tpu_custom_call.1} parent=1 // pred_check
      _
    $region7: #{tpu_custom_call.1} parent=1 // pred_check_branch
      %34 = sbr.rel (0) target = $region9
    $region8: #{tpu_custom_call.1} parent=1 // pred_region
      %s36 = ssub.s32 512, 512
      %37 = vsyncadd [#allocation6], %s36
      %s38 = sshll.u32 [#allocation5], 4
      %s39 = int_to_ptr.vmem [resolvable:$true] %s38
      %44 = dma.hbm_to_vmem [thread:$0]  %s1, 512, %s39, [#allocation6], 128, 128, 8
    $region9: #{tpu_custom_call.1} parent=1 // pred_fallthru
      _
    // Predicated region
    $region10: #{tpu_custom_call.1} parent=1 // pred_check
      _
    $region11: #{tpu_custom_call.1} parent=1 // pred_check_branch
      %46 = sbr.rel (0) target = $region13
    $region12: #{tpu_custom_call.1} parent=1 // pred_region
      %s48 = ssub.s32 512, 512
      %49 = vsyncadd [#allocation6], %s48
      %s50 = sshll.u32 [#allocation7], 4
      %s51 = int_to_ptr.vmem [resolvable:$true] %s50
      %56 = dma.hbm_to_vmem [thread:$0]  %s2, 512, %s51, [#allocation6], 128, 128, 8
    $region13: #{tpu_custom_call.1} parent=1 // pred_fallthru
      _
    // Predicated region
    $region14: #{tpu_custom_call.1} parent=1 // pred_check
      _
    $region15: #{tpu_custom_call.1} parent=1 // pred_check_branch
      %58 = sbr.rel (0) target = $region17
    $region16: #{tpu_custom_call.1} parent=1 // pred_region
      %s60 = ssub.s32 2048, 2048
      %61 = vsyncadd [#allocation9], %s60
      %s62 = sshll.u32 [#allocation8], 4
      %s63 = int_to_ptr.vmem [resolvable:$true] %s62
      %68 = dma.hbm_to_vmem [thread:$0]  %s3, 2048, %s63, [#allocation9], 128, 128, 8
    $region17: #{tpu_custom_call.1} parent=1 // pred_fallthru
      _
    // Predicated region
    $region18: #{tpu_custom_call.1} parent=1 // pred_check
      _
    $region19: #{tpu_custom_call.1} parent=1 // pred_check_branch
      %70 = sbr.rel (0) target = $region21
    $region20: #{tpu_custom_call.1} parent=1 // pred_region
      _
    $region21: #{tpu_custom_call.1} parent=1 // pred_fallthru
      _
    // Predicated region
    $region22: #{tpu_custom_call.1} parent=1 // pred_check
      _
    $region23: #{tpu_custom_call.1} parent=1 // pred_check_branch
      %72 = sbr.rel (0) target = $region25
    $region24: #{tpu_custom_call.1} parent=1 // pred_region
      %s74 = ssub.s32 2048, 2048
      %75 = vsyncadd [#allocation9], %s74
      %s76 = sshll.u32 [#allocation10], 4
      %s77 = int_to_ptr.vmem [resolvable:$true] %s76
      %82 = dma.hbm_to_vmem [thread:$0]  %s5, 2048, %s77, [#allocation9], 128, 128, 8
    $region25: #{tpu_custom_call.1} parent=1 // pred_fallthru
      _
    // Predicated region
    $region26: #{tpu_custom_call.1} parent=1 // pred_check
      _
    $region27: #{tpu_custom_call.1} parent=1 // pred_check_branch
      %84 = sbr.rel (0) target = $region29
    $region28: #{tpu_custom_call.1} parent=1 // pred_region
      _
    $region29: #{tpu_custom_call.1} parent=1 // pred_fallthru
      _
    // Predicated region
    $region30: #{tpu_custom_call.1} parent=1 // pred_check
      _
    $region31: #{tpu_custom_call.1} parent=1 // pred_check_branch
      %86 = sbr.rel (0) target = $region33
    $region32: #{tpu_custom_call.1} parent=1 // pred_region
      %s88 = ssub.s32 2048, 2048
      %89 = vsyncadd [#allocation12], %s88
      %s90 = sshll.u32 [#allocation11], 4
      %s91 = int_to_ptr.vmem [resolvable:$true] %s90
      %96 = dma.hbm_to_vmem [thread:$0]  %s7, 2048, %s91, [#allocation12], 128, 128, 8
    $region33: #{tpu_custom_call.1} parent=1 // pred_fallthru
      _
    // Predicated region
    $region34: #{tpu_custom_call.1} parent=1 // pred_check
      _
    $region35: #{tpu_custom_call.1} parent=1 // pred_check_branch
      %98 = sbr.rel (0) target = $region37
    $region36: #{tpu_custom_call.1} parent=1 // pred_region
      _
    $region37: #{tpu_custom_call.1} parent=1 // pred_fallthru
      _
    // Predicated region
    $region38: #{tpu_custom_call.1} parent=1 // pred_check
      _
    $region39: #{tpu_custom_call.1} parent=1 // pred_check_branch
      %100 = sbr.rel (0) target = $region41
    $region40: #{tpu_custom_call.1} parent=1 // pred_region
      %s102 = ssub.s32 2048, 2048
      %103 = vsyncadd [#allocation12], %s102
      %s104 = sshll.u32 [#allocation13], 4
      %s105 = int_to_ptr.vmem [resolvable:$true] %s104
      %110 = dma.hbm_to_vmem [thread:$0]  %s9, 2048, %s105, [#allocation12], 128, 128, 8
    $region41: #{tpu_custom_call.1} parent=1 // pred_fallthru
      _
    // Predicated region
    $region42: #{tpu_custom_call.1} parent=1 // pred_check
      _
    $region43: #{tpu_custom_call.1} parent=1 // pred_check_branch
      %112 = sbr.rel (0) target = $region45
    $region44: #{tpu_custom_call.1} parent=1 // pred_region
      _
    $region45: #{tpu_custom_call.1} parent=1 // pred_fallthru
      _
    // Predicated region
    $region46: #{tpu_custom_call.1} parent=1 // pred_check
      _
    $region47: #{tpu_custom_call.1} parent=1 // pred_check_branch
      %114 = sbr.rel (0) target = $region49
    $region48: #{tpu_custom_call.1} parent=1 // pred_region
      %115 = dma.done [#allocation3], 512
    $region49: #{tpu_custom_call.1} parent=1 // pred_fallthru
      _
    // Predicated region
    $region50: #{tpu_custom_call.1} parent=1 // pred_check
      _
    $region51: #{tpu_custom_call.1} parent=1 // pred_check_branch
      %117 = sbr.rel (0) target = $region53
    $region52: #{tpu_custom_call.1} parent=1 // pred_region
      %118 = dma.done [#allocation6], 512
    $region53: #{tpu_custom_call.1} parent=1 // pred_fallthru
      _
    // Predicated region
    $region54: #{tpu_custom_call.1} parent=1 // pred_check
      _
    $region55: #{tpu_custom_call.1} parent=1 // pred_check_branch
      %120 = sbr.rel (0) target = $region57
    $region56: #{tpu_custom_call.1} parent=1 // pred_region
      %121 = dma.done [#allocation6], 512
    $region57: #{tpu_custom_call.1} parent=1 // pred_fallthru
      _
    // Predicated region
    $region58: #{tpu_custom_call.1} parent=1 // pred_check
      _
    $region59: #{tpu_custom_call.1} parent=1 // pred_check_branch
      %123 = sbr.rel (0) target = $region61
    $region60: #{tpu_custom_call.1} parent=1 // pred_region
      %124 = dma.done [#allocation9], 2048
    $region61: #{tpu_custom_call.1} parent=1 // pred_fallthru
      _
    // Predicated region
    $region62: #{tpu_custom_call.1} parent=1 // pred_check
      _
    $region63: #{tpu_custom_call.1} parent=1 // pred_check_branch
      %126 = sbr.rel (0) target = $region65
    $region64: #{tpu_custom_call.1} parent=1 // pred_region
      %127 = dma.done [#allocation9], 2048
    $region65: #{tpu_custom_call.1} parent=1 // pred_fallthru
      _
    // Predicated region
    $region66: #{tpu_custom_call.1} parent=1 // pred_check
      _
    $region67: #{tpu_custom_call.1} parent=1 // pred_check_branch
      %129 = sbr.rel (0) target = $region69
    $region68: #{tpu_custom_call.1} parent=1 // pred_region
      %130 = dma.done [#allocation12], 2048
    $region69: #{tpu_custom_call.1} parent=1 // pred_fallthru
      _
    // Predicated region
    $region70: #{tpu_custom_call.1} parent=1 // pred_check
      _
    $region71: #{tpu_custom_call.1} parent=1 // pred_check_branch
      %132 = sbr.rel (0) target = $region73
    $region72: #{tpu_custom_call.1} parent=1 // pred_region
      %133 = dma.done [#allocation12], 2048
    $region73: #{tpu_custom_call.1} parent=1 // pred_fallthru
      _
    %v134 = vld [vmem:[#allocation2] sm:$0xff]
    %v135 = vld [vmem:[#allocation2 + $0x8] sm:$0xff]
    %v136 = vld [vmem:[#allocation2 + $0x10] sm:$0xff]
    %v137 = vld [vmem:[#allocation2 + $0x18] sm:$0xff]
    %v138 = vld [vmem:[#allocation5] sm:$0xff]
    %v139 = vld [vmem:[#allocation5 + $0x8] sm:$0xff]
    %v140 = vld [vmem:[#allocation5 + $0x10] sm:$0xff]
    %v141 = vld [vmem:[#allocation5 + $0x18] sm:$0xff]
    %v142 = vld [vmem:[#allocation7] sm:$0xff]
    %v143 = vld [vmem:[#allocation7 + $0x8] sm:$0xff]
    %v144 = vld [vmem:[#allocation7 + $0x10] sm:$0xff]
    %v145 = vld [vmem:[#allocation7 + $0x18] sm:$0xff]
    %v146 = vld [vmem:[#allocation8] sm:$0xff]
    %v147 = vld [vmem:[#allocation8 + $0x8] sm:$0xff]
    %v148 = vld [vmem:[#allocation8 + $0x10] sm:$0xff]
    %v149 = vld [vmem:[#allocation8 + $0x18] sm:$0xff]
    %v150 = vld [vmem:[#allocation8 + $0x20] sm:$0xff]
    %v151 = vld [vmem:[#allocation8 + $0x28] sm:$0xff]
    %v152 = vld [vmem:[#allocation8 + $0x30] sm:$0xff]
    %v153 = vld [vmem:[#allocation8 + $0x38] sm:$0xff]
    %v154 = vld [vmem:[#allocation8 + $0x40] sm:$0xff]
    %v155 = vld [vmem:[#allocation8 + $0x48] sm:$0xff]
    %v156 = vld [vmem:[#allocation8 + $0x50] sm:$0xff]
    %v157 = vld [vmem:[#allocation8 + $0x58] sm:$0xff]
    %v158 = vld [vmem:[#allocation8 + $0x60] sm:$0xff]
    %v159 = vld [vmem:[#allocation8 + $0x68] sm:$0xff]
    %v160 = vld [vmem:[#allocation8 + $0x70] sm:$0xff]
    %v161 = vld [vmem:[#allocation8 + $0x78] sm:$0xff]
    %v162 = vld [vmem:[%s4] sm:$0x1]
    %v164 = vlaneseq
    %v165 = vshrl.u32 %v164, 7
    %v166 = vsub.s32 0, %v165
    %v167 = vrot.slane %v162, %v166
    %169 = vmatprep.subr.mxu0 0.0
    %170 = vmatpush1.msra.mxu0 %v146
    %171 = vmatprep.subr.mxu0 0.0
    %172 = vmatpush1.msra.mxu0 %v147
    %173 = vmatprep.subr.mxu0 0.0
    %174 = vmatpush1.msra.mxu0 %v148
    %175 = vmatprep.subr.mxu0 0.0
    %176 = vmatpush1.msra.mxu0 %v149
    %177 = vmatprep.subr.mxu0 0.0
    %178 = vmatpush1.msra.mxu0 %v150
    %179 = vmatprep.subr.mxu0 0.0
    %180 = vmatpush1.msra.mxu0 %v151
    %181 = vmatprep.subr.mxu0 0.0
    %182 = vmatpush1.msra.mxu0 %v152
    %183 = vmatprep.subr.mxu0 0.0
    %184 = vmatpush1.msra.mxu0 %v153
    %185 = vmatprep.subr.mxu0 0.0
    %186 = vmatpush1.msra.mxu0 %v154
    %187 = vmatprep.subr.mxu0 0.0
    %188 = vmatpush1.msra.mxu0 %v155
    %189 = vmatprep.subr.mxu0 0.0
    %190 = vmatpush1.msra.mxu0 %v156
    %191 = vmatprep.subr.mxu0 0.0
    %192 = vmatpush1.msra.mxu0 %v157
    %193 = vmatprep.subr.mxu0 0.0
    %194 = vmatpush1.msra.mxu0 %v158
    %195 = vmatprep.subr.mxu0 0.0
    %196 = vmatpush1.msra.mxu0 %v159
    %197 = vmatprep.subr.mxu0 0.0
    %198 = vmatpush1.msra.mxu0 %v160
    %199 = vmatprep.subr.mxu0 0.0
    %200 = vmatpush1.msra.mxu0 %v161
    %201 = vmatprep.subr.mxu0 0.0
    %202 = vmatpush1.msra.mxu0 0.0
    %203 = vmatprep.subr.mxu0 0.0
    %204 = vmatpush1.msra.mxu0 0.0
    %205 = vmatprep.subr.mxu0 0.0
    %206 = vmatpush1.msra.mxu0 0.0
    %207 = vmatprep.subr.mxu0 0.0
    %208 = vmatpush1.msra.mxu0 0.0
    %209 = vmatprep.subr.mxu0 0.0
    %210 = vmatpush1.msra.mxu0 0.0
    %211 = vmatprep.subr.mxu0 0.0
    %212 = vmatpush1.msra.mxu0 0.0
    %213 = vmatprep.subr.mxu0 0.0
    %214 = vmatpush1.msra.mxu0 0.0
    %215 = vmatprep.subr.mxu0 0.0
    %216 = vmatpush1.msra.mxu0 0.0
    %217 = vmatprep.subr.mxu0 0.0
    %218 = vmatpush1.msra.mxu0 0.0
    %219 = vmatprep.subr.mxu0 0.0
    %220 = vmatpush1.msra.mxu0 0.0
    %221 = vmatprep.subr.mxu0 0.0
    %222 = vmatpush1.msra.mxu0 0.0
    %223 = vmatprep.subr.mxu0 0.0
    %224 = vmatpush1.msra.mxu0 0.0
    %225 = vmatprep.subr.mxu0 0.0
    %226 = vmatpush1.msra.mxu0 0.0
    %227 = vmatprep.subr.mxu0 0.0
    %228 = vmatpush1.msra.mxu0 0.0
    %229 = vmatprep.subr.mxu0 0.0
    %230 = vmatpush1.msra.mxu0 0.0
    %231 = vmatprep.subr.mxu0 0.0
    %232 = vmatpush1.msra.mxu0 0.0
    %233 = vmatprep.mubr.f32.mxu0 0.0
    %234 = vmatmul.mubr.f32.gmra.mrb[0].mxu0 %v134
    %v235 = vpop.f32.mrb[0].mxu0
    %v236 = vadd.f32 %v167, %v235
    %v237 = vpop.f32.mrb[0].mxu0
    %238 = vmatprep.mubr.f32.mxu0 0.0
    %239 = vmatmul.mubr.f32.gmra.mrb[0].mxu0 %v135
    %v240 = vpop.f32.mrb[0].mxu0
    %v241 = vadd.f32 %v167, %v240
    %v242 = vpop.f32.mrb[0].mxu0
    %243 = vmatprep.mubr.f32.mxu0 0.0
    %244 = vmatmul.mubr.f32.gmra.mrb[0].mxu0 %v136
    %v245 = vpop.f32.mrb[0].mxu0
    %v246 = vadd.f32 %v167, %v245
    %v247 = vpop.f32.mrb[0].mxu0
    %248 = vmatprep.mubr.f32.mxu0 0.0
    %249 = vmatmul.mubr.f32.gmra.mrb[0].mxu0 %v137
    %v250 = vpop.f32.mrb[0].mxu0
    %v251 = vadd.f32 %v167, %v250
    %v252 = vpop.f32.mrb[0].mxu0
    %253 = vdwg.mxu0
    %v254 = vld [vmem:[#allocation10] sm:$0xff]
    %v255 = vld [vmem:[#allocation10 + $0x8] sm:$0xff]
    %v256 = vld [vmem:[#allocation10 + $0x10] sm:$0xff]
    %v257 = vld [vmem:[#allocation10 + $0x18] sm:$0xff]
    %v258 = vld [vmem:[#allocation10 + $0x20] sm:$0xff]
    %v259 = vld [vmem:[#allocation10 + $0x28] sm:$0xff]
    %v260 = vld [vmem:[#allocation10 + $0x30] sm:$0xff]
    %v261 = vld [vmem:[#allocation10 + $0x38] sm:$0xff]
    %v262 = vld [vmem:[#allocation10 + $0x40] sm:$0xff]
    %v263 = vld [vmem:[#allocation10 + $0x48] sm:$0xff]
    %v264 = vld [vmem:[#allocation10 + $0x50] sm:$0xff]
    %v265 = vld [vmem:[#allocation10 + $0x58] sm:$0xff]
    %v266 = vld [vmem:[#allocation10 + $0x60] sm:$0xff]
    %v267 = vld [vmem:[#allocation10 + $0x68] sm:$0xff]
    %v268 = vld [vmem:[#allocation10 + $0x70] sm:$0xff]
    %v269 = vld [vmem:[#allocation10 + $0x78] sm:$0xff]
    %v270 = vld [vmem:[%s6] sm:$0x1]
    %v272 = vlaneseq
    %v273 = vshrl.u32 %v272, 7
    %v274 = vsub.s32 0, %v273
    %v275 = vrot.slane %v270, %v274
    %277 = vmatprep.subr.mxu0 0.0
    %278 = vmatpush1.msra.mxu0 %v254
    %279 = vmatprep.subr.mxu0 0.0
    %280 = vmatpush1.msra.mxu0 %v255
    %281 = vmatprep.subr.mxu0 0.0
    %282 = vmatpush1.msra.mxu0 %v256
    %283 = vmatprep.subr.mxu0 0.0
    %284 = vmatpush1.msra.mxu0 %v257
    %285 = vmatprep.subr.mxu0 0.0
    %286 = vmatpush1.msra.mxu0 %v258
    %287 = vmatprep.subr.mxu0 0.0
    %288 = vmatpush1.msra.mxu0 %v259
    %289 = vmatprep.subr.mxu0 0.0
    %290 = vmatpush1.msra.mxu0 %v260
    %291 = vmatprep.subr.mxu0 0.0
    %292 = vmatpush1.msra.mxu0 %v261
    %293 = vmatprep.subr.mxu0 0.0
    %294 = vmatpush1.msra.mxu0 %v262
    %295 = vmatprep.subr.mxu0 0.0
    %296 = vmatpush1.msra.mxu0 %v263
    %297 = vmatprep.subr.mxu0 0.0
    %298 = vmatpush1.msra.mxu0 %v264
    %299 = vmatprep.subr.mxu0 0.0
    %300 = vmatpush1.msra.mxu0 %v265
    %301 = vmatprep.subr.mxu0 0.0
    %302 = vmatpush1.msra.mxu0 %v266
    %303 = vmatprep.subr.mxu0 0.0
    %304 = vmatpush1.msra.mxu0 %v267
    %305 = vmatprep.subr.mxu0 0.0
    %306 = vmatpush1.msra.mxu0 %v268
    %307 = vmatprep.subr.mxu0 0.0
    %308 = vmatpush1.msra.mxu0 %v269
    %309 = vmatprep.subr.mxu0 0.0
    %310 = vmatpush1.msra.mxu0 0.0
    %311 = vmatprep.subr.mxu0 0.0
    %312 = vmatpush1.msra.mxu0 0.0
    %313 = vmatprep.subr.mxu0 0.0
    %314 = vmatpush1.msra.mxu0 0.0
    %315 = vmatprep.subr.mxu0 0.0
    %316 = vmatpush1.msra.mxu0 0.0
    %317 = vmatprep.subr.mxu0 0.0
    %318 = vmatpush1.msra.mxu0 0.0
    %319 = vmatprep.subr.mxu0 0.0
    %320 = vmatpush1.msra.mxu0 0.0
    %321 = vmatprep.subr.mxu0 0.0
    %322 = vmatpush1.msra.mxu0 0.0
    %323 = vmatprep.subr.mxu0 0.0
    %324 = vmatpush1.msra.mxu0 0.0
    %325 = vmatprep.subr.mxu0 0.0
    %326 = vmatpush1.msra.mxu0 0.0
    %327 = vmatprep.subr.mxu0 0.0
    %328 = vmatpush1.msra.mxu0 0.0
    %329 = vmatprep.subr.mxu0 0.0
    %330 = vmatpush1.msra.mxu0 0.0
    %331 = vmatprep.subr.mxu0 0.0
    %332 = vmatpush1.msra.mxu0 0.0
    %333 = vmatprep.subr.mxu0 0.0
    %334 = vmatpush1.msra.mxu0 0.0
    %335 = vmatprep.subr.mxu0 0.0
    %336 = vmatpush1.msra.mxu0 0.0
    %337 = vmatprep.subr.mxu0 0.0
    %338 = vmatpush1.msra.mxu0 0.0
    %339 = vmatprep.subr.mxu0 0.0
    %340 = vmatpush1.msra.mxu0 0.0
    %341 = vmatprep.mubr.f32.mxu0 0.0
    %342 = vmatmul.mubr.f32.gmra.mrb[0].mxu0 %v138
    %v343 = vpop.f32.mrb[0].mxu0
    %v344 = vadd.f32 %v275, %v343
    %v345 = vpop.f32.mrb[0].mxu0
    %346 = vmatprep.mubr.f32.mxu0 0.0
    %347 = vmatmul.mubr.f32.gmra.mrb[0].mxu0 %v139
    %v348 = vpop.f32.mrb[0].mxu0
    %v349 = vadd.f32 %v275, %v348
    %v350 = vpop.f32.mrb[0].mxu0
    %351 = vmatprep.mubr.f32.mxu0 0.0
    %352 = vmatmul.mubr.f32.gmra.mrb[0].mxu0 %v140
    %v353 = vpop.f32.mrb[0].mxu0
    %v354 = vadd.f32 %v275, %v353
    %v355 = vpop.f32.mrb[0].mxu0
    %356 = vmatprep.mubr.f32.mxu0 0.0
    %357 = vmatmul.mubr.f32.gmra.mrb[0].mxu0 %v141
    %v358 = vpop.f32.mrb[0].mxu0
    %v359 = vadd.f32 %v275, %v358
    %v360 = vpop.f32.mrb[0].mxu0
    %361 = vdwg.mxu0
    %v362 = vld [vmem:[#allocation11] sm:$0xff]
    %v363 = vld [vmem:[#allocation11 + $0x8] sm:$0xff]
    %v364 = vld [vmem:[#allocation11 + $0x10] sm:$0xff]
    %v365 = vld [vmem:[#allocation11 + $0x18] sm:$0xff]
    %v366 = vld [vmem:[#allocation11 + $0x20] sm:$0xff]
    %v367 = vld [vmem:[#allocation11 + $0x28] sm:$0xff]
    %v368 = vld [vmem:[#allocation11 + $0x30] sm:$0xff]
    %v369 = vld [vmem:[#allocation11 + $0x38] sm:$0xff]
    %v370 = vld [vmem:[#allocation11 + $0x40] sm:$0xff]
    %v371 = vld [vmem:[#allocation11 + $0x48] sm:$0xff]
    %v372 = vld [vmem:[#allocation11 + $0x50] sm:$0xff]
    %v373 = vld [vmem:[#allocation11 + $0x58] sm:$0xff]
    %v374 = vld [vmem:[#allocation11 + $0x60] sm:$0xff]
    %v375 = vld [vmem:[#allocation11 + $0x68] sm:$0xff]
    %v376 = vld [vmem:[#allocation11 + $0x70] sm:$0xff]
    %v377 = vld [vmem:[#allocation11 + $0x78] sm:$0xff]
    %v378 = vld [vmem:[%s8] sm:$0x1]
    %v380 = vlaneseq
    %v381 = vshrl.u32 %v380, 7
    %v382 = vsub.s32 0, %v381
    %v383 = vrot.slane %v378, %v382
    %385 = vmatprep.subr.mxu0 0.0
    %386 = vmatpush1.msra.mxu0 %v362
    %387 = vmatprep.subr.mxu0 0.0
    %388 = vmatpush1.msra.mxu0 %v363
    %389 = vmatprep.subr.mxu0 0.0
    %390 = vmatpush1.msra.mxu0 %v364
    %391 = vmatprep.subr.mxu0 0.0
    %392 = vmatpush1.msra.mxu0 %v365
    %393 = vmatprep.subr.mxu0 0.0
    %394 = vmatpush1.msra.mxu0 %v366
    %395 = vmatprep.subr.mxu0 0.0
    %396 = vmatpush1.msra.mxu0 %v367
    %397 = vmatprep.subr.mxu0 0.0
    %398 = vmatpush1.msra.mxu0 %v368
    %399 = vmatprep.subr.mxu0 0.0
    %400 = vmatpush1.msra.mxu0 %v369
    %401 = vmatprep.subr.mxu0 0.0
    %402 = vmatpush1.msra.mxu0 %v370
    %403 = vmatprep.subr.mxu0 0.0
    %404 = vmatpush1.msra.mxu0 %v371
    %405 = vmatprep.subr.mxu0 0.0
    %406 = vmatpush1.msra.mxu0 %v372
    %407 = vmatprep.subr.mxu0 0.0
    %408 = vmatpush1.msra.mxu0 %v373
    %409 = vmatprep.subr.mxu0 0.0
    %410 = vmatpush1.msra.mxu0 %v374
    %411 = vmatprep.subr.mxu0 0.0
    %412 = vmatpush1.msra.mxu0 %v375
    %413 = vmatprep.subr.mxu0 0.0
    %414 = vmatpush1.msra.mxu0 %v376
    %415 = vmatprep.subr.mxu0 0.0
    %416 = vmatpush1.msra.mxu0 %v377
    %417 = vmatprep.subr.mxu0 0.0
    %418 = vmatpush1.msra.mxu0 0.0
    %419 = vmatprep.subr.mxu0 0.0
    %420 = vmatpush1.msra.mxu0 0.0
    %421 = vmatprep.subr.mxu0 0.0
    %422 = vmatpush1.msra.mxu0 0.0
    %423 = vmatprep.subr.mxu0 0.0
    %424 = vmatpush1.msra.mxu0 0.0
    %425 = vmatprep.subr.mxu0 0.0
    %426 = vmatpush1.msra.mxu0 0.0
    %427 = vmatprep.subr.mxu0 0.0
    %428 = vmatpush1.msra.mxu0 0.0
    %429 = vmatprep.subr.mxu0 0.0
    %430 = vmatpush1.msra.mxu0 0.0
    %431 = vmatprep.subr.mxu0 0.0
    %432 = vmatpush1.msra.mxu0 0.0
    %433 = vmatprep.subr.mxu0 0.0
    %434 = vmatpush1.msra.mxu0 0.0
    %435 = vmatprep.subr.mxu0 0.0
    %436 = vmatpush1.msra.mxu0 0.0
    %437 = vmatprep.subr.mxu0 0.0
    %438 = vmatpush1.msra.mxu0 0.0
    %439 = vmatprep.subr.mxu0 0.0
    %440 = vmatpush1.msra.mxu0 0.0
    %441 = vmatprep.subr.mxu0 0.0
    %442 = vmatpush1.msra.mxu0 0.0
    %443 = vmatprep.subr.mxu0 0.0
    %444 = vmatpush1.msra.mxu0 0.0
    %445 = vmatprep.subr.mxu0 0.0
    %446 = vmatpush1.msra.mxu0 0.0
    %447 = vmatprep.subr.mxu0 0.0
    %448 = vmatpush1.msra.mxu0 0.0
    %449 = vmatprep.mubr.f32.mxu0 0.0
    %450 = vmatmul.mubr.f32.gmra.mrb[0].mxu0 %v142
    %v451 = vpop.f32.mrb[0].mxu0
    %v452 = vadd.f32 %v383, %v451
    %v453 = vpop.f32.mrb[0].mxu0
    %454 = vmatprep.mubr.f32.mxu0 0.0
    %455 = vmatmul.mubr.f32.gmra.mrb[0].mxu0 %v143
    %v456 = vpop.f32.mrb[0].mxu0
    %v457 = vadd.f32 %v383, %v456
    %v458 = vpop.f32.mrb[0].mxu0
    %459 = vmatprep.mubr.f32.mxu0 0.0
    %460 = vmatmul.mubr.f32.gmra.mrb[0].mxu0 %v144
    %v461 = vpop.f32.mrb[0].mxu0
    %v462 = vadd.f32 %v383, %v461
    %v463 = vpop.f32.mrb[0].mxu0
    %464 = vmatprep.mubr.f32.mxu0 0.0
    %465 = vmatmul.mubr.f32.gmra.mrb[0].mxu0 %v145
    %v466 = vpop.f32.mrb[0].mxu0
    %v467 = vadd.f32 %v383, %v466
    %v468 = vpop.f32.mrb[0].mxu0
    %469 = vdwg.mxu0
    %474 = vrot.lane.b32.xlu0 %v236, 112
    %v475 = vpop.permute.xlu0 %474
    %476 = vrot.lane.b32.xlu0 %v241, 112
    %v477 = vpop.permute.xlu0 %476
    %478 = vrot.lane.b32.xlu0 %v246, 112
    %v479 = vpop.permute.xlu0 %478
    %480 = vrot.lane.b32.xlu0 %v251, 112
    %v481 = vpop.permute.xlu0 %480
    %486 = vrot.lane.b32.xlu0 %v236, 96
    %v487 = vpop.permute.xlu0 %486
    %488 = vrot.lane.b32.xlu0 %v241, 96
    %v489 = vpop.permute.xlu0 %488
    %490 = vrot.lane.b32.xlu0 %v246, 96
    %v491 = vpop.permute.xlu0 %490
    %492 = vrot.lane.b32.xlu0 %v251, 96
    %v493 = vpop.permute.xlu0 %492
    %498 = vrot.lane.b32.xlu0 %v236, 80
    %v499 = vpop.permute.xlu0 %498
    %500 = vrot.lane.b32.xlu0 %v241, 80
    %v501 = vpop.permute.xlu0 %500
    %502 = vrot.lane.b32.xlu0 %v246, 80
    %v503 = vpop.permute.xlu0 %502
    %504 = vrot.lane.b32.xlu0 %v251, 80
    %v505 = vpop.permute.xlu0 %504
    %510 = vrot.lane.b32.xlu0 %v236, 64
    %v511 = vpop.permute.xlu0 %510
    %512 = vrot.lane.b32.xlu0 %v241, 64
    %v513 = vpop.permute.xlu0 %512
    %514 = vrot.lane.b32.xlu0 %v246, 64
    %v515 = vpop.permute.xlu0 %514
    %516 = vrot.lane.b32.xlu0 %v251, 64
    %v517 = vpop.permute.xlu0 %516
    %522 = vrot.lane.b32.xlu0 %v236, 48
    %v523 = vpop.permute.xlu0 %522
    %524 = vrot.lane.b32.xlu0 %v241, 48
    %v525 = vpop.permute.xlu0 %524
    %526 = vrot.lane.b32.xlu0 %v246, 48
    %v527 = vpop.permute.xlu0 %526
    %528 = vrot.lane.b32.xlu0 %v251, 48
    %v529 = vpop.permute.xlu0 %528
    %534 = vrot.lane.b32.xlu0 %v236, 32
    %v535 = vpop.permute.xlu0 %534
    %536 = vrot.lane.b32.xlu0 %v241, 32
    %v537 = vpop.permute.xlu0 %536
    %538 = vrot.lane.b32.xlu0 %v246, 32
    %v539 = vpop.permute.xlu0 %538
    %540 = vrot.lane.b32.xlu0 %v251, 32
    %v541 = vpop.permute.xlu0 %540
    %546 = vrot.lane.b32.xlu0 %v236, 16
    %v547 = vpop.permute.xlu0 %546
    %548 = vrot.lane.b32.xlu0 %v241, 16
    %v549 = vpop.permute.xlu0 %548
    %550 = vrot.lane.b32.xlu0 %v246, 16
    %v551 = vpop.permute.xlu0 %550
    %552 = vrot.lane.b32.xlu0 %v251, 16
    %v553 = vpop.permute.xlu0 %552
    %v558 = vcombine.low %v236, %v487
    %v559 = vcombine.high %v236, %v487
    %v561 = vunpack.c.l.s4 1983009808
    %v562 = vunpack.c.0.s8 %v561
    %v563 = vlaneseq
    %v564 = vshrl.u32 %v563, 7
    %v565 = vsub.s32 %v562, %v564
    %v566 = vrot.slane %v558, %v565
    %v568 = vunpack.c.l.s4 1983009808
    %v569 = vunpack.c.0.s8 %v568
    %v570 = vlaneseq
    %v571 = vshrl.u32 %v570, 7
    %v572 = vsub.s32 %v569, %v571
    %v573 = vrot.slane %v559, %v572
    %v574 = vcombine.low %v475, %v499
    %v575 = vcombine.high %v475, %v499
    %v577 = vunpack.c.l.s4 1983009808
    %v578 = vunpack.c.0.s8 %v577
    %v579 = vlaneseq
    %v580 = vshrl.u32 %v579, 7
    %v581 = vsub.s32 %v578, %v580
    %v582 = vrot.slane %v574, %v581
    %v584 = vunpack.c.l.s4 1983009808
    %v585 = vunpack.c.0.s8 %v584
    %v586 = vlaneseq
    %v587 = vshrl.u32 %v586, 7
    %v588 = vsub.s32 %v585, %v587
    %v589 = vrot.slane %v575, %v588
    %v590 = vcombine.low %v511, %v535
    %v591 = vcombine.high %v511, %v535
    %v593 = vunpack.c.l.s4 1983009808
    %v594 = vunpack.c.0.s8 %v593
    %v595 = vlaneseq
    %v596 = vshrl.u32 %v595, 7
    %v597 = vsub.s32 %v594, %v596
    %v598 = vrot.slane %v590, %v597
    %v600 = vunpack.c.l.s4 1983009808
    %v601 = vunpack.c.0.s8 %v600
    %v602 = vlaneseq
    %v603 = vshrl.u32 %v602, 7
    %v604 = vsub.s32 %v601, %v603
    %v605 = vrot.slane %v591, %v604
    %v606 = vcombine.low %v523, %v547
    %v607 = vcombine.high %v523, %v547
    %v609 = vunpack.c.l.s4 1983009808
    %v610 = vunpack.c.0.s8 %v609
    %v611 = vlaneseq
    %v612 = vshrl.u32 %v611, 7
    %v613 = vsub.s32 %v610, %v612
    %v614 = vrot.slane %v606, %v613
    %v616 = vunpack.c.l.s4 1983009808
    %v617 = vunpack.c.0.s8 %v616
    %v618 = vlaneseq
    %v619 = vshrl.u32 %v618, 7
    %v620 = vsub.s32 %v617, %v619
    %v621 = vrot.slane %v607, %v620
    %v622 = vcombine.low %v566, %v582
    %v623 = vcombine.high %v566, %v582
    %v625 = vunpack.c.l.s4 1934713408
    %v626 = vunpack.c.0.s8 %v625
    %v627 = vlaneseq
    %v628 = vshrl.u32 %v627, 7
    %v629 = vsub.s32 %v626, %v628
    %v630 = vrot.slane %v622, %v629
    %v632 = vunpack.c.l.s4 1934713408
    %v633 = vunpack.c.0.s8 %v632
    %v634 = vlaneseq
    %v635 = vshrl.u32 %v634, 7
    %v636 = vsub.s32 %v633, %v635
    %v637 = vrot.slane %v623, %v636
    %v638 = vcombine.low %v573, %v589
    %v639 = vcombine.high %v573, %v589
    %v641 = vunpack.c.l.s4 1934713408
    %v642 = vunpack.c.0.s8 %v641
    %v643 = vlaneseq
    %v644 = vshrl.u32 %v643, 7
    %v645 = vsub.s32 %v642, %v644
    %v646 = vrot.slane %v638, %v645
    %v648 = vunpack.c.l.s4 1934713408
    %v649 = vunpack.c.0.s8 %v648
    %v650 = vlaneseq
    %v651 = vshrl.u32 %v650, 7
    %v652 = vsub.s32 %v649, %v651
    %v653 = vrot.slane %v639, %v652
    %v654 = vcombine.low %v598, %v614
    %v655 = vcombine.high %v598, %v614
    %v657 = vunpack.c.l.s4 1934713408
    %v658 = vunpack.c.0.s8 %v657
    %v659 = vlaneseq
    %v660 = vshrl.u32 %v659, 7
    %v661 = vsub.s32 %v658, %v660
    %v662 = vrot.slane %v654, %v661
    %v664 = vunpack.c.l.s4 1934713408
    %v665 = vunpack.c.0.s8 %v664
    %v666 = vlaneseq
    %v667 = vshrl.u32 %v666, 7
    %v668 = vsub.s32 %v665, %v667
    %v669 = vrot.slane %v655, %v668
    %v670 = vcombine.low %v605, %v621
    %v671 = vcombine.high %v605, %v621
    %v673 = vunpack.c.l.s4 1934713408
    %v674 = vunpack.c.0.s8 %v673
    %v675 = vlaneseq
    %v676 = vshrl.u32 %v675, 7
    %v677 = vsub.s32 %v674, %v676
    %v678 = vrot.slane %v670, %v677
    %v680 = vunpack.c.l.s4 1934713408
    %v681 = vunpack.c.0.s8 %v680
    %v682 = vlaneseq
    %v683 = vshrl.u32 %v682, 7
    %v684 = vsub.s32 %v681, %v683
    %v685 = vrot.slane %v671, %v684
    %v686 = vcombine.low %v630, %v662
    %v687 = vcombine.high %v630, %v662
    %v688 = vcombine.low %v637, %v669
    %v689 = vcombine.high %v637, %v669
    %v690 = vcombine.low %v646, %v678
    %v691 = vcombine.high %v646, %v678
    %v692 = vcombine.low %v653, %v685
    %v693 = vcombine.high %v653, %v685
    %v694 = vcombine.low %v241, %v489
    %v695 = vcombine.high %v241, %v489
    %v697 = vunpack.c.l.s4 1983009808
    %v698 = vunpack.c.0.s8 %v697
    %v699 = vlaneseq
    %v700 = vshrl.u32 %v699, 7
    %v701 = vsub.s32 %v698, %v700
    %v702 = vrot.slane %v694, %v701
    %v704 = vunpack.c.l.s4 1983009808
    %v705 = vunpack.c.0.s8 %v704
    %v706 = vlaneseq
    %v707 = vshrl.u32 %v706, 7
    %v708 = vsub.s32 %v705, %v707
    %v709 = vrot.slane %v695, %v708
    %v710 = vcombine.low %v477, %v501
    %v711 = vcombine.high %v477, %v501
    %v713 = vunpack.c.l.s4 1983009808
    %v714 = vunpack.c.0.s8 %v713
    %v715 = vlaneseq
    %v716 = vshrl.u32 %v715, 7
    %v717 = vsub.s32 %v714, %v716
    %v718 = vrot.slane %v710, %v717
    %v720 = vunpack.c.l.s4 1983009808
    %v721 = vunpack.c.0.s8 %v720
    %v722 = vlaneseq
    %v723 = vshrl.u32 %v722, 7
    %v724 = vsub.s32 %v721, %v723
    %v725 = vrot.slane %v711, %v724
    %v726 = vcombine.low %v513, %v537
    %v727 = vcombine.high %v513, %v537
    %v729 = vunpack.c.l.s4 1983009808
    %v730 = vunpack.c.0.s8 %v729
    %v731 = vlaneseq
    %v732 = vshrl.u32 %v731, 7
    %v733 = vsub.s32 %v730, %v732
    %v734 = vrot.slane %v726, %v733
    %v736 = vunpack.c.l.s4 1983009808
    %v737 = vunpack.c.0.s8 %v736
    %v738 = vlaneseq
    %v739 = vshrl.u32 %v738, 7
    %v740 = vsub.s32 %v737, %v739
    %v741 = vrot.slane %v727, %v740
    %v742 = vcombine.low %v525, %v549
    %v743 = vcombine.high %v525, %v549
    %v745 = vunpack.c.l.s4 1983009808
    %v746 = vunpack.c.0.s8 %v745
    %v747 = vlaneseq
    %v748 = vshrl.u32 %v747, 7
    %v749 = vsub.s32 %v746, %v748
    %v750 = vrot.slane %v742, %v749
    %v752 = vunpack.c.l.s4 1983009808
    %v753 = vunpack.c.0.s8 %v752
    %v754 = vlaneseq
    %v755 = vshrl.u32 %v754, 7
    %v756 = vsub.s32 %v753, %v755
    %v757 = vrot.slane %v743, %v756
    %v758 = vcombine.low %v702, %v718
    %v759 = vcombine.high %v702, %v718
    %v761 = vunpack.c.l.s4 1934713408
    %v762 = vunpack.c.0.s8 %v761
    %v763 = vlaneseq
    %v764 = vshrl.u32 %v763, 7
    %v765 = vsub.s32 %v762, %v764
    %v766 = vrot.slane %v758, %v765
    %v768 = vunpack.c.l.s4 1934713408
    %v769 = vunpack.c.0.s8 %v768
    %v770 = vlaneseq
    %v771 = vshrl.u32 %v770, 7
    %v772 = vsub.s32 %v769, %v771
    %v773 = vrot.slane %v759, %v772
    %v774 = vcombine.low %v709, %v725
    %v775 = vcombine.high %v709, %v725
    %v777 = vunpack.c.l.s4 1934713408
    %v778 = vunpack.c.0.s8 %v777
    %v779 = vlaneseq
    %v780 = vshrl.u32 %v779, 7
    %v781 = vsub.s32 %v778, %v780
    %v782 = vrot.slane %v774, %v781
    %v784 = vunpack.c.l.s4 1934713408
    %v785 = vunpack.c.0.s8 %v784
    %v786 = vlaneseq
    %v787 = vshrl.u32 %v786, 7
    %v788 = vsub.s32 %v785, %v787
    %v789 = vrot.slane %v775, %v788
    %v790 = vcombine.low %v734, %v750
    %v791 = vcombine.high %v734, %v750
    %v793 = vunpack.c.l.s4 1934713408
    %v794 = vunpack.c.0.s8 %v793
    %v795 = vlaneseq
    %v796 = vshrl.u32 %v795, 7
    %v797 = vsub.s32 %v794, %v796
    %v798 = vrot.slane %v790, %v797
    %v800 = vunpack.c.l.s4 1934713408
    %v801 = vunpack.c.0.s8 %v800
    %v802 = vlaneseq
    %v803 = vshrl.u32 %v802, 7
    %v804 = vsub.s32 %v801, %v803
    %v805 = vrot.slane %v791, %v804
    %v806 = vcombine.low %v741, %v757
    %v807 = vcombine.high %v741, %v757
    %v809 = vunpack.c.l.s4 1934713408
    %v810 = vunpack.c.0.s8 %v809
    %v811 = vlaneseq
    %v812 = vshrl.u32 %v811, 7
    %v813 = vsub.s32 %v810, %v812
    %v814 = vrot.slane %v806, %v813
    %v816 = vunpack.c.l.s4 1934713408
    %v817 = vunpack.c.0.s8 %v816
    %v818 = vlaneseq
    %v819 = vshrl.u32 %v818, 7
    %v820 = vsub.s32 %v817, %v819
    %v821 = vrot.slane %v807, %v820
    %v822 = vcombine.low %v766, %v798
    %v823 = vcombine.high %v766, %v798
    %v824 = vcombine.low %v773, %v805
    %v825 = vcombine.high %v773, %v805
    %v826 = vcombine.low %v782, %v814
    %v827 = vcombine.high %v782, %v814
    %v828 = vcombine.low %v789, %v821
    %v829 = vcombine.high %v789, %v821
    %v830 = vcombine.low %v246, %v491
    %v831 = vcombine.high %v246, %v491
    %v833 = vunpack.c.l.s4 1983009808
    %v834 = vunpack.c.0.s8 %v833
    %v835 = vlaneseq
    %v836 = vshrl.u32 %v835, 7
    %v837 = vsub.s32 %v834, %v836
    %v838 = vrot.slane %v830, %v837
    %v840 = vunpack.c.l.s4 1983009808
    %v841 = vunpack.c.0.s8 %v840
    %v842 = vlaneseq
    %v843 = vshrl.u32 %v842, 7
    %v844 = vsub.s32 %v841, %v843
    %v845 = vrot.slane %v831, %v844
    %v846 = vcombine.low %v479, %v503
    %v847 = vcombine.high %v479, %v503
    %v849 = vunpack.c.l.s4 1983009808
    %v850 = vunpack.c.0.s8 %v849
    %v851 = vlaneseq
    %v852 = vshrl.u32 %v851, 7
    %v853 = vsub.s32 %v850, %v852
    %v854 = vrot.slane %v846, %v853
    %v856 = vunpack.c.l.s4 1983009808
    %v857 = vunpack.c.0.s8 %v856
    %v858 = vlaneseq
    %v859 = vshrl.u32 %v858, 7
    %v860 = vsub.s32 %v857, %v859
    %v861 = vrot.slane %v847, %v860
    %v862 = vcombine.low %v515, %v539
    %v863 = vcombine.high %v515, %v539
    %v865 = vunpack.c.l.s4 1983009808
    %v866 = vunpack.c.0.s8 %v865
    %v867 = vlaneseq
    %v868 = vshrl.u32 %v867, 7
    %v869 = vsub.s32 %v866, %v868
    %v870 = vrot.slane %v862, %v869
    %v872 = vunpack.c.l.s4 1983009808
    %v873 = vunpack.c.0.s8 %v872
    %v874 = vlaneseq
    %v875 = vshrl.u32 %v874, 7
    %v876 = vsub.s32 %v873, %v875
    %v877 = vrot.slane %v863, %v876
    %v878 = vcombine.low %v527, %v551
    %v879 = vcombine.high %v527, %v551
    %v881 = vunpack.c.l.s4 1983009808
    %v882 = vunpack.c.0.s8 %v881
    %v883 = vlaneseq
    %v884 = vshrl.u32 %v883, 7
    %v885 = vsub.s32 %v882, %v884
    %v886 = vrot.slane %v878, %v885
    %v888 = vunpack.c.l.s4 1983009808
    %v889 = vunpack.c.0.s8 %v888
    %v890 = vlaneseq
    %v891 = vshrl.u32 %v890, 7
    %v892 = vsub.s32 %v889, %v891
    %v893 = vrot.slane %v879, %v892
    %v894 = vcombine.low %v838, %v854
    %v895 = vcombine.high %v838, %v854
    %v897 = vunpack.c.l.s4 1934713408
    %v898 = vunpack.c.0.s8 %v897
    %v899 = vlaneseq
    %v900 = vshrl.u32 %v899, 7
    %v901 = vsub.s32 %v898, %v900
    %v902 = vrot.slane %v894, %v901
    %v904 = vunpack.c.l.s4 1934713408
    %v905 = vunpack.c.0.s8 %v904
    %v906 = vlaneseq
    %v907 = vshrl.u32 %v906, 7
    %v908 = vsub.s32 %v905, %v907
    %v909 = vrot.slane %v895, %v908
    %v910 = vcombine.low %v845, %v861
    %v911 = vcombine.high %v845, %v861
    %v913 = vunpack.c.l.s4 1934713408
    %v914 = vunpack.c.0.s8 %v913
    %v915 = vlaneseq
    %v916 = vshrl.u32 %v915, 7
    %v917 = vsub.s32 %v914, %v916
    %v918 = vrot.slane %v910, %v917
    %v920 = vunpack.c.l.s4 1934713408
    %v921 = vunpack.c.0.s8 %v920
    %v922 = vlaneseq
    %v923 = vshrl.u32 %v922, 7
    %v924 = vsub.s32 %v921, %v923
    %v925 = vrot.slane %v911, %v924
    %v926 = vcombine.low %v870, %v886
    %v927 = vcombine.high %v870, %v886
    %v929 = vunpack.c.l.s4 1934713408
    %v930 = vunpack.c.0.s8 %v929
    %v931 = vlaneseq
    %v932 = vshrl.u32 %v931, 7
    %v933 = vsub.s32 %v930, %v932
    %v934 = vrot.slane %v926, %v933
    %v936 = vunpack.c.l.s4 1934713408
    %v937 = vunpack.c.0.s8 %v936
    %v938 = vlaneseq
    %v939 = vshrl.u32 %v938, 7
    %v940 = vsub.s32 %v937, %v939
    %v941 = vrot.slane %v927, %v940
    %v942 = vcombine.low %v877, %v893
    %v943 = vcombine.high %v877, %v893
    %v945 = vunpack.c.l.s4 1934713408
    %v946 = vunpack.c.0.s8 %v945
    %v947 = vlaneseq
    %v948 = vshrl.u32 %v947, 7
    %v949 = vsub.s32 %v946, %v948
    %v950 = vrot.slane %v942, %v949
    %v952 = vunpack.c.l.s4 1934713408
    %v953 = vunpack.c.0.s8 %v952
    %v954 = vlaneseq
    %v955 = vshrl.u32 %v954, 7
    %v956 = vsub.s32 %v953, %v955
    %v957 = vrot.slane %v943, %v956
    %v958 = vcombine.low %v902, %v934
    %v959 = vcombine.high %v902, %v934
    %v960 = vcombine.low %v909, %v941
    %v961 = vcombine.high %v909, %v941
    %v962 = vcombine.low %v918, %v950
    %v963 = vcombine.high %v918, %v950
    %v964 = vcombine.low %v925, %v957
    %v965 = vcombine.high %v925, %v957
    %v966 = vcombine.low %v251, %v493
    %v967 = vcombine.high %v251, %v493
    %v969 = vunpack.c.l.s4 1983009808
    %v970 = vunpack.c.0.s8 %v969
    %v971 = vlaneseq
    %v972 = vshrl.u32 %v971, 7
    %v973 = vsub.s32 %v970, %v972
    %v974 = vrot.slane %v966, %v973
    %v976 = vunpack.c.l.s4 1983009808
    %v977 = vunpack.c.0.s8 %v976
    %v978 = vlaneseq
    %v979 = vshrl.u32 %v978, 7
    %v980 = vsub.s32 %v977, %v979
    %v981 = vrot.slane %v967, %v980
    %v982 = vcombine.low %v481, %v505
    %v983 = vcombine.high %v481, %v505
    %v985 = vunpack.c.l.s4 1983009808
    %v986 = vunpack.c.0.s8 %v985
    %v987 = vlaneseq
    %v988 = vshrl.u32 %v987, 7
    %v989 = vsub.s32 %v986, %v988
    %v990 = vrot.slane %v982, %v989
    %v992 = vunpack.c.l.s4 1983009808
    %v993 = vunpack.c.0.s8 %v992
    %v994 = vlaneseq
    %v995 = vshrl.u32 %v994, 7
    %v996 = vsub.s32 %v993, %v995
    %v997 = vrot.slane %v983, %v996
    %v998 = vcombine.low %v517, %v541
    %v999 = vcombine.high %v517, %v541
    %v1001 = vunpack.c.l.s4 1983009808
    %v1002 = vunpack.c.0.s8 %v1001
    %v1003 = vlaneseq
    %v1004 = vshrl.u32 %v1003, 7
    %v1005 = vsub.s32 %v1002, %v1004
    %v1006 = vrot.slane %v998, %v1005
    %v1008 = vunpack.c.l.s4 1983009808
    %v1009 = vunpack.c.0.s8 %v1008
    %v1010 = vlaneseq
    %v1011 = vshrl.u32 %v1010, 7
    %v1012 = vsub.s32 %v1009, %v1011
    %v1013 = vrot.slane %v999, %v1012
    %v1014 = vcombine.low %v529, %v553
    %v1015 = vcombine.high %v529, %v553
    %v1017 = vunpack.c.l.s4 1983009808
    %v1018 = vunpack.c.0.s8 %v1017
    %v1019 = vlaneseq
    %v1020 = vshrl.u32 %v1019, 7
    %v1021 = vsub.s32 %v1018, %v1020
    %v1022 = vrot.slane %v1014, %v1021
    %v1024 = vunpack.c.l.s4 1983009808
    %v1025 = vunpack.c.0.s8 %v1024
    %v1026 = vlaneseq
    %v1027 = vshrl.u32 %v1026, 7
    %v1028 = vsub.s32 %v1025, %v1027
    %v1029 = vrot.slane %v1015, %v1028
    %v1030 = vcombine.low %v974, %v990
    %v1031 = vcombine.high %v974, %v990
    %v1033 = vunpack.c.l.s4 1934713408
    %v1034 = vunpack.c.0.s8 %v1033
    %v1035 = vlaneseq
    %v1036 = vshrl.u32 %v1035, 7
    %v1037 = vsub.s32 %v1034, %v1036
    %v1038 = vrot.slane %v1030, %v1037
    %v1040 = vunpack.c.l.s4 1934713408
    %v1041 = vunpack.c.0.s8 %v1040
    %v1042 = vlaneseq
    %v1043 = vshrl.u32 %v1042, 7
    %v1044 = vsub.s32 %v1041, %v1043
    %v1045 = vrot.slane %v1031, %v1044
    %v1046 = vcombine.low %v981, %v997
    %v1047 = vcombine.high %v981, %v997
    %v1049 = vunpack.c.l.s4 1934713408
    %v1050 = vunpack.c.0.s8 %v1049
    %v1051 = vlaneseq
    %v1052 = vshrl.u32 %v1051, 7
    %v1053 = vsub.s32 %v1050, %v1052
    %v1054 = vrot.slane %v1046, %v1053
    %v1056 = vunpack.c.l.s4 1934713408
    %v1057 = vunpack.c.0.s8 %v1056
    %v1058 = vlaneseq
    %v1059 = vshrl.u32 %v1058, 7
    %v1060 = vsub.s32 %v1057, %v1059
    %v1061 = vrot.slane %v1047, %v1060
    %v1062 = vcombine.low %v1006, %v1022
    %v1063 = vcombine.high %v1006, %v1022
    %v1065 = vunpack.c.l.s4 1934713408
    %v1066 = vunpack.c.0.s8 %v1065
    %v1067 = vlaneseq
    %v1068 = vshrl.u32 %v1067, 7
    %v1069 = vsub.s32 %v1066, %v1068
    %v1070 = vrot.slane %v1062, %v1069
    %v1072 = vunpack.c.l.s4 1934713408
    %v1073 = vunpack.c.0.s8 %v1072
    %v1074 = vlaneseq
    %v1075 = vshrl.u32 %v1074, 7
    %v1076 = vsub.s32 %v1073, %v1075
    %v1077 = vrot.slane %v1063, %v1076
    %v1078 = vcombine.low %v1013, %v1029
    %v1079 = vcombine.high %v1013, %v1029
    %v1081 = vunpack.c.l.s4 1934713408
    %v1082 = vunpack.c.0.s8 %v1081
    %v1083 = vlaneseq
    %v1084 = vshrl.u32 %v1083, 7
    %v1085 = vsub.s32 %v1082, %v1084
    %v1086 = vrot.slane %v1078, %v1085
    %v1088 = vunpack.c.l.s4 1934713408
    %v1089 = vunpack.c.0.s8 %v1088
    %v1090 = vlaneseq
    %v1091 = vshrl.u32 %v1090, 7
    %v1092 = vsub.s32 %v1089, %v1091
    %v1093 = vrot.slane %v1079, %v1092
    %v1094 = vcombine.low %v1038, %v1070
    %v1095 = vcombine.high %v1038, %v1070
    %v1096 = vcombine.low %v1045, %v1077
    %v1097 = vcombine.high %v1045, %v1077
    %v1098 = vcombine.low %v1054, %v1086
    %v1099 = vcombine.high %v1054, %v1086
    %v1100 = vcombine.low %v1061, %v1093
    %v1101 = vcombine.high %v1061, %v1093
    %v1102 = vcombine.low %v686, %v688
    %v1103 = vcombine.high %v686, %v688
    %v1105 = vunpack.c.l.s4 1983009808
    %v1106 = vunpack.c.0.s8 %v1105
    %v1107 = vlaneseq
    %v1108 = vshrl.u32 %v1107, 7
    %v1109 = vsub.s32 %v1106, %v1108
    %v1110 = vrot.slane %v1102, %v1109
    %v1112 = vunpack.c.l.s4 1983009808
    %v1113 = vunpack.c.0.s8 %v1112
    %v1114 = vlaneseq
    %v1115 = vshrl.u32 %v1114, 7
    %v1116 = vsub.s32 %v1113, %v1115
    %v1117 = vrot.slane %v1103, %v1116
    %v1118 = vcombine.low %v687, %v689
    %v1119 = vcombine.high %v687, %v689
    %v1121 = vunpack.c.l.s4 1983009808
    %v1122 = vunpack.c.0.s8 %v1121
    %v1123 = vlaneseq
    %v1124 = vshrl.u32 %v1123, 7
    %v1125 = vsub.s32 %v1122, %v1124
    %v1126 = vrot.slane %v1118, %v1125
    %v1128 = vunpack.c.l.s4 1983009808
    %v1129 = vunpack.c.0.s8 %v1128
    %v1130 = vlaneseq
    %v1131 = vshrl.u32 %v1130, 7
    %v1132 = vsub.s32 %v1129, %v1131
    %v1133 = vrot.slane %v1119, %v1132
    %v1134 = vcombine.low %v690, %v692
    %v1135 = vcombine.high %v690, %v692
    %v1137 = vunpack.c.l.s4 1983009808
    %v1138 = vunpack.c.0.s8 %v1137
    %v1139 = vlaneseq
    %v1140 = vshrl.u32 %v1139, 7
    %v1141 = vsub.s32 %v1138, %v1140
    %v1142 = vrot.slane %v1134, %v1141
    %v1144 = vunpack.c.l.s4 1983009808
    %v1145 = vunpack.c.0.s8 %v1144
    %v1146 = vlaneseq
    %v1147 = vshrl.u32 %v1146, 7
    %v1148 = vsub.s32 %v1145, %v1147
    %v1149 = vrot.slane %v1135, %v1148
    %v1150 = vcombine.low %v691, %v693
    %v1151 = vcombine.high %v691, %v693
    %v1153 = vunpack.c.l.s4 1983009808
    %v1154 = vunpack.c.0.s8 %v1153
    %v1155 = vlaneseq
    %v1156 = vshrl.u32 %v1155, 7
    %v1157 = vsub.s32 %v1154, %v1156
    %v1158 = vrot.slane %v1150, %v1157
    %v1160 = vunpack.c.l.s4 1983009808
    %v1161 = vunpack.c.0.s8 %v1160
    %v1162 = vlaneseq
    %v1163 = vshrl.u32 %v1162, 7
    %v1164 = vsub.s32 %v1161, %v1163
    %v1165 = vrot.slane %v1151, %v1164
    %v1166 = vcombine.low %v1110, %v1126
    %v1167 = vcombine.high %v1110, %v1126
    %v1169 = vunpack.c.l.s4 1934713408
    %v1170 = vunpack.c.0.s8 %v1169
    %v1171 = vlaneseq
    %v1172 = vshrl.u32 %v1171, 7
    %v1173 = vsub.s32 %v1170, %v1172
    %v1174 = vrot.slane %v1166, %v1173
    %v1176 = vunpack.c.l.s4 1934713408
    %v1177 = vunpack.c.0.s8 %v1176
    %v1178 = vlaneseq
    %v1179 = vshrl.u32 %v1178, 7
    %v1180 = vsub.s32 %v1177, %v1179
    %v1181 = vrot.slane %v1167, %v1180
    %v1182 = vcombine.low %v1117, %v1133
    %v1183 = vcombine.high %v1117, %v1133
    %v1185 = vunpack.c.l.s4 1934713408
    %v1186 = vunpack.c.0.s8 %v1185
    %v1187 = vlaneseq
    %v1188 = vshrl.u32 %v1187, 7
    %v1189 = vsub.s32 %v1186, %v1188
    %v1190 = vrot.slane %v1182, %v1189
    %v1192 = vunpack.c.l.s4 1934713408
    %v1193 = vunpack.c.0.s8 %v1192
    %v1194 = vlaneseq
    %v1195 = vshrl.u32 %v1194, 7
    %v1196 = vsub.s32 %v1193, %v1195
    %v1197 = vrot.slane %v1183, %v1196
    %v1198 = vcombine.low %v1142, %v1158
    %v1199 = vcombine.high %v1142, %v1158
    %v1201 = vunpack.c.l.s4 1934713408
    %v1202 = vunpack.c.0.s8 %v1201
    %v1203 = vlaneseq
    %v1204 = vshrl.u32 %v1203, 7
    %v1205 = vsub.s32 %v1202, %v1204
    %v1206 = vrot.slane %v1198, %v1205
    %v1208 = vunpack.c.l.s4 1934713408
    %v1209 = vunpack.c.0.s8 %v1208
    %v1210 = vlaneseq
    %v1211 = vshrl.u32 %v1210, 7
    %v1212 = vsub.s32 %v1209, %v1211
    %v1213 = vrot.slane %v1199, %v1212
    %v1214 = vcombine.low %v1149, %v1165
    %v1215 = vcombine.high %v1149, %v1165
    %v1217 = vunpack.c.l.s4 1934713408
    %v1218 = vunpack.c.0.s8 %v1217
    %v1219 = vlaneseq
    %v1220 = vshrl.u32 %v1219, 7
    %v1221 = vsub.s32 %v1218, %v1220
    %v1222 = vrot.slane %v1214, %v1221
    %v1224 = vunpack.c.l.s4 1934713408
    %v1225 = vunpack.c.0.s8 %v1224
    %v1226 = vlaneseq
    %v1227 = vshrl.u32 %v1226, 7
    %v1228 = vsub.s32 %v1225, %v1227
    %v1229 = vrot.slane %v1215, %v1228
    %v1230 = vcombine.low %v1174, %v1206
    %v1231 = vcombine.high %v1174, %v1206
    %v1232 = vcombine.low %v1181, %v1213
    %v1233 = vcombine.high %v1181, %v1213
    %v1234 = vcombine.low %v1190, %v1222
    %v1235 = vcombine.high %v1190, %v1222
    %v1236 = vcombine.low %v1197, %v1229
    %v1237 = vcombine.high %v1197, %v1229
    %v1238 = vcombine.low %v822, %v824
    %v1239 = vcombine.high %v822, %v824
    %v1241 = vunpack.c.l.s4 1983009808
    %v1242 = vunpack.c.0.s8 %v1241
    %v1243 = vlaneseq
    %v1244 = vshrl.u32 %v1243, 7
    %v1245 = vsub.s32 %v1242, %v1244
    %v1246 = vrot.slane %v1238, %v1245
    %v1248 = vunpack.c.l.s4 1983009808
    %v1249 = vunpack.c.0.s8 %v1248
    %v1250 = vlaneseq
    %v1251 = vshrl.u32 %v1250, 7
    %v1252 = vsub.s32 %v1249, %v1251
    %v1253 = vrot.slane %v1239, %v1252
    %v1254 = vcombine.low %v823, %v825
    %v1255 = vcombine.high %v823, %v825
    %v1257 = vunpack.c.l.s4 1983009808
    %v1258 = vunpack.c.0.s8 %v1257
    %v1259 = vlaneseq
    %v1260 = vshrl.u32 %v1259, 7
    %v1261 = vsub.s32 %v1258, %v1260
    %v1262 = vrot.slane %v1254, %v1261
    %v1264 = vunpack.c.l.s4 1983009808
    %v1265 = vunpack.c.0.s8 %v1264
    %v1266 = vlaneseq
    %v1267 = vshrl.u32 %v1266, 7
    %v1268 = vsub.s32 %v1265, %v1267
    %v1269 = vrot.slane %v1255, %v1268
    %v1270 = vcombine.low %v826, %v828
    %v1271 = vcombine.high %v826, %v828
    %v1273 = vunpack.c.l.s4 1983009808
    %v1274 = vunpack.c.0.s8 %v1273
    %v1275 = vlaneseq
    %v1276 = vshrl.u32 %v1275, 7
    %v1277 = vsub.s32 %v1274, %v1276
    %v1278 = vrot.slane %v1270, %v1277
    %v1280 = vunpack.c.l.s4 1983009808
    %v1281 = vunpack.c.0.s8 %v1280
    %v1282 = vlaneseq
    %v1283 = vshrl.u32 %v1282, 7
    %v1284 = vsub.s32 %v1281, %v1283
    %v1285 = vrot.slane %v1271, %v1284
    %v1286 = vcombine.low %v827, %v829
    %v1287 = vcombine.high %v827, %v829
    %v1289 = vunpack.c.l.s4 1983009808
    %v1290 = vunpack.c.0.s8 %v1289
    %v1291 = vlaneseq
    %v1292 = vshrl.u32 %v1291, 7
    %v1293 = vsub.s32 %v1290, %v1292
    %v1294 = vrot.slane %v1286, %v1293
    %v1296 = vunpack.c.l.s4 1983009808
    %v1297 = vunpack.c.0.s8 %v1296
    %v1298 = vlaneseq
    %v1299 = vshrl.u32 %v1298, 7
    %v1300 = vsub.s32 %v1297, %v1299
    %v1301 = vrot.slane %v1287, %v1300
    %v1302 = vcombine.low %v1246, %v1262
    %v1303 = vcombine.high %v1246, %v1262
    %v1305 = vunpack.c.l.s4 1934713408
    %v1306 = vunpack.c.0.s8 %v1305
    %v1307 = vlaneseq
    %v1308 = vshrl.u32 %v1307, 7
    %v1309 = vsub.s32 %v1306, %v1308
    %v1310 = vrot.slane %v1302, %v1309
    %v1312 = vunpack.c.l.s4 1934713408
    %v1313 = vunpack.c.0.s8 %v1312
    %v1314 = vlaneseq
    %v1315 = vshrl.u32 %v1314, 7
    %v1316 = vsub.s32 %v1313, %v1315
    %v1317 = vrot.slane %v1303, %v1316
    %v1318 = vcombine.low %v1253, %v1269
    %v1319 = vcombine.high %v1253, %v1269
    %v1321 = vunpack.c.l.s4 1934713408
    %v1322 = vunpack.c.0.s8 %v1321
    %v1323 = vlaneseq
    %v1324 = vshrl.u32 %v1323, 7
    %v1325 = vsub.s32 %v1322, %v1324
    %v1326 = vrot.slane %v1318, %v1325
    %v1328 = vunpack.c.l.s4 1934713408
    %v1329 = vunpack.c.0.s8 %v1328
    %v1330 = vlaneseq
    %v1331 = vshrl.u32 %v1330, 7
    %v1332 = vsub.s32 %v1329, %v1331
    %v1333 = vrot.slane %v1319, %v1332
    %v1334 = vcombine.low %v1278, %v1294
    %v1335 = vcombine.high %v1278, %v1294
    %v1337 = vunpack.c.l.s4 1934713408
    %v1338 = vunpack.c.0.s8 %v1337
    %v1339 = vlaneseq
    %v1340 = vshrl.u32 %v1339, 7
    %v1341 = vsub.s32 %v1338, %v1340
    %v1342 = vrot.slane %v1334, %v1341
    %v1344 = vunpack.c.l.s4 1934713408
    %v1345 = vunpack.c.0.s8 %v1344
    %v1346 = vlaneseq
    %v1347 = vshrl.u32 %v1346, 7
    %v1348 = vsub.s32 %v1345, %v1347
    %v1349 = vrot.slane %v1335, %v1348
    %v1350 = vcombine.low %v1285, %v1301
    %v1351 = vcombine.high %v1285, %v1301
    %v1353 = vunpack.c.l.s4 1934713408
    %v1354 = vunpack.c.0.s8 %v1353
    %v1355 = vlaneseq
    %v1356 = vshrl.u32 %v1355, 7
    %v1357 = vsub.s32 %v1354, %v1356
    %v1358 = vrot.slane %v1350, %v1357
    %v1360 = vunpack.c.l.s4 1934713408
    %v1361 = vunpack.c.0.s8 %v1360
    %v1362 = vlaneseq
    %v1363 = vshrl.u32 %v1362, 7
    %v1364 = vsub.s32 %v1361, %v1363
    %v1365 = vrot.slane %v1351, %v1364
    %v1366 = vcombine.low %v1310, %v1342
    %v1367 = vcombine.high %v1310, %v1342
    %v1368 = vcombine.low %v1317, %v1349
    %v1369 = vcombine.high %v1317, %v1349
    %v1370 = vcombine.low %v1326, %v1358
    %v1371 = vcombine.high %v1326, %v1358
    %v1372 = vcombine.low %v1333, %v1365
    %v1373 = vcombine.high %v1333, %v1365
    %v1374 = vcombine.low %v958, %v960
    %v1375 = vcombine.high %v958, %v960
    %v1377 = vunpack.c.l.s4 1983009808
    %v1378 = vunpack.c.0.s8 %v1377
    %v1379 = vlaneseq
    %v1380 = vshrl.u32 %v1379, 7
    %v1381 = vsub.s32 %v1378, %v1380
    %v1382 = vrot.slane %v1374, %v1381
    %v1384 = vunpack.c.l.s4 1983009808
    %v1385 = vunpack.c.0.s8 %v1384
    %v1386 = vlaneseq
    %v1387 = vshrl.u32 %v1386, 7
    %v1388 = vsub.s32 %v1385, %v1387
    %v1389 = vrot.slane %v1375, %v1388
    %v1390 = vcombine.low %v959, %v961
    %v1391 = vcombine.high %v959, %v961
    %v1393 = vunpack.c.l.s4 1983009808
    %v1394 = vunpack.c.0.s8 %v1393
    %v1395 = vlaneseq
    %v1396 = vshrl.u32 %v1395, 7
    %v1397 = vsub.s32 %v1394, %v1396
    %v1398 = vrot.slane %v1390, %v1397
    %v1400 = vunpack.c.l.s4 1983009808
    %v1401 = vunpack.c.0.s8 %v1400
    %v1402 = vlaneseq
    %v1403 = vshrl.u32 %v1402, 7
    %v1404 = vsub.s32 %v1401, %v1403
    %v1405 = vrot.slane %v1391, %v1404
    %v1406 = vcombine.low %v962, %v964
    %v1407 = vcombine.high %v962, %v964
    %v1409 = vunpack.c.l.s4 1983009808
    %v1410 = vunpack.c.0.s8 %v1409
    %v1411 = vlaneseq
    %v1412 = vshrl.u32 %v1411, 7
    %v1413 = vsub.s32 %v1410, %v1412
    %v1414 = vrot.slane %v1406, %v1413
    %v1416 = vunpack.c.l.s4 1983009808
    %v1417 = vunpack.c.0.s8 %v1416
    %v1418 = vlaneseq
    %v1419 = vshrl.u32 %v1418, 7
    %v1420 = vsub.s32 %v1417, %v1419
    %v1421 = vrot.slane %v1407, %v1420
    %v1422 = vcombine.low %v963, %v965
    %v1423 = vcombine.high %v963, %v965
    %v1425 = vunpack.c.l.s4 1983009808
    %v1426 = vunpack.c.0.s8 %v1425
    %v1427 = vlaneseq
    %v1428 = vshrl.u32 %v1427, 7
    %v1429 = vsub.s32 %v1426, %v1428
    %v1430 = vrot.slane %v1422, %v1429
    %v1432 = vunpack.c.l.s4 1983009808
    %v1433 = vunpack.c.0.s8 %v1432
    %v1434 = vlaneseq
    %v1435 = vshrl.u32 %v1434, 7
    %v1436 = vsub.s32 %v1433, %v1435
    %v1437 = vrot.slane %v1423, %v1436
    %v1438 = vcombine.low %v1382, %v1398
    %v1439 = vcombine.high %v1382, %v1398
    %v1441 = vunpack.c.l.s4 1934713408
    %v1442 = vunpack.c.0.s8 %v1441
    %v1443 = vlaneseq
    %v1444 = vshrl.u32 %v1443, 7
    %v1445 = vsub.s32 %v1442, %v1444
    %v1446 = vrot.slane %v1438, %v1445
    %v1448 = vunpack.c.l.s4 1934713408
    %v1449 = vunpack.c.0.s8 %v1448
    %v1450 = vlaneseq
    %v1451 = vshrl.u32 %v1450, 7
    %v1452 = vsub.s32 %v1449, %v1451
    %v1453 = vrot.slane %v1439, %v1452
    %v1454 = vcombine.low %v1389, %v1405
    %v1455 = vcombine.high %v1389, %v1405
    %v1457 = vunpack.c.l.s4 1934713408
    %v1458 = vunpack.c.0.s8 %v1457
    %v1459 = vlaneseq
    %v1460 = vshrl.u32 %v1459, 7
    %v1461 = vsub.s32 %v1458, %v1460
    %v1462 = vrot.slane %v1454, %v1461
    %v1464 = vunpack.c.l.s4 1934713408
    %v1465 = vunpack.c.0.s8 %v1464
    %v1466 = vlaneseq
    %v1467 = vshrl.u32 %v1466, 7
    %v1468 = vsub.s32 %v1465, %v1467
    %v1469 = vrot.slane %v1455, %v1468
    %v1470 = vcombine.low %v1414, %v1430
    %v1471 = vcombine.high %v1414, %v1430
    %v1473 = vunpack.c.l.s4 1934713408
    %v1474 = vunpack.c.0.s8 %v1473
    %v1475 = vlaneseq
    %v1476 = vshrl.u32 %v1475, 7
    %v1477 = vsub.s32 %v1474, %v1476
    %v1478 = vrot.slane %v1470, %v1477
    %v1480 = vunpack.c.l.s4 1934713408
    %v1481 = vunpack.c.0.s8 %v1480
    %v1482 = vlaneseq
    %v1483 = vshrl.u32 %v1482, 7
    %v1484 = vsub.s32 %v1481, %v1483
    %v1485 = vrot.slane %v1471, %v1484
    %v1486 = vcombine.low %v1421, %v1437
    %v1487 = vcombine.high %v1421, %v1437
    %v1489 = vunpack.c.l.s4 1934713408
    %v1490 = vunpack.c.0.s8 %v1489
    %v1491 = vlaneseq
    %v1492 = vshrl.u32 %v1491, 7
    %v1493 = vsub.s32 %v1490, %v1492
    %v1494 = vrot.slane %v1486, %v1493
    %v1496 = vunpack.c.l.s4 1934713408
    %v1497 = vunpack.c.0.s8 %v1496
    %v1498 = vlaneseq
    %v1499 = vshrl.u32 %v1498, 7
    %v1500 = vsub.s32 %v1497, %v1499
    %v1501 = vrot.slane %v1487, %v1500
    %v1502 = vcombine.low %v1446, %v1478
    %v1503 = vcombine.high %v1446, %v1478
    %v1504 = vcombine.low %v1453, %v1485
    %v1505 = vcombine.high %v1453, %v1485
    %v1506 = vcombine.low %v1462, %v1494
    %v1507 = vcombine.high %v1462, %v1494
    %v1508 = vcombine.low %v1469, %v1501
    %v1509 = vcombine.high %v1469, %v1501
    %v1510 = vcombine.low %v1094, %v1096
    %v1511 = vcombine.high %v1094, %v1096
    %v1513 = vunpack.c.l.s4 1983009808
    %v1514 = vunpack.c.0.s8 %v1513
    %v1515 = vlaneseq
    %v1516 = vshrl.u32 %v1515, 7
    %v1517 = vsub.s32 %v1514, %v1516
    %v1518 = vrot.slane %v1510, %v1517
    %v1520 = vunpack.c.l.s4 1983009808
    %v1521 = vunpack.c.0.s8 %v1520
    %v1522 = vlaneseq
    %v1523 = vshrl.u32 %v1522, 7
    %v1524 = vsub.s32 %v1521, %v1523
    %v1525 = vrot.slane %v1511, %v1524
    %v1526 = vcombine.low %v1095, %v1097
    %v1527 = vcombine.high %v1095, %v1097
    %v1529 = vunpack.c.l.s4 1983009808
    %v1530 = vunpack.c.0.s8 %v1529
    %v1531 = vlaneseq
    %v1532 = vshrl.u32 %v1531, 7
    %v1533 = vsub.s32 %v1530, %v1532
    %v1534 = vrot.slane %v1526, %v1533
    %v1536 = vunpack.c.l.s4 1983009808
    %v1537 = vunpack.c.0.s8 %v1536
    %v1538 = vlaneseq
    %v1539 = vshrl.u32 %v1538, 7
    %v1540 = vsub.s32 %v1537, %v1539
    %v1541 = vrot.slane %v1527, %v1540
    %v1542 = vcombine.low %v1098, %v1100
    %v1543 = vcombine.high %v1098, %v1100
    %v1545 = vunpack.c.l.s4 1983009808
    %v1546 = vunpack.c.0.s8 %v1545
    %v1547 = vlaneseq
    %v1548 = vshrl.u32 %v1547, 7
    %v1549 = vsub.s32 %v1546, %v1548
    %v1550 = vrot.slane %v1542, %v1549
    %v1552 = vunpack.c.l.s4 1983009808
    %v1553 = vunpack.c.0.s8 %v1552
    %v1554 = vlaneseq
    %v1555 = vshrl.u32 %v1554, 7
    %v1556 = vsub.s32 %v1553, %v1555
    %v1557 = vrot.slane %v1543, %v1556
    %v1558 = vcombine.low %v1099, %v1101
    %v1559 = vcombine.high %v1099, %v1101
    %v1561 = vunpack.c.l.s4 1983009808
    %v1562 = vunpack.c.0.s8 %v1561
    %v1563 = vlaneseq
    %v1564 = vshrl.u32 %v1563, 7
    %v1565 = vsub.s32 %v1562, %v1564
    %v1566 = vrot.slane %v1558, %v1565
    %v1568 = vunpack.c.l.s4 1983009808
    %v1569 = vunpack.c.0.s8 %v1568
    %v1570 = vlaneseq
    %v1571 = vshrl.u32 %v1570, 7
    %v1572 = vsub.s32 %v1569, %v1571
    %v1573 = vrot.slane %v1559, %v1572
    %v1574 = vcombine.low %v1518, %v1534
    %v1575 = vcombine.high %v1518, %v1534
    %v1577 = vunpack.c.l.s4 1934713408
    %v1578 = vunpack.c.0.s8 %v1577
    %v1579 = vlaneseq
    %v1580 = vshrl.u32 %v1579, 7
    %v1581 = vsub.s32 %v1578, %v1580
    %v1582 = vrot.slane %v1574, %v1581
    %v1584 = vunpack.c.l.s4 1934713408
    %v1585 = vunpack.c.0.s8 %v1584
    %v1586 = vlaneseq
    %v1587 = vshrl.u32 %v1586, 7
    %v1588 = vsub.s32 %v1585, %v1587
    %v1589 = vrot.slane %v1575, %v1588
    %v1590 = vcombine.low %v1525, %v1541
    %v1591 = vcombine.high %v1525, %v1541
    %v1593 = vunpack.c.l.s4 1934713408
    %v1594 = vunpack.c.0.s8 %v1593
    %v1595 = vlaneseq
    %v1596 = vshrl.u32 %v1595, 7
    %v1597 = vsub.s32 %v1594, %v1596
    %v1598 = vrot.slane %v1590, %v1597
    %v1600 = vunpack.c.l.s4 1934713408
    %v1601 = vunpack.c.0.s8 %v1600
    %v1602 = vlaneseq
    %v1603 = vshrl.u32 %v1602, 7
    %v1604 = vsub.s32 %v1601, %v1603
    %v1605 = vrot.slane %v1591, %v1604
    %v1606 = vcombine.low %v1550, %v1566
    %v1607 = vcombine.high %v1550, %v1566
    %v1609 = vunpack.c.l.s4 1934713408
    %v1610 = vunpack.c.0.s8 %v1609
    %v1611 = vlaneseq
    %v1612 = vshrl.u32 %v1611, 7
    %v1613 = vsub.s32 %v1610, %v1612
    %v1614 = vrot.slane %v1606, %v1613
    %v1616 = vunpack.c.l.s4 1934713408
    %v1617 = vunpack.c.0.s8 %v1616
    %v1618 = vlaneseq
    %v1619 = vshrl.u32 %v1618, 7
    %v1620 = vsub.s32 %v1617, %v1619
    %v1621 = vrot.slane %v1607, %v1620
    %v1622 = vcombine.low %v1557, %v1573
    %v1623 = vcombine.high %v1557, %v1573
    %v1625 = vunpack.c.l.s4 1934713408
    %v1626 = vunpack.c.0.s8 %v1625
    %v1627 = vlaneseq
    %v1628 = vshrl.u32 %v1627, 7
    %v1629 = vsub.s32 %v1626, %v1628
    %v1630 = vrot.slane %v1622, %v1629
    %v1632 = vunpack.c.l.s4 1934713408
    %v1633 = vunpack.c.0.s8 %v1632
    %v1634 = vlaneseq
    %v1635 = vshrl.u32 %v1634, 7
    %v1636 = vsub.s32 %v1633, %v1635
    %v1637 = vrot.slane %v1623, %v1636
    %v1638 = vcombine.low %v1582, %v1614
    %v1639 = vcombine.high %v1582, %v1614
    %v1640 = vcombine.low %v1589, %v1621
    %v1641 = vcombine.high %v1589, %v1621
    %v1642 = vcombine.low %v1598, %v1630
    %v1643 = vcombine.high %v1598, %v1630
    %v1644 = vcombine.low %v1605, %v1637
    %v1645 = vcombine.high %v1605, %v1637
    %1650 = vrot.lane.b32.xlu0 %v344, 112
    %v1651 = vpop.permute.xlu0 %1650
    %1652 = vrot.lane.b32.xlu0 %v349, 112
    %v1653 = vpop.permute.xlu0 %1652
    %1654 = vrot.lane.b32.xlu0 %v354, 112
    %v1655 = vpop.permute.xlu0 %1654
    %1656 = vrot.lane.b32.xlu0 %v359, 112
    %v1657 = vpop.permute.xlu0 %1656
    %1662 = vrot.lane.b32.xlu0 %v344, 96
    %v1663 = vpop.permute.xlu0 %1662
    %1664 = vrot.lane.b32.xlu0 %v349, 96
    %v1665 = vpop.permute.xlu0 %1664
    %1666 = vrot.lane.b32.xlu0 %v354, 96
    %v1667 = vpop.permute.xlu0 %1666
    %1668 = vrot.lane.b32.xlu0 %v359, 96
    %v1669 = vpop.permute.xlu0 %1668
    %1674 = vrot.lane.b32.xlu0 %v344, 80
    %v1675 = vpop.permute.xlu0 %1674
    %1676 = vrot.lane.b32.xlu0 %v349, 80
    %v1677 = vpop.permute.xlu0 %1676
    %1678 = vrot.lane.b32.xlu0 %v354, 80
    %v1679 = vpop.permute.xlu0 %1678
    %1680 = vrot.lane.b32.xlu0 %v359, 80
    %v1681 = vpop.permute.xlu0 %1680
    %1686 = vrot.lane.b32.xlu0 %v344, 64
    %v1687 = vpop.permute.xlu0 %1686
    %1688 = vrot.lane.b32.xlu0 %v349, 64
    %v1689 = vpop.permute.xlu0 %1688
    %1690 = vrot.lane.b32.xlu0 %v354, 64
    %v1691 = vpop.permute.xlu0 %1690
    %1692 = vrot.lane.b32.xlu0 %v359, 64
    %v1693 = vpop.permute.xlu0 %1692
    %1698 = vrot.lane.b32.xlu0 %v344, 48
    %v1699 = vpop.permute.xlu0 %1698
    %1700 = vrot.lane.b32.xlu0 %v349, 48
    %v1701 = vpop.permute.xlu0 %1700
    %1702 = vrot.lane.b32.xlu0 %v354, 48
    %v1703 = vpop.permute.xlu0 %1702
    %1704 = vrot.lane.b32.xlu0 %v359, 48
    %v1705 = vpop.permute.xlu0 %1704
    %1710 = vrot.lane.b32.xlu0 %v344, 32
    %v1711 = vpop.permute.xlu0 %1710
    %1712 = vrot.lane.b32.xlu0 %v349, 32
    %v1713 = vpop.permute.xlu0 %1712
    %1714 = vrot.lane.b32.xlu0 %v354, 32
    %v1715 = vpop.permute.xlu0 %1714
    %1716 = vrot.lane.b32.xlu0 %v359, 32
    %v1717 = vpop.permute.xlu0 %1716
    %1722 = vrot.lane.b32.xlu0 %v344, 16
    %v1723 = vpop.permute.xlu0 %1722
    %1724 = vrot.lane.b32.xlu0 %v349, 16
    %v1725 = vpop.permute.xlu0 %1724
    %1726 = vrot.lane.b32.xlu0 %v354, 16
    %v1727 = vpop.permute.xlu0 %1726
    %1728 = vrot.lane.b32.xlu0 %v359, 16
    %v1729 = vpop.permute.xlu0 %1728
    %v1734 = vcombine.low %v344, %v1663
    %v1735 = vcombine.high %v344, %v1663
    %v1737 = vunpack.c.l.s4 1983009808
    %v1738 = vunpack.c.0.s8 %v1737
    %v1739 = vlaneseq
    %v1740 = vshrl.u32 %v1739, 7
    %v1741 = vsub.s32 %v1738, %v1740
    %v1742 = vrot.slane %v1734, %v1741
    %v1744 = vunpack.c.l.s4 1983009808
    %v1745 = vunpack.c.0.s8 %v1744
    %v1746 = vlaneseq
    %v1747 = vshrl.u32 %v1746, 7
    %v1748 = vsub.s32 %v1745, %v1747
    %v1749 = vrot.slane %v1735, %v1748
    %v1750 = vcombine.low %v1651, %v1675
    %v1751 = vcombine.high %v1651, %v1675
    %v1753 = vunpack.c.l.s4 1983009808
    %v1754 = vunpack.c.0.s8 %v1753
    %v1755 = vlaneseq
    %v1756 = vshrl.u32 %v1755, 7
    %v1757 = vsub.s32 %v1754, %v1756
    %v1758 = vrot.slane %v1750, %v1757
    %v1760 = vunpack.c.l.s4 1983009808
    %v1761 = vunpack.c.0.s8 %v1760
    %v1762 = vlaneseq
    %v1763 = vshrl.u32 %v1762, 7
    %v1764 = vsub.s32 %v1761, %v1763
    %v1765 = vrot.slane %v1751, %v1764
    %v1766 = vcombine.low %v1687, %v1711
    %v1767 = vcombine.high %v1687, %v1711
    %v1769 = vunpack.c.l.s4 1983009808
    %v1770 = vunpack.c.0.s8 %v1769
    %v1771 = vlaneseq
    %v1772 = vshrl.u32 %v1771, 7
    %v1773 = vsub.s32 %v1770, %v1772
    %v1774 = vrot.slane %v1766, %v1773
    %v1776 = vunpack.c.l.s4 1983009808
    %v1777 = vunpack.c.0.s8 %v1776
    %v1778 = vlaneseq
    %v1779 = vshrl.u32 %v1778, 7
    %v1780 = vsub.s32 %v1777, %v1779
    %v1781 = vrot.slane %v1767, %v1780
    %v1782 = vcombine.low %v1699, %v1723
    %v1783 = vcombine.high %v1699, %v1723
    %v1785 = vunpack.c.l.s4 1983009808
    %v1786 = vunpack.c.0.s8 %v1785
    %v1787 = vlaneseq
    %v1788 = vshrl.u32 %v1787, 7
    %v1789 = vsub.s32 %v1786, %v1788
    %v1790 = vrot.slane %v1782, %v1789
    %v1792 = vunpack.c.l.s4 1983009808
    %v1793 = vunpack.c.0.s8 %v1792
    %v1794 = vlaneseq
    %v1795 = vshrl.u32 %v1794, 7
    %v1796 = vsub.s32 %v1793, %v1795
    %v1797 = vrot.slane %v1783, %v1796
    %v1798 = vcombine.low %v1742, %v1758
    %v1799 = vcombine.high %v1742, %v1758
    %v1801 = vunpack.c.l.s4 1934713408
    %v1802 = vunpack.c.0.s8 %v1801
    %v1803 = vlaneseq
    %v1804 = vshrl.u32 %v1803, 7
    %v1805 = vsub.s32 %v1802, %v1804
    %v1806 = vrot.slane %v1798, %v1805
    %v1808 = vunpack.c.l.s4 1934713408
    %v1809 = vunpack.c.0.s8 %v1808
    %v1810 = vlaneseq
    %v1811 = vshrl.u32 %v1810, 7
    %v1812 = vsub.s32 %v1809, %v1811
    %v1813 = vrot.slane %v1799, %v1812
    %v1814 = vcombine.low %v1749, %v1765
    %v1815 = vcombine.high %v1749, %v1765
    %v1817 = vunpack.c.l.s4 1934713408
    %v1818 = vunpack.c.0.s8 %v1817
    %v1819 = vlaneseq
    %v1820 = vshrl.u32 %v1819, 7
    %v1821 = vsub.s32 %v1818, %v1820
    %v1822 = vrot.slane %v1814, %v1821
    %v1824 = vunpack.c.l.s4 1934713408
    %v1825 = vunpack.c.0.s8 %v1824
    %v1826 = vlaneseq
    %v1827 = vshrl.u32 %v1826, 7
    %v1828 = vsub.s32 %v1825, %v1827
    %v1829 = vrot.slane %v1815, %v1828
    %v1830 = vcombine.low %v1774, %v1790
    %v1831 = vcombine.high %v1774, %v1790
    %v1833 = vunpack.c.l.s4 1934713408
    %v1834 = vunpack.c.0.s8 %v1833
    %v1835 = vlaneseq
    %v1836 = vshrl.u32 %v1835, 7
    %v1837 = vsub.s32 %v1834, %v1836
    %v1838 = vrot.slane %v1830, %v1837
    %v1840 = vunpack.c.l.s4 1934713408
    %v1841 = vunpack.c.0.s8 %v1840
    %v1842 = vlaneseq
    %v1843 = vshrl.u32 %v1842, 7
    %v1844 = vsub.s32 %v1841, %v1843
    %v1845 = vrot.slane %v1831, %v1844
    %v1846 = vcombine.low %v1781, %v1797
    %v1847 = vcombine.high %v1781, %v1797
    %v1849 = vunpack.c.l.s4 1934713408
    %v1850 = vunpack.c.0.s8 %v1849
    %v1851 = vlaneseq
    %v1852 = vshrl.u32 %v1851, 7
    %v1853 = vsub.s32 %v1850, %v1852
    %v1854 = vrot.slane %v1846, %v1853
    %v1856 = vunpack.c.l.s4 1934713408
    %v1857 = vunpack.c.0.s8 %v1856
    %v1858 = vlaneseq
    %v1859 = vshrl.u32 %v1858, 7
    %v1860 = vsub.s32 %v1857, %v1859
    %v1861 = vrot.slane %v1847, %v1860
    %v1862 = vcombine.low %v1806, %v1838
    %v1863 = vcombine.high %v1806, %v1838
    %v1864 = vcombine.low %v1813, %v1845
    %v1865 = vcombine.high %v1813, %v1845
    %v1866 = vcombine.low %v1822, %v1854
    %v1867 = vcombine.high %v1822, %v1854
    %v1868 = vcombine.low %v1829, %v1861
    %v1869 = vcombine.high %v1829, %v1861
    %v1870 = vcombine.low %v349, %v1665
    %v1871 = vcombine.high %v349, %v1665
    %v1873 = vunpack.c.l.s4 1983009808
    %v1874 = vunpack.c.0.s8 %v1873
    %v1875 = vlaneseq
    %v1876 = vshrl.u32 %v1875, 7
    %v1877 = vsub.s32 %v1874, %v1876
    %v1878 = vrot.slane %v1870, %v1877
    %v1880 = vunpack.c.l.s4 1983009808
    %v1881 = vunpack.c.0.s8 %v1880
    %v1882 = vlaneseq
    %v1883 = vshrl.u32 %v1882, 7
    %v1884 = vsub.s32 %v1881, %v1883
    %v1885 = vrot.slane %v1871, %v1884
    %v1886 = vcombine.low %v1653, %v1677
    %v1887 = vcombine.high %v1653, %v1677
    %v1889 = vunpack.c.l.s4 1983009808
    %v1890 = vunpack.c.0.s8 %v1889
    %v1891 = vlaneseq
    %v1892 = vshrl.u32 %v1891, 7
    %v1893 = vsub.s32 %v1890, %v1892
    %v1894 = vrot.slane %v1886, %v1893
    %v1896 = vunpack.c.l.s4 1983009808
    %v1897 = vunpack.c.0.s8 %v1896
    %v1898 = vlaneseq
    %v1899 = vshrl.u32 %v1898, 7
    %v1900 = vsub.s32 %v1897, %v1899
    %v1901 = vrot.slane %v1887, %v1900
    %v1902 = vcombine.low %v1689, %v1713
    %v1903 = vcombine.high %v1689, %v1713
    %v1905 = vunpack.c.l.s4 1983009808
    %v1906 = vunpack.c.0.s8 %v1905
    %v1907 = vlaneseq
    %v1908 = vshrl.u32 %v1907, 7
    %v1909 = vsub.s32 %v1906, %v1908
    %v1910 = vrot.slane %v1902, %v1909
    %v1912 = vunpack.c.l.s4 1983009808
    %v1913 = vunpack.c.0.s8 %v1912
    %v1914 = vlaneseq
    %v1915 = vshrl.u32 %v1914, 7
    %v1916 = vsub.s32 %v1913, %v1915
    %v1917 = vrot.slane %v1903, %v1916
    %v1918 = vcombine.low %v1701, %v1725
    %v1919 = vcombine.high %v1701, %v1725
    %v1921 = vunpack.c.l.s4 1983009808
    %v1922 = vunpack.c.0.s8 %v1921
    %v1923 = vlaneseq
    %v1924 = vshrl.u32 %v1923, 7
    %v1925 = vsub.s32 %v1922, %v1924
    %v1926 = vrot.slane %v1918, %v1925
    %v1928 = vunpack.c.l.s4 1983009808
    %v1929 = vunpack.c.0.s8 %v1928
    %v1930 = vlaneseq
    %v1931 = vshrl.u32 %v1930, 7
    %v1932 = vsub.s32 %v1929, %v1931
    %v1933 = vrot.slane %v1919, %v1932
    %v1934 = vcombine.low %v1878, %v1894
    %v1935 = vcombine.high %v1878, %v1894
    %v1937 = vunpack.c.l.s4 1934713408
    %v1938 = vunpack.c.0.s8 %v1937
    %v1939 = vlaneseq
    %v1940 = vshrl.u32 %v1939, 7
    %v1941 = vsub.s32 %v1938, %v1940
    %v1942 = vrot.slane %v1934, %v1941
    %v1944 = vunpack.c.l.s4 1934713408
    %v1945 = vunpack.c.0.s8 %v1944
    %v1946 = vlaneseq
    %v1947 = vshrl.u32 %v1946, 7
    %v1948 = vsub.s32 %v1945, %v1947
    %v1949 = vrot.slane %v1935, %v1948
    %v1950 = vcombine.low %v1885, %v1901
    %v1951 = vcombine.high %v1885, %v1901
    %v1953 = vunpack.c.l.s4 1934713408
    %v1954 = vunpack.c.0.s8 %v1953
    %v1955 = vlaneseq
    %v1956 = vshrl.u32 %v1955, 7
    %v1957 = vsub.s32 %v1954, %v1956
    %v1958 = vrot.slane %v1950, %v1957
    %v1960 = vunpack.c.l.s4 1934713408
    %v1961 = vunpack.c.0.s8 %v1960
    %v1962 = vlaneseq
    %v1963 = vshrl.u32 %v1962, 7
    %v1964 = vsub.s32 %v1961, %v1963
    %v1965 = vrot.slane %v1951, %v1964
    %v1966 = vcombine.low %v1910, %v1926
    %v1967 = vcombine.high %v1910, %v1926
    %v1969 = vunpack.c.l.s4 1934713408
    %v1970 = vunpack.c.0.s8 %v1969
    %v1971 = vlaneseq
    %v1972 = vshrl.u32 %v1971, 7
    %v1973 = vsub.s32 %v1970, %v1972
    %v1974 = vrot.slane %v1966, %v1973
    %v1976 = vunpack.c.l.s4 1934713408
    %v1977 = vunpack.c.0.s8 %v1976
    %v1978 = vlaneseq
    %v1979 = vshrl.u32 %v1978, 7
    %v1980 = vsub.s32 %v1977, %v1979
    %v1981 = vrot.slane %v1967, %v1980
    %v1982 = vcombine.low %v1917, %v1933
    %v1983 = vcombine.high %v1917, %v1933
    %v1985 = vunpack.c.l.s4 1934713408
    %v1986 = vunpack.c.0.s8 %v1985
    %v1987 = vlaneseq
    %v1988 = vshrl.u32 %v1987, 7
    %v1989 = vsub.s32 %v1986, %v1988
    %v1990 = vrot.slane %v1982, %v1989
    %v1992 = vunpack.c.l.s4 1934713408
    %v1993 = vunpack.c.0.s8 %v1992
    %v1994 = vlaneseq
    %v1995 = vshrl.u32 %v1994, 7
    %v1996 = vsub.s32 %v1993, %v1995
    %v1997 = vrot.slane %v1983, %v1996
    %v1998 = vcombine.low %v1942, %v1974
    %v1999 = vcombine.high %v1942, %v1974
    %v2000 = vcombine.low %v1949, %v1981
    %v2001 = vcombine.high %v1949, %v1981
    %v2002 = vcombine.low %v1958, %v1990
    %v2003 = vcombine.high %v1958, %v1990
    %v2004 = vcombine.low %v1965, %v1997
    %v2005 = vcombine.high %v1965, %v1997
    %v2006 = vcombine.low %v354, %v1667
    %v2007 = vcombine.high %v354, %v1667
    %v2009 = vunpack.c.l.s4 1983009808
    %v2010 = vunpack.c.0.s8 %v2009
    %v2011 = vlaneseq
    %v2012 = vshrl.u32 %v2011, 7
    %v2013 = vsub.s32 %v2010, %v2012
    %v2014 = vrot.slane %v2006, %v2013
    %v2016 = vunpack.c.l.s4 1983009808
    %v2017 = vunpack.c.0.s8 %v2016
    %v2018 = vlaneseq
    %v2019 = vshrl.u32 %v2018, 7
    %v2020 = vsub.s32 %v2017, %v2019
    %v2021 = vrot.slane %v2007, %v2020
    %v2022 = vcombine.low %v1655, %v1679
    %v2023 = vcombine.high %v1655, %v1679
    %v2025 = vunpack.c.l.s4 1983009808
    %v2026 = vunpack.c.0.s8 %v2025
    %v2027 = vlaneseq
    %v2028 = vshrl.u32 %v2027, 7
    %v2029 = vsub.s32 %v2026, %v2028
    %v2030 = vrot.slane %v2022, %v2029
    %v2032 = vunpack.c.l.s4 1983009808
    %v2033 = vunpack.c.0.s8 %v2032
    %v2034 = vlaneseq
    %v2035 = vshrl.u32 %v2034, 7
    %v2036 = vsub.s32 %v2033, %v2035
    %v2037 = vrot.slane %v2023, %v2036
    %v2038 = vcombine.low %v1691, %v1715
    %v2039 = vcombine.high %v1691, %v1715
    %v2041 = vunpack.c.l.s4 1983009808
    %v2042 = vunpack.c.0.s8 %v2041
    %v2043 = vlaneseq
    %v2044 = vshrl.u32 %v2043, 7
    %v2045 = vsub.s32 %v2042, %v2044
    %v2046 = vrot.slane %v2038, %v2045
    %v2048 = vunpack.c.l.s4 1983009808
    %v2049 = vunpack.c.0.s8 %v2048
    %v2050 = vlaneseq
    %v2051 = vshrl.u32 %v2050, 7
    %v2052 = vsub.s32 %v2049, %v2051
    %v2053 = vrot.slane %v2039, %v2052
    %v2054 = vcombine.low %v1703, %v1727
    %v2055 = vcombine.high %v1703, %v1727
    %v2057 = vunpack.c.l.s4 1983009808
    %v2058 = vunpack.c.0.s8 %v2057
    %v2059 = vlaneseq
    %v2060 = vshrl.u32 %v2059, 7
    %v2061 = vsub.s32 %v2058, %v2060
    %v2062 = vrot.slane %v2054, %v2061
    %v2064 = vunpack.c.l.s4 1983009808
    %v2065 = vunpack.c.0.s8 %v2064
    %v2066 = vlaneseq
    %v2067 = vshrl.u32 %v2066, 7
    %v2068 = vsub.s32 %v2065, %v2067
    %v2069 = vrot.slane %v2055, %v2068
    %v2070 = vcombine.low %v2014, %v2030
    %v2071 = vcombine.high %v2014, %v2030
    %v2073 = vunpack.c.l.s4 1934713408
    %v2074 = vunpack.c.0.s8 %v2073
    %v2075 = vlaneseq
    %v2076 = vshrl.u32 %v2075, 7
    %v2077 = vsub.s32 %v2074, %v2076
    %v2078 = vrot.slane %v2070, %v2077
    %v2080 = vunpack.c.l.s4 1934713408
    %v2081 = vunpack.c.0.s8 %v2080
    %v2082 = vlaneseq
    %v2083 = vshrl.u32 %v2082, 7
    %v2084 = vsub.s32 %v2081, %v2083
    %v2085 = vrot.slane %v2071, %v2084
    %v2086 = vcombine.low %v2021, %v2037
    %v2087 = vcombine.high %v2021, %v2037
    %v2089 = vunpack.c.l.s4 1934713408
    %v2090 = vunpack.c.0.s8 %v2089
    %v2091 = vlaneseq
    %v2092 = vshrl.u32 %v2091, 7
    %v2093 = vsub.s32 %v2090, %v2092
    %v2094 = vrot.slane %v2086, %v2093
    %v2096 = vunpack.c.l.s4 1934713408
    %v2097 = vunpack.c.0.s8 %v2096
    %v2098 = vlaneseq
    %v2099 = vshrl.u32 %v2098, 7
    %v2100 = vsub.s32 %v2097, %v2099
    %v2101 = vrot.slane %v2087, %v2100
    %v2102 = vcombine.low %v2046, %v2062
    %v2103 = vcombine.high %v2046, %v2062
    %v2105 = vunpack.c.l.s4 1934713408
    %v2106 = vunpack.c.0.s8 %v2105
    %v2107 = vlaneseq
    %v2108 = vshrl.u32 %v2107, 7
    %v2109 = vsub.s32 %v2106, %v2108
    %v2110 = vrot.slane %v2102, %v2109
    %v2112 = vunpack.c.l.s4 1934713408
    %v2113 = vunpack.c.0.s8 %v2112
    %v2114 = vlaneseq
    %v2115 = vshrl.u32 %v2114, 7
    %v2116 = vsub.s32 %v2113, %v2115
    %v2117 = vrot.slane %v2103, %v2116
    %v2118 = vcombine.low %v2053, %v2069
    %v2119 = vcombine.high %v2053, %v2069
    %v2121 = vunpack.c.l.s4 1934713408
    %v2122 = vunpack.c.0.s8 %v2121
    %v2123 = vlaneseq
    %v2124 = vshrl.u32 %v2123, 7
    %v2125 = vsub.s32 %v2122, %v2124
    %v2126 = vrot.slane %v2118, %v2125
    %v2128 = vunpack.c.l.s4 1934713408
    %v2129 = vunpack.c.0.s8 %v2128
    %v2130 = vlaneseq
    %v2131 = vshrl.u32 %v2130, 7
    %v2132 = vsub.s32 %v2129, %v2131
    %v2133 = vrot.slane %v2119, %v2132
    %v2134 = vcombine.low %v2078, %v2110
    %v2135 = vcombine.high %v2078, %v2110
    %v2136 = vcombine.low %v2085, %v2117
    %v2137 = vcombine.high %v2085, %v2117
    %v2138 = vcombine.low %v2094, %v2126
    %v2139 = vcombine.high %v2094, %v2126
    %v2140 = vcombine.low %v2101, %v2133
    %v2141 = vcombine.high %v2101, %v2133
    %v2142 = vcombine.low %v359, %v1669
    %v2143 = vcombine.high %v359, %v1669
    %v2145 = vunpack.c.l.s4 1983009808
    %v2146 = vunpack.c.0.s8 %v2145
    %v2147 = vlaneseq
    %v2148 = vshrl.u32 %v2147, 7
    %v2149 = vsub.s32 %v2146, %v2148
    %v2150 = vrot.slane %v2142, %v2149
    %v2152 = vunpack.c.l.s4 1983009808
    %v2153 = vunpack.c.0.s8 %v2152
    %v2154 = vlaneseq
    %v2155 = vshrl.u32 %v2154, 7
    %v2156 = vsub.s32 %v2153, %v2155
    %v2157 = vrot.slane %v2143, %v2156
    %v2158 = vcombine.low %v1657, %v1681
    %v2159 = vcombine.high %v1657, %v1681
    %v2161 = vunpack.c.l.s4 1983009808
    %v2162 = vunpack.c.0.s8 %v2161
    %v2163 = vlaneseq
    %v2164 = vshrl.u32 %v2163, 7
    %v2165 = vsub.s32 %v2162, %v2164
    %v2166 = vrot.slane %v2158, %v2165
    %v2168 = vunpack.c.l.s4 1983009808
    %v2169 = vunpack.c.0.s8 %v2168
    %v2170 = vlaneseq
    %v2171 = vshrl.u32 %v2170, 7
    %v2172 = vsub.s32 %v2169, %v2171
    %v2173 = vrot.slane %v2159, %v2172
    %v2174 = vcombine.low %v1693, %v1717
    %v2175 = vcombine.high %v1693, %v1717
    %v2177 = vunpack.c.l.s4 1983009808
    %v2178 = vunpack.c.0.s8 %v2177
    %v2179 = vlaneseq
    %v2180 = vshrl.u32 %v2179, 7
    %v2181 = vsub.s32 %v2178, %v2180
    %v2182 = vrot.slane %v2174, %v2181
    %v2184 = vunpack.c.l.s4 1983009808
    %v2185 = vunpack.c.0.s8 %v2184
    %v2186 = vlaneseq
    %v2187 = vshrl.u32 %v2186, 7
    %v2188 = vsub.s32 %v2185, %v2187
    %v2189 = vrot.slane %v2175, %v2188
    %v2190 = vcombine.low %v1705, %v1729
    %v2191 = vcombine.high %v1705, %v1729
    %v2193 = vunpack.c.l.s4 1983009808
    %v2194 = vunpack.c.0.s8 %v2193
    %v2195 = vlaneseq
    %v2196 = vshrl.u32 %v2195, 7
    %v2197 = vsub.s32 %v2194, %v2196
    %v2198 = vrot.slane %v2190, %v2197
    %v2200 = vunpack.c.l.s4 1983009808
    %v2201 = vunpack.c.0.s8 %v2200
    %v2202 = vlaneseq
    %v2203 = vshrl.u32 %v2202, 7
    %v2204 = vsub.s32 %v2201, %v2203
    %v2205 = vrot.slane %v2191, %v2204
    %v2206 = vcombine.low %v2150, %v2166
    %v2207 = vcombine.high %v2150, %v2166
    %v2209 = vunpack.c.l.s4 1934713408
    %v2210 = vunpack.c.0.s8 %v2209
    %v2211 = vlaneseq
    %v2212 = vshrl.u32 %v2211, 7
    %v2213 = vsub.s32 %v2210, %v2212
    %v2214 = vrot.slane %v2206, %v2213
    %v2216 = vunpack.c.l.s4 1934713408
    %v2217 = vunpack.c.0.s8 %v2216
    %v2218 = vlaneseq
    %v2219 = vshrl.u32 %v2218, 7
    %v2220 = vsub.s32 %v2217, %v2219
    %v2221 = vrot.slane %v2207, %v2220
    %v2222 = vcombine.low %v2157, %v2173
    %v2223 = vcombine.high %v2157, %v2173
    %v2225 = vunpack.c.l.s4 1934713408
    %v2226 = vunpack.c.0.s8 %v2225
    %v2227 = vlaneseq
    %v2228 = vshrl.u32 %v2227, 7
    %v2229 = vsub.s32 %v2226, %v2228
    %v2230 = vrot.slane %v2222, %v2229
    %v2232 = vunpack.c.l.s4 1934713408
    %v2233 = vunpack.c.0.s8 %v2232
    %v2234 = vlaneseq
    %v2235 = vshrl.u32 %v2234, 7
    %v2236 = vsub.s32 %v2233, %v2235
    %v2237 = vrot.slane %v2223, %v2236
    %v2238 = vcombine.low %v2182, %v2198
    %v2239 = vcombine.high %v2182, %v2198
    %v2241 = vunpack.c.l.s4 1934713408
    %v2242 = vunpack.c.0.s8 %v2241
    %v2243 = vlaneseq
    %v2244 = vshrl.u32 %v2243, 7
    %v2245 = vsub.s32 %v2242, %v2244
    %v2246 = vrot.slane %v2238, %v2245
    %v2248 = vunpack.c.l.s4 1934713408
    %v2249 = vunpack.c.0.s8 %v2248
    %v2250 = vlaneseq
    %v2251 = vshrl.u32 %v2250, 7
    %v2252 = vsub.s32 %v2249, %v2251
    %v2253 = vrot.slane %v2239, %v2252
    %v2254 = vcombine.low %v2189, %v2205
    %v2255 = vcombine.high %v2189, %v2205
    %v2257 = vunpack.c.l.s4 1934713408
    %v2258 = vunpack.c.0.s8 %v2257
    %v2259 = vlaneseq
    %v2260 = vshrl.u32 %v2259, 7
    %v2261 = vsub.s32 %v2258, %v2260
    %v2262 = vrot.slane %v2254, %v2261
    %v2264 = vunpack.c.l.s4 1934713408
    %v2265 = vunpack.c.0.s8 %v2264
    %v2266 = vlaneseq
    %v2267 = vshrl.u32 %v2266, 7
    %v2268 = vsub.s32 %v2265, %v2267
    %v2269 = vrot.slane %v2255, %v2268
    %v2270 = vcombine.low %v2214, %v2246
    %v2271 = vcombine.high %v2214, %v2246
    %v2272 = vcombine.low %v2221, %v2253
    %v2273 = vcombine.high %v2221, %v2253
    %v2274 = vcombine.low %v2230, %v2262
    %v2275 = vcombine.high %v2230, %v2262
    %v2276 = vcombine.low %v2237, %v2269
    %v2277 = vcombine.high %v2237, %v2269
    %v2278 = vcombine.low %v1862, %v1864
    %v2279 = vcombine.high %v1862, %v1864
    %v2281 = vunpack.c.l.s4 1983009808
    %v2282 = vunpack.c.0.s8 %v2281
    %v2283 = vlaneseq
    %v2284 = vshrl.u32 %v2283, 7
    %v2285 = vsub.s32 %v2282, %v2284
    %v2286 = vrot.slane %v2278, %v2285
    %v2288 = vunpack.c.l.s4 1983009808
    %v2289 = vunpack.c.0.s8 %v2288
    %v2290 = vlaneseq
    %v2291 = vshrl.u32 %v2290, 7
    %v2292 = vsub.s32 %v2289, %v2291
    %v2293 = vrot.slane %v2279, %v2292
    %v2294 = vcombine.low %v1863, %v1865
    %v2295 = vcombine.high %v1863, %v1865
    %v2297 = vunpack.c.l.s4 1983009808
    %v2298 = vunpack.c.0.s8 %v2297
    %v2299 = vlaneseq
    %v2300 = vshrl.u32 %v2299, 7
    %v2301 = vsub.s32 %v2298, %v2300
    %v2302 = vrot.slane %v2294, %v2301
    %v2304 = vunpack.c.l.s4 1983009808
    %v2305 = vunpack.c.0.s8 %v2304
    %v2306 = vlaneseq
    %v2307 = vshrl.u32 %v2306, 7
    %v2308 = vsub.s32 %v2305, %v2307
    %v2309 = vrot.slane %v2295, %v2308
    %v2310 = vcombine.low %v1866, %v1868
    %v2311 = vcombine.high %v1866, %v1868
    %v2313 = vunpack.c.l.s4 1983009808
    %v2314 = vunpack.c.0.s8 %v2313
    %v2315 = vlaneseq
    %v2316 = vshrl.u32 %v2315, 7
    %v2317 = vsub.s32 %v2314, %v2316
    %v2318 = vrot.slane %v2310, %v2317
    %v2320 = vunpack.c.l.s4 1983009808
    %v2321 = vunpack.c.0.s8 %v2320
    %v2322 = vlaneseq
    %v2323 = vshrl.u32 %v2322, 7
    %v2324 = vsub.s32 %v2321, %v2323
    %v2325 = vrot.slane %v2311, %v2324
    %v2326 = vcombine.low %v1867, %v1869
    %v2327 = vcombine.high %v1867, %v1869
    %v2329 = vunpack.c.l.s4 1983009808
    %v2330 = vunpack.c.0.s8 %v2329
    %v2331 = vlaneseq
    %v2332 = vshrl.u32 %v2331, 7
    %v2333 = vsub.s32 %v2330, %v2332
    %v2334 = vrot.slane %v2326, %v2333
    %v2336 = vunpack.c.l.s4 1983009808
    %v2337 = vunpack.c.0.s8 %v2336
    %v2338 = vlaneseq
    %v2339 = vshrl.u32 %v2338, 7
    %v2340 = vsub.s32 %v2337, %v2339
    %v2341 = vrot.slane %v2327, %v2340
    %v2342 = vcombine.low %v2286, %v2302
    %v2343 = vcombine.high %v2286, %v2302
    %v2345 = vunpack.c.l.s4 1934713408
    %v2346 = vunpack.c.0.s8 %v2345
    %v2347 = vlaneseq
    %v2348 = vshrl.u32 %v2347, 7
    %v2349 = vsub.s32 %v2346, %v2348
    %v2350 = vrot.slane %v2342, %v2349
    %v2352 = vunpack.c.l.s4 1934713408
    %v2353 = vunpack.c.0.s8 %v2352
    %v2354 = vlaneseq
    %v2355 = vshrl.u32 %v2354, 7
    %v2356 = vsub.s32 %v2353, %v2355
    %v2357 = vrot.slane %v2343, %v2356
    %v2358 = vcombine.low %v2293, %v2309
    %v2359 = vcombine.high %v2293, %v2309
    %v2361 = vunpack.c.l.s4 1934713408
    %v2362 = vunpack.c.0.s8 %v2361
    %v2363 = vlaneseq
    %v2364 = vshrl.u32 %v2363, 7
    %v2365 = vsub.s32 %v2362, %v2364
    %v2366 = vrot.slane %v2358, %v2365
    %v2368 = vunpack.c.l.s4 1934713408
    %v2369 = vunpack.c.0.s8 %v2368
    %v2370 = vlaneseq
    %v2371 = vshrl.u32 %v2370, 7
    %v2372 = vsub.s32 %v2369, %v2371
    %v2373 = vrot.slane %v2359, %v2372
    %v2374 = vcombine.low %v2318, %v2334
    %v2375 = vcombine.high %v2318, %v2334
    %v2377 = vunpack.c.l.s4 1934713408
    %v2378 = vunpack.c.0.s8 %v2377
    %v2379 = vlaneseq
    %v2380 = vshrl.u32 %v2379, 7
    %v2381 = vsub.s32 %v2378, %v2380
    %v2382 = vrot.slane %v2374, %v2381
    %v2384 = vunpack.c.l.s4 1934713408
    %v2385 = vunpack.c.0.s8 %v2384
    %v2386 = vlaneseq
    %v2387 = vshrl.u32 %v2386, 7
    %v2388 = vsub.s32 %v2385, %v2387
    %v2389 = vrot.slane %v2375, %v2388
    %v2390 = vcombine.low %v2325, %v2341
    %v2391 = vcombine.high %v2325, %v2341
    %v2393 = vunpack.c.l.s4 1934713408
    %v2394 = vunpack.c.0.s8 %v2393
    %v2395 = vlaneseq
    %v2396 = vshrl.u32 %v2395, 7
    %v2397 = vsub.s32 %v2394, %v2396
    %v2398 = vrot.slane %v2390, %v2397
    %v2400 = vunpack.c.l.s4 1934713408
    %v2401 = vunpack.c.0.s8 %v2400
    %v2402 = vlaneseq
    %v2403 = vshrl.u32 %v2402, 7
    %v2404 = vsub.s32 %v2401, %v2403
    %v2405 = vrot.slane %v2391, %v2404
    %v2406 = vcombine.low %v2350, %v2382
    %v2407 = vcombine.high %v2350, %v2382
    %v2408 = vcombine.low %v2357, %v2389
    %v2409 = vcombine.high %v2357, %v2389
    %v2410 = vcombine.low %v2366, %v2398
    %v2411 = vcombine.high %v2366, %v2398
    %v2412 = vcombine.low %v2373, %v2405
    %v2413 = vcombine.high %v2373, %v2405
    %v2414 = vcombine.low %v1998, %v2000
    %v2415 = vcombine.high %v1998, %v2000
    %v2417 = vunpack.c.l.s4 1983009808
    %v2418 = vunpack.c.0.s8 %v2417
    %v2419 = vlaneseq
    %v2420 = vshrl.u32 %v2419, 7
    %v2421 = vsub.s32 %v2418, %v2420
    %v2422 = vrot.slane %v2414, %v2421
    %v2424 = vunpack.c.l.s4 1983009808
    %v2425 = vunpack.c.0.s8 %v2424
    %v2426 = vlaneseq
    %v2427 = vshrl.u32 %v2426, 7
    %v2428 = vsub.s32 %v2425, %v2427
    %v2429 = vrot.slane %v2415, %v2428
    %v2430 = vcombine.low %v1999, %v2001
    %v2431 = vcombine.high %v1999, %v2001
    %v2433 = vunpack.c.l.s4 1983009808
    %v2434 = vunpack.c.0.s8 %v2433
    %v2435 = vlaneseq
    %v2436 = vshrl.u32 %v2435, 7
    %v2437 = vsub.s32 %v2434, %v2436
    %v2438 = vrot.slane %v2430, %v2437
    %v2440 = vunpack.c.l.s4 1983009808
    %v2441 = vunpack.c.0.s8 %v2440
    %v2442 = vlaneseq
    %v2443 = vshrl.u32 %v2442, 7
    %v2444 = vsub.s32 %v2441, %v2443
    %v2445 = vrot.slane %v2431, %v2444
    %v2446 = vcombine.low %v2002, %v2004
    %v2447 = vcombine.high %v2002, %v2004
    %v2449 = vunpack.c.l.s4 1983009808
    %v2450 = vunpack.c.0.s8 %v2449
    %v2451 = vlaneseq
    %v2452 = vshrl.u32 %v2451, 7
    %v2453 = vsub.s32 %v2450, %v2452
    %v2454 = vrot.slane %v2446, %v2453
    %v2456 = vunpack.c.l.s4 1983009808
    %v2457 = vunpack.c.0.s8 %v2456
    %v2458 = vlaneseq
    %v2459 = vshrl.u32 %v2458, 7
    %v2460 = vsub.s32 %v2457, %v2459
    %v2461 = vrot.slane %v2447, %v2460
    %v2462 = vcombine.low %v2003, %v2005
    %v2463 = vcombine.high %v2003, %v2005
    %v2465 = vunpack.c.l.s4 1983009808
    %v2466 = vunpack.c.0.s8 %v2465
    %v2467 = vlaneseq
    %v2468 = vshrl.u32 %v2467, 7
    %v2469 = vsub.s32 %v2466, %v2468
    %v2470 = vrot.slane %v2462, %v2469
    %v2472 = vunpack.c.l.s4 1983009808
    %v2473 = vunpack.c.0.s8 %v2472
    %v2474 = vlaneseq
    %v2475 = vshrl.u32 %v2474, 7
    %v2476 = vsub.s32 %v2473, %v2475
    %v2477 = vrot.slane %v2463, %v2476
    %v2478 = vcombine.low %v2422, %v2438
    %v2479 = vcombine.high %v2422, %v2438
    %v2481 = vunpack.c.l.s4 1934713408
    %v2482 = vunpack.c.0.s8 %v2481
    %v2483 = vlaneseq
    %v2484 = vshrl.u32 %v2483, 7
    %v2485 = vsub.s32 %v2482, %v2484
    %v2486 = vrot.slane %v2478, %v2485
    %v2488 = vunpack.c.l.s4 1934713408
    %v2489 = vunpack.c.0.s8 %v2488
    %v2490 = vlaneseq
    %v2491 = vshrl.u32 %v2490, 7
    %v2492 = vsub.s32 %v2489, %v2491
    %v2493 = vrot.slane %v2479, %v2492
    %v2494 = vcombine.low %v2429, %v2445
    %v2495 = vcombine.high %v2429, %v2445
    %v2497 = vunpack.c.l.s4 1934713408
    %v2498 = vunpack.c.0.s8 %v2497
    %v2499 = vlaneseq
    %v2500 = vshrl.u32 %v2499, 7
    %v2501 = vsub.s32 %v2498, %v2500
    %v2502 = vrot.slane %v2494, %v2501
    %v2504 = vunpack.c.l.s4 1934713408
    %v2505 = vunpack.c.0.s8 %v2504
    %v2506 = vlaneseq
    %v2507 = vshrl.u32 %v2506, 7
    %v2508 = vsub.s32 %v2505, %v2507
    %v2509 = vrot.slane %v2495, %v2508
    %v2510 = vcombine.low %v2454, %v2470
    %v2511 = vcombine.high %v2454, %v2470
    %v2513 = vunpack.c.l.s4 1934713408
    %v2514 = vunpack.c.0.s8 %v2513
    %v2515 = vlaneseq
    %v2516 = vshrl.u32 %v2515, 7
    %v2517 = vsub.s32 %v2514, %v2516
    %v2518 = vrot.slane %v2510, %v2517
    %v2520 = vunpack.c.l.s4 1934713408
    %v2521 = vunpack.c.0.s8 %v2520
    %v2522 = vlaneseq
    %v2523 = vshrl.u32 %v2522, 7
    %v2524 = vsub.s32 %v2521, %v2523
    %v2525 = vrot.slane %v2511, %v2524
    %v2526 = vcombine.low %v2461, %v2477
    %v2527 = vcombine.high %v2461, %v2477
    %v2529 = vunpack.c.l.s4 1934713408
    %v2530 = vunpack.c.0.s8 %v2529
    %v2531 = vlaneseq
    %v2532 = vshrl.u32 %v2531, 7
    %v2533 = vsub.s32 %v2530, %v2532
    %v2534 = vrot.slane %v2526, %v2533
    %v2536 = vunpack.c.l.s4 1934713408
    %v2537 = vunpack.c.0.s8 %v2536
    %v2538 = vlaneseq
    %v2539 = vshrl.u32 %v2538, 7
    %v2540 = vsub.s32 %v2537, %v2539
    %v2541 = vrot.slane %v2527, %v2540
    %v2542 = vcombine.low %v2486, %v2518
    %v2543 = vcombine.high %v2486, %v2518
    %v2544 = vcombine.low %v2493, %v2525
    %v2545 = vcombine.high %v2493, %v2525
    %v2546 = vcombine.low %v2502, %v2534
    %v2547 = vcombine.high %v2502, %v2534
    %v2548 = vcombine.low %v2509, %v2541
    %v2549 = vcombine.high %v2509, %v2541
    %v2550 = vcombine.low %v2134, %v2136
    %v2551 = vcombine.high %v2134, %v2136
    %v2553 = vunpack.c.l.s4 1983009808
    %v2554 = vunpack.c.0.s8 %v2553
    %v2555 = vlaneseq
    %v2556 = vshrl.u32 %v2555, 7
    %v2557 = vsub.s32 %v2554, %v2556
    %v2558 = vrot.slane %v2550, %v2557
    %v2560 = vunpack.c.l.s4 1983009808
    %v2561 = vunpack.c.0.s8 %v2560
    %v2562 = vlaneseq
    %v2563 = vshrl.u32 %v2562, 7
    %v2564 = vsub.s32 %v2561, %v2563
    %v2565 = vrot.slane %v2551, %v2564
    %v2566 = vcombine.low %v2135, %v2137
    %v2567 = vcombine.high %v2135, %v2137
    %v2569 = vunpack.c.l.s4 1983009808
    %v2570 = vunpack.c.0.s8 %v2569
    %v2571 = vlaneseq
    %v2572 = vshrl.u32 %v2571, 7
    %v2573 = vsub.s32 %v2570, %v2572
    %v2574 = vrot.slane %v2566, %v2573
    %v2576 = vunpack.c.l.s4 1983009808
    %v2577 = vunpack.c.0.s8 %v2576
    %v2578 = vlaneseq
    %v2579 = vshrl.u32 %v2578, 7
    %v2580 = vsub.s32 %v2577, %v2579
    %v2581 = vrot.slane %v2567, %v2580
    %v2582 = vcombine.low %v2138, %v2140
    %v2583 = vcombine.high %v2138, %v2140
    %v2585 = vunpack.c.l.s4 1983009808
    %v2586 = vunpack.c.0.s8 %v2585
    %v2587 = vlaneseq
    %v2588 = vshrl.u32 %v2587, 7
    %v2589 = vsub.s32 %v2586, %v2588
    %v2590 = vrot.slane %v2582, %v2589
    %v2592 = vunpack.c.l.s4 1983009808
    %v2593 = vunpack.c.0.s8 %v2592
    %v2594 = vlaneseq
    %v2595 = vshrl.u32 %v2594, 7
    %v2596 = vsub.s32 %v2593, %v2595
    %v2597 = vrot.slane %v2583, %v2596
    %v2598 = vcombine.low %v2139, %v2141
    %v2599 = vcombine.high %v2139, %v2141
    %v2601 = vunpack.c.l.s4 1983009808
    %v2602 = vunpack.c.0.s8 %v2601
    %v2603 = vlaneseq
    %v2604 = vshrl.u32 %v2603, 7
    %v2605 = vsub.s32 %v2602, %v2604
    %v2606 = vrot.slane %v2598, %v2605
    %v2608 = vunpack.c.l.s4 1983009808
    %v2609 = vunpack.c.0.s8 %v2608
    %v2610 = vlaneseq
    %v2611 = vshrl.u32 %v2610, 7
    %v2612 = vsub.s32 %v2609, %v2611
    %v2613 = vrot.slane %v2599, %v2612
    %v2614 = vcombine.low %v2558, %v2574
    %v2615 = vcombine.high %v2558, %v2574
    %v2617 = vunpack.c.l.s4 1934713408
    %v2618 = vunpack.c.0.s8 %v2617
    %v2619 = vlaneseq
    %v2620 = vshrl.u32 %v2619, 7
    %v2621 = vsub.s32 %v2618, %v2620
    %v2622 = vrot.slane %v2614, %v2621
    %v2624 = vunpack.c.l.s4 1934713408
    %v2625 = vunpack.c.0.s8 %v2624
    %v2626 = vlaneseq
    %v2627 = vshrl.u32 %v2626, 7
    %v2628 = vsub.s32 %v2625, %v2627
    %v2629 = vrot.slane %v2615, %v2628
    %v2630 = vcombine.low %v2565, %v2581
    %v2631 = vcombine.high %v2565, %v2581
    %v2633 = vunpack.c.l.s4 1934713408
    %v2634 = vunpack.c.0.s8 %v2633
    %v2635 = vlaneseq
    %v2636 = vshrl.u32 %v2635, 7
    %v2637 = vsub.s32 %v2634, %v2636
    %v2638 = vrot.slane %v2630, %v2637
    %v2640 = vunpack.c.l.s4 1934713408
    %v2641 = vunpack.c.0.s8 %v2640
    %v2642 = vlaneseq
    %v2643 = vshrl.u32 %v2642, 7
    %v2644 = vsub.s32 %v2641, %v2643
    %v2645 = vrot.slane %v2631, %v2644
    %v2646 = vcombine.low %v2590, %v2606
    %v2647 = vcombine.high %v2590, %v2606
    %v2649 = vunpack.c.l.s4 1934713408
    %v2650 = vunpack.c.0.s8 %v2649
    %v2651 = vlaneseq
    %v2652 = vshrl.u32 %v2651, 7
    %v2653 = vsub.s32 %v2650, %v2652
    %v2654 = vrot.slane %v2646, %v2653
    %v2656 = vunpack.c.l.s4 1934713408
    %v2657 = vunpack.c.0.s8 %v2656
    %v2658 = vlaneseq
    %v2659 = vshrl.u32 %v2658, 7
    %v2660 = vsub.s32 %v2657, %v2659
    %v2661 = vrot.slane %v2647, %v2660
    %v2662 = vcombine.low %v2597, %v2613
    %v2663 = vcombine.high %v2597, %v2613
    %v2665 = vunpack.c.l.s4 1934713408
    %v2666 = vunpack.c.0.s8 %v2665
    %v2667 = vlaneseq
    %v2668 = vshrl.u32 %v2667, 7
    %v2669 = vsub.s32 %v2666, %v2668
    %v2670 = vrot.slane %v2662, %v2669
    %v2672 = vunpack.c.l.s4 1934713408
    %v2673 = vunpack.c.0.s8 %v2672
    %v2674 = vlaneseq
    %v2675 = vshrl.u32 %v2674, 7
    %v2676 = vsub.s32 %v2673, %v2675
    %v2677 = vrot.slane %v2663, %v2676
    %v2678 = vcombine.low %v2622, %v2654
    %v2679 = vcombine.high %v2622, %v2654
    %v2680 = vcombine.low %v2629, %v2661
    %v2681 = vcombine.high %v2629, %v2661
    %v2682 = vcombine.low %v2638, %v2670
    %v2683 = vcombine.high %v2638, %v2670
    %v2684 = vcombine.low %v2645, %v2677
    %v2685 = vcombine.high %v2645, %v2677
    %v2686 = vcombine.low %v2270, %v2272
    %v2687 = vcombine.high %v2270, %v2272
    %v2689 = vunpack.c.l.s4 1983009808
    %v2690 = vunpack.c.0.s8 %v2689
    %v2691 = vlaneseq
    %v2692 = vshrl.u32 %v2691, 7
    %v2693 = vsub.s32 %v2690, %v2692
    %v2694 = vrot.slane %v2686, %v2693
    %v2696 = vunpack.c.l.s4 1983009808
    %v2697 = vunpack.c.0.s8 %v2696
    %v2698 = vlaneseq
    %v2699 = vshrl.u32 %v2698, 7
    %v2700 = vsub.s32 %v2697, %v2699
    %v2701 = vrot.slane %v2687, %v2700
    %v2702 = vcombine.low %v2271, %v2273
    %v2703 = vcombine.high %v2271, %v2273
    %v2705 = vunpack.c.l.s4 1983009808
    %v2706 = vunpack.c.0.s8 %v2705
    %v2707 = vlaneseq
    %v2708 = vshrl.u32 %v2707, 7
    %v2709 = vsub.s32 %v2706, %v2708
    %v2710 = vrot.slane %v2702, %v2709
    %v2712 = vunpack.c.l.s4 1983009808
    %v2713 = vunpack.c.0.s8 %v2712
    %v2714 = vlaneseq
    %v2715 = vshrl.u32 %v2714, 7
    %v2716 = vsub.s32 %v2713, %v2715
    %v2717 = vrot.slane %v2703, %v2716
    %v2718 = vcombine.low %v2274, %v2276
    %v2719 = vcombine.high %v2274, %v2276
    %v2721 = vunpack.c.l.s4 1983009808
    %v2722 = vunpack.c.0.s8 %v2721
    %v2723 = vlaneseq
    %v2724 = vshrl.u32 %v2723, 7
    %v2725 = vsub.s32 %v2722, %v2724
    %v2726 = vrot.slane %v2718, %v2725
    %v2728 = vunpack.c.l.s4 1983009808
    %v2729 = vunpack.c.0.s8 %v2728
    %v2730 = vlaneseq
    %v2731 = vshrl.u32 %v2730, 7
    %v2732 = vsub.s32 %v2729, %v2731
    %v2733 = vrot.slane %v2719, %v2732
    %v2734 = vcombine.low %v2275, %v2277
    %v2735 = vcombine.high %v2275, %v2277
    %v2737 = vunpack.c.l.s4 1983009808
    %v2738 = vunpack.c.0.s8 %v2737
    %v2739 = vlaneseq
    %v2740 = vshrl.u32 %v2739, 7
    %v2741 = vsub.s32 %v2738, %v2740
    %v2742 = vrot.slane %v2734, %v2741
    %v2744 = vunpack.c.l.s4 1983009808
    %v2745 = vunpack.c.0.s8 %v2744
    %v2746 = vlaneseq
    %v2747 = vshrl.u32 %v2746, 7
    %v2748 = vsub.s32 %v2745, %v2747
    %v2749 = vrot.slane %v2735, %v2748
    %v2750 = vcombine.low %v2694, %v2710
    %v2751 = vcombine.high %v2694, %v2710
    %v2753 = vunpack.c.l.s4 1934713408
    %v2754 = vunpack.c.0.s8 %v2753
    %v2755 = vlaneseq
    %v2756 = vshrl.u32 %v2755, 7
    %v2757 = vsub.s32 %v2754, %v2756
    %v2758 = vrot.slane %v2750, %v2757
    %v2760 = vunpack.c.l.s4 1934713408
    %v2761 = vunpack.c.0.s8 %v2760
    %v2762 = vlaneseq
    %v2763 = vshrl.u32 %v2762, 7
    %v2764 = vsub.s32 %v2761, %v2763
    %v2765 = vrot.slane %v2751, %v2764
    %v2766 = vcombine.low %v2701, %v2717
    %v2767 = vcombine.high %v2701, %v2717
    %v2769 = vunpack.c.l.s4 1934713408
    %v2770 = vunpack.c.0.s8 %v2769
    %v2771 = vlaneseq
    %v2772 = vshrl.u32 %v2771, 7
    %v2773 = vsub.s32 %v2770, %v2772
    %v2774 = vrot.slane %v2766, %v2773
    %v2776 = vunpack.c.l.s4 1934713408
    %v2777 = vunpack.c.0.s8 %v2776
    %v2778 = vlaneseq
    %v2779 = vshrl.u32 %v2778, 7
    %v2780 = vsub.s32 %v2777, %v2779
    %v2781 = vrot.slane %v2767, %v2780
    %v2782 = vcombine.low %v2726, %v2742
    %v2783 = vcombine.high %v2726, %v2742
    %v2785 = vunpack.c.l.s4 1934713408
    %v2786 = vunpack.c.0.s8 %v2785
    %v2787 = vlaneseq
    %v2788 = vshrl.u32 %v2787, 7
    %v2789 = vsub.s32 %v2786, %v2788
    %v2790 = vrot.slane %v2782, %v2789
    %v2792 = vunpack.c.l.s4 1934713408
    %v2793 = vunpack.c.0.s8 %v2792
    %v2794 = vlaneseq
    %v2795 = vshrl.u32 %v2794, 7
    %v2796 = vsub.s32 %v2793, %v2795
    %v2797 = vrot.slane %v2783, %v2796
    %v2798 = vcombine.low %v2733, %v2749
    %v2799 = vcombine.high %v2733, %v2749
    %v2801 = vunpack.c.l.s4 1934713408
    %v2802 = vunpack.c.0.s8 %v2801
    %v2803 = vlaneseq
    %v2804 = vshrl.u32 %v2803, 7
    %v2805 = vsub.s32 %v2802, %v2804
    %v2806 = vrot.slane %v2798, %v2805
    %v2808 = vunpack.c.l.s4 1934713408
    %v2809 = vunpack.c.0.s8 %v2808
    %v2810 = vlaneseq
    %v2811 = vshrl.u32 %v2810, 7
    %v2812 = vsub.s32 %v2809, %v2811
    %v2813 = vrot.slane %v2799, %v2812
    %v2814 = vcombine.low %v2758, %v2790
    %v2815 = vcombine.high %v2758, %v2790
    %v2816 = vcombine.low %v2765, %v2797
    %v2817 = vcombine.high %v2765, %v2797
    %v2818 = vcombine.low %v2774, %v2806
    %v2819 = vcombine.high %v2774, %v2806
    %v2820 = vcombine.low %v2781, %v2813
    %v2821 = vcombine.high %v2781, %v2813
    %2826 = vrot.lane.b32.xlu0 %v452, 112
    %v2827 = vpop.permute.xlu0 %2826
    %2828 = vrot.lane.b32.xlu0 %v457, 112
    %v2829 = vpop.permute.xlu0 %2828
    %2830 = vrot.lane.b32.xlu0 %v462, 112
    %v2831 = vpop.permute.xlu0 %2830
    %2832 = vrot.lane.b32.xlu0 %v467, 112
    %v2833 = vpop.permute.xlu0 %2832
    %2838 = vrot.lane.b32.xlu0 %v452, 96
    %v2839 = vpop.permute.xlu0 %2838
    %2840 = vrot.lane.b32.xlu0 %v457, 96
    %v2841 = vpop.permute.xlu0 %2840
    %2842 = vrot.lane.b32.xlu0 %v462, 96
    %v2843 = vpop.permute.xlu0 %2842
    %2844 = vrot.lane.b32.xlu0 %v467, 96
    %v2845 = vpop.permute.xlu0 %2844
    %2850 = vrot.lane.b32.xlu0 %v452, 80
    %v2851 = vpop.permute.xlu0 %2850
    %2852 = vrot.lane.b32.xlu0 %v457, 80
    %v2853 = vpop.permute.xlu0 %2852
    %2854 = vrot.lane.b32.xlu0 %v462, 80
    %v2855 = vpop.permute.xlu0 %2854
    %2856 = vrot.lane.b32.xlu0 %v467, 80
    %v2857 = vpop.permute.xlu0 %2856
    %2862 = vrot.lane.b32.xlu0 %v452, 64
    %v2863 = vpop.permute.xlu0 %2862
    %2864 = vrot.lane.b32.xlu0 %v457, 64
    %v2865 = vpop.permute.xlu0 %2864
    %2866 = vrot.lane.b32.xlu0 %v462, 64
    %v2867 = vpop.permute.xlu0 %2866
    %2868 = vrot.lane.b32.xlu0 %v467, 64
    %v2869 = vpop.permute.xlu0 %2868
    %2874 = vrot.lane.b32.xlu0 %v452, 48
    %v2875 = vpop.permute.xlu0 %2874
    %2876 = vrot.lane.b32.xlu0 %v457, 48
    %v2877 = vpop.permute.xlu0 %2876
    %2878 = vrot.lane.b32.xlu0 %v462, 48
    %v2879 = vpop.permute.xlu0 %2878
    %2880 = vrot.lane.b32.xlu0 %v467, 48
    %v2881 = vpop.permute.xlu0 %2880
    %2886 = vrot.lane.b32.xlu0 %v452, 32
    %v2887 = vpop.permute.xlu0 %2886
    %2888 = vrot.lane.b32.xlu0 %v457, 32
    %v2889 = vpop.permute.xlu0 %2888
    %2890 = vrot.lane.b32.xlu0 %v462, 32
    %v2891 = vpop.permute.xlu0 %2890
    %2892 = vrot.lane.b32.xlu0 %v467, 32
    %v2893 = vpop.permute.xlu0 %2892
    %2898 = vrot.lane.b32.xlu0 %v452, 16
    %v2899 = vpop.permute.xlu0 %2898
    %2900 = vrot.lane.b32.xlu0 %v457, 16
    %v2901 = vpop.permute.xlu0 %2900
    %2902 = vrot.lane.b32.xlu0 %v462, 16
    %v2903 = vpop.permute.xlu0 %2902
    %2904 = vrot.lane.b32.xlu0 %v467, 16
    %v2905 = vpop.permute.xlu0 %2904
    %v2910 = vcombine.low %v452, %v2839
    %v2911 = vcombine.high %v452, %v2839
    %v2913 = vunpack.c.l.s4 1983009808
    %v2914 = vunpack.c.0.s8 %v2913
    %v2915 = vlaneseq
    %v2916 = vshrl.u32 %v2915, 7
    %v2917 = vsub.s32 %v2914, %v2916
    %v2918 = vrot.slane %v2910, %v2917
    %v2920 = vunpack.c.l.s4 1983009808
    %v2921 = vunpack.c.0.s8 %v2920
    %v2922 = vlaneseq
    %v2923 = vshrl.u32 %v2922, 7
    %v2924 = vsub.s32 %v2921, %v2923
    %v2925 = vrot.slane %v2911, %v2924
    %v2926 = vcombine.low %v2827, %v2851
    %v2927 = vcombine.high %v2827, %v2851
    %v2929 = vunpack.c.l.s4 1983009808
    %v2930 = vunpack.c.0.s8 %v2929
    %v2931 = vlaneseq
    %v2932 = vshrl.u32 %v2931, 7
    %v2933 = vsub.s32 %v2930, %v2932
    %v2934 = vrot.slane %v2926, %v2933
    %v2936 = vunpack.c.l.s4 1983009808
    %v2937 = vunpack.c.0.s8 %v2936
    %v2938 = vlaneseq
    %v2939 = vshrl.u32 %v2938, 7
    %v2940 = vsub.s32 %v2937, %v2939
    %v2941 = vrot.slane %v2927, %v2940
    %v2942 = vcombine.low %v2863, %v2887
    %v2943 = vcombine.high %v2863, %v2887
    %v2945 = vunpack.c.l.s4 1983009808
    %v2946 = vunpack.c.0.s8 %v2945
    %v2947 = vlaneseq
    %v2948 = vshrl.u32 %v2947, 7
    %v2949 = vsub.s32 %v2946, %v2948
    %v2950 = vrot.slane %v2942, %v2949
    %v2952 = vunpack.c.l.s4 1983009808
    %v2953 = vunpack.c.0.s8 %v2952
    %v2954 = vlaneseq
    %v2955 = vshrl.u32 %v2954, 7
    %v2956 = vsub.s32 %v2953, %v2955
    %v2957 = vrot.slane %v2943, %v2956
    %v2958 = vcombine.low %v2875, %v2899
    %v2959 = vcombine.high %v2875, %v2899
    %v2961 = vunpack.c.l.s4 1983009808
    %v2962 = vunpack.c.0.s8 %v2961
    %v2963 = vlaneseq
    %v2964 = vshrl.u32 %v2963, 7
    %v2965 = vsub.s32 %v2962, %v2964
    %v2966 = vrot.slane %v2958, %v2965
    %v2968 = vunpack.c.l.s4 1983009808
    %v2969 = vunpack.c.0.s8 %v2968
    %v2970 = vlaneseq
    %v2971 = vshrl.u32 %v2970, 7
    %v2972 = vsub.s32 %v2969, %v2971
    %v2973 = vrot.slane %v2959, %v2972
    %v2974 = vcombine.low %v2918, %v2934
    %v2975 = vcombine.high %v2918, %v2934
    %v2977 = vunpack.c.l.s4 1934713408
    %v2978 = vunpack.c.0.s8 %v2977
    %v2979 = vlaneseq
    %v2980 = vshrl.u32 %v2979, 7
    %v2981 = vsub.s32 %v2978, %v2980
    %v2982 = vrot.slane %v2974, %v2981
    %v2984 = vunpack.c.l.s4 1934713408
    %v2985 = vunpack.c.0.s8 %v2984
    %v2986 = vlaneseq
    %v2987 = vshrl.u32 %v2986, 7
    %v2988 = vsub.s32 %v2985, %v2987
    %v2989 = vrot.slane %v2975, %v2988
    %v2990 = vcombine.low %v2925, %v2941
    %v2991 = vcombine.high %v2925, %v2941
    %v2993 = vunpack.c.l.s4 1934713408
    %v2994 = vunpack.c.0.s8 %v2993
    %v2995 = vlaneseq
    %v2996 = vshrl.u32 %v2995, 7
    %v2997 = vsub.s32 %v2994, %v2996
    %v2998 = vrot.slane %v2990, %v2997
    %v3000 = vunpack.c.l.s4 1934713408
    %v3001 = vunpack.c.0.s8 %v3000
    %v3002 = vlaneseq
    %v3003 = vshrl.u32 %v3002, 7
    %v3004 = vsub.s32 %v3001, %v3003
    %v3005 = vrot.slane %v2991, %v3004
    %v3006 = vcombine.low %v2950, %v2966
    %v3007 = vcombine.high %v2950, %v2966
    %v3009 = vunpack.c.l.s4 1934713408
    %v3010 = vunpack.c.0.s8 %v3009
    %v3011 = vlaneseq
    %v3012 = vshrl.u32 %v3011, 7
    %v3013 = vsub.s32 %v3010, %v3012
    %v3014 = vrot.slane %v3006, %v3013
    %v3016 = vunpack.c.l.s4 1934713408
    %v3017 = vunpack.c.0.s8 %v3016
    %v3018 = vlaneseq
    %v3019 = vshrl.u32 %v3018, 7
    %v3020 = vsub.s32 %v3017, %v3019
    %v3021 = vrot.slane %v3007, %v3020
    %v3022 = vcombine.low %v2957, %v2973
    %v3023 = vcombine.high %v2957, %v2973
    %v3025 = vunpack.c.l.s4 1934713408
    %v3026 = vunpack.c.0.s8 %v3025
    %v3027 = vlaneseq
    %v3028 = vshrl.u32 %v3027, 7
    %v3029 = vsub.s32 %v3026, %v3028
    %v3030 = vrot.slane %v3022, %v3029
    %v3032 = vunpack.c.l.s4 1934713408
    %v3033 = vunpack.c.0.s8 %v3032
    %v3034 = vlaneseq
    %v3035 = vshrl.u32 %v3034, 7
    %v3036 = vsub.s32 %v3033, %v3035
    %v3037 = vrot.slane %v3023, %v3036
    %v3038 = vcombine.low %v2982, %v3014
    %v3039 = vcombine.high %v2982, %v3014
    %v3040 = vcombine.low %v2989, %v3021
    %v3041 = vcombine.high %v2989, %v3021
    %v3042 = vcombine.low %v2998, %v3030
    %v3043 = vcombine.high %v2998, %v3030
    %v3044 = vcombine.low %v3005, %v3037
    %v3045 = vcombine.high %v3005, %v3037
    %v3046 = vcombine.low %v457, %v2841
    %v3047 = vcombine.high %v457, %v2841
    %v3049 = vunpack.c.l.s4 1983009808
    %v3050 = vunpack.c.0.s8 %v3049
    %v3051 = vlaneseq
    %v3052 = vshrl.u32 %v3051, 7
    %v3053 = vsub.s32 %v3050, %v3052
    %v3054 = vrot.slane %v3046, %v3053
    %v3056 = vunpack.c.l.s4 1983009808
    %v3057 = vunpack.c.0.s8 %v3056
    %v3058 = vlaneseq
    %v3059 = vshrl.u32 %v3058, 7
    %v3060 = vsub.s32 %v3057, %v3059
    %v3061 = vrot.slane %v3047, %v3060
    %v3062 = vcombine.low %v2829, %v2853
    %v3063 = vcombine.high %v2829, %v2853
    %v3065 = vunpack.c.l.s4 1983009808
    %v3066 = vunpack.c.0.s8 %v3065
    %v3067 = vlaneseq
    %v3068 = vshrl.u32 %v3067, 7
    %v3069 = vsub.s32 %v3066, %v3068
    %v3070 = vrot.slane %v3062, %v3069
    %v3072 = vunpack.c.l.s4 1983009808
    %v3073 = vunpack.c.0.s8 %v3072
    %v3074 = vlaneseq
    %v3075 = vshrl.u32 %v3074, 7
    %v3076 = vsub.s32 %v3073, %v3075
    %v3077 = vrot.slane %v3063, %v3076
    %v3078 = vcombine.low %v2865, %v2889
    %v3079 = vcombine.high %v2865, %v2889
    %v3081 = vunpack.c.l.s4 1983009808
    %v3082 = vunpack.c.0.s8 %v3081
    %v3083 = vlaneseq
    %v3084 = vshrl.u32 %v3083, 7
    %v3085 = vsub.s32 %v3082, %v3084
    %v3086 = vrot.slane %v3078, %v3085
    %v3088 = vunpack.c.l.s4 1983009808
    %v3089 = vunpack.c.0.s8 %v3088
    %v3090 = vlaneseq
    %v3091 = vshrl.u32 %v3090, 7
    %v3092 = vsub.s32 %v3089, %v3091
    %v3093 = vrot.slane %v3079, %v3092
    %v3094 = vcombine.low %v2877, %v2901
    %v3095 = vcombine.high %v2877, %v2901
    %v3097 = vunpack.c.l.s4 1983009808
    %v3098 = vunpack.c.0.s8 %v3097
    %v3099 = vlaneseq
    %v3100 = vshrl.u32 %v3099, 7
    %v3101 = vsub.s32 %v3098, %v3100
    %v3102 = vrot.slane %v3094, %v3101
    %v3104 = vunpack.c.l.s4 1983009808
    %v3105 = vunpack.c.0.s8 %v3104
    %v3106 = vlaneseq
    %v3107 = vshrl.u32 %v3106, 7
    %v3108 = vsub.s32 %v3105, %v3107
    %v3109 = vrot.slane %v3095, %v3108
    %v3110 = vcombine.low %v3054, %v3070
    %v3111 = vcombine.high %v3054, %v3070
    %v3113 = vunpack.c.l.s4 1934713408
    %v3114 = vunpack.c.0.s8 %v3113
    %v3115 = vlaneseq
    %v3116 = vshrl.u32 %v3115, 7
    %v3117 = vsub.s32 %v3114, %v3116
    %v3118 = vrot.slane %v3110, %v3117
    %v3120 = vunpack.c.l.s4 1934713408
    %v3121 = vunpack.c.0.s8 %v3120
    %v3122 = vlaneseq
    %v3123 = vshrl.u32 %v3122, 7
    %v3124 = vsub.s32 %v3121, %v3123
    %v3125 = vrot.slane %v3111, %v3124
    %v3126 = vcombine.low %v3061, %v3077
    %v3127 = vcombine.high %v3061, %v3077
    %v3129 = vunpack.c.l.s4 1934713408
    %v3130 = vunpack.c.0.s8 %v3129
    %v3131 = vlaneseq
    %v3132 = vshrl.u32 %v3131, 7
    %v3133 = vsub.s32 %v3130, %v3132
    %v3134 = vrot.slane %v3126, %v3133
    %v3136 = vunpack.c.l.s4 1934713408
    %v3137 = vunpack.c.0.s8 %v3136
    %v3138 = vlaneseq
    %v3139 = vshrl.u32 %v3138, 7
    %v3140 = vsub.s32 %v3137, %v3139
    %v3141 = vrot.slane %v3127, %v3140
    %v3142 = vcombine.low %v3086, %v3102
    %v3143 = vcombine.high %v3086, %v3102
    %v3145 = vunpack.c.l.s4 1934713408
    %v3146 = vunpack.c.0.s8 %v3145
    %v3147 = vlaneseq
    %v3148 = vshrl.u32 %v3147, 7
    %v3149 = vsub.s32 %v3146, %v3148
    %v3150 = vrot.slane %v3142, %v3149
    %v3152 = vunpack.c.l.s4 1934713408
    %v3153 = vunpack.c.0.s8 %v3152
    %v3154 = vlaneseq
    %v3155 = vshrl.u32 %v3154, 7
    %v3156 = vsub.s32 %v3153, %v3155
    %v3157 = vrot.slane %v3143, %v3156
    %v3158 = vcombine.low %v3093, %v3109
    %v3159 = vcombine.high %v3093, %v3109
    %v3161 = vunpack.c.l.s4 1934713408
    %v3162 = vunpack.c.0.s8 %v3161
    %v3163 = vlaneseq
    %v3164 = vshrl.u32 %v3163, 7
    %v3165 = vsub.s32 %v3162, %v3164
    %v3166 = vrot.slane %v3158, %v3165
    %v3168 = vunpack.c.l.s4 1934713408
    %v3169 = vunpack.c.0.s8 %v3168
    %v3170 = vlaneseq
    %v3171 = vshrl.u32 %v3170, 7
    %v3172 = vsub.s32 %v3169, %v3171
    %v3173 = vrot.slane %v3159, %v3172
    %v3174 = vcombine.low %v3118, %v3150
    %v3175 = vcombine.high %v3118, %v3150
    %v3176 = vcombine.low %v3125, %v3157
    %v3177 = vcombine.high %v3125, %v3157
    %v3178 = vcombine.low %v3134, %v3166
    %v3179 = vcombine.high %v3134, %v3166
    %v3180 = vcombine.low %v3141, %v3173
    %v3181 = vcombine.high %v3141, %v3173
    %v3182 = vcombine.low %v462, %v2843
    %v3183 = vcombine.high %v462, %v2843
    %v3185 = vunpack.c.l.s4 1983009808
    %v3186 = vunpack.c.0.s8 %v3185
    %v3187 = vlaneseq
    %v3188 = vshrl.u32 %v3187, 7
    %v3189 = vsub.s32 %v3186, %v3188
    %v3190 = vrot.slane %v3182, %v3189
    %v3192 = vunpack.c.l.s4 1983009808
    %v3193 = vunpack.c.0.s8 %v3192
    %v3194 = vlaneseq
    %v3195 = vshrl.u32 %v3194, 7
    %v3196 = vsub.s32 %v3193, %v3195
    %v3197 = vrot.slane %v3183, %v3196
    %v3198 = vcombine.low %v2831, %v2855
    %v3199 = vcombine.high %v2831, %v2855
    %v3201 = vunpack.c.l.s4 1983009808
    %v3202 = vunpack.c.0.s8 %v3201
    %v3203 = vlaneseq
    %v3204 = vshrl.u32 %v3203, 7
    %v3205 = vsub.s32 %v3202, %v3204
    %v3206 = vrot.slane %v3198, %v3205
    %v3208 = vunpack.c.l.s4 1983009808
    %v3209 = vunpack.c.0.s8 %v3208
    %v3210 = vlaneseq
    %v3211 = vshrl.u32 %v3210, 7
    %v3212 = vsub.s32 %v3209, %v3211
    %v3213 = vrot.slane %v3199, %v3212
    %v3214 = vcombine.low %v2867, %v2891
    %v3215 = vcombine.high %v2867, %v2891
    %v3217 = vunpack.c.l.s4 1983009808
    %v3218 = vunpack.c.0.s8 %v3217
    %v3219 = vlaneseq
    %v3220 = vshrl.u32 %v3219, 7
    %v3221 = vsub.s32 %v3218, %v3220
    %v3222 = vrot.slane %v3214, %v3221
    %v3224 = vunpack.c.l.s4 1983009808
    %v3225 = vunpack.c.0.s8 %v3224
    %v3226 = vlaneseq
    %v3227 = vshrl.u32 %v3226, 7
    %v3228 = vsub.s32 %v3225, %v3227
    %v3229 = vrot.slane %v3215, %v3228
    %v3230 = vcombine.low %v2879, %v2903
    %v3231 = vcombine.high %v2879, %v2903
    %v3233 = vunpack.c.l.s4 1983009808
    %v3234 = vunpack.c.0.s8 %v3233
    %v3235 = vlaneseq
    %v3236 = vshrl.u32 %v3235, 7
    %v3237 = vsub.s32 %v3234, %v3236
    %v3238 = vrot.slane %v3230, %v3237
    %v3240 = vunpack.c.l.s4 1983009808
    %v3241 = vunpack.c.0.s8 %v3240
    %v3242 = vlaneseq
    %v3243 = vshrl.u32 %v3242, 7
    %v3244 = vsub.s32 %v3241, %v3243
    %v3245 = vrot.slane %v3231, %v3244
    %v3246 = vcombine.low %v3190, %v3206
    %v3247 = vcombine.high %v3190, %v3206
    %v3249 = vunpack.c.l.s4 1934713408
    %v3250 = vunpack.c.0.s8 %v3249
    %v3251 = vlaneseq
    %v3252 = vshrl.u32 %v3251, 7
    %v3253 = vsub.s32 %v3250, %v3252
    %v3254 = vrot.slane %v3246, %v3253
    %v3256 = vunpack.c.l.s4 1934713408
    %v3257 = vunpack.c.0.s8 %v3256
    %v3258 = vlaneseq
    %v3259 = vshrl.u32 %v3258, 7
    %v3260 = vsub.s32 %v3257, %v3259
    %v3261 = vrot.slane %v3247, %v3260
    %v3262 = vcombine.low %v3197, %v3213
    %v3263 = vcombine.high %v3197, %v3213
    %v3265 = vunpack.c.l.s4 1934713408
    %v3266 = vunpack.c.0.s8 %v3265
    %v3267 = vlaneseq
    %v3268 = vshrl.u32 %v3267, 7
    %v3269 = vsub.s32 %v3266, %v3268
    %v3270 = vrot.slane %v3262, %v3269
    %v3272 = vunpack.c.l.s4 1934713408
    %v3273 = vunpack.c.0.s8 %v3272
    %v3274 = vlaneseq
    %v3275 = vshrl.u32 %v3274, 7
    %v3276 = vsub.s32 %v3273, %v3275
    %v3277 = vrot.slane %v3263, %v3276
    %v3278 = vcombine.low %v3222, %v3238
    %v3279 = vcombine.high %v3222, %v3238
    %v3281 = vunpack.c.l.s4 1934713408
    %v3282 = vunpack.c.0.s8 %v3281
    %v3283 = vlaneseq
    %v3284 = vshrl.u32 %v3283, 7
    %v3285 = vsub.s32 %v3282, %v3284
    %v3286 = vrot.slane %v3278, %v3285
    %v3288 = vunpack.c.l.s4 1934713408
    %v3289 = vunpack.c.0.s8 %v3288
    %v3290 = vlaneseq
    %v3291 = vshrl.u32 %v3290, 7
    %v3292 = vsub.s32 %v3289, %v3291
    %v3293 = vrot.slane %v3279, %v3292
    %v3294 = vcombine.low %v3229, %v3245
    %v3295 = vcombine.high %v3229, %v3245
    %v3297 = vunpack.c.l.s4 1934713408
    %v3298 = vunpack.c.0.s8 %v3297
    %v3299 = vlaneseq
    %v3300 = vshrl.u32 %v3299, 7
    %v3301 = vsub.s32 %v3298, %v3300
    %v3302 = vrot.slane %v3294, %v3301
    %v3304 = vunpack.c.l.s4 1934713408
    %v3305 = vunpack.c.0.s8 %v3304
    %v3306 = vlaneseq
    %v3307 = vshrl.u32 %v3306, 7
    %v3308 = vsub.s32 %v3305, %v3307
    %v3309 = vrot.slane %v3295, %v3308
    %v3310 = vcombine.low %v3254, %v3286
    %v3311 = vcombine.high %v3254, %v3286
    %v3312 = vcombine.low %v3261, %v3293
    %v3313 = vcombine.high %v3261, %v3293
    %v3314 = vcombine.low %v3270, %v3302
    %v3315 = vcombine.high %v3270, %v3302
    %v3316 = vcombine.low %v3277, %v3309
    %v3317 = vcombine.high %v3277, %v3309
    %v3318 = vcombine.low %v467, %v2845
    %v3319 = vcombine.high %v467, %v2845
    %v3321 = vunpack.c.l.s4 1983009808
    %v3322 = vunpack.c.0.s8 %v3321
    %v3323 = vlaneseq
    %v3324 = vshrl.u32 %v3323, 7
    %v3325 = vsub.s32 %v3322, %v3324
    %v3326 = vrot.slane %v3318, %v3325
    %v3328 = vunpack.c.l.s4 1983009808
    %v3329 = vunpack.c.0.s8 %v3328
    %v3330 = vlaneseq
    %v3331 = vshrl.u32 %v3330, 7
    %v3332 = vsub.s32 %v3329, %v3331
    %v3333 = vrot.slane %v3319, %v3332
    %v3334 = vcombine.low %v2833, %v2857
    %v3335 = vcombine.high %v2833, %v2857
    %v3337 = vunpack.c.l.s4 1983009808
    %v3338 = vunpack.c.0.s8 %v3337
    %v3339 = vlaneseq
    %v3340 = vshrl.u32 %v3339, 7
    %v3341 = vsub.s32 %v3338, %v3340
    %v3342 = vrot.slane %v3334, %v3341
    %v3344 = vunpack.c.l.s4 1983009808
    %v3345 = vunpack.c.0.s8 %v3344
    %v3346 = vlaneseq
    %v3347 = vshrl.u32 %v3346, 7
    %v3348 = vsub.s32 %v3345, %v3347
    %v3349 = vrot.slane %v3335, %v3348
    %v3350 = vcombine.low %v2869, %v2893
    %v3351 = vcombine.high %v2869, %v2893
    %v3353 = vunpack.c.l.s4 1983009808
    %v3354 = vunpack.c.0.s8 %v3353
    %v3355 = vlaneseq
    %v3356 = vshrl.u32 %v3355, 7
    %v3357 = vsub.s32 %v3354, %v3356
    %v3358 = vrot.slane %v3350, %v3357
    %v3360 = vunpack.c.l.s4 1983009808
    %v3361 = vunpack.c.0.s8 %v3360
    %v3362 = vlaneseq
    %v3363 = vshrl.u32 %v3362, 7
    %v3364 = vsub.s32 %v3361, %v3363
    %v3365 = vrot.slane %v3351, %v3364
    %v3366 = vcombine.low %v2881, %v2905
    %v3367 = vcombine.high %v2881, %v2905
    %v3369 = vunpack.c.l.s4 1983009808
    %v3370 = vunpack.c.0.s8 %v3369
    %v3371 = vlaneseq
    %v3372 = vshrl.u32 %v3371, 7
    %v3373 = vsub.s32 %v3370, %v3372
    %v3374 = vrot.slane %v3366, %v3373
    %v3376 = vunpack.c.l.s4 1983009808
    %v3377 = vunpack.c.0.s8 %v3376
    %v3378 = vlaneseq
    %v3379 = vshrl.u32 %v3378, 7
    %v3380 = vsub.s32 %v3377, %v3379
    %v3381 = vrot.slane %v3367, %v3380
    %v3382 = vcombine.low %v3326, %v3342
    %v3383 = vcombine.high %v3326, %v3342
    %v3385 = vunpack.c.l.s4 1934713408
    %v3386 = vunpack.c.0.s8 %v3385
    %v3387 = vlaneseq
    %v3388 = vshrl.u32 %v3387, 7
    %v3389 = vsub.s32 %v3386, %v3388
    %v3390 = vrot.slane %v3382, %v3389
    %v3392 = vunpack.c.l.s4 1934713408
    %v3393 = vunpack.c.0.s8 %v3392
    %v3394 = vlaneseq
    %v3395 = vshrl.u32 %v3394, 7
    %v3396 = vsub.s32 %v3393, %v3395
    %v3397 = vrot.slane %v3383, %v3396
    %v3398 = vcombine.low %v3333, %v3349
    %v3399 = vcombine.high %v3333, %v3349
    %v3401 = vunpack.c.l.s4 1934713408
    %v3402 = vunpack.c.0.s8 %v3401
    %v3403 = vlaneseq
    %v3404 = vshrl.u32 %v3403, 7
    %v3405 = vsub.s32 %v3402, %v3404
    %v3406 = vrot.slane %v3398, %v3405
    %v3408 = vunpack.c.l.s4 1934713408
    %v3409 = vunpack.c.0.s8 %v3408
    %v3410 = vlaneseq
    %v3411 = vshrl.u32 %v3410, 7
    %v3412 = vsub.s32 %v3409, %v3411
    %v3413 = vrot.slane %v3399, %v3412
    %v3414 = vcombine.low %v3358, %v3374
    %v3415 = vcombine.high %v3358, %v3374
    %v3417 = vunpack.c.l.s4 1934713408
    %v3418 = vunpack.c.0.s8 %v3417
    %v3419 = vlaneseq
    %v3420 = vshrl.u32 %v3419, 7
    %v3421 = vsub.s32 %v3418, %v3420
    %v3422 = vrot.slane %v3414, %v3421
    %v3424 = vunpack.c.l.s4 1934713408
    %v3425 = vunpack.c.0.s8 %v3424
    %v3426 = vlaneseq
    %v3427 = vshrl.u32 %v3426, 7
    %v3428 = vsub.s32 %v3425, %v3427
    %v3429 = vrot.slane %v3415, %v3428
    %v3430 = vcombine.low %v3365, %v3381
    %v3431 = vcombine.high %v3365, %v3381
    %v3433 = vunpack.c.l.s4 1934713408
    %v3434 = vunpack.c.0.s8 %v3433
    %v3435 = vlaneseq
    %v3436 = vshrl.u32 %v3435, 7
    %v3437 = vsub.s32 %v3434, %v3436
    %v3438 = vrot.slane %v3430, %v3437
    %v3440 = vunpack.c.l.s4 1934713408
    %v3441 = vunpack.c.0.s8 %v3440
    %v3442 = vlaneseq
    %v3443 = vshrl.u32 %v3442, 7
    %v3444 = vsub.s32 %v3441, %v3443
    %v3445 = vrot.slane %v3431, %v3444
    %v3446 = vcombine.low %v3390, %v3422
    %v3447 = vcombine.high %v3390, %v3422
    %v3448 = vcombine.low %v3397, %v3429
    %v3449 = vcombine.high %v3397, %v3429
    %v3450 = vcombine.low %v3406, %v3438
    %v3451 = vcombine.high %v3406, %v3438
    %v3452 = vcombine.low %v3413, %v3445
    %v3453 = vcombine.high %v3413, %v3445
    %v3454 = vcombine.low %v3038, %v3040
    %v3455 = vcombine.high %v3038, %v3040
    %v3457 = vunpack.c.l.s4 1983009808
    %v3458 = vunpack.c.0.s8 %v3457
    %v3459 = vlaneseq
    %v3460 = vshrl.u32 %v3459, 7
    %v3461 = vsub.s32 %v3458, %v3460
    %v3462 = vrot.slane %v3454, %v3461
    %v3464 = vunpack.c.l.s4 1983009808
    %v3465 = vunpack.c.0.s8 %v3464
    %v3466 = vlaneseq
    %v3467 = vshrl.u32 %v3466, 7
    %v3468 = vsub.s32 %v3465, %v3467
    %v3469 = vrot.slane %v3455, %v3468
    %v3470 = vcombine.low %v3039, %v3041
    %v3471 = vcombine.high %v3039, %v3041
    %v3473 = vunpack.c.l.s4 1983009808
    %v3474 = vunpack.c.0.s8 %v3473
    %v3475 = vlaneseq
    %v3476 = vshrl.u32 %v3475, 7
    %v3477 = vsub.s32 %v3474, %v3476
    %v3478 = vrot.slane %v3470, %v3477
    %v3480 = vunpack.c.l.s4 1983009808
    %v3481 = vunpack.c.0.s8 %v3480
    %v3482 = vlaneseq
    %v3483 = vshrl.u32 %v3482, 7
    %v3484 = vsub.s32 %v3481, %v3483
    %v3485 = vrot.slane %v3471, %v3484
    %v3486 = vcombine.low %v3042, %v3044
    %v3487 = vcombine.high %v3042, %v3044
    %v3489 = vunpack.c.l.s4 1983009808
    %v3490 = vunpack.c.0.s8 %v3489
    %v3491 = vlaneseq
    %v3492 = vshrl.u32 %v3491, 7
    %v3493 = vsub.s32 %v3490, %v3492
    %v3494 = vrot.slane %v3486, %v3493
    %v3496 = vunpack.c.l.s4 1983009808
    %v3497 = vunpack.c.0.s8 %v3496
    %v3498 = vlaneseq
    %v3499 = vshrl.u32 %v3498, 7
    %v3500 = vsub.s32 %v3497, %v3499
    %v3501 = vrot.slane %v3487, %v3500
    %v3502 = vcombine.low %v3043, %v3045
    %v3503 = vcombine.high %v3043, %v3045
    %v3505 = vunpack.c.l.s4 1983009808
    %v3506 = vunpack.c.0.s8 %v3505
    %v3507 = vlaneseq
    %v3508 = vshrl.u32 %v3507, 7
    %v3509 = vsub.s32 %v3506, %v3508
    %v3510 = vrot.slane %v3502, %v3509
    %v3512 = vunpack.c.l.s4 1983009808
    %v3513 = vunpack.c.0.s8 %v3512
    %v3514 = vlaneseq
    %v3515 = vshrl.u32 %v3514, 7
    %v3516 = vsub.s32 %v3513, %v3515
    %v3517 = vrot.slane %v3503, %v3516
    %v3518 = vcombine.low %v3462, %v3478
    %v3519 = vcombine.high %v3462, %v3478
    %v3521 = vunpack.c.l.s4 1934713408
    %v3522 = vunpack.c.0.s8 %v3521
    %v3523 = vlaneseq
    %v3524 = vshrl.u32 %v3523, 7
    %v3525 = vsub.s32 %v3522, %v3524
    %v3526 = vrot.slane %v3518, %v3525
    %v3528 = vunpack.c.l.s4 1934713408
    %v3529 = vunpack.c.0.s8 %v3528
    %v3530 = vlaneseq
    %v3531 = vshrl.u32 %v3530, 7
    %v3532 = vsub.s32 %v3529, %v3531
    %v3533 = vrot.slane %v3519, %v3532
    %v3534 = vcombine.low %v3469, %v3485
    %v3535 = vcombine.high %v3469, %v3485
    %v3537 = vunpack.c.l.s4 1934713408
    %v3538 = vunpack.c.0.s8 %v3537
    %v3539 = vlaneseq
    %v3540 = vshrl.u32 %v3539, 7
    %v3541 = vsub.s32 %v3538, %v3540
    %v3542 = vrot.slane %v3534, %v3541
    %v3544 = vunpack.c.l.s4 1934713408
    %v3545 = vunpack.c.0.s8 %v3544
    %v3546 = vlaneseq
    %v3547 = vshrl.u32 %v3546, 7
    %v3548 = vsub.s32 %v3545, %v3547
    %v3549 = vrot.slane %v3535, %v3548
    %v3550 = vcombine.low %v3494, %v3510
    %v3551 = vcombine.high %v3494, %v3510
    %v3553 = vunpack.c.l.s4 1934713408
    %v3554 = vunpack.c.0.s8 %v3553
    %v3555 = vlaneseq
    %v3556 = vshrl.u32 %v3555, 7
    %v3557 = vsub.s32 %v3554, %v3556
    %v3558 = vrot.slane %v3550, %v3557
    %v3560 = vunpack.c.l.s4 1934713408
    %v3561 = vunpack.c.0.s8 %v3560
    %v3562 = vlaneseq
    %v3563 = vshrl.u32 %v3562, 7
    %v3564 = vsub.s32 %v3561, %v3563
    %v3565 = vrot.slane %v3551, %v3564
    %v3566 = vcombine.low %v3501, %v3517
    %v3567 = vcombine.high %v3501, %v3517
    %v3569 = vunpack.c.l.s4 1934713408
    %v3570 = vunpack.c.0.s8 %v3569
    %v3571 = vlaneseq
    %v3572 = vshrl.u32 %v3571, 7
    %v3573 = vsub.s32 %v3570, %v3572
    %v3574 = vrot.slane %v3566, %v3573
    %v3576 = vunpack.c.l.s4 1934713408
    %v3577 = vunpack.c.0.s8 %v3576
    %v3578 = vlaneseq
    %v3579 = vshrl.u32 %v3578, 7
    %v3580 = vsub.s32 %v3577, %v3579
    %v3581 = vrot.slane %v3567, %v3580
    %v3582 = vcombine.low %v3526, %v3558
    %v3583 = vcombine.high %v3526, %v3558
    %v3584 = vcombine.low %v3533, %v3565
    %v3585 = vcombine.high %v3533, %v3565
    %v3586 = vcombine.low %v3542, %v3574
    %v3587 = vcombine.high %v3542, %v3574
    %v3588 = vcombine.low %v3549, %v3581
    %v3589 = vcombine.high %v3549, %v3581
    %v3590 = vcombine.low %v3174, %v3176
    %v3591 = vcombine.high %v3174, %v3176
    %v3593 = vunpack.c.l.s4 1983009808
    %v3594 = vunpack.c.0.s8 %v3593
    %v3595 = vlaneseq
    %v3596 = vshrl.u32 %v3595, 7
    %v3597 = vsub.s32 %v3594, %v3596
    %v3598 = vrot.slane %v3590, %v3597
    %v3600 = vunpack.c.l.s4 1983009808
    %v3601 = vunpack.c.0.s8 %v3600
    %v3602 = vlaneseq
    %v3603 = vshrl.u32 %v3602, 7
    %v3604 = vsub.s32 %v3601, %v3603
    %v3605 = vrot.slane %v3591, %v3604
    %v3606 = vcombine.low %v3175, %v3177
    %v3607 = vcombine.high %v3175, %v3177
    %v3609 = vunpack.c.l.s4 1983009808
    %v3610 = vunpack.c.0.s8 %v3609
    %v3611 = vlaneseq
    %v3612 = vshrl.u32 %v3611, 7
    %v3613 = vsub.s32 %v3610, %v3612
    %v3614 = vrot.slane %v3606, %v3613
    %v3616 = vunpack.c.l.s4 1983009808
    %v3617 = vunpack.c.0.s8 %v3616
    %v3618 = vlaneseq
    %v3619 = vshrl.u32 %v3618, 7
    %v3620 = vsub.s32 %v3617, %v3619
    %v3621 = vrot.slane %v3607, %v3620
    %v3622 = vcombine.low %v3178, %v3180
    %v3623 = vcombine.high %v3178, %v3180
    %v3625 = vunpack.c.l.s4 1983009808
    %v3626 = vunpack.c.0.s8 %v3625
    %v3627 = vlaneseq
    %v3628 = vshrl.u32 %v3627, 7
    %v3629 = vsub.s32 %v3626, %v3628
    %v3630 = vrot.slane %v3622, %v3629
    %v3632 = vunpack.c.l.s4 1983009808
    %v3633 = vunpack.c.0.s8 %v3632
    %v3634 = vlaneseq
    %v3635 = vshrl.u32 %v3634, 7
    %v3636 = vsub.s32 %v3633, %v3635
    %v3637 = vrot.slane %v3623, %v3636
    %v3638 = vcombine.low %v3179, %v3181
    %v3639 = vcombine.high %v3179, %v3181
    %v3641 = vunpack.c.l.s4 1983009808
    %v3642 = vunpack.c.0.s8 %v3641
    %v3643 = vlaneseq
    %v3644 = vshrl.u32 %v3643, 7
    %v3645 = vsub.s32 %v3642, %v3644
    %v3646 = vrot.slane %v3638, %v3645
    %v3648 = vunpack.c.l.s4 1983009808
    %v3649 = vunpack.c.0.s8 %v3648
    %v3650 = vlaneseq
    %v3651 = vshrl.u32 %v3650, 7
    %v3652 = vsub.s32 %v3649, %v3651
    %v3653 = vrot.slane %v3639, %v3652
    %v3654 = vcombine.low %v3598, %v3614
    %v3655 = vcombine.high %v3598, %v3614
    %v3657 = vunpack.c.l.s4 1934713408
    %v3658 = vunpack.c.0.s8 %v3657
    %v3659 = vlaneseq
    %v3660 = vshrl.u32 %v3659, 7
    %v3661 = vsub.s32 %v3658, %v3660
    %v3662 = vrot.slane %v3654, %v3661
    %v3664 = vunpack.c.l.s4 1934713408
    %v3665 = vunpack.c.0.s8 %v3664
    %v3666 = vlaneseq
    %v3667 = vshrl.u32 %v3666, 7
    %v3668 = vsub.s32 %v3665, %v3667
    %v3669 = vrot.slane %v3655, %v3668
    %v3670 = vcombine.low %v3605, %v3621
    %v3671 = vcombine.high %v3605, %v3621
    %v3673 = vunpack.c.l.s4 1934713408
    %v3674 = vunpack.c.0.s8 %v3673
    %v3675 = vlaneseq
    %v3676 = vshrl.u32 %v3675, 7
    %v3677 = vsub.s32 %v3674, %v3676
    %v3678 = vrot.slane %v3670, %v3677
    %v3680 = vunpack.c.l.s4 1934713408
    %v3681 = vunpack.c.0.s8 %v3680
    %v3682 = vlaneseq
    %v3683 = vshrl.u32 %v3682, 7
    %v3684 = vsub.s32 %v3681, %v3683
    %v3685 = vrot.slane %v3671, %v3684
    %v3686 = vcombine.low %v3630, %v3646
    %v3687 = vcombine.high %v3630, %v3646
    %v3689 = vunpack.c.l.s4 1934713408
    %v3690 = vunpack.c.0.s8 %v3689
    %v3691 = vlaneseq
    %v3692 = vshrl.u32 %v3691, 7
    %v3693 = vsub.s32 %v3690, %v3692
    %v3694 = vrot.slane %v3686, %v3693
    %v3696 = vunpack.c.l.s4 1934713408
    %v3697 = vunpack.c.0.s8 %v3696
    %v3698 = vlaneseq
    %v3699 = vshrl.u32 %v3698, 7
    %v3700 = vsub.s32 %v3697, %v3699
    %v3701 = vrot.slane %v3687, %v3700
    %v3702 = vcombine.low %v3637, %v3653
    %v3703 = vcombine.high %v3637, %v3653
    %v3705 = vunpack.c.l.s4 1934713408
    %v3706 = vunpack.c.0.s8 %v3705
    %v3707 = vlaneseq
    %v3708 = vshrl.u32 %v3707, 7
    %v3709 = vsub.s32 %v3706, %v3708
    %v3710 = vrot.slane %v3702, %v3709
    %v3712 = vunpack.c.l.s4 1934713408
    %v3713 = vunpack.c.0.s8 %v3712
    %v3714 = vlaneseq
    %v3715 = vshrl.u32 %v3714, 7
    %v3716 = vsub.s32 %v3713, %v3715
    %v3717 = vrot.slane %v3703, %v3716
    %v3718 = vcombine.low %v3662, %v3694
    %v3719 = vcombine.high %v3662, %v3694
    %v3720 = vcombine.low %v3669, %v3701
    %v3721 = vcombine.high %v3669, %v3701
    %v3722 = vcombine.low %v3678, %v3710
    %v3723 = vcombine.high %v3678, %v3710
    %v3724 = vcombine.low %v3685, %v3717
    %v3725 = vcombine.high %v3685, %v3717
    %v3726 = vcombine.low %v3310, %v3312
    %v3727 = vcombine.high %v3310, %v3312
    %v3729 = vunpack.c.l.s4 1983009808
    %v3730 = vunpack.c.0.s8 %v3729
    %v3731 = vlaneseq
    %v3732 = vshrl.u32 %v3731, 7
    %v3733 = vsub.s32 %v3730, %v3732
    %v3734 = vrot.slane %v3726, %v3733
    %v3736 = vunpack.c.l.s4 1983009808
    %v3737 = vunpack.c.0.s8 %v3736
    %v3738 = vlaneseq
    %v3739 = vshrl.u32 %v3738, 7
    %v3740 = vsub.s32 %v3737, %v3739
    %v3741 = vrot.slane %v3727, %v3740
    %v3742 = vcombine.low %v3311, %v3313
    %v3743 = vcombine.high %v3311, %v3313
    %v3745 = vunpack.c.l.s4 1983009808
    %v3746 = vunpack.c.0.s8 %v3745
    %v3747 = vlaneseq
    %v3748 = vshrl.u32 %v3747, 7
    %v3749 = vsub.s32 %v3746, %v3748
    %v3750 = vrot.slane %v3742, %v3749
    %v3752 = vunpack.c.l.s4 1983009808
    %v3753 = vunpack.c.0.s8 %v3752
    %v3754 = vlaneseq
    %v3755 = vshrl.u32 %v3754, 7
    %v3756 = vsub.s32 %v3753, %v3755
    %v3757 = vrot.slane %v3743, %v3756
    %v3758 = vcombine.low %v3314, %v3316
    %v3759 = vcombine.high %v3314, %v3316
    %v3761 = vunpack.c.l.s4 1983009808
    %v3762 = vunpack.c.0.s8 %v3761
    %v3763 = vlaneseq
    %v3764 = vshrl.u32 %v3763, 7
    %v3765 = vsub.s32 %v3762, %v3764
    %v3766 = vrot.slane %v3758, %v3765
    %v3768 = vunpack.c.l.s4 1983009808
    %v3769 = vunpack.c.0.s8 %v3768
    %v3770 = vlaneseq
    %v3771 = vshrl.u32 %v3770, 7
    %v3772 = vsub.s32 %v3769, %v3771
    %v3773 = vrot.slane %v3759, %v3772
    %v3774 = vcombine.low %v3315, %v3317
    %v3775 = vcombine.high %v3315, %v3317
    %v3777 = vunpack.c.l.s4 1983009808
    %v3778 = vunpack.c.0.s8 %v3777
    %v3779 = vlaneseq
    %v3780 = vshrl.u32 %v3779, 7
    %v3781 = vsub.s32 %v3778, %v3780
    %v3782 = vrot.slane %v3774, %v3781
    %v3784 = vunpack.c.l.s4 1983009808
    %v3785 = vunpack.c.0.s8 %v3784
    %v3786 = vlaneseq
    %v3787 = vshrl.u32 %v3786, 7
    %v3788 = vsub.s32 %v3785, %v3787
    %v3789 = vrot.slane %v3775, %v3788
    %v3790 = vcombine.low %v3734, %v3750
    %v3791 = vcombine.high %v3734, %v3750
    %v3793 = vunpack.c.l.s4 1934713408
    %v3794 = vunpack.c.0.s8 %v3793
    %v3795 = vlaneseq
    %v3796 = vshrl.u32 %v3795, 7
    %v3797 = vsub.s32 %v3794, %v3796
    %v3798 = vrot.slane %v3790, %v3797
    %v3800 = vunpack.c.l.s4 1934713408
    %v3801 = vunpack.c.0.s8 %v3800
    %v3802 = vlaneseq
    %v3803 = vshrl.u32 %v3802, 7
    %v3804 = vsub.s32 %v3801, %v3803
    %v3805 = vrot.slane %v3791, %v3804
    %v3806 = vcombine.low %v3741, %v3757
    %v3807 = vcombine.high %v3741, %v3757
    %v3809 = vunpack.c.l.s4 1934713408
    %v3810 = vunpack.c.0.s8 %v3809
    %v3811 = vlaneseq
    %v3812 = vshrl.u32 %v3811, 7
    %v3813 = vsub.s32 %v3810, %v3812
    %v3814 = vrot.slane %v3806, %v3813
    %v3816 = vunpack.c.l.s4 1934713408
    %v3817 = vunpack.c.0.s8 %v3816
    %v3818 = vlaneseq
    %v3819 = vshrl.u32 %v3818, 7
    %v3820 = vsub.s32 %v3817, %v3819
    %v3821 = vrot.slane %v3807, %v3820
    %v3822 = vcombine.low %v3766, %v3782
    %v3823 = vcombine.high %v3766, %v3782
    %v3825 = vunpack.c.l.s4 1934713408
    %v3826 = vunpack.c.0.s8 %v3825
    %v3827 = vlaneseq
    %v3828 = vshrl.u32 %v3827, 7
    %v3829 = vsub.s32 %v3826, %v3828
    %v3830 = vrot.slane %v3822, %v3829
    %v3832 = vunpack.c.l.s4 1934713408
    %v3833 = vunpack.c.0.s8 %v3832
    %v3834 = vlaneseq
    %v3835 = vshrl.u32 %v3834, 7
    %v3836 = vsub.s32 %v3833, %v3835
    %v3837 = vrot.slane %v3823, %v3836
    %v3838 = vcombine.low %v3773, %v3789
    %v3839 = vcombine.high %v3773, %v3789
    %v3841 = vunpack.c.l.s4 1934713408
    %v3842 = vunpack.c.0.s8 %v3841
    %v3843 = vlaneseq
    %v3844 = vshrl.u32 %v3843, 7
    %v3845 = vsub.s32 %v3842, %v3844
    %v3846 = vrot.slane %v3838, %v3845
    %v3848 = vunpack.c.l.s4 1934713408
    %v3849 = vunpack.c.0.s8 %v3848
    %v3850 = vlaneseq
    %v3851 = vshrl.u32 %v3850, 7
    %v3852 = vsub.s32 %v3849, %v3851
    %v3853 = vrot.slane %v3839, %v3852
    %v3854 = vcombine.low %v3798, %v3830
    %v3855 = vcombine.high %v3798, %v3830
    %v3856 = vcombine.low %v3805, %v3837
    %v3857 = vcombine.high %v3805, %v3837
    %v3858 = vcombine.low %v3814, %v3846
    %v3859 = vcombine.high %v3814, %v3846
    %v3860 = vcombine.low %v3821, %v3853
    %v3861 = vcombine.high %v3821, %v3853
    %v3862 = vcombine.low %v3446, %v3448
    %v3863 = vcombine.high %v3446, %v3448
    %v3865 = vunpack.c.l.s4 1983009808
    %v3866 = vunpack.c.0.s8 %v3865
    %v3867 = vlaneseq
    %v3868 = vshrl.u32 %v3867, 7
    %v3869 = vsub.s32 %v3866, %v3868
    %v3870 = vrot.slane %v3862, %v3869
    %v3872 = vunpack.c.l.s4 1983009808
    %v3873 = vunpack.c.0.s8 %v3872
    %v3874 = vlaneseq
    %v3875 = vshrl.u32 %v3874, 7
    %v3876 = vsub.s32 %v3873, %v3875
    %v3877 = vrot.slane %v3863, %v3876
    %v3878 = vcombine.low %v3447, %v3449
    %v3879 = vcombine.high %v3447, %v3449
    %v3881 = vunpack.c.l.s4 1983009808
    %v3882 = vunpack.c.0.s8 %v3881
    %v3883 = vlaneseq
    %v3884 = vshrl.u32 %v3883, 7
    %v3885 = vsub.s32 %v3882, %v3884
    %v3886 = vrot.slane %v3878, %v3885
    %v3888 = vunpack.c.l.s4 1983009808
    %v3889 = vunpack.c.0.s8 %v3888
    %v3890 = vlaneseq
    %v3891 = vshrl.u32 %v3890, 7
    %v3892 = vsub.s32 %v3889, %v3891
    %v3893 = vrot.slane %v3879, %v3892
    %v3894 = vcombine.low %v3450, %v3452
    %v3895 = vcombine.high %v3450, %v3452
    %v3897 = vunpack.c.l.s4 1983009808
    %v3898 = vunpack.c.0.s8 %v3897
    %v3899 = vlaneseq
    %v3900 = vshrl.u32 %v3899, 7
    %v3901 = vsub.s32 %v3898, %v3900
    %v3902 = vrot.slane %v3894, %v3901
    %v3904 = vunpack.c.l.s4 1983009808
    %v3905 = vunpack.c.0.s8 %v3904
    %v3906 = vlaneseq
    %v3907 = vshrl.u32 %v3906, 7
    %v3908 = vsub.s32 %v3905, %v3907
    %v3909 = vrot.slane %v3895, %v3908
    %v3910 = vcombine.low %v3451, %v3453
    %v3911 = vcombine.high %v3451, %v3453
    %v3913 = vunpack.c.l.s4 1983009808
    %v3914 = vunpack.c.0.s8 %v3913
    %v3915 = vlaneseq
    %v3916 = vshrl.u32 %v3915, 7
    %v3917 = vsub.s32 %v3914, %v3916
    %v3918 = vrot.slane %v3910, %v3917
    %v3920 = vunpack.c.l.s4 1983009808
    %v3921 = vunpack.c.0.s8 %v3920
    %v3922 = vlaneseq
    %v3923 = vshrl.u32 %v3922, 7
    %v3924 = vsub.s32 %v3921, %v3923
    %v3925 = vrot.slane %v3911, %v3924
    %v3926 = vcombine.low %v3870, %v3886
    %v3927 = vcombine.high %v3870, %v3886
    %v3929 = vunpack.c.l.s4 1934713408
    %v3930 = vunpack.c.0.s8 %v3929
    %v3931 = vlaneseq
    %v3932 = vshrl.u32 %v3931, 7
    %v3933 = vsub.s32 %v3930, %v3932
    %v3934 = vrot.slane %v3926, %v3933
    %v3936 = vunpack.c.l.s4 1934713408
    %v3937 = vunpack.c.0.s8 %v3936
    %v3938 = vlaneseq
    %v3939 = vshrl.u32 %v3938, 7
    %v3940 = vsub.s32 %v3937, %v3939
    %v3941 = vrot.slane %v3927, %v3940
    %v3942 = vcombine.low %v3877, %v3893
    %v3943 = vcombine.high %v3877, %v3893
    %v3945 = vunpack.c.l.s4 1934713408
    %v3946 = vunpack.c.0.s8 %v3945
    %v3947 = vlaneseq
    %v3948 = vshrl.u32 %v3947, 7
    %v3949 = vsub.s32 %v3946, %v3948
    %v3950 = vrot.slane %v3942, %v3949
    %v3952 = vunpack.c.l.s4 1934713408
    %v3953 = vunpack.c.0.s8 %v3952
    %v3954 = vlaneseq
    %v3955 = vshrl.u32 %v3954, 7
    %v3956 = vsub.s32 %v3953, %v3955
    %v3957 = vrot.slane %v3943, %v3956
    %v3958 = vcombine.low %v3902, %v3918
    %v3959 = vcombine.high %v3902, %v3918
    %v3961 = vunpack.c.l.s4 1934713408
    %v3962 = vunpack.c.0.s8 %v3961
    %v3963 = vlaneseq
    %v3964 = vshrl.u32 %v3963, 7
    %v3965 = vsub.s32 %v3962, %v3964
    %v3966 = vrot.slane %v3958, %v3965
    %v3968 = vunpack.c.l.s4 1934713408
    %v3969 = vunpack.c.0.s8 %v3968
    %v3970 = vlaneseq
    %v3971 = vshrl.u32 %v3970, 7
    %v3972 = vsub.s32 %v3969, %v3971
    %v3973 = vrot.slane %v3959, %v3972
    %v3974 = vcombine.low %v3909, %v3925
    %v3975 = vcombine.high %v3909, %v3925
    %v3977 = vunpack.c.l.s4 1934713408
    %v3978 = vunpack.c.0.s8 %v3977
    %v3979 = vlaneseq
    %v3980 = vshrl.u32 %v3979, 7
    %v3981 = vsub.s32 %v3978, %v3980
    %v3982 = vrot.slane %v3974, %v3981
    %v3984 = vunpack.c.l.s4 1934713408
    %v3985 = vunpack.c.0.s8 %v3984
    %v3986 = vlaneseq
    %v3987 = vshrl.u32 %v3986, 7
    %v3988 = vsub.s32 %v3985, %v3987
    %v3989 = vrot.slane %v3975, %v3988
    %v3990 = vcombine.low %v3934, %v3966
    %v3991 = vcombine.high %v3934, %v3966
    %v3992 = vcombine.low %v3941, %v3973
    %v3993 = vcombine.high %v3941, %v3973
    %v3994 = vcombine.low %v3950, %v3982
    %v3995 = vcombine.high %v3950, %v3982
    %v3996 = vcombine.low %v3957, %v3989
    %v3997 = vcombine.high %v3957, %v3989
    %vm3998 = vcmask 130048
    %v4000 = vsel %vm3998, %v1230, 0
    %v4003 = vsel %vm3998, %v1366, 0
    %v4006 = vsel %vm3998, %v2406, 0
    %v4009 = vsel %vm3998, %v2542, 0
    %4011 = vmatprep.subr.mxu0 0.0
    %4012 = vmatpush1.xpose.msra.mxu0 %v4006
    %4013 = vmatprep.subr.mxu0 0.0
    %4014 = vmatpush1.xpose.msra.mxu0 %v4009
    %4015 = vmatprep.subr.mxu0 0.0
    %4016 = vmatpush1.xpose.msra.mxu0 0.0
    %4017 = vmatprep.subr.mxu0 0.0
    %4018 = vmatpush1.xpose.msra.mxu0 0.0
    %4019 = vmatprep.subr.mxu0 0.0
    %4020 = vmatpush1.xpose.msra.mxu0 0.0
    %4021 = vmatprep.subr.mxu0 0.0
    %4022 = vmatpush1.xpose.msra.mxu0 0.0
    %4023 = vmatprep.subr.mxu0 0.0
    %4024 = vmatpush1.xpose.msra.mxu0 0.0
    %4025 = vmatprep.subr.mxu0 0.0
    %4026 = vmatpush1.xpose.msra.mxu0 0.0
    %4027 = vmatprep.subr.mxu0 0.0
    %4028 = vmatpush1.xpose.msra.mxu0 0.0
    %4029 = vmatprep.subr.mxu0 0.0
    %4030 = vmatpush1.xpose.msra.mxu0 0.0
    %4031 = vmatprep.subr.mxu0 0.0
    %4032 = vmatpush1.xpose.msra.mxu0 0.0
    %4033 = vmatprep.subr.mxu0 0.0
    %4034 = vmatpush1.xpose.msra.mxu0 0.0
    %4035 = vmatprep.subr.mxu0 0.0
    %4036 = vmatpush1.xpose.msra.mxu0 0.0
    %4037 = vmatprep.subr.mxu0 0.0
    %4038 = vmatpush1.xpose.msra.mxu0 0.0
    %4039 = vmatprep.subr.mxu0 0.0
    %4040 = vmatpush1.xpose.msra.mxu0 0.0
    %4041 = vmatprep.subr.mxu0 0.0
    %4042 = vmatpush1.xpose.msra.mxu0 0.0
    %4043 = vmatprep.subr.mxu0 0.0
    %4044 = vmatpush1.xpose.msra.mxu0 0.0
    %4045 = vmatprep.subr.mxu0 0.0
    %4046 = vmatpush1.xpose.msra.mxu0 0.0
    %4047 = vmatprep.subr.mxu0 0.0
    %4048 = vmatpush1.xpose.msra.mxu0 0.0
    %4049 = vmatprep.subr.mxu0 0.0
    %4050 = vmatpush1.xpose.msra.mxu0 0.0
    %4051 = vmatprep.subr.mxu0 0.0
    %4052 = vmatpush1.xpose.msra.mxu0 0.0
    %4053 = vmatprep.subr.mxu0 0.0
    %4054 = vmatpush1.xpose.msra.mxu0 0.0
    %4055 = vmatprep.subr.mxu0 0.0
    %4056 = vmatpush1.xpose.msra.mxu0 0.0
    %4057 = vmatprep.subr.mxu0 0.0
    %4058 = vmatpush1.xpose.msra.mxu0 0.0
    %4059 = vmatprep.subr.mxu0 0.0
    %4060 = vmatpush1.xpose.msra.mxu0 0.0
    %4061 = vmatprep.subr.mxu0 0.0
    %4062 = vmatpush1.xpose.msra.mxu0 0.0
    %4063 = vmatprep.subr.mxu0 0.0
    %4064 = vmatpush1.xpose.msra.mxu0 0.0
    %4065 = vmatprep.subr.mxu0 0.0
    %4066 = vmatpush1.xpose.msra.mxu0 0.0
    %4067 = vmatprep.subr.mxu0 0.0
    %4068 = vmatpush1.xpose.msra.mxu0 0.0
    %4069 = vmatprep.subr.mxu0 0.0
    %4070 = vmatpush1.xpose.msra.mxu0 0.0
    %4071 = vmatprep.subr.mxu0 0.0
    %4072 = vmatpush1.xpose.msra.mxu0 0.0
    %4073 = vmatprep.subr.mxu0 0.0
    %4074 = vmatpush1.xpose.msra.mxu0 0.0
    %4075 = vmatprep.mubr.f32.mxu0 0.0
    %4076 = vmatmul.mubr.f32.gmra.mrb[0].mxu0 %v4000
    %v4077 = vpop.f32.mrb[0].mxu0
    %v4078 = vadd.f32 0.0, %v4077
    %v4079 = vpop.f32.mrb[0].mxu0
    %4080 = vmatprep.mubr.f32.mxu0 0.0
    %4081 = vmatmul.mubr.f32.gmra.mrb[0].mxu0 %v4003
    %v4082 = vpop.f32.mrb[0].mxu0
    %v4083 = vadd.f32 0.0, %v4082
    %v4084 = vpop.f32.mrb[0].mxu0
    %4085 = vdwg.mxu0
    %v4087 = vsel %vm3998, %v1231, 0
    %v4090 = vsel %vm3998, %v1367, 0
    %v4093 = vsel %vm3998, %v2407, 0
    %v4096 = vsel %vm3998, %v2543, 0
    %4098 = vmatprep.subr.mxu0 0.0
    %4099 = vmatpush1.xpose.msra.mxu0 %v4093
    %4100 = vmatprep.subr.mxu0 0.0
    %4101 = vmatpush1.xpose.msra.mxu0 %v4096
    %4102 = vmatprep.subr.mxu0 0.0
    %4103 = vmatpush1.xpose.msra.mxu0 0.0
    %4104 = vmatprep.subr.mxu0 0.0
    %4105 = vmatpush1.xpose.msra.mxu0 0.0
    %4106 = vmatprep.subr.mxu0 0.0
    %4107 = vmatpush1.xpose.msra.mxu0 0.0
    %4108 = vmatprep.subr.mxu0 0.0
    %4109 = vmatpush1.xpose.msra.mxu0 0.0
    %4110 = vmatprep.subr.mxu0 0.0
    %4111 = vmatpush1.xpose.msra.mxu0 0.0
    %4112 = vmatprep.subr.mxu0 0.0
    %4113 = vmatpush1.xpose.msra.mxu0 0.0
    %4114 = vmatprep.subr.mxu0 0.0
    %4115 = vmatpush1.xpose.msra.mxu0 0.0
    %4116 = vmatprep.subr.mxu0 0.0
    %4117 = vmatpush1.xpose.msra.mxu0 0.0
    %4118 = vmatprep.subr.mxu0 0.0
    %4119 = vmatpush1.xpose.msra.mxu0 0.0
    %4120 = vmatprep.subr.mxu0 0.0
    %4121 = vmatpush1.xpose.msra.mxu0 0.0
    %4122 = vmatprep.subr.mxu0 0.0
    %4123 = vmatpush1.xpose.msra.mxu0 0.0
    %4124 = vmatprep.subr.mxu0 0.0
    %4125 = vmatpush1.xpose.msra.mxu0 0.0
    %4126 = vmatprep.subr.mxu0 0.0
    %4127 = vmatpush1.xpose.msra.mxu0 0.0
    %4128 = vmatprep.subr.mxu0 0.0
    %4129 = vmatpush1.xpose.msra.mxu0 0.0
    %4130 = vmatprep.subr.mxu0 0.0
    %4131 = vmatpush1.xpose.msra.mxu0 0.0
    %4132 = vmatprep.subr.mxu0 0.0
    %4133 = vmatpush1.xpose.msra.mxu0 0.0
    %4134 = vmatprep.subr.mxu0 0.0
    %4135 = vmatpush1.xpose.msra.mxu0 0.0
    %4136 = vmatprep.subr.mxu0 0.0
    %4137 = vmatpush1.xpose.msra.mxu0 0.0
    %4138 = vmatprep.subr.mxu0 0.0
    %4139 = vmatpush1.xpose.msra.mxu0 0.0
    %4140 = vmatprep.subr.mxu0 0.0
    %4141 = vmatpush1.xpose.msra.mxu0 0.0
    %4142 = vmatprep.subr.mxu0 0.0
    %4143 = vmatpush1.xpose.msra.mxu0 0.0
    %4144 = vmatprep.subr.mxu0 0.0
    %4145 = vmatpush1.xpose.msra.mxu0 0.0
    %4146 = vmatprep.subr.mxu0 0.0
    %4147 = vmatpush1.xpose.msra.mxu0 0.0
    %4148 = vmatprep.subr.mxu0 0.0
    %4149 = vmatpush1.xpose.msra.mxu0 0.0
    %4150 = vmatprep.subr.mxu0 0.0
    %4151 = vmatpush1.xpose.msra.mxu0 0.0
    %4152 = vmatprep.subr.mxu0 0.0
    %4153 = vmatpush1.xpose.msra.mxu0 0.0
    %4154 = vmatprep.subr.mxu0 0.0
    %4155 = vmatpush1.xpose.msra.mxu0 0.0
    %4156 = vmatprep.subr.mxu0 0.0
    %4157 = vmatpush1.xpose.msra.mxu0 0.0
    %4158 = vmatprep.subr.mxu0 0.0
    %4159 = vmatpush1.xpose.msra.mxu0 0.0
    %4160 = vmatprep.subr.mxu0 0.0
    %4161 = vmatpush1.xpose.msra.mxu0 0.0
    %4162 = vmatprep.mubr.f32.mxu0 0.0
    %4163 = vmatmul.mubr.f32.gmra.mrb[0].mxu0 %v4087
    %v4164 = vpop.f32.mrb[0].mxu0
    %v4165 = vadd.f32 0.0, %v4164
    %v4166 = vpop.f32.mrb[0].mxu0
    %4167 = vmatprep.mubr.f32.mxu0 0.0
    %4168 = vmatmul.mubr.f32.gmra.mrb[0].mxu0 %v4090
    %v4169 = vpop.f32.mrb[0].mxu0
    %v4170 = vadd.f32 0.0, %v4169
    %v4171 = vpop.f32.mrb[0].mxu0
    %4172 = vdwg.mxu0
    %v4174 = vsel %vm3998, %v1232, 0
    %v4177 = vsel %vm3998, %v1368, 0
    %v4180 = vsel %vm3998, %v2408, 0
    %v4183 = vsel %vm3998, %v2544, 0
    %4185 = vmatprep.subr.mxu0 0.0
    %4186 = vmatpush1.xpose.msra.mxu0 %v4180
    %4187 = vmatprep.subr.mxu0 0.0
    %4188 = vmatpush1.xpose.msra.mxu0 %v4183
    %4189 = vmatprep.subr.mxu0 0.0
    %4190 = vmatpush1.xpose.msra.mxu0 0.0
    %4191 = vmatprep.subr.mxu0 0.0
    %4192 = vmatpush1.xpose.msra.mxu0 0.0
    %4193 = vmatprep.subr.mxu0 0.0
    %4194 = vmatpush1.xpose.msra.mxu0 0.0
    %4195 = vmatprep.subr.mxu0 0.0
    %4196 = vmatpush1.xpose.msra.mxu0 0.0
    %4197 = vmatprep.subr.mxu0 0.0
    %4198 = vmatpush1.xpose.msra.mxu0 0.0
    %4199 = vmatprep.subr.mxu0 0.0
    %4200 = vmatpush1.xpose.msra.mxu0 0.0
    %4201 = vmatprep.subr.mxu0 0.0
    %4202 = vmatpush1.xpose.msra.mxu0 0.0
    %4203 = vmatprep.subr.mxu0 0.0
    %4204 = vmatpush1.xpose.msra.mxu0 0.0
    %4205 = vmatprep.subr.mxu0 0.0
    %4206 = vmatpush1.xpose.msra.mxu0 0.0
    %4207 = vmatprep.subr.mxu0 0.0
    %4208 = vmatpush1.xpose.msra.mxu0 0.0
    %4209 = vmatprep.subr.mxu0 0.0
    %4210 = vmatpush1.xpose.msra.mxu0 0.0
    %4211 = vmatprep.subr.mxu0 0.0
    %4212 = vmatpush1.xpose.msra.mxu0 0.0
    %4213 = vmatprep.subr.mxu0 0.0
    %4214 = vmatpush1.xpose.msra.mxu0 0.0
    %4215 = vmatprep.subr.mxu0 0.0
    %4216 = vmatpush1.xpose.msra.mxu0 0.0
    %4217 = vmatprep.subr.mxu0 0.0
    %4218 = vmatpush1.xpose.msra.mxu0 0.0
    %4219 = vmatprep.subr.mxu0 0.0
    %4220 = vmatpush1.xpose.msra.mxu0 0.0
    %4221 = vmatprep.subr.mxu0 0.0
    %4222 = vmatpush1.xpose.msra.mxu0 0.0
    %4223 = vmatprep.subr.mxu0 0.0
    %4224 = vmatpush1.xpose.msra.mxu0 0.0
    %4225 = vmatprep.subr.mxu0 0.0
    %4226 = vmatpush1.xpose.msra.mxu0 0.0
    %4227 = vmatprep.subr.mxu0 0.0
    %4228 = vmatpush1.xpose.msra.mxu0 0.0
    %4229 = vmatprep.subr.mxu0 0.0
    %4230 = vmatpush1.xpose.msra.mxu0 0.0
    %4231 = vmatprep.subr.mxu0 0.0
    %4232 = vmatpush1.xpose.msra.mxu0 0.0
    %4233 = vmatprep.subr.mxu0 0.0
    %4234 = vmatpush1.xpose.msra.mxu0 0.0
    %4235 = vmatprep.subr.mxu0 0.0
    %4236 = vmatpush1.xpose.msra.mxu0 0.0
    %4237 = vmatprep.subr.mxu0 0.0
    %4238 = vmatpush1.xpose.msra.mxu0 0.0
    %4239 = vmatprep.subr.mxu0 0.0
    %4240 = vmatpush1.xpose.msra.mxu0 0.0
    %4241 = vmatprep.subr.mxu0 0.0
    %4242 = vmatpush1.xpose.msra.mxu0 0.0
    %4243 = vmatprep.subr.mxu0 0.0
    %4244 = vmatpush1.xpose.msra.mxu0 0.0
    %4245 = vmatprep.subr.mxu0 0.0
    %4246 = vmatpush1.xpose.msra.mxu0 0.0
    %4247 = vmatprep.subr.mxu0 0.0
    %4248 = vmatpush1.xpose.msra.mxu0 0.0
    %4249 = vmatprep.mubr.f32.mxu0 0.0
    %4250 = vmatmul.mubr.f32.gmra.mrb[0].mxu0 %v4174
    %v4251 = vpop.f32.mrb[0].mxu0
    %v4252 = vadd.f32 0.0, %v4251
    %v4253 = vpop.f32.mrb[0].mxu0
    %4254 = vmatprep.mubr.f32.mxu0 0.0
    %4255 = vmatmul.mubr.f32.gmra.mrb[0].mxu0 %v4177
    %v4256 = vpop.f32.mrb[0].mxu0
    %v4257 = vadd.f32 0.0, %v4256
    %v4258 = vpop.f32.mrb[0].mxu0
    %4259 = vdwg.mxu0
    %v4261 = vsel %vm3998, %v1233, 0
    %v4264 = vsel %vm3998, %v1369, 0
    %v4267 = vsel %vm3998, %v2409, 0
    %v4270 = vsel %vm3998, %v2545, 0
    %4272 = vmatprep.subr.mxu0 0.0
    %4273 = vmatpush1.xpose.msra.mxu0 %v4267
    %4274 = vmatprep.subr.mxu0 0.0
    %4275 = vmatpush1.xpose.msra.mxu0 %v4270
    %4276 = vmatprep.subr.mxu0 0.0
    %4277 = vmatpush1.xpose.msra.mxu0 0.0
    %4278 = vmatprep.subr.mxu0 0.0
    %4279 = vmatpush1.xpose.msra.mxu0 0.0
    %4280 = vmatprep.subr.mxu0 0.0
    %4281 = vmatpush1.xpose.msra.mxu0 0.0
    %4282 = vmatprep.subr.mxu0 0.0
    %4283 = vmatpush1.xpose.msra.mxu0 0.0
    %4284 = vmatprep.subr.mxu0 0.0
    %4285 = vmatpush1.xpose.msra.mxu0 0.0
    %4286 = vmatprep.subr.mxu0 0.0
    %4287 = vmatpush1.xpose.msra.mxu0 0.0
    %4288 = vmatprep.subr.mxu0 0.0
    %4289 = vmatpush1.xpose.msra.mxu0 0.0
    %4290 = vmatprep.subr.mxu0 0.0
    %4291 = vmatpush1.xpose.msra.mxu0 0.0
    %4292 = vmatprep.subr.mxu0 0.0
    %4293 = vmatpush1.xpose.msra.mxu0 0.0
    %4294 = vmatprep.subr.mxu0 0.0
    %4295 = vmatpush1.xpose.msra.mxu0 0.0
    %4296 = vmatprep.subr.mxu0 0.0
    %4297 = vmatpush1.xpose.msra.mxu0 0.0
    %4298 = vmatprep.subr.mxu0 0.0
    %4299 = vmatpush1.xpose.msra.mxu0 0.0
    %4300 = vmatprep.subr.mxu0 0.0
    %4301 = vmatpush1.xpose.msra.mxu0 0.0
    %4302 = vmatprep.subr.mxu0 0.0
    %4303 = vmatpush1.xpose.msra.mxu0 0.0
    %4304 = vmatprep.subr.mxu0 0.0
    %4305 = vmatpush1.xpose.msra.mxu0 0.0
    %4306 = vmatprep.subr.mxu0 0.0
    %4307 = vmatpush1.xpose.msra.mxu0 0.0
    %4308 = vmatprep.subr.mxu0 0.0
    %4309 = vmatpush1.xpose.msra.mxu0 0.0
    %4310 = vmatprep.subr.mxu0 0.0
    %4311 = vmatpush1.xpose.msra.mxu0 0.0
    %4312 = vmatprep.subr.mxu0 0.0
    %4313 = vmatpush1.xpose.msra.mxu0 0.0
    %4314 = vmatprep.subr.mxu0 0.0
    %4315 = vmatpush1.xpose.msra.mxu0 0.0
    %4316 = vmatprep.subr.mxu0 0.0
    %4317 = vmatpush1.xpose.msra.mxu0 0.0
    %4318 = vmatprep.subr.mxu0 0.0
    %4319 = vmatpush1.xpose.msra.mxu0 0.0
    %4320 = vmatprep.subr.mxu0 0.0
    %4321 = vmatpush1.xpose.msra.mxu0 0.0
    %4322 = vmatprep.subr.mxu0 0.0
    %4323 = vmatpush1.xpose.msra.mxu0 0.0
    %4324 = vmatprep.subr.mxu0 0.0
    %4325 = vmatpush1.xpose.msra.mxu0 0.0
    %4326 = vmatprep.subr.mxu0 0.0
    %4327 = vmatpush1.xpose.msra.mxu0 0.0
    %4328 = vmatprep.subr.mxu0 0.0
    %4329 = vmatpush1.xpose.msra.mxu0 0.0
    %4330 = vmatprep.subr.mxu0 0.0
    %4331 = vmatpush1.xpose.msra.mxu0 0.0
    %4332 = vmatprep.subr.mxu0 0.0
    %4333 = vmatpush1.xpose.msra.mxu0 0.0
    %4334 = vmatprep.subr.mxu0 0.0
    %4335 = vmatpush1.xpose.msra.mxu0 0.0
    %4336 = vmatprep.mubr.f32.mxu0 0.0
    %4337 = vmatmul.mubr.f32.gmra.mrb[0].mxu0 %v4261
    %v4338 = vpop.f32.mrb[0].mxu0
    %v4339 = vadd.f32 0.0, %v4338
    %v4340 = vpop.f32.mrb[0].mxu0
    %4341 = vmatprep.mubr.f32.mxu0 0.0
    %4342 = vmatmul.mubr.f32.gmra.mrb[0].mxu0 %v4264
    %v4343 = vpop.f32.mrb[0].mxu0
    %v4344 = vadd.f32 0.0, %v4343
    %v4345 = vpop.f32.mrb[0].mxu0
    %4346 = vdwg.mxu0
    %v4348 = vsel %vm3998, %v1234, 0
    %v4351 = vsel %vm3998, %v1370, 0
    %v4354 = vsel %vm3998, %v2410, 0
    %v4357 = vsel %vm3998, %v2546, 0
    %4359 = vmatprep.subr.mxu0 0.0
    %4360 = vmatpush1.xpose.msra.mxu0 %v4354
    %4361 = vmatprep.subr.mxu0 0.0
    %4362 = vmatpush1.xpose.msra.mxu0 %v4357
    %4363 = vmatprep.subr.mxu0 0.0
    %4364 = vmatpush1.xpose.msra.mxu0 0.0
    %4365 = vmatprep.subr.mxu0 0.0
    %4366 = vmatpush1.xpose.msra.mxu0 0.0
    %4367 = vmatprep.subr.mxu0 0.0
    %4368 = vmatpush1.xpose.msra.mxu0 0.0
    %4369 = vmatprep.subr.mxu0 0.0
    %4370 = vmatpush1.xpose.msra.mxu0 0.0
    %4371 = vmatprep.subr.mxu0 0.0
    %4372 = vmatpush1.xpose.msra.mxu0 0.0
    %4373 = vmatprep.subr.mxu0 0.0
    %4374 = vmatpush1.xpose.msra.mxu0 0.0
    %4375 = vmatprep.subr.mxu0 0.0
    %4376 = vmatpush1.xpose.msra.mxu0 0.0
    %4377 = vmatprep.subr.mxu0 0.0
    %4378 = vmatpush1.xpose.msra.mxu0 0.0
    %4379 = vmatprep.subr.mxu0 0.0
    %4380 = vmatpush1.xpose.msra.mxu0 0.0
    %4381 = vmatprep.subr.mxu0 0.0
    %4382 = vmatpush1.xpose.msra.mxu0 0.0
    %4383 = vmatprep.subr.mxu0 0.0
    %4384 = vmatpush1.xpose.msra.mxu0 0.0
    %4385 = vmatprep.subr.mxu0 0.0
    %4386 = vmatpush1.xpose.msra.mxu0 0.0
    %4387 = vmatprep.subr.mxu0 0.0
    %4388 = vmatpush1.xpose.msra.mxu0 0.0
    %4389 = vmatprep.subr.mxu0 0.0
    %4390 = vmatpush1.xpose.msra.mxu0 0.0
    %4391 = vmatprep.subr.mxu0 0.0
    %4392 = vmatpush1.xpose.msra.mxu0 0.0
    %4393 = vmatprep.subr.mxu0 0.0
    %4394 = vmatpush1.xpose.msra.mxu0 0.0
    %4395 = vmatprep.subr.mxu0 0.0
    %4396 = vmatpush1.xpose.msra.mxu0 0.0
    %4397 = vmatprep.subr.mxu0 0.0
    %4398 = vmatpush1.xpose.msra.mxu0 0.0
    %4399 = vmatprep.subr.mxu0 0.0
    %4400 = vmatpush1.xpose.msra.mxu0 0.0
    %4401 = vmatprep.subr.mxu0 0.0
    %4402 = vmatpush1.xpose.msra.mxu0 0.0
    %4403 = vmatprep.subr.mxu0 0.0
    %4404 = vmatpush1.xpose.msra.mxu0 0.0
    %4405 = vmatprep.subr.mxu0 0.0
    %4406 = vmatpush1.xpose.msra.mxu0 0.0
    %4407 = vmatprep.subr.mxu0 0.0
    %4408 = vmatpush1.xpose.msra.mxu0 0.0
    %4409 = vmatprep.subr.mxu0 0.0
    %4410 = vmatpush1.xpose.msra.mxu0 0.0
    %4411 = vmatprep.subr.mxu0 0.0
    %4412 = vmatpush1.xpose.msra.mxu0 0.0
    %4413 = vmatprep.subr.mxu0 0.0
    %4414 = vmatpush1.xpose.msra.mxu0 0.0
    %4415 = vmatprep.subr.mxu0 0.0
    %4416 = vmatpush1.xpose.msra.mxu0 0.0
    %4417 = vmatprep.subr.mxu0 0.0
    %4418 = vmatpush1.xpose.msra.mxu0 0.0
    %4419 = vmatprep.subr.mxu0 0.0
    %4420 = vmatpush1.xpose.msra.mxu0 0.0
    %4421 = vmatprep.subr.mxu0 0.0
    %4422 = vmatpush1.xpose.msra.mxu0 0.0
    %4423 = vmatprep.mubr.f32.mxu0 0.0
    %4424 = vmatmul.mubr.f32.gmra.mrb[0].mxu0 %v4348
    %v4425 = vpop.f32.mrb[0].mxu0
    %v4426 = vadd.f32 0.0, %v4425
    %v4427 = vpop.f32.mrb[0].mxu0
    %4428 = vmatprep.mubr.f32.mxu0 0.0
    %4429 = vmatmul.mubr.f32.gmra.mrb[0].mxu0 %v4351
    %v4430 = vpop.f32.mrb[0].mxu0
    %v4431 = vadd.f32 0.0, %v4430
    %v4432 = vpop.f32.mrb[0].mxu0
    %4433 = vdwg.mxu0
    %v4435 = vsel %vm3998, %v1235, 0
    %v4438 = vsel %vm3998, %v1371, 0
    %v4441 = vsel %vm3998, %v2411, 0
    %v4444 = vsel %vm3998, %v2547, 0
    %4446 = vmatprep.subr.mxu0 0.0
    %4447 = vmatpush1.xpose.msra.mxu0 %v4441
    %4448 = vmatprep.subr.mxu0 0.0
    %4449 = vmatpush1.xpose.msra.mxu0 %v4444
    %4450 = vmatprep.subr.mxu0 0.0
    %4451 = vmatpush1.xpose.msra.mxu0 0.0
    %4452 = vmatprep.subr.mxu0 0.0
    %4453 = vmatpush1.xpose.msra.mxu0 0.0
    %4454 = vmatprep.subr.mxu0 0.0
    %4455 = vmatpush1.xpose.msra.mxu0 0.0
    %4456 = vmatprep.subr.mxu0 0.0
    %4457 = vmatpush1.xpose.msra.mxu0 0.0
    %4458 = vmatprep.subr.mxu0 0.0
    %4459 = vmatpush1.xpose.msra.mxu0 0.0
    %4460 = vmatprep.subr.mxu0 0.0
    %4461 = vmatpush1.xpose.msra.mxu0 0.0
    %4462 = vmatprep.subr.mxu0 0.0
    %4463 = vmatpush1.xpose.msra.mxu0 0.0
    %4464 = vmatprep.subr.mxu0 0.0
    %4465 = vmatpush1.xpose.msra.mxu0 0.0
    %4466 = vmatprep.subr.mxu0 0.0
    %4467 = vmatpush1.xpose.msra.mxu0 0.0
    %4468 = vmatprep.subr.mxu0 0.0
    %4469 = vmatpush1.xpose.msra.mxu0 0.0
    %4470 = vmatprep.subr.mxu0 0.0
    %4471 = vmatpush1.xpose.msra.mxu0 0.0
    %4472 = vmatprep.subr.mxu0 0.0
    %4473 = vmatpush1.xpose.msra.mxu0 0.0
    %4474 = vmatprep.subr.mxu0 0.0
    %4475 = vmatpush1.xpose.msra.mxu0 0.0
    %4476 = vmatprep.subr.mxu0 0.0
    %4477 = vmatpush1.xpose.msra.mxu0 0.0
    %4478 = vmatprep.subr.mxu0 0.0
    %4479 = vmatpush1.xpose.msra.mxu0 0.0
    %4480 = vmatprep.subr.mxu0 0.0
    %4481 = vmatpush1.xpose.msra.mxu0 0.0
    %4482 = vmatprep.subr.mxu0 0.0
    %4483 = vmatpush1.xpose.msra.mxu0 0.0
    %4484 = vmatprep.subr.mxu0 0.0
    %4485 = vmatpush1.xpose.msra.mxu0 0.0
    %4486 = vmatprep.subr.mxu0 0.0
    %4487 = vmatpush1.xpose.msra.mxu0 0.0
    %4488 = vmatprep.subr.mxu0 0.0
    %4489 = vmatpush1.xpose.msra.mxu0 0.0
    %4490 = vmatprep.subr.mxu0 0.0
    %4491 = vmatpush1.xpose.msra.mxu0 0.0
    %4492 = vmatprep.subr.mxu0 0.0
    %4493 = vmatpush1.xpose.msra.mxu0 0.0
    %4494 = vmatprep.subr.mxu0 0.0
    %4495 = vmatpush1.xpose.msra.mxu0 0.0
    %4496 = vmatprep.subr.mxu0 0.0
    %4497 = vmatpush1.xpose.msra.mxu0 0.0
    %4498 = vmatprep.subr.mxu0 0.0
    %4499 = vmatpush1.xpose.msra.mxu0 0.0
    %4500 = vmatprep.subr.mxu0 0.0
    %4501 = vmatpush1.xpose.msra.mxu0 0.0
    %4502 = vmatprep.subr.mxu0 0.0
    %4503 = vmatpush1.xpose.msra.mxu0 0.0
    %4504 = vmatprep.subr.mxu0 0.0
    %4505 = vmatpush1.xpose.msra.mxu0 0.0
    %4506 = vmatprep.subr.mxu0 0.0
    %4507 = vmatpush1.xpose.msra.mxu0 0.0
    %4508 = vmatprep.subr.mxu0 0.0
    %4509 = vmatpush1.xpose.msra.mxu0 0.0
    %4510 = vmatprep.mubr.f32.mxu0 0.0
    %4511 = vmatmul.mubr.f32.gmra.mrb[0].mxu0 %v4435
    %v4512 = vpop.f32.mrb[0].mxu0
    %v4513 = vadd.f32 0.0, %v4512
    %v4514 = vpop.f32.mrb[0].mxu0
    %4515 = vmatprep.mubr.f32.mxu0 0.0
    %4516 = vmatmul.mubr.f32.gmra.mrb[0].mxu0 %v4438
    %v4517 = vpop.f32.mrb[0].mxu0
    %v4518 = vadd.f32 0.0, %v4517
    %v4519 = vpop.f32.mrb[0].mxu0
    %4520 = vdwg.mxu0
    %v4522 = vsel %vm3998, %v1236, 0
    %v4525 = vsel %vm3998, %v1372, 0
    %v4528 = vsel %vm3998, %v2412, 0
    %v4531 = vsel %vm3998, %v2548, 0
    %4533 = vmatprep.subr.mxu0 0.0
    %4534 = vmatpush1.xpose.msra.mxu0 %v4528
    %4535 = vmatprep.subr.mxu0 0.0
    %4536 = vmatpush1.xpose.msra.mxu0 %v4531
    %4537 = vmatprep.subr.mxu0 0.0
    %4538 = vmatpush1.xpose.msra.mxu0 0.0
    %4539 = vmatprep.subr.mxu0 0.0
    %4540 = vmatpush1.xpose.msra.mxu0 0.0
    %4541 = vmatprep.subr.mxu0 0.0
    %4542 = vmatpush1.xpose.msra.mxu0 0.0
    %4543 = vmatprep.subr.mxu0 0.0
    %4544 = vmatpush1.xpose.msra.mxu0 0.0
    %4545 = vmatprep.subr.mxu0 0.0
    %4546 = vmatpush1.xpose.msra.mxu0 0.0
    %4547 = vmatprep.subr.mxu0 0.0
    %4548 = vmatpush1.xpose.msra.mxu0 0.0
    %4549 = vmatprep.subr.mxu0 0.0
    %4550 = vmatpush1.xpose.msra.mxu0 0.0
    %4551 = vmatprep.subr.mxu0 0.0
    %4552 = vmatpush1.xpose.msra.mxu0 0.0
    %4553 = vmatprep.subr.mxu0 0.0
    %4554 = vmatpush1.xpose.msra.mxu0 0.0
    %4555 = vmatprep.subr.mxu0 0.0
    %4556 = vmatpush1.xpose.msra.mxu0 0.0
    %4557 = vmatprep.subr.mxu0 0.0
    %4558 = vmatpush1.xpose.msra.mxu0 0.0
    %4559 = vmatprep.subr.mxu0 0.0
    %4560 = vmatpush1.xpose.msra.mxu0 0.0
    %4561 = vmatprep.subr.mxu0 0.0
    %4562 = vmatpush1.xpose.msra.mxu0 0.0
    %4563 = vmatprep.subr.mxu0 0.0
    %4564 = vmatpush1.xpose.msra.mxu0 0.0
    %4565 = vmatprep.subr.mxu0 0.0
    %4566 = vmatpush1.xpose.msra.mxu0 0.0
    %4567 = vmatprep.subr.mxu0 0.0
    %4568 = vmatpush1.xpose.msra.mxu0 0.0
    %4569 = vmatprep.subr.mxu0 0.0
    %4570 = vmatpush1.xpose.msra.mxu0 0.0
    %4571 = vmatprep.subr.mxu0 0.0
    %4572 = vmatpush1.xpose.msra.mxu0 0.0
    %4573 = vmatprep.subr.mxu0 0.0
    %4574 = vmatpush1.xpose.msra.mxu0 0.0
    %4575 = vmatprep.subr.mxu0 0.0
    %4576 = vmatpush1.xpose.msra.mxu0 0.0
    %4577 = vmatprep.subr.mxu0 0.0
    %4578 = vmatpush1.xpose.msra.mxu0 0.0
    %4579 = vmatprep.subr.mxu0 0.0
    %4580 = vmatpush1.xpose.msra.mxu0 0.0
    %4581 = vmatprep.subr.mxu0 0.0
    %4582 = vmatpush1.xpose.msra.mxu0 0.0
    %4583 = vmatprep.subr.mxu0 0.0
    %4584 = vmatpush1.xpose.msra.mxu0 0.0
    %4585 = vmatprep.subr.mxu0 0.0
    %4586 = vmatpush1.xpose.msra.mxu0 0.0
    %4587 = vmatprep.subr.mxu0 0.0
    %4588 = vmatpush1.xpose.msra.mxu0 0.0
    %4589 = vmatprep.subr.mxu0 0.0
    %4590 = vmatpush1.xpose.msra.mxu0 0.0
    %4591 = vmatprep.subr.mxu0 0.0
    %4592 = vmatpush1.xpose.msra.mxu0 0.0
    %4593 = vmatprep.subr.mxu0 0.0
    %4594 = vmatpush1.xpose.msra.mxu0 0.0
    %4595 = vmatprep.subr.mxu0 0.0
    %4596 = vmatpush1.xpose.msra.mxu0 0.0
    %4597 = vmatprep.mubr.f32.mxu0 0.0
    %4598 = vmatmul.mubr.f32.gmra.mrb[0].mxu0 %v4522
    %v4599 = vpop.f32.mrb[0].mxu0
    %v4600 = vadd.f32 0.0, %v4599
    %v4601 = vpop.f32.mrb[0].mxu0
    %4602 = vmatprep.mubr.f32.mxu0 0.0
    %4603 = vmatmul.mubr.f32.gmra.mrb[0].mxu0 %v4525
    %v4604 = vpop.f32.mrb[0].mxu0
    %v4605 = vadd.f32 0.0, %v4604
    %v4606 = vpop.f32.mrb[0].mxu0
    %4607 = vdwg.mxu0
    %v4609 = vsel %vm3998, %v1237, 0
    %v4612 = vsel %vm3998, %v1373, 0
    %v4615 = vsel %vm3998, %v2413, 0
    %v4618 = vsel %vm3998, %v2549, 0
    %4620 = vmatprep.subr.mxu0 0.0
    %4621 = vmatpush1.xpose.msra.mxu0 %v4615
    %4622 = vmatprep.subr.mxu0 0.0
    %4623 = vmatpush1.xpose.msra.mxu0 %v4618
    %4624 = vmatprep.subr.mxu0 0.0
    %4625 = vmatpush1.xpose.msra.mxu0 0.0
    %4626 = vmatprep.subr.mxu0 0.0
    %4627 = vmatpush1.xpose.msra.mxu0 0.0
    %4628 = vmatprep.subr.mxu0 0.0
    %4629 = vmatpush1.xpose.msra.mxu0 0.0
    %4630 = vmatprep.subr.mxu0 0.0
    %4631 = vmatpush1.xpose.msra.mxu0 0.0
    %4632 = vmatprep.subr.mxu0 0.0
    %4633 = vmatpush1.xpose.msra.mxu0 0.0
    %4634 = vmatprep.subr.mxu0 0.0
    %4635 = vmatpush1.xpose.msra.mxu0 0.0
    %4636 = vmatprep.subr.mxu0 0.0
    %4637 = vmatpush1.xpose.msra.mxu0 0.0
    %4638 = vmatprep.subr.mxu0 0.0
    %4639 = vmatpush1.xpose.msra.mxu0 0.0
    %4640 = vmatprep.subr.mxu0 0.0
    %4641 = vmatpush1.xpose.msra.mxu0 0.0
    %4642 = vmatprep.subr.mxu0 0.0
    %4643 = vmatpush1.xpose.msra.mxu0 0.0
    %4644 = vmatprep.subr.mxu0 0.0
    %4645 = vmatpush1.xpose.msra.mxu0 0.0
    %4646 = vmatprep.subr.mxu0 0.0
    %4647 = vmatpush1.xpose.msra.mxu0 0.0
    %4648 = vmatprep.subr.mxu0 0.0
    %4649 = vmatpush1.xpose.msra.mxu0 0.0
    %4650 = vmatprep.subr.mxu0 0.0
    %4651 = vmatpush1.xpose.msra.mxu0 0.0
    %4652 = vmatprep.subr.mxu0 0.0
    %4653 = vmatpush1.xpose.msra.mxu0 0.0
    %4654 = vmatprep.subr.mxu0 0.0
    %4655 = vmatpush1.xpose.msra.mxu0 0.0
    %4656 = vmatprep.subr.mxu0 0.0
    %4657 = vmatpush1.xpose.msra.mxu0 0.0
    %4658 = vmatprep.subr.mxu0 0.0
    %4659 = vmatpush1.xpose.msra.mxu0 0.0
    %4660 = vmatprep.subr.mxu0 0.0
    %4661 = vmatpush1.xpose.msra.mxu0 0.0
    %4662 = vmatprep.subr.mxu0 0.0
    %4663 = vmatpush1.xpose.msra.mxu0 0.0
    %4664 = vmatprep.subr.mxu0 0.0
    %4665 = vmatpush1.xpose.msra.mxu0 0.0
    %4666 = vmatprep.subr.mxu0 0.0
    %4667 = vmatpush1.xpose.msra.mxu0 0.0
    %4668 = vmatprep.subr.mxu0 0.0
    %4669 = vmatpush1.xpose.msra.mxu0 0.0
    %4670 = vmatprep.subr.mxu0 0.0
    %4671 = vmatpush1.xpose.msra.mxu0 0.0
    %4672 = vmatprep.subr.mxu0 0.0
    %4673 = vmatpush1.xpose.msra.mxu0 0.0
    %4674 = vmatprep.subr.mxu0 0.0
    %4675 = vmatpush1.xpose.msra.mxu0 0.0
    %4676 = vmatprep.subr.mxu0 0.0
    %4677 = vmatpush1.xpose.msra.mxu0 0.0
    %4678 = vmatprep.subr.mxu0 0.0
    %4679 = vmatpush1.xpose.msra.mxu0 0.0
    %4680 = vmatprep.subr.mxu0 0.0
    %4681 = vmatpush1.xpose.msra.mxu0 0.0
    %4682 = vmatprep.subr.mxu0 0.0
    %4683 = vmatpush1.xpose.msra.mxu0 0.0
    %4684 = vmatprep.mubr.f32.mxu0 0.0
    %4685 = vmatmul.mubr.f32.gmra.mrb[0].mxu0 %v4609
    %v4686 = vpop.f32.mrb[0].mxu0
    %v4687 = vadd.f32 0.0, %v4686
    %v4688 = vpop.f32.mrb[0].mxu0
    %4689 = vmatprep.mubr.f32.mxu0 0.0
    %4690 = vmatmul.mubr.f32.gmra.mrb[0].mxu0 %v4612
    %v4691 = vpop.f32.mrb[0].mxu0
    %v4692 = vadd.f32 0.0, %v4691
    %v4693 = vpop.f32.mrb[0].mxu0
    %4694 = vdwg.mxu0
    %v4696 = vsel %vm3998, %v1502, 0
    %v4699 = vsel %vm3998, %v1638, 0
    %v4702 = vsel %vm3998, %v2678, 0
    %v4705 = vsel %vm3998, %v2814, 0
    %4707 = vmatprep.subr.mxu0 0.0
    %4708 = vmatpush1.xpose.msra.mxu0 %v4702
    %4709 = vmatprep.subr.mxu0 0.0
    %4710 = vmatpush1.xpose.msra.mxu0 %v4705
    %4711 = vmatprep.subr.mxu0 0.0
    %4712 = vmatpush1.xpose.msra.mxu0 0.0
    %4713 = vmatprep.subr.mxu0 0.0
    %4714 = vmatpush1.xpose.msra.mxu0 0.0
    %4715 = vmatprep.subr.mxu0 0.0
    %4716 = vmatpush1.xpose.msra.mxu0 0.0
    %4717 = vmatprep.subr.mxu0 0.0
    %4718 = vmatpush1.xpose.msra.mxu0 0.0
    %4719 = vmatprep.subr.mxu0 0.0
    %4720 = vmatpush1.xpose.msra.mxu0 0.0
    %4721 = vmatprep.subr.mxu0 0.0
    %4722 = vmatpush1.xpose.msra.mxu0 0.0
    %4723 = vmatprep.subr.mxu0 0.0
    %4724 = vmatpush1.xpose.msra.mxu0 0.0
    %4725 = vmatprep.subr.mxu0 0.0
    %4726 = vmatpush1.xpose.msra.mxu0 0.0
    %4727 = vmatprep.subr.mxu0 0.0
    %4728 = vmatpush1.xpose.msra.mxu0 0.0
    %4729 = vmatprep.subr.mxu0 0.0
    %4730 = vmatpush1.xpose.msra.mxu0 0.0
    %4731 = vmatprep.subr.mxu0 0.0
    %4732 = vmatpush1.xpose.msra.mxu0 0.0
    %4733 = vmatprep.subr.mxu0 0.0
    %4734 = vmatpush1.xpose.msra.mxu0 0.0
    %4735 = vmatprep.subr.mxu0 0.0
    %4736 = vmatpush1.xpose.msra.mxu0 0.0
    %4737 = vmatprep.subr.mxu0 0.0
    %4738 = vmatpush1.xpose.msra.mxu0 0.0
    %4739 = vmatprep.subr.mxu0 0.0
    %4740 = vmatpush1.xpose.msra.mxu0 0.0
    %4741 = vmatprep.subr.mxu0 0.0
    %4742 = vmatpush1.xpose.msra.mxu0 0.0
    %4743 = vmatprep.subr.mxu0 0.0
    %4744 = vmatpush1.xpose.msra.mxu0 0.0
    %4745 = vmatprep.subr.mxu0 0.0
    %4746 = vmatpush1.xpose.msra.mxu0 0.0
    %4747 = vmatprep.subr.mxu0 0.0
    %4748 = vmatpush1.xpose.msra.mxu0 0.0
    %4749 = vmatprep.subr.mxu0 0.0
    %4750 = vmatpush1.xpose.msra.mxu0 0.0
    %4751 = vmatprep.subr.mxu0 0.0
    %4752 = vmatpush1.xpose.msra.mxu0 0.0
    %4753 = vmatprep.subr.mxu0 0.0
    %4754 = vmatpush1.xpose.msra.mxu0 0.0
    %4755 = vmatprep.subr.mxu0 0.0
    %4756 = vmatpush1.xpose.msra.mxu0 0.0
    %4757 = vmatprep.subr.mxu0 0.0
    %4758 = vmatpush1.xpose.msra.mxu0 0.0
    %4759 = vmatprep.subr.mxu0 0.0
    %4760 = vmatpush1.xpose.msra.mxu0 0.0
    %4761 = vmatprep.subr.mxu0 0.0
    %4762 = vmatpush1.xpose.msra.mxu0 0.0
    %4763 = vmatprep.subr.mxu0 0.0
    %4764 = vmatpush1.xpose.msra.mxu0 0.0
    %4765 = vmatprep.subr.mxu0 0.0
    %4766 = vmatpush1.xpose.msra.mxu0 0.0
    %4767 = vmatprep.subr.mxu0 0.0
    %4768 = vmatpush1.xpose.msra.mxu0 0.0
    %4769 = vmatprep.subr.mxu0 0.0
    %4770 = vmatpush1.xpose.msra.mxu0 0.0
    %4771 = vmatprep.mubr.f32.mxu0 0.0
    %4772 = vmatmul.mubr.f32.gmra.mrb[0].mxu0 %v4696
    %v4773 = vpop.f32.mrb[0].mxu0
    %v4774 = vadd.f32 0.0, %v4773
    %v4775 = vpop.f32.mrb[0].mxu0
    %4776 = vmatprep.mubr.f32.mxu0 0.0
    %4777 = vmatmul.mubr.f32.gmra.mrb[0].mxu0 %v4699
    %v4778 = vpop.f32.mrb[0].mxu0
    %v4779 = vadd.f32 0.0, %v4778
    %v4780 = vpop.f32.mrb[0].mxu0
    %4781 = vdwg.mxu0
    %v4783 = vsel %vm3998, %v1503, 0
    %v4786 = vsel %vm3998, %v1639, 0
    %v4789 = vsel %vm3998, %v2679, 0
    %v4792 = vsel %vm3998, %v2815, 0
    %4794 = vmatprep.subr.mxu0 0.0
    %4795 = vmatpush1.xpose.msra.mxu0 %v4789
    %4796 = vmatprep.subr.mxu0 0.0
    %4797 = vmatpush1.xpose.msra.mxu0 %v4792
    %4798 = vmatprep.subr.mxu0 0.0
    %4799 = vmatpush1.xpose.msra.mxu0 0.0
    %4800 = vmatprep.subr.mxu0 0.0
    %4801 = vmatpush1.xpose.msra.mxu0 0.0
    %4802 = vmatprep.subr.mxu0 0.0
    %4803 = vmatpush1.xpose.msra.mxu0 0.0
    %4804 = vmatprep.subr.mxu0 0.0
    %4805 = vmatpush1.xpose.msra.mxu0 0.0
    %4806 = vmatprep.subr.mxu0 0.0
    %4807 = vmatpush1.xpose.msra.mxu0 0.0
    %4808 = vmatprep.subr.mxu0 0.0
    %4809 = vmatpush1.xpose.msra.mxu0 0.0
    %4810 = vmatprep.subr.mxu0 0.0
    %4811 = vmatpush1.xpose.msra.mxu0 0.0
    %4812 = vmatprep.subr.mxu0 0.0
    %4813 = vmatpush1.xpose.msra.mxu0 0.0
    %4814 = vmatprep.subr.mxu0 0.0
    %4815 = vmatpush1.xpose.msra.mxu0 0.0
    %4816 = vmatprep.subr.mxu0 0.0
    %4817 = vmatpush1.xpose.msra.mxu0 0.0
    %4818 = vmatprep.subr.mxu0 0.0
    %4819 = vmatpush1.xpose.msra.mxu0 0.0
    %4820 = vmatprep.subr.mxu0 0.0
    %4821 = vmatpush1.xpose.msra.mxu0 0.0
    %4822 = vmatprep.subr.mxu0 0.0
    %4823 = vmatpush1.xpose.msra.mxu0 0.0
    %4824 = vmatprep.subr.mxu0 0.0
    %4825 = vmatpush1.xpose.msra.mxu0 0.0
    %4826 = vmatprep.subr.mxu0 0.0
    %4827 = vmatpush1.xpose.msra.mxu0 0.0
    %4828 = vmatprep.subr.mxu0 0.0
    %4829 = vmatpush1.xpose.msra.mxu0 0.0
    %4830 = vmatprep.subr.mxu0 0.0
    %4831 = vmatpush1.xpose.msra.mxu0 0.0
    %4832 = vmatprep.subr.mxu0 0.0
    %4833 = vmatpush1.xpose.msra.mxu0 0.0
    %4834 = vmatprep.subr.mxu0 0.0
    %4835 = vmatpush1.xpose.msra.mxu0 0.0
    %4836 = vmatprep.subr.mxu0 0.0
    %4837 = vmatpush1.xpose.msra.mxu0 0.0
    %4838 = vmatprep.subr.mxu0 0.0
    %4839 = vmatpush1.xpose.msra.mxu0 0.0
    %4840 = vmatprep.subr.mxu0 0.0
    %4841 = vmatpush1.xpose.msra.mxu0 0.0
    %4842 = vmatprep.subr.mxu0 0.0
    %4843 = vmatpush1.xpose.msra.mxu0 0.0
    %4844 = vmatprep.subr.mxu0 0.0
    %4845 = vmatpush1.xpose.msra.mxu0 0.0
    %4846 = vmatprep.subr.mxu0 0.0
    %4847 = vmatpush1.xpose.msra.mxu0 0.0
    %4848 = vmatprep.subr.mxu0 0.0
    %4849 = vmatpush1.xpose.msra.mxu0 0.0
    %4850 = vmatprep.subr.mxu0 0.0
    %4851 = vmatpush1.xpose.msra.mxu0 0.0
    %4852 = vmatprep.subr.mxu0 0.0
    %4853 = vmatpush1.xpose.msra.mxu0 0.0
    %4854 = vmatprep.subr.mxu0 0.0
    %4855 = vmatpush1.xpose.msra.mxu0 0.0
    %4856 = vmatprep.subr.mxu0 0.0
    %4857 = vmatpush1.xpose.msra.mxu0 0.0
    %4858 = vmatprep.mubr.f32.mxu0 0.0
    %4859 = vmatmul.mubr.f32.gmra.mrb[0].mxu0 %v4783
    %v4860 = vpop.f32.mrb[0].mxu0
    %v4861 = vadd.f32 0.0, %v4860
    %v4862 = vpop.f32.mrb[0].mxu0
    %4863 = vmatprep.mubr.f32.mxu0 0.0
    %4864 = vmatmul.mubr.f32.gmra.mrb[0].mxu0 %v4786
    %v4865 = vpop.f32.mrb[0].mxu0
    %v4866 = vadd.f32 0.0, %v4865
    %v4867 = vpop.f32.mrb[0].mxu0
    %4868 = vdwg.mxu0
    %v4870 = vsel %vm3998, %v1504, 0
    %v4873 = vsel %vm3998, %v1640, 0
    %v4876 = vsel %vm3998, %v2680, 0
    %v4879 = vsel %vm3998, %v2816, 0
    %4881 = vmatprep.subr.mxu0 0.0
    %4882 = vmatpush1.xpose.msra.mxu0 %v4876
    %4883 = vmatprep.subr.mxu0 0.0
    %4884 = vmatpush1.xpose.msra.mxu0 %v4879
    %4885 = vmatprep.subr.mxu0 0.0
    %4886 = vmatpush1.xpose.msra.mxu0 0.0
    %4887 = vmatprep.subr.mxu0 0.0
    %4888 = vmatpush1.xpose.msra.mxu0 0.0
    %4889 = vmatprep.subr.mxu0 0.0
    %4890 = vmatpush1.xpose.msra.mxu0 0.0
    %4891 = vmatprep.subr.mxu0 0.0
    %4892 = vmatpush1.xpose.msra.mxu0 0.0
    %4893 = vmatprep.subr.mxu0 0.0
    %4894 = vmatpush1.xpose.msra.mxu0 0.0
    %4895 = vmatprep.subr.mxu0 0.0
    %4896 = vmatpush1.xpose.msra.mxu0 0.0
    %4897 = vmatprep.subr.mxu0 0.0
    %4898 = vmatpush1.xpose.msra.mxu0 0.0
    %4899 = vmatprep.subr.mxu0 0.0
    %4900 = vmatpush1.xpose.msra.mxu0 0.0
    %4901 = vmatprep.subr.mxu0 0.0
    %4902 = vmatpush1.xpose.msra.mxu0 0.0
    %4903 = vmatprep.subr.mxu0 0.0
    %4904 = vmatpush1.xpose.msra.mxu0 0.0
    %4905 = vmatprep.subr.mxu0 0.0
    %4906 = vmatpush1.xpose.msra.mxu0 0.0
    %4907 = vmatprep.subr.mxu0 0.0
    %4908 = vmatpush1.xpose.msra.mxu0 0.0
    %4909 = vmatprep.subr.mxu0 0.0
    %4910 = vmatpush1.xpose.msra.mxu0 0.0
    %4911 = vmatprep.subr.mxu0 0.0
    %4912 = vmatpush1.xpose.msra.mxu0 0.0
    %4913 = vmatprep.subr.mxu0 0.0
    %4914 = vmatpush1.xpose.msra.mxu0 0.0
    %4915 = vmatprep.subr.mxu0 0.0
    %4916 = vmatpush1.xpose.msra.mxu0 0.0
    %4917 = vmatprep.subr.mxu0 0.0
    %4918 = vmatpush1.xpose.msra.mxu0 0.0
    %4919 = vmatprep.subr.mxu0 0.0
    %4920 = vmatpush1.xpose.msra.mxu0 0.0
    %4921 = vmatprep.subr.mxu0 0.0
    %4922 = vmatpush1.xpose.msra.mxu0 0.0
    %4923 = vmatprep.subr.mxu0 0.0
    %4924 = vmatpush1.xpose.msra.mxu0 0.0
    %4925 = vmatprep.subr.mxu0 0.0
    %4926 = vmatpush1.xpose.msra.mxu0 0.0
    %4927 = vmatprep.subr.mxu0 0.0
    %4928 = vmatpush1.xpose.msra.mxu0 0.0
    %4929 = vmatprep.subr.mxu0 0.0
    %4930 = vmatpush1.xpose.msra.mxu0 0.0
    %4931 = vmatprep.subr.mxu0 0.0
    %4932 = vmatpush1.xpose.msra.mxu0 0.0
    %4933 = vmatprep.subr.mxu0 0.0
    %4934 = vmatpush1.xpose.msra.mxu0 0.0
    %4935 = vmatprep.subr.mxu0 0.0
    %4936 = vmatpush1.xpose.msra.mxu0 0.0
    %4937 = vmatprep.subr.mxu0 0.0
    %4938 = vmatpush1.xpose.msra.mxu0 0.0
    %4939 = vmatprep.subr.mxu0 0.0
    %4940 = vmatpush1.xpose.msra.mxu0 0.0
    %4941 = vmatprep.subr.mxu0 0.0
    %4942 = vmatpush1.xpose.msra.mxu0 0.0
    %4943 = vmatprep.subr.mxu0 0.0
    %4944 = vmatpush1.xpose.msra.mxu0 0.0
    %4945 = vmatprep.mubr.f32.mxu0 0.0
    %4946 = vmatmul.mubr.f32.gmra.mrb[0].mxu0 %v4870
    %v4947 = vpop.f32.mrb[0].mxu0
    %v4948 = vadd.f32 0.0, %v4947
    %v4949 = vpop.f32.mrb[0].mxu0
    %4950 = vmatprep.mubr.f32.mxu0 0.0
    %4951 = vmatmul.mubr.f32.gmra.mrb[0].mxu0 %v4873
    %v4952 = vpop.f32.mrb[0].mxu0
    %v4953 = vadd.f32 0.0, %v4952
    %v4954 = vpop.f32.mrb[0].mxu0
    %4955 = vdwg.mxu0
    %v4957 = vsel %vm3998, %v1505, 0
    %v4960 = vsel %vm3998, %v1641, 0
    %v4963 = vsel %vm3998, %v2681, 0
    %v4966 = vsel %vm3998, %v2817, 0
    %4968 = vmatprep.subr.mxu0 0.0
    %4969 = vmatpush1.xpose.msra.mxu0 %v4963
    %4970 = vmatprep.subr.mxu0 0.0
    %4971 = vmatpush1.xpose.msra.mxu0 %v4966
    %4972 = vmatprep.subr.mxu0 0.0
    %4973 = vmatpush1.xpose.msra.mxu0 0.0
    %4974 = vmatprep.subr.mxu0 0.0
    %4975 = vmatpush1.xpose.msra.mxu0 0.0
    %4976 = vmatprep.subr.mxu0 0.0
    %4977 = vmatpush1.xpose.msra.mxu0 0.0
    %4978 = vmatprep.subr.mxu0 0.0
    %4979 = vmatpush1.xpose.msra.mxu0 0.0
    %4980 = vmatprep.subr.mxu0 0.0
    %4981 = vmatpush1.xpose.msra.mxu0 0.0
    %4982 = vmatprep.subr.mxu0 0.0
    %4983 = vmatpush1.xpose.msra.mxu0 0.0
    %4984 = vmatprep.subr.mxu0 0.0
    %4985 = vmatpush1.xpose.msra.mxu0 0.0
    %4986 = vmatprep.subr.mxu0 0.0
    %4987 = vmatpush1.xpose.msra.mxu0 0.0
    %4988 = vmatprep.subr.mxu0 0.0
    %4989 = vmatpush1.xpose.msra.mxu0 0.0
    %4990 = vmatprep.subr.mxu0 0.0
    %4991 = vmatpush1.xpose.msra.mxu0 0.0
    %4992 = vmatprep.subr.mxu0 0.0
    %4993 = vmatpush1.xpose.msra.mxu0 0.0
    %4994 = vmatprep.subr.mxu0 0.0
    %4995 = vmatpush1.xpose.msra.mxu0 0.0
    %4996 = vmatprep.subr.mxu0 0.0
    %4997 = vmatpush1.xpose.msra.mxu0 0.0
    %4998 = vmatprep.subr.mxu0 0.0
    %4999 = vmatpush1.xpose.msra.mxu0 0.0
    %5000 = vmatprep.subr.mxu0 0.0
    %5001 = vmatpush1.xpose.msra.mxu0 0.0
    %5002 = vmatprep.subr.mxu0 0.0
    %5003 = vmatpush1.xpose.msra.mxu0 0.0
    %5004 = vmatprep.subr.mxu0 0.0
    %5005 = vmatpush1.xpose.msra.mxu0 0.0
    %5006 = vmatprep.subr.mxu0 0.0
    %5007 = vmatpush1.xpose.msra.mxu0 0.0
    %5008 = vmatprep.subr.mxu0 0.0
    %5009 = vmatpush1.xpose.msra.mxu0 0.0
    %5010 = vmatprep.subr.mxu0 0.0
    %5011 = vmatpush1.xpose.msra.mxu0 0.0
    %5012 = vmatprep.subr.mxu0 0.0
    %5013 = vmatpush1.xpose.msra.mxu0 0.0
    %5014 = vmatprep.subr.mxu0 0.0
    %5015 = vmatpush1.xpose.msra.mxu0 0.0
    %5016 = vmatprep.subr.mxu0 0.0
    %5017 = vmatpush1.xpose.msra.mxu0 0.0
    %5018 = vmatprep.subr.mxu0 0.0
    %5019 = vmatpush1.xpose.msra.mxu0 0.0
    %5020 = vmatprep.subr.mxu0 0.0
    %5021 = vmatpush1.xpose.msra.mxu0 0.0
    %5022 = vmatprep.subr.mxu0 0.0
    %5023 = vmatpush1.xpose.msra.mxu0 0.0
    %5024 = vmatprep.subr.mxu0 0.0
    %5025 = vmatpush1.xpose.msra.mxu0 0.0
    %5026 = vmatprep.subr.mxu0 0.0
    %5027 = vmatpush1.xpose.msra.mxu0 0.0
    %5028 = vmatprep.subr.mxu0 0.0
    %5029 = vmatpush1.xpose.msra.mxu0 0.0
    %5030 = vmatprep.subr.mxu0 0.0
    %5031 = vmatpush1.xpose.msra.mxu0 0.0
    %5032 = vmatprep.mubr.f32.mxu0 0.0
    %5033 = vmatmul.mubr.f32.gmra.mrb[0].mxu0 %v4957
    %v5034 = vpop.f32.mrb[0].mxu0
    %v5035 = vadd.f32 0.0, %v5034
    %v5036 = vpop.f32.mrb[0].mxu0
    %5037 = vmatprep.mubr.f32.mxu0 0.0
    %5038 = vmatmul.mubr.f32.gmra.mrb[0].mxu0 %v4960
    %v5039 = vpop.f32.mrb[0].mxu0
    %v5040 = vadd.f32 0.0, %v5039
    %v5041 = vpop.f32.mrb[0].mxu0
    %5042 = vdwg.mxu0
    %v5044 = vsel %vm3998, %v1506, 0
    %v5047 = vsel %vm3998, %v1642, 0
    %v5050 = vsel %vm3998, %v2682, 0
    %v5053 = vsel %vm3998, %v2818, 0
    %5055 = vmatprep.subr.mxu0 0.0
    %5056 = vmatpush1.xpose.msra.mxu0 %v5050
    %5057 = vmatprep.subr.mxu0 0.0
    %5058 = vmatpush1.xpose.msra.mxu0 %v5053
    %5059 = vmatprep.subr.mxu0 0.0
    %5060 = vmatpush1.xpose.msra.mxu0 0.0
    %5061 = vmatprep.subr.mxu0 0.0
    %5062 = vmatpush1.xpose.msra.mxu0 0.0
    %5063 = vmatprep.subr.mxu0 0.0
    %5064 = vmatpush1.xpose.msra.mxu0 0.0
    %5065 = vmatprep.subr.mxu0 0.0
    %5066 = vmatpush1.xpose.msra.mxu0 0.0
    %5067 = vmatprep.subr.mxu0 0.0
    %5068 = vmatpush1.xpose.msra.mxu0 0.0
    %5069 = vmatprep.subr.mxu0 0.0
    %5070 = vmatpush1.xpose.msra.mxu0 0.0
    %5071 = vmatprep.subr.mxu0 0.0
    %5072 = vmatpush1.xpose.msra.mxu0 0.0
    %5073 = vmatprep.subr.mxu0 0.0
    %5074 = vmatpush1.xpose.msra.mxu0 0.0
    %5075 = vmatprep.subr.mxu0 0.0
    %5076 = vmatpush1.xpose.msra.mxu0 0.0
    %5077 = vmatprep.subr.mxu0 0.0
    %5078 = vmatpush1.xpose.msra.mxu0 0.0
    %5079 = vmatprep.subr.mxu0 0.0
    %5080 = vmatpush1.xpose.msra.mxu0 0.0
    %5081 = vmatprep.subr.mxu0 0.0
    %5082 = vmatpush1.xpose.msra.mxu0 0.0
    %5083 = vmatprep.subr.mxu0 0.0
    %5084 = vmatpush1.xpose.msra.mxu0 0.0
    %5085 = vmatprep.subr.mxu0 0.0
    %5086 = vmatpush1.xpose.msra.mxu0 0.0
    %5087 = vmatprep.subr.mxu0 0.0
    %5088 = vmatpush1.xpose.msra.mxu0 0.0
    %5089 = vmatprep.subr.mxu0 0.0
    %5090 = vmatpush1.xpose.msra.mxu0 0.0
    %5091 = vmatprep.subr.mxu0 0.0
    %5092 = vmatpush1.xpose.msra.mxu0 0.0
    %5093 = vmatprep.subr.mxu0 0.0
    %5094 = vmatpush1.xpose.msra.mxu0 0.0
    %5095 = vmatprep.subr.mxu0 0.0
    %5096 = vmatpush1.xpose.msra.mxu0 0.0
    %5097 = vmatprep.subr.mxu0 0.0
    %5098 = vmatpush1.xpose.msra.mxu0 0.0
    %5099 = vmatprep.subr.mxu0 0.0
    %5100 = vmatpush1.xpose.msra.mxu0 0.0
    %5101 = vmatprep.subr.mxu0 0.0
    %5102 = vmatpush1.xpose.msra.mxu0 0.0
    %5103 = vmatprep.subr.mxu0 0.0
    %5104 = vmatpush1.xpose.msra.mxu0 0.0
    %5105 = vmatprep.subr.mxu0 0.0
    %5106 = vmatpush1.xpose.msra.mxu0 0.0
    %5107 = vmatprep.subr.mxu0 0.0
    %5108 = vmatpush1.xpose.msra.mxu0 0.0
    %5109 = vmatprep.subr.mxu0 0.0
    %5110 = vmatpush1.xpose.msra.mxu0 0.0
    %5111 = vmatprep.subr.mxu0 0.0
    %5112 = vmatpush1.xpose.msra.mxu0 0.0
    %5113 = vmatprep.subr.mxu0 0.0
    %5114 = vmatpush1.xpose.msra.mxu0 0.0
    %5115 = vmatprep.subr.mxu0 0.0
    %5116 = vmatpush1.xpose.msra.mxu0 0.0
    %5117 = vmatprep.subr.mxu0 0.0
    %5118 = vmatpush1.xpose.msra.mxu0 0.0
    %5119 = vmatprep.mubr.f32.mxu0 0.0
    %5120 = vmatmul.mubr.f32.gmra.mrb[0].mxu0 %v5044
    %v5121 = vpop.f32.mrb[0].mxu0
    %v5122 = vadd.f32 0.0, %v5121
    %v5123 = vpop.f32.mrb[0].mxu0
    %5124 = vmatprep.mubr.f32.mxu0 0.0
    %5125 = vmatmul.mubr.f32.gmra.mrb[0].mxu0 %v5047
    %v5126 = vpop.f32.mrb[0].mxu0
    %v5127 = vadd.f32 0.0, %v5126
    %v5128 = vpop.f32.mrb[0].mxu0
    %5129 = vdwg.mxu0
    %v5131 = vsel %vm3998, %v1507, 0
    %v5134 = vsel %vm3998, %v1643, 0
    %v5137 = vsel %vm3998, %v2683, 0
    %v5140 = vsel %vm3998, %v2819, 0
    %5142 = vmatprep.subr.mxu0 0.0
    %5143 = vmatpush1.xpose.msra.mxu0 %v5137
    %5144 = vmatprep.subr.mxu0 0.0
    %5145 = vmatpush1.xpose.msra.mxu0 %v5140
    %5146 = vmatprep.subr.mxu0 0.0
    %5147 = vmatpush1.xpose.msra.mxu0 0.0
    %5148 = vmatprep.subr.mxu0 0.0
    %5149 = vmatpush1.xpose.msra.mxu0 0.0
    %5150 = vmatprep.subr.mxu0 0.0
    %5151 = vmatpush1.xpose.msra.mxu0 0.0
    %5152 = vmatprep.subr.mxu0 0.0
    %5153 = vmatpush1.xpose.msra.mxu0 0.0
    %5154 = vmatprep.subr.mxu0 0.0
    %5155 = vmatpush1.xpose.msra.mxu0 0.0
    %5156 = vmatprep.subr.mxu0 0.0
    %5157 = vmatpush1.xpose.msra.mxu0 0.0
    %5158 = vmatprep.subr.mxu0 0.0
    %5159 = vmatpush1.xpose.msra.mxu0 0.0
    %5160 = vmatprep.subr.mxu0 0.0
    %5161 = vmatpush1.xpose.msra.mxu0 0.0
    %5162 = vmatprep.subr.mxu0 0.0
    %5163 = vmatpush1.xpose.msra.mxu0 0.0
    %5164 = vmatprep.subr.mxu0 0.0
    %5165 = vmatpush1.xpose.msra.mxu0 0.0
    %5166 = vmatprep.subr.mxu0 0.0
    %5167 = vmatpush1.xpose.msra.mxu0 0.0
    %5168 = vmatprep.subr.mxu0 0.0
    %5169 = vmatpush1.xpose.msra.mxu0 0.0
    %5170 = vmatprep.subr.mxu0 0.0
    %5171 = vmatpush1.xpose.msra.mxu0 0.0
    %5172 = vmatprep.subr.mxu0 0.0
    %5173 = vmatpush1.xpose.msra.mxu0 0.0
    %5174 = vmatprep.subr.mxu0 0.0
    %5175 = vmatpush1.xpose.msra.mxu0 0.0
    %5176 = vmatprep.subr.mxu0 0.0
    %5177 = vmatpush1.xpose.msra.mxu0 0.0
    %5178 = vmatprep.subr.mxu0 0.0
    %5179 = vmatpush1.xpose.msra.mxu0 0.0
    %5180 = vmatprep.subr.mxu0 0.0
    %5181 = vmatpush1.xpose.msra.mxu0 0.0
    %5182 = vmatprep.subr.mxu0 0.0
    %5183 = vmatpush1.xpose.msra.mxu0 0.0
    %5184 = vmatprep.subr.mxu0 0.0
    %5185 = vmatpush1.xpose.msra.mxu0 0.0
    %5186 = vmatprep.subr.mxu0 0.0
    %5187 = vmatpush1.xpose.msra.mxu0 0.0
    %5188 = vmatprep.subr.mxu0 0.0
    %5189 = vmatpush1.xpose.msra.mxu0 0.0
    %5190 = vmatprep.subr.mxu0 0.0
    %5191 = vmatpush1.xpose.msra.mxu0 0.0
    %5192 = vmatprep.subr.mxu0 0.0
    %5193 = vmatpush1.xpose.msra.mxu0 0.0
    %5194 = vmatprep.subr.mxu0 0.0
    %5195 = vmatpush1.xpose.msra.mxu0 0.0
    %5196 = vmatprep.subr.mxu0 0.0
    %5197 = vmatpush1.xpose.msra.mxu0 0.0
    %5198 = vmatprep.subr.mxu0 0.0
    %5199 = vmatpush1.xpose.msra.mxu0 0.0
    %5200 = vmatprep.subr.mxu0 0.0
    %5201 = vmatpush1.xpose.msra.mxu0 0.0
    %5202 = vmatprep.subr.mxu0 0.0
    %5203 = vmatpush1.xpose.msra.mxu0 0.0
    %5204 = vmatprep.subr.mxu0 0.0
    %5205 = vmatpush1.xpose.msra.mxu0 0.0
    %5206 = vmatprep.mubr.f32.mxu0 0.0
    %5207 = vmatmul.mubr.f32.gmra.mrb[0].mxu0 %v5131
    %v5208 = vpop.f32.mrb[0].mxu0
    %v5209 = vadd.f32 0.0, %v5208
    %v5210 = vpop.f32.mrb[0].mxu0
    %5211 = vmatprep.mubr.f32.mxu0 0.0
    %5212 = vmatmul.mubr.f32.gmra.mrb[0].mxu0 %v5134
    %v5213 = vpop.f32.mrb[0].mxu0
    %v5214 = vadd.f32 0.0, %v5213
    %v5215 = vpop.f32.mrb[0].mxu0
    %5216 = vdwg.mxu0
    %v5218 = vsel %vm3998, %v1508, 0
    %v5221 = vsel %vm3998, %v1644, 0
    %v5224 = vsel %vm3998, %v2684, 0
    %v5227 = vsel %vm3998, %v2820, 0
    %5229 = vmatprep.subr.mxu0 0.0
    %5230 = vmatpush1.xpose.msra.mxu0 %v5224
    %5231 = vmatprep.subr.mxu0 0.0
    %5232 = vmatpush1.xpose.msra.mxu0 %v5227
    %5233 = vmatprep.subr.mxu0 0.0
    %5234 = vmatpush1.xpose.msra.mxu0 0.0
    %5235 = vmatprep.subr.mxu0 0.0
    %5236 = vmatpush1.xpose.msra.mxu0 0.0
    %5237 = vmatprep.subr.mxu0 0.0
    %5238 = vmatpush1.xpose.msra.mxu0 0.0
    %5239 = vmatprep.subr.mxu0 0.0
    %5240 = vmatpush1.xpose.msra.mxu0 0.0
    %5241 = vmatprep.subr.mxu0 0.0
    %5242 = vmatpush1.xpose.msra.mxu0 0.0
    %5243 = vmatprep.subr.mxu0 0.0
    %5244 = vmatpush1.xpose.msra.mxu0 0.0
    %5245 = vmatprep.subr.mxu0 0.0
    %5246 = vmatpush1.xpose.msra.mxu0 0.0
    %5247 = vmatprep.subr.mxu0 0.0
    %5248 = vmatpush1.xpose.msra.mxu0 0.0
    %5249 = vmatprep.subr.mxu0 0.0
    %5250 = vmatpush1.xpose.msra.mxu0 0.0
    %5251 = vmatprep.subr.mxu0 0.0
    %5252 = vmatpush1.xpose.msra.mxu0 0.0
    %5253 = vmatprep.subr.mxu0 0.0
    %5254 = vmatpush1.xpose.msra.mxu0 0.0
    %5255 = vmatprep.subr.mxu0 0.0
    %5256 = vmatpush1.xpose.msra.mxu0 0.0
    %5257 = vmatprep.subr.mxu0 0.0
    %5258 = vmatpush1.xpose.msra.mxu0 0.0
    %5259 = vmatprep.subr.mxu0 0.0
    %5260 = vmatpush1.xpose.msra.mxu0 0.0
    %5261 = vmatprep.subr.mxu0 0.0
    %5262 = vmatpush1.xpose.msra.mxu0 0.0
    %5263 = vmatprep.subr.mxu0 0.0
    %5264 = vmatpush1.xpose.msra.mxu0 0.0
    %5265 = vmatprep.subr.mxu0 0.0
    %5266 = vmatpush1.xpose.msra.mxu0 0.0
    %5267 = vmatprep.subr.mxu0 0.0
    %5268 = vmatpush1.xpose.msra.mxu0 0.0
    %5269 = vmatprep.subr.mxu0 0.0
    %5270 = vmatpush1.xpose.msra.mxu0 0.0
    %5271 = vmatprep.subr.mxu0 0.0
    %5272 = vmatpush1.xpose.msra.mxu0 0.0
    %5273 = vmatprep.subr.mxu0 0.0
    %5274 = vmatpush1.xpose.msra.mxu0 0.0
    %5275 = vmatprep.subr.mxu0 0.0
    %5276 = vmatpush1.xpose.msra.mxu0 0.0
    %5277 = vmatprep.subr.mxu0 0.0
    %5278 = vmatpush1.xpose.msra.mxu0 0.0
    %5279 = vmatprep.subr.mxu0 0.0
    %5280 = vmatpush1.xpose.msra.mxu0 0.0
    %5281 = vmatprep.subr.mxu0 0.0
    %5282 = vmatpush1.xpose.msra.mxu0 0.0
    %5283 = vmatprep.subr.mxu0 0.0
    %5284 = vmatpush1.xpose.msra.mxu0 0.0
    %5285 = vmatprep.subr.mxu0 0.0
    %5286 = vmatpush1.xpose.msra.mxu0 0.0
    %5287 = vmatprep.subr.mxu0 0.0
    %5288 = vmatpush1.xpose.msra.mxu0 0.0
    %5289 = vmatprep.subr.mxu0 0.0
    %5290 = vmatpush1.xpose.msra.mxu0 0.0
    %5291 = vmatprep.subr.mxu0 0.0
    %5292 = vmatpush1.xpose.msra.mxu0 0.0
    %5293 = vmatprep.mubr.f32.mxu0 0.0
    %5294 = vmatmul.mubr.f32.gmra.mrb[0].mxu0 %v5218
    %v5295 = vpop.f32.mrb[0].mxu0
    %v5296 = vadd.f32 0.0, %v5295
    %v5297 = vpop.f32.mrb[0].mxu0
    %5298 = vmatprep.mubr.f32.mxu0 0.0
    %5299 = vmatmul.mubr.f32.gmra.mrb[0].mxu0 %v5221
    %v5300 = vpop.f32.mrb[0].mxu0
    %v5301 = vadd.f32 0.0, %v5300
    %v5302 = vpop.f32.mrb[0].mxu0
    %5303 = vdwg.mxu0
    %v5305 = vsel %vm3998, %v1509, 0
    %v5308 = vsel %vm3998, %v1645, 0
    %v5311 = vsel %vm3998, %v2685, 0
    %v5314 = vsel %vm3998, %v2821, 0
    %5316 = vmatprep.subr.mxu0 0.0
    %5317 = vmatpush1.xpose.msra.mxu0 %v5311
    %5318 = vmatprep.subr.mxu0 0.0
    %5319 = vmatpush1.xpose.msra.mxu0 %v5314
    %5320 = vmatprep.subr.mxu0 0.0
    %5321 = vmatpush1.xpose.msra.mxu0 0.0
    %5322 = vmatprep.subr.mxu0 0.0
    %5323 = vmatpush1.xpose.msra.mxu0 0.0
    %5324 = vmatprep.subr.mxu0 0.0
    %5325 = vmatpush1.xpose.msra.mxu0 0.0
    %5326 = vmatprep.subr.mxu0 0.0
    %5327 = vmatpush1.xpose.msra.mxu0 0.0
    %5328 = vmatprep.subr.mxu0 0.0
    %5329 = vmatpush1.xpose.msra.mxu0 0.0
    %5330 = vmatprep.subr.mxu0 0.0
    %5331 = vmatpush1.xpose.msra.mxu0 0.0
    %5332 = vmatprep.subr.mxu0 0.0
    %5333 = vmatpush1.xpose.msra.mxu0 0.0
    %5334 = vmatprep.subr.mxu0 0.0
    %5335 = vmatpush1.xpose.msra.mxu0 0.0
    %5336 = vmatprep.subr.mxu0 0.0
    %5337 = vmatpush1.xpose.msra.mxu0 0.0
    %5338 = vmatprep.subr.mxu0 0.0
    %5339 = vmatpush1.xpose.msra.mxu0 0.0
    %5340 = vmatprep.subr.mxu0 0.0
    %5341 = vmatpush1.xpose.msra.mxu0 0.0
    %5342 = vmatprep.subr.mxu0 0.0
    %5343 = vmatpush1.xpose.msra.mxu0 0.0
    %5344 = vmatprep.subr.mxu0 0.0
    %5345 = vmatpush1.xpose.msra.mxu0 0.0
    %5346 = vmatprep.subr.mxu0 0.0
    %5347 = vmatpush1.xpose.msra.mxu0 0.0
    %5348 = vmatprep.subr.mxu0 0.0
    %5349 = vmatpush1.xpose.msra.mxu0 0.0
    %5350 = vmatprep.subr.mxu0 0.0
    %5351 = vmatpush1.xpose.msra.mxu0 0.0
    %5352 = vmatprep.subr.mxu0 0.0
    %5353 = vmatpush1.xpose.msra.mxu0 0.0
    %5354 = vmatprep.subr.mxu0 0.0
    %5355 = vmatpush1.xpose.msra.mxu0 0.0
    %5356 = vmatprep.subr.mxu0 0.0
    %5357 = vmatpush1.xpose.msra.mxu0 0.0
    %5358 = vmatprep.subr.mxu0 0.0
    %5359 = vmatpush1.xpose.msra.mxu0 0.0
    %5360 = vmatprep.subr.mxu0 0.0
    %5361 = vmatpush1.xpose.msra.mxu0 0.0
    %5362 = vmatprep.subr.mxu0 0.0
    %5363 = vmatpush1.xpose.msra.mxu0 0.0
    %5364 = vmatprep.subr.mxu0 0.0
    %5365 = vmatpush1.xpose.msra.mxu0 0.0
    %5366 = vmatprep.subr.mxu0 0.0
    %5367 = vmatpush1.xpose.msra.mxu0 0.0
    %5368 = vmatprep.subr.mxu0 0.0
    %5369 = vmatpush1.xpose.msra.mxu0 0.0
    %5370 = vmatprep.subr.mxu0 0.0
    %5371 = vmatpush1.xpose.msra.mxu0 0.0
    %5372 = vmatprep.subr.mxu0 0.0
    %5373 = vmatpush1.xpose.msra.mxu0 0.0
    %5374 = vmatprep.subr.mxu0 0.0
    %5375 = vmatpush1.xpose.msra.mxu0 0.0
    %5376 = vmatprep.subr.mxu0 0.0
    %5377 = vmatpush1.xpose.msra.mxu0 0.0
    %5378 = vmatprep.subr.mxu0 0.0
    %5379 = vmatpush1.xpose.msra.mxu0 0.0
    %5380 = vmatprep.mubr.f32.mxu0 0.0
    %5381 = vmatmul.mubr.f32.gmra.mrb[0].mxu0 %v5305
    %v5382 = vpop.f32.mrb[0].mxu0
    %v5383 = vadd.f32 0.0, %v5382
    %v5384 = vpop.f32.mrb[0].mxu0
    %5385 = vmatprep.mubr.f32.mxu0 0.0
    %5386 = vmatmul.mubr.f32.gmra.mrb[0].mxu0 %v5308
    %v5387 = vpop.f32.mrb[0].mxu0
    %v5388 = vadd.f32 0.0, %v5387
    %v5389 = vpop.f32.mrb[0].mxu0
    %5390 = vdwg.mxu0
    %v5391 = vlaneseq
    %v5392 = vshrl.u32 %v5391, 7
    %v5393 = vadd.s32 %v5392, 8
    %v5394 = vlaneseq
    %v5395 = vand.u32 %v5394, 127
    %vm5396 = vcmp.ge.s32.totalorder %v5392, %v5395
    %vm5397 = vcmp.ge.s32.totalorder %v5393, %v5395
    %v5398 = vsel %vm5396, 1, 0
    %v5399 = vsel %vm5397, 1, 0
    %vm5400 = vcmp.eq.s32.totalorder %v5398, 1
    %vm5401 = vcmp.eq.s32.totalorder %v5399, 1
    %v5402 = vsel %vm5400, %v4078, -3.4028235e+38
    %v5403 = vsel %vm5401, %v4083, -3.4028235e+38
    %v5404 = vsel %vm5400, %v4165, -3.4028235e+38
    %v5405 = vsel %vm5401, %v4170, -3.4028235e+38
    %v5406 = vsel %vm5400, %v4252, -3.4028235e+38
    %v5407 = vsel %vm5401, %v4257, -3.4028235e+38
    %v5408 = vsel %vm5400, %v4339, -3.4028235e+38
    %v5409 = vsel %vm5401, %v4344, -3.4028235e+38
    %v5410 = vsel %vm5400, %v4426, -3.4028235e+38
    %v5411 = vsel %vm5401, %v4431, -3.4028235e+38
    %v5412 = vsel %vm5400, %v4513, -3.4028235e+38
    %v5413 = vsel %vm5401, %v4518, -3.4028235e+38
    %v5414 = vsel %vm5400, %v4600, -3.4028235e+38
    %v5415 = vsel %vm5401, %v4605, -3.4028235e+38
    %v5416 = vsel %vm5400, %v4687, -3.4028235e+38
    %v5417 = vsel %vm5401, %v4692, -3.4028235e+38
    %v5418 = vsel %vm5400, %v4774, -3.4028235e+38
    %v5419 = vsel %vm5401, %v4779, -3.4028235e+38
    %v5420 = vsel %vm5400, %v4861, -3.4028235e+38
    %v5421 = vsel %vm5401, %v4866, -3.4028235e+38
    %v5422 = vsel %vm5400, %v4948, -3.4028235e+38
    %v5423 = vsel %vm5401, %v4953, -3.4028235e+38
    %v5424 = vsel %vm5400, %v5035, -3.4028235e+38
    %v5425 = vsel %vm5401, %v5040, -3.4028235e+38
    %v5426 = vsel %vm5400, %v5122, -3.4028235e+38
    %v5427 = vsel %vm5401, %v5127, -3.4028235e+38
    %v5428 = vsel %vm5400, %v5209, -3.4028235e+38
    %v5429 = vsel %vm5401, %v5214, -3.4028235e+38
    %v5430 = vsel %vm5400, %v5296, -3.4028235e+38
    %v5431 = vsel %vm5401, %v5301, -3.4028235e+38
    %v5432 = vsel %vm5400, %v5383, -3.4028235e+38
    %v5433 = vsel %vm5401, %v5388, -3.4028235e+38
    %v5434 = vsel %vm3998, %v5402, -inf
    %5435 = vmax.xlane.f32.xlu0 %v5434
    %v5436 = vpop.xlane.xlu0 %5435
    %v5437 = vsel %vm3998, %v5403, -inf
    %5438 = vmax.xlane.f32.xlu0 %v5437
    %v5439 = vpop.xlane.xlu0 %5438
    %v5440 = vsel %vm3998, %v5404, -inf
    %5441 = vmax.xlane.f32.xlu0 %v5440
    %v5442 = vpop.xlane.xlu0 %5441
    %v5443 = vsel %vm3998, %v5405, -inf
    %5444 = vmax.xlane.f32.xlu0 %v5443
    %v5445 = vpop.xlane.xlu0 %5444
    %v5446 = vsel %vm3998, %v5406, -inf
    %5447 = vmax.xlane.f32.xlu0 %v5446
    %v5448 = vpop.xlane.xlu0 %5447
    %v5449 = vsel %vm3998, %v5407, -inf
    %5450 = vmax.xlane.f32.xlu0 %v5449
    %v5451 = vpop.xlane.xlu0 %5450
    %v5452 = vsel %vm3998, %v5408, -inf
    %5453 = vmax.xlane.f32.xlu0 %v5452
    %v5454 = vpop.xlane.xlu0 %5453
    %v5455 = vsel %vm3998, %v5409, -inf
    %5456 = vmax.xlane.f32.xlu0 %v5455
    %v5457 = vpop.xlane.xlu0 %5456
    %v5458 = vsel %vm3998, %v5410, -inf
    %5459 = vmax.xlane.f32.xlu0 %v5458
    %v5460 = vpop.xlane.xlu0 %5459
    %v5461 = vsel %vm3998, %v5411, -inf
    %5462 = vmax.xlane.f32.xlu0 %v5461
    %v5463 = vpop.xlane.xlu0 %5462
    %v5464 = vsel %vm3998, %v5412, -inf
    %5465 = vmax.xlane.f32.xlu0 %v5464
    %v5466 = vpop.xlane.xlu0 %5465
    %v5467 = vsel %vm3998, %v5413, -inf
    %5468 = vmax.xlane.f32.xlu0 %v5467
    %v5469 = vpop.xlane.xlu0 %5468
    %v5470 = vsel %vm3998, %v5414, -inf
    %5471 = vmax.xlane.f32.xlu0 %v5470
    %v5472 = vpop.xlane.xlu0 %5471
    %v5473 = vsel %vm3998, %v5415, -inf
    %5474 = vmax.xlane.f32.xlu0 %v5473
    %v5475 = vpop.xlane.xlu0 %5474
    %v5476 = vsel %vm3998, %v5416, -inf
    %5477 = vmax.xlane.f32.xlu0 %v5476
    %v5478 = vpop.xlane.xlu0 %5477
    %v5479 = vsel %vm3998, %v5417, -inf
    %5480 = vmax.xlane.f32.xlu0 %v5479
    %v5481 = vpop.xlane.xlu0 %5480
    %v5482 = vsel %vm3998, %v5418, -inf
    %5483 = vmax.xlane.f32.xlu0 %v5482
    %v5484 = vpop.xlane.xlu0 %5483
    %v5485 = vsel %vm3998, %v5419, -inf
    %5486 = vmax.xlane.f32.xlu0 %v5485
    %v5487 = vpop.xlane.xlu0 %5486
    %v5488 = vsel %vm3998, %v5420, -inf
    %5489 = vmax.xlane.f32.xlu0 %v5488
    %v5490 = vpop.xlane.xlu0 %5489
    %v5491 = vsel %vm3998, %v5421, -inf
    %5492 = vmax.xlane.f32.xlu0 %v5491
    %v5493 = vpop.xlane.xlu0 %5492
    %v5494 = vsel %vm3998, %v5422, -inf
    %5495 = vmax.xlane.f32.xlu0 %v5494
    %v5496 = vpop.xlane.xlu0 %5495
    %v5497 = vsel %vm3998, %v5423, -inf
    %5498 = vmax.xlane.f32.xlu0 %v5497
    %v5499 = vpop.xlane.xlu0 %5498
    %v5500 = vsel %vm3998, %v5424, -inf
    %5501 = vmax.xlane.f32.xlu0 %v5500
    %v5502 = vpop.xlane.xlu0 %5501
    %v5503 = vsel %vm3998, %v5425, -inf
    %5504 = vmax.xlane.f32.xlu0 %v5503
    %v5505 = vpop.xlane.xlu0 %5504
    %v5506 = vsel %vm3998, %v5426, -inf
    %5507 = vmax.xlane.f32.xlu0 %v5506
    %v5508 = vpop.xlane.xlu0 %5507
    %v5509 = vsel %vm3998, %v5427, -inf
    %5510 = vmax.xlane.f32.xlu0 %v5509
    %v5511 = vpop.xlane.xlu0 %5510
    %v5512 = vsel %vm3998, %v5428, -inf
    %5513 = vmax.xlane.f32.xlu0 %v5512
    %v5514 = vpop.xlane.xlu0 %5513
    %v5515 = vsel %vm3998, %v5429, -inf
    %5516 = vmax.xlane.f32.xlu0 %v5515
    %v5517 = vpop.xlane.xlu0 %5516
    %v5518 = vsel %vm3998, %v5430, -inf
    %5519 = vmax.xlane.f32.xlu0 %v5518
    %v5520 = vpop.xlane.xlu0 %5519
    %v5521 = vsel %vm3998, %v5431, -inf
    %5522 = vmax.xlane.f32.xlu0 %v5521
    %v5523 = vpop.xlane.xlu0 %5522
    %v5524 = vsel %vm3998, %v5432, -inf
    %5525 = vmax.xlane.f32.xlu0 %v5524
    %v5526 = vpop.xlane.xlu0 %5525
    %v5527 = vsel %vm3998, %v5433, -inf
    %5528 = vmax.xlane.f32.xlu0 %v5527
    %v5529 = vpop.xlane.xlu0 %5528
    %v5530 = vsub.f32 %v5402, %v5436
    %v5531 = vsub.f32 %v5403, %v5439
    %v5532 = vsub.f32 %v5404, %v5442
    %v5533 = vsub.f32 %v5405, %v5445
    %v5534 = vsub.f32 %v5406, %v5448
    %v5535 = vsub.f32 %v5407, %v5451
    %v5536 = vsub.f32 %v5408, %v5454
    %v5537 = vsub.f32 %v5409, %v5457
    %v5538 = vsub.f32 %v5410, %v5460
    %v5539 = vsub.f32 %v5411, %v5463
    %v5540 = vsub.f32 %v5412, %v5466
    %v5541 = vsub.f32 %v5413, %v5469
    %v5542 = vsub.f32 %v5414, %v5472
    %v5543 = vsub.f32 %v5415, %v5475
    %v5544 = vsub.f32 %v5416, %v5478
    %v5545 = vsub.f32 %v5417, %v5481
    %v5546 = vsub.f32 %v5418, %v5484
    %v5547 = vsub.f32 %v5419, %v5487
    %v5548 = vsub.f32 %v5420, %v5490
    %v5549 = vsub.f32 %v5421, %v5493
    %v5550 = vsub.f32 %v5422, %v5496
    %v5551 = vsub.f32 %v5423, %v5499
    %v5552 = vsub.f32 %v5424, %v5502
    %v5553 = vsub.f32 %v5425, %v5505
    %v5554 = vsub.f32 %v5426, %v5508
    %v5555 = vsub.f32 %v5427, %v5511
    %v5556 = vsub.f32 %v5428, %v5514
    %v5557 = vsub.f32 %v5429, %v5517
    %v5558 = vsub.f32 %v5430, %v5520
    %v5559 = vsub.f32 %v5431, %v5523
    %v5560 = vsub.f32 %v5432, %v5526
    %v5561 = vsub.f32 %v5433, %v5529
    %v5562 = vmul.f32 %v5530, 1.442695
    %v5563 = vpow.pop %v5562
    %v5564 = vmul.f32 %v5531, 1.442695
    %v5565 = vpow.pop %v5564
    %v5566 = vmul.f32 %v5532, 1.442695
    %v5567 = vpow.pop %v5566
    %v5568 = vmul.f32 %v5533, 1.442695
    %v5569 = vpow.pop %v5568
    %v5570 = vmul.f32 %v5534, 1.442695
    %v5571 = vpow.pop %v5570
    %v5572 = vmul.f32 %v5535, 1.442695
    %v5573 = vpow.pop %v5572
    %v5574 = vmul.f32 %v5536, 1.442695
    %v5575 = vpow.pop %v5574
    %v5576 = vmul.f32 %v5537, 1.442695
    %v5577 = vpow.pop %v5576
    %v5578 = vmul.f32 %v5538, 1.442695
    %v5579 = vpow.pop %v5578
    %v5580 = vmul.f32 %v5539, 1.442695
    %v5581 = vpow.pop %v5580
    %v5582 = vmul.f32 %v5540, 1.442695
    %v5583 = vpow.pop %v5582
    %v5584 = vmul.f32 %v5541, 1.442695
    %v5585 = vpow.pop %v5584
    %v5586 = vmul.f32 %v5542, 1.442695
    %v5587 = vpow.pop %v5586
    %v5588 = vmul.f32 %v5543, 1.442695
    %v5589 = vpow.pop %v5588
    %v5590 = vmul.f32 %v5544, 1.442695
    %v5591 = vpow.pop %v5590
    %v5592 = vmul.f32 %v5545, 1.442695
    %v5593 = vpow.pop %v5592
    %v5594 = vmul.f32 %v5546, 1.442695
    %v5595 = vpow.pop %v5594
    %v5596 = vmul.f32 %v5547, 1.442695
    %v5597 = vpow.pop %v5596
    %v5598 = vmul.f32 %v5548, 1.442695
    %v5599 = vpow.pop %v5598
    %v5600 = vmul.f32 %v5549, 1.442695
    %v5601 = vpow.pop %v5600
    %v5602 = vmul.f32 %v5550, 1.442695
    %v5603 = vpow.pop %v5602
    %v5604 = vmul.f32 %v5551, 1.442695
    %v5605 = vpow.pop %v5604
    %v5606 = vmul.f32 %v5552, 1.442695
    %v5607 = vpow.pop %v5606
    %v5608 = vmul.f32 %v5553, 1.442695
    %v5609 = vpow.pop %v5608
    %v5610 = vmul.f32 %v5554, 1.442695
    %v5611 = vpow.pop %v5610
    %v5612 = vmul.f32 %v5555, 1.442695
    %v5613 = vpow.pop %v5612
    %v5614 = vmul.f32 %v5556, 1.442695
    %v5615 = vpow.pop %v5614
    %v5616 = vmul.f32 %v5557, 1.442695
    %v5617 = vpow.pop %v5616
    %v5618 = vmul.f32 %v5558, 1.442695
    %v5619 = vpow.pop %v5618
    %v5620 = vmul.f32 %v5559, 1.442695
    %v5621 = vpow.pop %v5620
    %v5622 = vmul.f32 %v5560, 1.442695
    %v5623 = vpow.pop %v5622
    %v5624 = vmul.f32 %v5561, 1.442695
    %v5625 = vpow.pop %v5624
    %v5626 = vsel %vm3998, %v5563, 0.0
    %5627 = vadd.xlane.f32.xlu0 %v5626
    %v5628 = vpop.xlane.xlu0 %5627
    %v5629 = vsel %vm3998, %v5565, 0.0
    %5630 = vadd.xlane.f32.xlu0 %v5629
    %v5631 = vpop.xlane.xlu0 %5630
    %v5632 = vsel %vm3998, %v5567, 0.0
    %5633 = vadd.xlane.f32.xlu0 %v5632
    %v5634 = vpop.xlane.xlu0 %5633
    %v5635 = vsel %vm3998, %v5569, 0.0
    %5636 = vadd.xlane.f32.xlu0 %v5635
    %v5637 = vpop.xlane.xlu0 %5636
    %v5638 = vsel %vm3998, %v5571, 0.0
    %5639 = vadd.xlane.f32.xlu0 %v5638
    %v5640 = vpop.xlane.xlu0 %5639
    %v5641 = vsel %vm3998, %v5573, 0.0
    %5642 = vadd.xlane.f32.xlu0 %v5641
    %v5643 = vpop.xlane.xlu0 %5642
    %v5644 = vsel %vm3998, %v5575, 0.0
    %5645 = vadd.xlane.f32.xlu0 %v5644
    %v5646 = vpop.xlane.xlu0 %5645
    %v5647 = vsel %vm3998, %v5577, 0.0
    %5648 = vadd.xlane.f32.xlu0 %v5647
    %v5649 = vpop.xlane.xlu0 %5648
    %v5650 = vsel %vm3998, %v5579, 0.0
    %5651 = vadd.xlane.f32.xlu0 %v5650
    %v5652 = vpop.xlane.xlu0 %5651
    %v5653 = vsel %vm3998, %v5581, 0.0
    %5654 = vadd.xlane.f32.xlu0 %v5653
    %v5655 = vpop.xlane.xlu0 %5654
    %v5656 = vsel %vm3998, %v5583, 0.0
    %5657 = vadd.xlane.f32.xlu0 %v5656
    %v5658 = vpop.xlane.xlu0 %5657
    %v5659 = vsel %vm3998, %v5585, 0.0
    %5660 = vadd.xlane.f32.xlu0 %v5659
    %v5661 = vpop.xlane.xlu0 %5660
    %v5662 = vsel %vm3998, %v5587, 0.0
    %5663 = vadd.xlane.f32.xlu0 %v5662
    %v5664 = vpop.xlane.xlu0 %5663
    %v5665 = vsel %vm3998, %v5589, 0.0
    %5666 = vadd.xlane.f32.xlu0 %v5665
    %v5667 = vpop.xlane.xlu0 %5666
    %v5668 = vsel %vm3998, %v5591, 0.0
    %5669 = vadd.xlane.f32.xlu0 %v5668
    %v5670 = vpop.xlane.xlu0 %5669
    %v5671 = vsel %vm3998, %v5593, 0.0
    %5672 = vadd.xlane.f32.xlu0 %v5671
    %v5673 = vpop.xlane.xlu0 %5672
    %v5674 = vsel %vm3998, %v5595, 0.0
    %5675 = vadd.xlane.f32.xlu0 %v5674
    %v5676 = vpop.xlane.xlu0 %5675
    %v5677 = vsel %vm3998, %v5597, 0.0
    %5678 = vadd.xlane.f32.xlu0 %v5677
    %v5679 = vpop.xlane.xlu0 %5678
    %v5680 = vsel %vm3998, %v5599, 0.0
    %5681 = vadd.xlane.f32.xlu0 %v5680
    %v5682 = vpop.xlane.xlu0 %5681
    %v5683 = vsel %vm3998, %v5601, 0.0
    %5684 = vadd.xlane.f32.xlu0 %v5683
    %v5685 = vpop.xlane.xlu0 %5684
    %v5686 = vsel %vm3998, %v5603, 0.0
    %5687 = vadd.xlane.f32.xlu0 %v5686
    %v5688 = vpop.xlane.xlu0 %5687
    %v5689 = vsel %vm3998, %v5605, 0.0
    %5690 = vadd.xlane.f32.xlu0 %v5689
    %v5691 = vpop.xlane.xlu0 %5690
    %v5692 = vsel %vm3998, %v5607, 0.0
    %5693 = vadd.xlane.f32.xlu0 %v5692
    %v5694 = vpop.xlane.xlu0 %5693
    %v5695 = vsel %vm3998, %v5609, 0.0
    %5696 = vadd.xlane.f32.xlu0 %v5695
    %v5697 = vpop.xlane.xlu0 %5696
    %v5698 = vsel %vm3998, %v5611, 0.0
    %5699 = vadd.xlane.f32.xlu0 %v5698
    %v5700 = vpop.xlane.xlu0 %5699
    %v5701 = vsel %vm3998, %v5613, 0.0
    %5702 = vadd.xlane.f32.xlu0 %v5701
    %v5703 = vpop.xlane.xlu0 %5702
    %v5704 = vsel %vm3998, %v5615, 0.0
    %5705 = vadd.xlane.f32.xlu0 %v5704
    %v5706 = vpop.xlane.xlu0 %5705
    %v5707 = vsel %vm3998, %v5617, 0.0
    %5708 = vadd.xlane.f32.xlu0 %v5707
    %v5709 = vpop.xlane.xlu0 %5708
    %v5710 = vsel %vm3998, %v5619, 0.0
    %5711 = vadd.xlane.f32.xlu0 %v5710
    %v5712 = vpop.xlane.xlu0 %5711
    %v5713 = vsel %vm3998, %v5621, 0.0
    %5714 = vadd.xlane.f32.xlu0 %v5713
    %v5715 = vpop.xlane.xlu0 %5714
    %v5716 = vsel %vm3998, %v5623, 0.0
    %5717 = vadd.xlane.f32.xlu0 %v5716
    %v5718 = vpop.xlane.xlu0 %5717
    %v5719 = vsel %vm3998, %v5625, 0.0
    %5720 = vadd.xlane.f32.xlu0 %v5719
    %v5721 = vpop.xlane.xlu0 %5720
    %v5722 = vrcp.pop %v5628
    %v5723 = vrcp.pop %v5631
    %v5724 = vrcp.pop %v5634
    %v5725 = vrcp.pop %v5637
    %v5726 = vrcp.pop %v5640
    %v5727 = vrcp.pop %v5643
    %v5728 = vrcp.pop %v5646
    %v5729 = vrcp.pop %v5649
    %v5730 = vrcp.pop %v5652
    %v5731 = vrcp.pop %v5655
    %v5732 = vrcp.pop %v5658
    %v5733 = vrcp.pop %v5661
    %v5734 = vrcp.pop %v5664
    %v5735 = vrcp.pop %v5667
    %v5736 = vrcp.pop %v5670
    %v5737 = vrcp.pop %v5673
    %v5738 = vrcp.pop %v5676
    %v5739 = vrcp.pop %v5679
    %v5740 = vrcp.pop %v5682
    %v5741 = vrcp.pop %v5685
    %v5742 = vrcp.pop %v5688
    %v5743 = vrcp.pop %v5691
    %v5744 = vrcp.pop %v5694
    %v5745 = vrcp.pop %v5697
    %v5746 = vrcp.pop %v5700
    %v5747 = vrcp.pop %v5703
    %v5748 = vrcp.pop %v5706
    %v5749 = vrcp.pop %v5709
    %v5750 = vrcp.pop %v5712
    %v5751 = vrcp.pop %v5715
    %v5752 = vrcp.pop %v5718
    %v5753 = vrcp.pop %v5721
    %v5754 = vmul.f32 %v5563, %v5722
    %v5755 = vmul.f32 %v5565, %v5723
    %v5756 = vmul.f32 %v5567, %v5724
    %v5757 = vmul.f32 %v5569, %v5725
    %v5758 = vmul.f32 %v5571, %v5726
    %v5759 = vmul.f32 %v5573, %v5727
    %v5760 = vmul.f32 %v5575, %v5728
    %v5761 = vmul.f32 %v5577, %v5729
    %v5762 = vmul.f32 %v5579, %v5730
    %v5763 = vmul.f32 %v5581, %v5731
    %v5764 = vmul.f32 %v5583, %v5732
    %v5765 = vmul.f32 %v5585, %v5733
    %v5766 = vmul.f32 %v5587, %v5734
    %v5767 = vmul.f32 %v5589, %v5735
    %v5768 = vmul.f32 %v5591, %v5736
    %v5769 = vmul.f32 %v5593, %v5737
    %v5770 = vmul.f32 %v5595, %v5738
    %v5771 = vmul.f32 %v5597, %v5739
    %v5772 = vmul.f32 %v5599, %v5740
    %v5773 = vmul.f32 %v5601, %v5741
    %v5774 = vmul.f32 %v5603, %v5742
    %v5775 = vmul.f32 %v5605, %v5743
    %v5776 = vmul.f32 %v5607, %v5744
    %v5777 = vmul.f32 %v5609, %v5745
    %v5778 = vmul.f32 %v5611, %v5746
    %v5779 = vmul.f32 %v5613, %v5747
    %v5780 = vmul.f32 %v5615, %v5748
    %v5781 = vmul.f32 %v5617, %v5749
    %v5782 = vmul.f32 %v5619, %v5750
    %v5783 = vmul.f32 %v5621, %v5751
    %v5784 = vmul.f32 %v5623, %v5752
    %v5785 = vmul.f32 %v5625, %v5753
    %v5787 = vsel %vm3998, %v5754, 0
    %v5790 = vsel %vm3998, %v5755, 0
    %5792 = vmatprep.subr.mxu0 0.0
    %5793 = vmatpush1.msra.mxu0 %v3582
    %5794 = vmatprep.subr.mxu0 0.0
    %5795 = vmatpush1.msra.mxu0 %v3718
    %5796 = vmatprep.subr.mxu0 0.0
    %5797 = vmatpush1.msra.mxu0 0.0
    %5798 = vmatprep.subr.mxu0 0.0
    %5799 = vmatpush1.msra.mxu0 0.0
    %5800 = vmatprep.subr.mxu0 0.0
    %5801 = vmatpush1.msra.mxu0 0.0
    %5802 = vmatprep.subr.mxu0 0.0
    %5803 = vmatpush1.msra.mxu0 0.0
    %5804 = vmatprep.subr.mxu0 0.0
    %5805 = vmatpush1.msra.mxu0 0.0
    %5806 = vmatprep.subr.mxu0 0.0
    %5807 = vmatpush1.msra.mxu0 0.0
    %5808 = vmatprep.subr.mxu0 0.0
    %5809 = vmatpush1.msra.mxu0 0.0
    %5810 = vmatprep.subr.mxu0 0.0
    %5811 = vmatpush1.msra.mxu0 0.0
    %5812 = vmatprep.subr.mxu0 0.0
    %5813 = vmatpush1.msra.mxu0 0.0
    %5814 = vmatprep.subr.mxu0 0.0
    %5815 = vmatpush1.msra.mxu0 0.0
    %5816 = vmatprep.subr.mxu0 0.0
    %5817 = vmatpush1.msra.mxu0 0.0
    %5818 = vmatprep.subr.mxu0 0.0
    %5819 = vmatpush1.msra.mxu0 0.0
    %5820 = vmatprep.subr.mxu0 0.0
    %5821 = vmatpush1.msra.mxu0 0.0
    %5822 = vmatprep.subr.mxu0 0.0
    %5823 = vmatpush1.msra.mxu0 0.0
    %5824 = vmatprep.subr.mxu0 0.0
    %5825 = vmatpush1.msra.mxu0 0.0
    %5826 = vmatprep.subr.mxu0 0.0
    %5827 = vmatpush1.msra.mxu0 0.0
    %5828 = vmatprep.subr.mxu0 0.0
    %5829 = vmatpush1.msra.mxu0 0.0
    %5830 = vmatprep.subr.mxu0 0.0
    %5831 = vmatpush1.msra.mxu0 0.0
    %5832 = vmatprep.subr.mxu0 0.0
    %5833 = vmatpush1.msra.mxu0 0.0
    %5834 = vmatprep.subr.mxu0 0.0
    %5835 = vmatpush1.msra.mxu0 0.0
    %5836 = vmatprep.subr.mxu0 0.0
    %5837 = vmatpush1.msra.mxu0 0.0
    %5838 = vmatprep.subr.mxu0 0.0
    %5839 = vmatpush1.msra.mxu0 0.0
    %5840 = vmatprep.subr.mxu0 0.0
    %5841 = vmatpush1.msra.mxu0 0.0
    %5842 = vmatprep.subr.mxu0 0.0
    %5843 = vmatpush1.msra.mxu0 0.0
    %5844 = vmatprep.subr.mxu0 0.0
    %5845 = vmatpush1.msra.mxu0 0.0
    %5846 = vmatprep.subr.mxu0 0.0
    %5847 = vmatpush1.msra.mxu0 0.0
    %5848 = vmatprep.subr.mxu0 0.0
    %5849 = vmatpush1.msra.mxu0 0.0
    %5850 = vmatprep.subr.mxu0 0.0
    %5851 = vmatpush1.msra.mxu0 0.0
    %5852 = vmatprep.subr.mxu0 0.0
    %5853 = vmatpush1.msra.mxu0 0.0
    %5854 = vmatprep.subr.mxu0 0.0
    %5855 = vmatpush1.msra.mxu0 0.0
    %5856 = vmatprep.mubr.f32.mxu0 0.0
    %5857 = vmatmul.mubr.f32.gmra.mrb[0].mxu0 %v5787
    %v5858 = vpop.f32.mrb[0].mxu0
    %v5859 = vadd.f32 0.0, %v5858
    %v5860 = vpop.f32.mrb[0].mxu0
    %5861 = vmatprep.mubr.f32.mxu0 0.0
    %5862 = vmatmul.mubr.f32.gmra.mrb[0].mxu0 %v5790
    %v5863 = vpop.f32.mrb[0].mxu0
    %v5864 = vadd.f32 0.0, %v5863
    %v5865 = vpop.f32.mrb[0].mxu0
    %5866 = vdwg.mxu0
    %v5868 = vsel %vm3998, %v5756, 0
    %v5871 = vsel %vm3998, %v5757, 0
    %5873 = vmatprep.subr.mxu0 0.0
    %5874 = vmatpush1.msra.mxu0 %v3583
    %5875 = vmatprep.subr.mxu0 0.0
    %5876 = vmatpush1.msra.mxu0 %v3719
    %5877 = vmatprep.subr.mxu0 0.0
    %5878 = vmatpush1.msra.mxu0 0.0
    %5879 = vmatprep.subr.mxu0 0.0
    %5880 = vmatpush1.msra.mxu0 0.0
    %5881 = vmatprep.subr.mxu0 0.0
    %5882 = vmatpush1.msra.mxu0 0.0
    %5883 = vmatprep.subr.mxu0 0.0
    %5884 = vmatpush1.msra.mxu0 0.0
    %5885 = vmatprep.subr.mxu0 0.0
    %5886 = vmatpush1.msra.mxu0 0.0
    %5887 = vmatprep.subr.mxu0 0.0
    %5888 = vmatpush1.msra.mxu0 0.0
    %5889 = vmatprep.subr.mxu0 0.0
    %5890 = vmatpush1.msra.mxu0 0.0
    %5891 = vmatprep.subr.mxu0 0.0
    %5892 = vmatpush1.msra.mxu0 0.0
    %5893 = vmatprep.subr.mxu0 0.0
    %5894 = vmatpush1.msra.mxu0 0.0
    %5895 = vmatprep.subr.mxu0 0.0
    %5896 = vmatpush1.msra.mxu0 0.0
    %5897 = vmatprep.subr.mxu0 0.0
    %5898 = vmatpush1.msra.mxu0 0.0
    %5899 = vmatprep.subr.mxu0 0.0
    %5900 = vmatpush1.msra.mxu0 0.0
    %5901 = vmatprep.subr.mxu0 0.0
    %5902 = vmatpush1.msra.mxu0 0.0
    %5903 = vmatprep.subr.mxu0 0.0
    %5904 = vmatpush1.msra.mxu0 0.0
    %5905 = vmatprep.subr.mxu0 0.0
    %5906 = vmatpush1.msra.mxu0 0.0
    %5907 = vmatprep.subr.mxu0 0.0
    %5908 = vmatpush1.msra.mxu0 0.0
    %5909 = vmatprep.subr.mxu0 0.0
    %5910 = vmatpush1.msra.mxu0 0.0
    %5911 = vmatprep.subr.mxu0 0.0
    %5912 = vmatpush1.msra.mxu0 0.0
    %5913 = vmatprep.subr.mxu0 0.0
    %5914 = vmatpush1.msra.mxu0 0.0
    %5915 = vmatprep.subr.mxu0 0.0
    %5916 = vmatpush1.msra.mxu0 0.0
    %5917 = vmatprep.subr.mxu0 0.0
    %5918 = vmatpush1.msra.mxu0 0.0
    %5919 = vmatprep.subr.mxu0 0.0
    %5920 = vmatpush1.msra.mxu0 0.0
    %5921 = vmatprep.subr.mxu0 0.0
    %5922 = vmatpush1.msra.mxu0 0.0
    %5923 = vmatprep.subr.mxu0 0.0
    %5924 = vmatpush1.msra.mxu0 0.0
    %5925 = vmatprep.subr.mxu0 0.0
    %5926 = vmatpush1.msra.mxu0 0.0
    %5927 = vmatprep.subr.mxu0 0.0
    %5928 = vmatpush1.msra.mxu0 0.0
    %5929 = vmatprep.subr.mxu0 0.0
    %5930 = vmatpush1.msra.mxu0 0.0
    %5931 = vmatprep.subr.mxu0 0.0
    %5932 = vmatpush1.msra.mxu0 0.0
    %5933 = vmatprep.subr.mxu0 0.0
    %5934 = vmatpush1.msra.mxu0 0.0
    %5935 = vmatprep.subr.mxu0 0.0
    %5936 = vmatpush1.msra.mxu0 0.0
    %5937 = vmatprep.mubr.f32.mxu0 0.0
    %5938 = vmatmul.mubr.f32.gmra.mrb[0].mxu0 %v5868
    %v5939 = vpop.f32.mrb[0].mxu0
    %v5940 = vadd.f32 0.0, %v5939
    %v5941 = vpop.f32.mrb[0].mxu0
    %5942 = vmatprep.mubr.f32.mxu0 0.0
    %5943 = vmatmul.mubr.f32.gmra.mrb[0].mxu0 %v5871
    %v5944 = vpop.f32.mrb[0].mxu0
    %v5945 = vadd.f32 0.0, %v5944
    %v5946 = vpop.f32.mrb[0].mxu0
    %5947 = vdwg.mxu0
    %v5949 = vsel %vm3998, %v5758, 0
    %v5952 = vsel %vm3998, %v5759, 0
    %5954 = vmatprep.subr.mxu0 0.0
    %5955 = vmatpush1.msra.mxu0 %v3584
    %5956 = vmatprep.subr.mxu0 0.0
    %5957 = vmatpush1.msra.mxu0 %v3720
    %5958 = vmatprep.subr.mxu0 0.0
    %5959 = vmatpush1.msra.mxu0 0.0
    %5960 = vmatprep.subr.mxu0 0.0
    %5961 = vmatpush1.msra.mxu0 0.0
    %5962 = vmatprep.subr.mxu0 0.0
    %5963 = vmatpush1.msra.mxu0 0.0
    %5964 = vmatprep.subr.mxu0 0.0
    %5965 = vmatpush1.msra.mxu0 0.0
    %5966 = vmatprep.subr.mxu0 0.0
    %5967 = vmatpush1.msra.mxu0 0.0
    %5968 = vmatprep.subr.mxu0 0.0
    %5969 = vmatpush1.msra.mxu0 0.0
    %5970 = vmatprep.subr.mxu0 0.0
    %5971 = vmatpush1.msra.mxu0 0.0
    %5972 = vmatprep.subr.mxu0 0.0
    %5973 = vmatpush1.msra.mxu0 0.0
    %5974 = vmatprep.subr.mxu0 0.0
    %5975 = vmatpush1.msra.mxu0 0.0
    %5976 = vmatprep.subr.mxu0 0.0
    %5977 = vmatpush1.msra.mxu0 0.0
    %5978 = vmatprep.subr.mxu0 0.0
    %5979 = vmatpush1.msra.mxu0 0.0
    %5980 = vmatprep.subr.mxu0 0.0
    %5981 = vmatpush1.msra.mxu0 0.0
    %5982 = vmatprep.subr.mxu0 0.0
    %5983 = vmatpush1.msra.mxu0 0.0
    %5984 = vmatprep.subr.mxu0 0.0
    %5985 = vmatpush1.msra.mxu0 0.0
    %5986 = vmatprep.subr.mxu0 0.0
    %5987 = vmatpush1.msra.mxu0 0.0
    %5988 = vmatprep.subr.mxu0 0.0
    %5989 = vmatpush1.msra.mxu0 0.0
    %5990 = vmatprep.subr.mxu0 0.0
    %5991 = vmatpush1.msra.mxu0 0.0
    %5992 = vmatprep.subr.mxu0 0.0
    %5993 = vmatpush1.msra.mxu0 0.0
    %5994 = vmatprep.subr.mxu0 0.0
    %5995 = vmatpush1.msra.mxu0 0.0
    %5996 = vmatprep.subr.mxu0 0.0
    %5997 = vmatpush1.msra.mxu0 0.0
    %5998 = vmatprep.subr.mxu0 0.0
    %5999 = vmatpush1.msra.mxu0 0.0
    %6000 = vmatprep.subr.mxu0 0.0
    %6001 = vmatpush1.msra.mxu0 0.0
    %6002 = vmatprep.subr.mxu0 0.0
    %6003 = vmatpush1.msra.mxu0 0.0
    %6004 = vmatprep.subr.mxu0 0.0
    %6005 = vmatpush1.msra.mxu0 0.0
    %6006 = vmatprep.subr.mxu0 0.0
    %6007 = vmatpush1.msra.mxu0 0.0
    %6008 = vmatprep.subr.mxu0 0.0
    %6009 = vmatpush1.msra.mxu0 0.0
    %6010 = vmatprep.subr.mxu0 0.0
    %6011 = vmatpush1.msra.mxu0 0.0
    %6012 = vmatprep.subr.mxu0 0.0
    %6013 = vmatpush1.msra.mxu0 0.0
    %6014 = vmatprep.subr.mxu0 0.0
    %6015 = vmatpush1.msra.mxu0 0.0
    %6016 = vmatprep.subr.mxu0 0.0
    %6017 = vmatpush1.msra.mxu0 0.0
    %6018 = vmatprep.mubr.f32.mxu0 0.0
    %6019 = vmatmul.mubr.f32.gmra.mrb[0].mxu0 %v5949
    %v6020 = vpop.f32.mrb[0].mxu0
    %v6021 = vadd.f32 0.0, %v6020
    %v6022 = vpop.f32.mrb[0].mxu0
    %6023 = vmatprep.mubr.f32.mxu0 0.0
    %6024 = vmatmul.mubr.f32.gmra.mrb[0].mxu0 %v5952
    %v6025 = vpop.f32.mrb[0].mxu0
    %v6026 = vadd.f32 0.0, %v6025
    %v6027 = vpop.f32.mrb[0].mxu0
    %6028 = vdwg.mxu0
    %v6030 = vsel %vm3998, %v5760, 0
    %v6033 = vsel %vm3998, %v5761, 0
    %6035 = vmatprep.subr.mxu0 0.0
    %6036 = vmatpush1.msra.mxu0 %v3585
    %6037 = vmatprep.subr.mxu0 0.0
    %6038 = vmatpush1.msra.mxu0 %v3721
    %6039 = vmatprep.subr.mxu0 0.0
    %6040 = vmatpush1.msra.mxu0 0.0
    %6041 = vmatprep.subr.mxu0 0.0
    %6042 = vmatpush1.msra.mxu0 0.0
    %6043 = vmatprep.subr.mxu0 0.0
    %6044 = vmatpush1.msra.mxu0 0.0
    %6045 = vmatprep.subr.mxu0 0.0
    %6046 = vmatpush1.msra.mxu0 0.0
    %6047 = vmatprep.subr.mxu0 0.0
    %6048 = vmatpush1.msra.mxu0 0.0
    %6049 = vmatprep.subr.mxu0 0.0
    %6050 = vmatpush1.msra.mxu0 0.0
    %6051 = vmatprep.subr.mxu0 0.0
    %6052 = vmatpush1.msra.mxu0 0.0
    %6053 = vmatprep.subr.mxu0 0.0
    %6054 = vmatpush1.msra.mxu0 0.0
    %6055 = vmatprep.subr.mxu0 0.0
    %6056 = vmatpush1.msra.mxu0 0.0
    %6057 = vmatprep.subr.mxu0 0.0
    %6058 = vmatpush1.msra.mxu0 0.0
    %6059 = vmatprep.subr.mxu0 0.0
    %6060 = vmatpush1.msra.mxu0 0.0
    %6061 = vmatprep.subr.mxu0 0.0
    %6062 = vmatpush1.msra.mxu0 0.0
    %6063 = vmatprep.subr.mxu0 0.0
    %6064 = vmatpush1.msra.mxu0 0.0
    %6065 = vmatprep.subr.mxu0 0.0
    %6066 = vmatpush1.msra.mxu0 0.0
    %6067 = vmatprep.subr.mxu0 0.0
    %6068 = vmatpush1.msra.mxu0 0.0
    %6069 = vmatprep.subr.mxu0 0.0
    %6070 = vmatpush1.msra.mxu0 0.0
    %6071 = vmatprep.subr.mxu0 0.0
    %6072 = vmatpush1.msra.mxu0 0.0
    %6073 = vmatprep.subr.mxu0 0.0
    %6074 = vmatpush1.msra.mxu0 0.0
    %6075 = vmatprep.subr.mxu0 0.0
    %6076 = vmatpush1.msra.mxu0 0.0
    %6077 = vmatprep.subr.mxu0 0.0
    %6078 = vmatpush1.msra.mxu0 0.0
    %6079 = vmatprep.subr.mxu0 0.0
    %6080 = vmatpush1.msra.mxu0 0.0
    %6081 = vmatprep.subr.mxu0 0.0
    %6082 = vmatpush1.msra.mxu0 0.0
    %6083 = vmatprep.subr.mxu0 0.0
    %6084 = vmatpush1.msra.mxu0 0.0
    %6085 = vmatprep.subr.mxu0 0.0
    %6086 = vmatpush1.msra.mxu0 0.0
    %6087 = vmatprep.subr.mxu0 0.0
    %6088 = vmatpush1.msra.mxu0 0.0
    %6089 = vmatprep.subr.mxu0 0.0
    %6090 = vmatpush1.msra.mxu0 0.0
    %6091 = vmatprep.subr.mxu0 0.0
    %6092 = vmatpush1.msra.mxu0 0.0
    %6093 = vmatprep.subr.mxu0 0.0
    %6094 = vmatpush1.msra.mxu0 0.0
    %6095 = vmatprep.subr.mxu0 0.0
    %6096 = vmatpush1.msra.mxu0 0.0
    %6097 = vmatprep.subr.mxu0 0.0
    %6098 = vmatpush1.msra.mxu0 0.0
    %6099 = vmatprep.mubr.f32.mxu0 0.0
    %6100 = vmatmul.mubr.f32.gmra.mrb[0].mxu0 %v6030
    %v6101 = vpop.f32.mrb[0].mxu0
    %v6102 = vadd.f32 0.0, %v6101
    %v6103 = vpop.f32.mrb[0].mxu0
    %6104 = vmatprep.mubr.f32.mxu0 0.0
    %6105 = vmatmul.mubr.f32.gmra.mrb[0].mxu0 %v6033
    %v6106 = vpop.f32.mrb[0].mxu0
    %v6107 = vadd.f32 0.0, %v6106
    %v6108 = vpop.f32.mrb[0].mxu0
    %6109 = vdwg.mxu0
    %v6111 = vsel %vm3998, %v5762, 0
    %v6114 = vsel %vm3998, %v5763, 0
    %6116 = vmatprep.subr.mxu0 0.0
    %6117 = vmatpush1.msra.mxu0 %v3586
    %6118 = vmatprep.subr.mxu0 0.0
    %6119 = vmatpush1.msra.mxu0 %v3722
    %6120 = vmatprep.subr.mxu0 0.0
    %6121 = vmatpush1.msra.mxu0 0.0
    %6122 = vmatprep.subr.mxu0 0.0
    %6123 = vmatpush1.msra.mxu0 0.0
    %6124 = vmatprep.subr.mxu0 0.0
    %6125 = vmatpush1.msra.mxu0 0.0
    %6126 = vmatprep.subr.mxu0 0.0
    %6127 = vmatpush1.msra.mxu0 0.0
    %6128 = vmatprep.subr.mxu0 0.0
    %6129 = vmatpush1.msra.mxu0 0.0
    %6130 = vmatprep.subr.mxu0 0.0
    %6131 = vmatpush1.msra.mxu0 0.0
    %6132 = vmatprep.subr.mxu0 0.0
    %6133 = vmatpush1.msra.mxu0 0.0
    %6134 = vmatprep.subr.mxu0 0.0
    %6135 = vmatpush1.msra.mxu0 0.0
    %6136 = vmatprep.subr.mxu0 0.0
    %6137 = vmatpush1.msra.mxu0 0.0
    %6138 = vmatprep.subr.mxu0 0.0
    %6139 = vmatpush1.msra.mxu0 0.0
    %6140 = vmatprep.subr.mxu0 0.0
    %6141 = vmatpush1.msra.mxu0 0.0
    %6142 = vmatprep.subr.mxu0 0.0
    %6143 = vmatpush1.msra.mxu0 0.0
    %6144 = vmatprep.subr.mxu0 0.0
    %6145 = vmatpush1.msra.mxu0 0.0
    %6146 = vmatprep.subr.mxu0 0.0
    %6147 = vmatpush1.msra.mxu0 0.0
    %6148 = vmatprep.subr.mxu0 0.0
    %6149 = vmatpush1.msra.mxu0 0.0
    %6150 = vmatprep.subr.mxu0 0.0
    %6151 = vmatpush1.msra.mxu0 0.0
    %6152 = vmatprep.subr.mxu0 0.0
    %6153 = vmatpush1.msra.mxu0 0.0
    %6154 = vmatprep.subr.mxu0 0.0
    %6155 = vmatpush1.msra.mxu0 0.0
    %6156 = vmatprep.subr.mxu0 0.0
    %6157 = vmatpush1.msra.mxu0 0.0
    %6158 = vmatprep.subr.mxu0 0.0
    %6159 = vmatpush1.msra.mxu0 0.0
    %6160 = vmatprep.subr.mxu0 0.0
    %6161 = vmatpush1.msra.mxu0 0.0
    %6162 = vmatprep.subr.mxu0 0.0
    %6163 = vmatpush1.msra.mxu0 0.0
    %6164 = vmatprep.subr.mxu0 0.0
    %6165 = vmatpush1.msra.mxu0 0.0
    %6166 = vmatprep.subr.mxu0 0.0
    %6167 = vmatpush1.msra.mxu0 0.0
    %6168 = vmatprep.subr.mxu0 0.0
    %6169 = vmatpush1.msra.mxu0 0.0
    %6170 = vmatprep.subr.mxu0 0.0
    %6171 = vmatpush1.msra.mxu0 0.0
    %6172 = vmatprep.subr.mxu0 0.0
    %6173 = vmatpush1.msra.mxu0 0.0
    %6174 = vmatprep.subr.mxu0 0.0
    %6175 = vmatpush1.msra.mxu0 0.0
    %6176 = vmatprep.subr.mxu0 0.0
    %6177 = vmatpush1.msra.mxu0 0.0
    %6178 = vmatprep.subr.mxu0 0.0
    %6179 = vmatpush1.msra.mxu0 0.0
    %6180 = vmatprep.mubr.f32.mxu0 0.0
    %6181 = vmatmul.mubr.f32.gmra.mrb[0].mxu0 %v6111
    %v6182 = vpop.f32.mrb[0].mxu0
    %v6183 = vadd.f32 0.0, %v6182
    %v6184 = vpop.f32.mrb[0].mxu0
    %6185 = vmatprep.mubr.f32.mxu0 0.0
    %6186 = vmatmul.mubr.f32.gmra.mrb[0].mxu0 %v6114
    %v6187 = vpop.f32.mrb[0].mxu0
    %v6188 = vadd.f32 0.0, %v6187
    %v6189 = vpop.f32.mrb[0].mxu0
    %6190 = vdwg.mxu0
    %v6192 = vsel %vm3998, %v5764, 0
    %v6195 = vsel %vm3998, %v5765, 0
    %6197 = vmatprep.subr.mxu0 0.0
    %6198 = vmatpush1.msra.mxu0 %v3587
    %6199 = vmatprep.subr.mxu0 0.0
    %6200 = vmatpush1.msra.mxu0 %v3723
    %6201 = vmatprep.subr.mxu0 0.0
    %6202 = vmatpush1.msra.mxu0 0.0
    %6203 = vmatprep.subr.mxu0 0.0
    %6204 = vmatpush1.msra.mxu0 0.0
    %6205 = vmatprep.subr.mxu0 0.0
    %6206 = vmatpush1.msra.mxu0 0.0
    %6207 = vmatprep.subr.mxu0 0.0
    %6208 = vmatpush1.msra.mxu0 0.0
    %6209 = vmatprep.subr.mxu0 0.0
    %6210 = vmatpush1.msra.mxu0 0.0
    %6211 = vmatprep.subr.mxu0 0.0
    %6212 = vmatpush1.msra.mxu0 0.0
    %6213 = vmatprep.subr.mxu0 0.0
    %6214 = vmatpush1.msra.mxu0 0.0
    %6215 = vmatprep.subr.mxu0 0.0
    %6216 = vmatpush1.msra.mxu0 0.0
    %6217 = vmatprep.subr.mxu0 0.0
    %6218 = vmatpush1.msra.mxu0 0.0
    %6219 = vmatprep.subr.mxu0 0.0
    %6220 = vmatpush1.msra.mxu0 0.0
    %6221 = vmatprep.subr.mxu0 0.0
    %6222 = vmatpush1.msra.mxu0 0.0
    %6223 = vmatprep.subr.mxu0 0.0
    %6224 = vmatpush1.msra.mxu0 0.0
    %6225 = vmatprep.subr.mxu0 0.0
    %6226 = vmatpush1.msra.mxu0 0.0
    %6227 = vmatprep.subr.mxu0 0.0
    %6228 = vmatpush1.msra.mxu0 0.0
    %6229 = vmatprep.subr.mxu0 0.0
    %6230 = vmatpush1.msra.mxu0 0.0
    %6231 = vmatprep.subr.mxu0 0.0
    %6232 = vmatpush1.msra.mxu0 0.0
    %6233 = vmatprep.subr.mxu0 0.0
    %6234 = vmatpush1.msra.mxu0 0.0
    %6235 = vmatprep.subr.mxu0 0.0
    %6236 = vmatpush1.msra.mxu0 0.0
    %6237 = vmatprep.subr.mxu0 0.0
    %6238 = vmatpush1.msra.mxu0 0.0
    %6239 = vmatprep.subr.mxu0 0.0
    %6240 = vmatpush1.msra.mxu0 0.0
    %6241 = vmatprep.subr.mxu0 0.0
    %6242 = vmatpush1.msra.mxu0 0.0
    %6243 = vmatprep.subr.mxu0 0.0
    %6244 = vmatpush1.msra.mxu0 0.0
    %6245 = vmatprep.subr.mxu0 0.0
    %6246 = vmatpush1.msra.mxu0 0.0
    %6247 = vmatprep.subr.mxu0 0.0
    %6248 = vmatpush1.msra.mxu0 0.0
    %6249 = vmatprep.subr.mxu0 0.0
    %6250 = vmatpush1.msra.mxu0 0.0
    %6251 = vmatprep.subr.mxu0 0.0
    %6252 = vmatpush1.msra.mxu0 0.0
    %6253 = vmatprep.subr.mxu0 0.0
    %6254 = vmatpush1.msra.mxu0 0.0
    %6255 = vmatprep.subr.mxu0 0.0
    %6256 = vmatpush1.msra.mxu0 0.0
    %6257 = vmatprep.subr.mxu0 0.0
    %6258 = vmatpush1.msra.mxu0 0.0
    %6259 = vmatprep.subr.mxu0 0.0
    %6260 = vmatpush1.msra.mxu0 0.0
    %6261 = vmatprep.mubr.f32.mxu0 0.0
    %6262 = vmatmul.mubr.f32.gmra.mrb[0].mxu0 %v6192
    %v6263 = vpop.f32.mrb[0].mxu0
    %v6264 = vadd.f32 0.0, %v6263
    %v6265 = vpop.f32.mrb[0].mxu0
    %6266 = vmatprep.mubr.f32.mxu0 0.0
    %6267 = vmatmul.mubr.f32.gmra.mrb[0].mxu0 %v6195
    %v6268 = vpop.f32.mrb[0].mxu0
    %v6269 = vadd.f32 0.0, %v6268
    %v6270 = vpop.f32.mrb[0].mxu0
    %6271 = vdwg.mxu0
    %v6273 = vsel %vm3998, %v5766, 0
    %v6276 = vsel %vm3998, %v5767, 0
    %6278 = vmatprep.subr.mxu0 0.0
    %6279 = vmatpush1.msra.mxu0 %v3588
    %6280 = vmatprep.subr.mxu0 0.0
    %6281 = vmatpush1.msra.mxu0 %v3724
    %6282 = vmatprep.subr.mxu0 0.0
    %6283 = vmatpush1.msra.mxu0 0.0
    %6284 = vmatprep.subr.mxu0 0.0
    %6285 = vmatpush1.msra.mxu0 0.0
    %6286 = vmatprep.subr.mxu0 0.0
    %6287 = vmatpush1.msra.mxu0 0.0
    %6288 = vmatprep.subr.mxu0 0.0
    %6289 = vmatpush1.msra.mxu0 0.0
    %6290 = vmatprep.subr.mxu0 0.0
    %6291 = vmatpush1.msra.mxu0 0.0
    %6292 = vmatprep.subr.mxu0 0.0
    %6293 = vmatpush1.msra.mxu0 0.0
    %6294 = vmatprep.subr.mxu0 0.0
    %6295 = vmatpush1.msra.mxu0 0.0
    %6296 = vmatprep.subr.mxu0 0.0
    %6297 = vmatpush1.msra.mxu0 0.0
    %6298 = vmatprep.subr.mxu0 0.0
    %6299 = vmatpush1.msra.mxu0 0.0
    %6300 = vmatprep.subr.mxu0 0.0
    %6301 = vmatpush1.msra.mxu0 0.0
    %6302 = vmatprep.subr.mxu0 0.0
    %6303 = vmatpush1.msra.mxu0 0.0
    %6304 = vmatprep.subr.mxu0 0.0
    %6305 = vmatpush1.msra.mxu0 0.0
    %6306 = vmatprep.subr.mxu0 0.0
    %6307 = vmatpush1.msra.mxu0 0.0
    %6308 = vmatprep.subr.mxu0 0.0
    %6309 = vmatpush1.msra.mxu0 0.0
    %6310 = vmatprep.subr.mxu0 0.0
    %6311 = vmatpush1.msra.mxu0 0.0
    %6312 = vmatprep.subr.mxu0 0.0
    %6313 = vmatpush1.msra.mxu0 0.0
    %6314 = vmatprep.subr.mxu0 0.0
    %6315 = vmatpush1.msra.mxu0 0.0
    %6316 = vmatprep.subr.mxu0 0.0
    %6317 = vmatpush1.msra.mxu0 0.0
    %6318 = vmatprep.subr.mxu0 0.0
    %6319 = vmatpush1.msra.mxu0 0.0
    %6320 = vmatprep.subr.mxu0 0.0
    %6321 = vmatpush1.msra.mxu0 0.0
    %6322 = vmatprep.subr.mxu0 0.0
    %6323 = vmatpush1.msra.mxu0 0.0
    %6324 = vmatprep.subr.mxu0 0.0
    %6325 = vmatpush1.msra.mxu0 0.0
    %6326 = vmatprep.subr.mxu0 0.0
    %6327 = vmatpush1.msra.mxu0 0.0
    %6328 = vmatprep.subr.mxu0 0.0
    %6329 = vmatpush1.msra.mxu0 0.0
    %6330 = vmatprep.subr.mxu0 0.0
    %6331 = vmatpush1.msra.mxu0 0.0
    %6332 = vmatprep.subr.mxu0 0.0
    %6333 = vmatpush1.msra.mxu0 0.0
    %6334 = vmatprep.subr.mxu0 0.0
    %6335 = vmatpush1.msra.mxu0 0.0
    %6336 = vmatprep.subr.mxu0 0.0
    %6337 = vmatpush1.msra.mxu0 0.0
    %6338 = vmatprep.subr.mxu0 0.0
    %6339 = vmatpush1.msra.mxu0 0.0
    %6340 = vmatprep.subr.mxu0 0.0
    %6341 = vmatpush1.msra.mxu0 0.0
    %6342 = vmatprep.mubr.f32.mxu0 0.0
    %6343 = vmatmul.mubr.f32.gmra.mrb[0].mxu0 %v6273
    %v6344 = vpop.f32.mrb[0].mxu0
    %v6345 = vadd.f32 0.0, %v6344
    %v6346 = vpop.f32.mrb[0].mxu0
    %6347 = vmatprep.mubr.f32.mxu0 0.0
    %6348 = vmatmul.mubr.f32.gmra.mrb[0].mxu0 %v6276
    %v6349 = vpop.f32.mrb[0].mxu0
    %v6350 = vadd.f32 0.0, %v6349
    %v6351 = vpop.f32.mrb[0].mxu0
    %6352 = vdwg.mxu0
    %v6354 = vsel %vm3998, %v5768, 0
    %v6357 = vsel %vm3998, %v5769, 0
    %6359 = vmatprep.subr.mxu0 0.0
    %6360 = vmatpush1.msra.mxu0 %v3589
    %6361 = vmatprep.subr.mxu0 0.0
    %6362 = vmatpush1.msra.mxu0 %v3725
    %6363 = vmatprep.subr.mxu0 0.0
    %6364 = vmatpush1.msra.mxu0 0.0
    %6365 = vmatprep.subr.mxu0 0.0
    %6366 = vmatpush1.msra.mxu0 0.0
    %6367 = vmatprep.subr.mxu0 0.0
    %6368 = vmatpush1.msra.mxu0 0.0
    %6369 = vmatprep.subr.mxu0 0.0
    %6370 = vmatpush1.msra.mxu0 0.0
    %6371 = vmatprep.subr.mxu0 0.0
    %6372 = vmatpush1.msra.mxu0 0.0
    %6373 = vmatprep.subr.mxu0 0.0
    %6374 = vmatpush1.msra.mxu0 0.0
    %6375 = vmatprep.subr.mxu0 0.0
    %6376 = vmatpush1.msra.mxu0 0.0
    %6377 = vmatprep.subr.mxu0 0.0
    %6378 = vmatpush1.msra.mxu0 0.0
    %6379 = vmatprep.subr.mxu0 0.0
    %6380 = vmatpush1.msra.mxu0 0.0
    %6381 = vmatprep.subr.mxu0 0.0
    %6382 = vmatpush1.msra.mxu0 0.0
    %6383 = vmatprep.subr.mxu0 0.0
    %6384 = vmatpush1.msra.mxu0 0.0
    %6385 = vmatprep.subr.mxu0 0.0
    %6386 = vmatpush1.msra.mxu0 0.0
    %6387 = vmatprep.subr.mxu0 0.0
    %6388 = vmatpush1.msra.mxu0 0.0
    %6389 = vmatprep.subr.mxu0 0.0
    %6390 = vmatpush1.msra.mxu0 0.0
    %6391 = vmatprep.subr.mxu0 0.0
    %6392 = vmatpush1.msra.mxu0 0.0
    %6393 = vmatprep.subr.mxu0 0.0
    %6394 = vmatpush1.msra.mxu0 0.0
    %6395 = vmatprep.subr.mxu0 0.0
    %6396 = vmatpush1.msra.mxu0 0.0
    %6397 = vmatprep.subr.mxu0 0.0
    %6398 = vmatpush1.msra.mxu0 0.0
    %6399 = vmatprep.subr.mxu0 0.0
    %6400 = vmatpush1.msra.mxu0 0.0
    %6401 = vmatprep.subr.mxu0 0.0
    %6402 = vmatpush1.msra.mxu0 0.0
    %6403 = vmatprep.subr.mxu0 0.0
    %6404 = vmatpush1.msra.mxu0 0.0
    %6405 = vmatprep.subr.mxu0 0.0
    %6406 = vmatpush1.msra.mxu0 0.0
    %6407 = vmatprep.subr.mxu0 0.0
    %6408 = vmatpush1.msra.mxu0 0.0
    %6409 = vmatprep.subr.mxu0 0.0
    %6410 = vmatpush1.msra.mxu0 0.0
    %6411 = vmatprep.subr.mxu0 0.0
    %6412 = vmatpush1.msra.mxu0 0.0
    %6413 = vmatprep.subr.mxu0 0.0
    %6414 = vmatpush1.msra.mxu0 0.0
    %6415 = vmatprep.subr.mxu0 0.0
    %6416 = vmatpush1.msra.mxu0 0.0
    %6417 = vmatprep.subr.mxu0 0.0
    %6418 = vmatpush1.msra.mxu0 0.0
    %6419 = vmatprep.subr.mxu0 0.0
    %6420 = vmatpush1.msra.mxu0 0.0
    %6421 = vmatprep.subr.mxu0 0.0
    %6422 = vmatpush1.msra.mxu0 0.0
    %6423 = vmatprep.mubr.f32.mxu0 0.0
    %6424 = vmatmul.mubr.f32.gmra.mrb[0].mxu0 %v6354
    %v6425 = vpop.f32.mrb[0].mxu0
    %v6426 = vadd.f32 0.0, %v6425
    %v6427 = vpop.f32.mrb[0].mxu0
    %6428 = vmatprep.mubr.f32.mxu0 0.0
    %6429 = vmatmul.mubr.f32.gmra.mrb[0].mxu0 %v6357
    %v6430 = vpop.f32.mrb[0].mxu0
    %v6431 = vadd.f32 0.0, %v6430
    %v6432 = vpop.f32.mrb[0].mxu0
    %6433 = vdwg.mxu0
    %v6435 = vsel %vm3998, %v5770, 0
    %v6438 = vsel %vm3998, %v5771, 0
    %6440 = vmatprep.subr.mxu0 0.0
    %6441 = vmatpush1.msra.mxu0 %v3854
    %6442 = vmatprep.subr.mxu0 0.0
    %6443 = vmatpush1.msra.mxu0 %v3990
    %6444 = vmatprep.subr.mxu0 0.0
    %6445 = vmatpush1.msra.mxu0 0.0
    %6446 = vmatprep.subr.mxu0 0.0
    %6447 = vmatpush1.msra.mxu0 0.0
    %6448 = vmatprep.subr.mxu0 0.0
    %6449 = vmatpush1.msra.mxu0 0.0
    %6450 = vmatprep.subr.mxu0 0.0
    %6451 = vmatpush1.msra.mxu0 0.0
    %6452 = vmatprep.subr.mxu0 0.0
    %6453 = vmatpush1.msra.mxu0 0.0
    %6454 = vmatprep.subr.mxu0 0.0
    %6455 = vmatpush1.msra.mxu0 0.0
    %6456 = vmatprep.subr.mxu0 0.0
    %6457 = vmatpush1.msra.mxu0 0.0
    %6458 = vmatprep.subr.mxu0 0.0
    %6459 = vmatpush1.msra.mxu0 0.0
    %6460 = vmatprep.subr.mxu0 0.0
    %6461 = vmatpush1.msra.mxu0 0.0
    %6462 = vmatprep.subr.mxu0 0.0
    %6463 = vmatpush1.msra.mxu0 0.0
    %6464 = vmatprep.subr.mxu0 0.0
    %6465 = vmatpush1.msra.mxu0 0.0
    %6466 = vmatprep.subr.mxu0 0.0
    %6467 = vmatpush1.msra.mxu0 0.0
    %6468 = vmatprep.subr.mxu0 0.0
    %6469 = vmatpush1.msra.mxu0 0.0
    %6470 = vmatprep.subr.mxu0 0.0
    %6471 = vmatpush1.msra.mxu0 0.0
    %6472 = vmatprep.subr.mxu0 0.0
    %6473 = vmatpush1.msra.mxu0 0.0
    %6474 = vmatprep.subr.mxu0 0.0
    %6475 = vmatpush1.msra.mxu0 0.0
    %6476 = vmatprep.subr.mxu0 0.0
    %6477 = vmatpush1.msra.mxu0 0.0
    %6478 = vmatprep.subr.mxu0 0.0
    %6479 = vmatpush1.msra.mxu0 0.0
    %6480 = vmatprep.subr.mxu0 0.0
    %6481 = vmatpush1.msra.mxu0 0.0
    %6482 = vmatprep.subr.mxu0 0.0
    %6483 = vmatpush1.msra.mxu0 0.0
    %6484 = vmatprep.subr.mxu0 0.0
    %6485 = vmatpush1.msra.mxu0 0.0
    %6486 = vmatprep.subr.mxu0 0.0
    %6487 = vmatpush1.msra.mxu0 0.0
    %6488 = vmatprep.subr.mxu0 0.0
    %6489 = vmatpush1.msra.mxu0 0.0
    %6490 = vmatprep.subr.mxu0 0.0
    %6491 = vmatpush1.msra.mxu0 0.0
    %6492 = vmatprep.subr.mxu0 0.0
    %6493 = vmatpush1.msra.mxu0 0.0
    %6494 = vmatprep.subr.mxu0 0.0
    %6495 = vmatpush1.msra.mxu0 0.0
    %6496 = vmatprep.subr.mxu0 0.0
    %6497 = vmatpush1.msra.mxu0 0.0
    %6498 = vmatprep.subr.mxu0 0.0
    %6499 = vmatpush1.msra.mxu0 0.0
    %6500 = vmatprep.subr.mxu0 0.0
    %6501 = vmatpush1.msra.mxu0 0.0
    %6502 = vmatprep.subr.mxu0 0.0
    %6503 = vmatpush1.msra.mxu0 0.0
    %6504 = vmatprep.mubr.f32.mxu0 0.0
    %6505 = vmatmul.mubr.f32.gmra.mrb[0].mxu0 %v6435
    %v6506 = vpop.f32.mrb[0].mxu0
    %v6507 = vadd.f32 0.0, %v6506
    %v6508 = vpop.f32.mrb[0].mxu0
    %6509 = vmatprep.mubr.f32.mxu0 0.0
    %6510 = vmatmul.mubr.f32.gmra.mrb[0].mxu0 %v6438
    %v6511 = vpop.f32.mrb[0].mxu0
    %v6512 = vadd.f32 0.0, %v6511
    %v6513 = vpop.f32.mrb[0].mxu0
    %6514 = vdwg.mxu0
    %v6516 = vsel %vm3998, %v5772, 0
    %v6519 = vsel %vm3998, %v5773, 0
    %6521 = vmatprep.subr.mxu0 0.0
    %6522 = vmatpush1.msra.mxu0 %v3855
    %6523 = vmatprep.subr.mxu0 0.0
    %6524 = vmatpush1.msra.mxu0 %v3991
    %6525 = vmatprep.subr.mxu0 0.0
    %6526 = vmatpush1.msra.mxu0 0.0
    %6527 = vmatprep.subr.mxu0 0.0
    %6528 = vmatpush1.msra.mxu0 0.0
    %6529 = vmatprep.subr.mxu0 0.0
    %6530 = vmatpush1.msra.mxu0 0.0
    %6531 = vmatprep.subr.mxu0 0.0
    %6532 = vmatpush1.msra.mxu0 0.0
    %6533 = vmatprep.subr.mxu0 0.0
    %6534 = vmatpush1.msra.mxu0 0.0
    %6535 = vmatprep.subr.mxu0 0.0
    %6536 = vmatpush1.msra.mxu0 0.0
    %6537 = vmatprep.subr.mxu0 0.0
    %6538 = vmatpush1.msra.mxu0 0.0
    %6539 = vmatprep.subr.mxu0 0.0
    %6540 = vmatpush1.msra.mxu0 0.0
    %6541 = vmatprep.subr.mxu0 0.0
    %6542 = vmatpush1.msra.mxu0 0.0
    %6543 = vmatprep.subr.mxu0 0.0
    %6544 = vmatpush1.msra.mxu0 0.0
    %6545 = vmatprep.subr.mxu0 0.0
    %6546 = vmatpush1.msra.mxu0 0.0
    %6547 = vmatprep.subr.mxu0 0.0
    %6548 = vmatpush1.msra.mxu0 0.0
    %6549 = vmatprep.subr.mxu0 0.0
    %6550 = vmatpush1.msra.mxu0 0.0
    %6551 = vmatprep.subr.mxu0 0.0
    %6552 = vmatpush1.msra.mxu0 0.0
    %6553 = vmatprep.subr.mxu0 0.0
    %6554 = vmatpush1.msra.mxu0 0.0
    %6555 = vmatprep.subr.mxu0 0.0
    %6556 = vmatpush1.msra.mxu0 0.0
    %6557 = vmatprep.subr.mxu0 0.0
    %6558 = vmatpush1.msra.mxu0 0.0
    %6559 = vmatprep.subr.mxu0 0.0
    %6560 = vmatpush1.msra.mxu0 0.0
    %6561 = vmatprep.subr.mxu0 0.0
    %6562 = vmatpush1.msra.mxu0 0.0
    %6563 = vmatprep.subr.mxu0 0.0
    %6564 = vmatpush1.msra.mxu0 0.0
    %6565 = vmatprep.subr.mxu0 0.0
    %6566 = vmatpush1.msra.mxu0 0.0
    %6567 = vmatprep.subr.mxu0 0.0
    %6568 = vmatpush1.msra.mxu0 0.0
    %6569 = vmatprep.subr.mxu0 0.0
    %6570 = vmatpush1.msra.mxu0 0.0
    %6571 = vmatprep.subr.mxu0 0.0
    %6572 = vmatpush1.msra.mxu0 0.0
    %6573 = vmatprep.subr.mxu0 0.0
    %6574 = vmatpush1.msra.mxu0 0.0
    %6575 = vmatprep.subr.mxu0 0.0
    %6576 = vmatpush1.msra.mxu0 0.0
    %6577 = vmatprep.subr.mxu0 0.0
    %6578 = vmatpush1.msra.mxu0 0.0
    %6579 = vmatprep.subr.mxu0 0.0
    %6580 = vmatpush1.msra.mxu0 0.0
    %6581 = vmatprep.subr.mxu0 0.0
    %6582 = vmatpush1.msra.mxu0 0.0
    %6583 = vmatprep.subr.mxu0 0.0
    %6584 = vmatpush1.msra.mxu0 0.0
    %6585 = vmatprep.mubr.f32.mxu0 0.0
    %6586 = vmatmul.mubr.f32.gmra.mrb[0].mxu0 %v6516
    %v6587 = vpop.f32.mrb[0].mxu0
    %v6588 = vadd.f32 0.0, %v6587
    %v6589 = vpop.f32.mrb[0].mxu0
    %6590 = vmatprep.mubr.f32.mxu0 0.0
    %6591 = vmatmul.mubr.f32.gmra.mrb[0].mxu0 %v6519
    %v6592 = vpop.f32.mrb[0].mxu0
    %v6593 = vadd.f32 0.0, %v6592
    %v6594 = vpop.f32.mrb[0].mxu0
    %6595 = vdwg.mxu0
    %v6597 = vsel %vm3998, %v5774, 0
    %v6600 = vsel %vm3998, %v5775, 0
    %6602 = vmatprep.subr.mxu0 0.0
    %6603 = vmatpush1.msra.mxu0 %v3856
    %6604 = vmatprep.subr.mxu0 0.0
    %6605 = vmatpush1.msra.mxu0 %v3992
    %6606 = vmatprep.subr.mxu0 0.0
    %6607 = vmatpush1.msra.mxu0 0.0
    %6608 = vmatprep.subr.mxu0 0.0
    %6609 = vmatpush1.msra.mxu0 0.0
    %6610 = vmatprep.subr.mxu0 0.0
    %6611 = vmatpush1.msra.mxu0 0.0
    %6612 = vmatprep.subr.mxu0 0.0
    %6613 = vmatpush1.msra.mxu0 0.0
    %6614 = vmatprep.subr.mxu0 0.0
    %6615 = vmatpush1.msra.mxu0 0.0
    %6616 = vmatprep.subr.mxu0 0.0
    %6617 = vmatpush1.msra.mxu0 0.0
    %6618 = vmatprep.subr.mxu0 0.0
    %6619 = vmatpush1.msra.mxu0 0.0
    %6620 = vmatprep.subr.mxu0 0.0
    %6621 = vmatpush1.msra.mxu0 0.0
    %6622 = vmatprep.subr.mxu0 0.0
    %6623 = vmatpush1.msra.mxu0 0.0
    %6624 = vmatprep.subr.mxu0 0.0
    %6625 = vmatpush1.msra.mxu0 0.0
    %6626 = vmatprep.subr.mxu0 0.0
    %6627 = vmatpush1.msra.mxu0 0.0
    %6628 = vmatprep.subr.mxu0 0.0
    %6629 = vmatpush1.msra.mxu0 0.0
    %6630 = vmatprep.subr.mxu0 0.0
    %6631 = vmatpush1.msra.mxu0 0.0
    %6632 = vmatprep.subr.mxu0 0.0
    %6633 = vmatpush1.msra.mxu0 0.0
    %6634 = vmatprep.subr.mxu0 0.0
    %6635 = vmatpush1.msra.mxu0 0.0
    %6636 = vmatprep.subr.mxu0 0.0
    %6637 = vmatpush1.msra.mxu0 0.0
    %6638 = vmatprep.subr.mxu0 0.0
    %6639 = vmatpush1.msra.mxu0 0.0
    %6640 = vmatprep.subr.mxu0 0.0
    %6641 = vmatpush1.msra.mxu0 0.0
    %6642 = vmatprep.subr.mxu0 0.0
    %6643 = vmatpush1.msra.mxu0 0.0
    %6644 = vmatprep.subr.mxu0 0.0
    %6645 = vmatpush1.msra.mxu0 0.0
    %6646 = vmatprep.subr.mxu0 0.0
    %6647 = vmatpush1.msra.mxu0 0.0
    %6648 = vmatprep.subr.mxu0 0.0
    %6649 = vmatpush1.msra.mxu0 0.0
    %6650 = vmatprep.subr.mxu0 0.0
    %6651 = vmatpush1.msra.mxu0 0.0
    %6652 = vmatprep.subr.mxu0 0.0
    %6653 = vmatpush1.msra.mxu0 0.0
    %6654 = vmatprep.subr.mxu0 0.0
    %6655 = vmatpush1.msra.mxu0 0.0
    %6656 = vmatprep.subr.mxu0 0.0
    %6657 = vmatpush1.msra.mxu0 0.0
    %6658 = vmatprep.subr.mxu0 0.0
    %6659 = vmatpush1.msra.mxu0 0.0
    %6660 = vmatprep.subr.mxu0 0.0
    %6661 = vmatpush1.msra.mxu0 0.0
    %6662 = vmatprep.subr.mxu0 0.0
    %6663 = vmatpush1.msra.mxu0 0.0
    %6664 = vmatprep.subr.mxu0 0.0
    %6665 = vmatpush1.msra.mxu0 0.0
    %6666 = vmatprep.mubr.f32.mxu0 0.0
    %6667 = vmatmul.mubr.f32.gmra.mrb[0].mxu0 %v6597
    %v6668 = vpop.f32.mrb[0].mxu0
    %v6669 = vadd.f32 0.0, %v6668
    %v6670 = vpop.f32.mrb[0].mxu0
    %6671 = vmatprep.mubr.f32.mxu0 0.0
    %6672 = vmatmul.mubr.f32.gmra.mrb[0].mxu0 %v6600
    %v6673 = vpop.f32.mrb[0].mxu0
    %v6674 = vadd.f32 0.0, %v6673
    %v6675 = vpop.f32.mrb[0].mxu0
    %6676 = vdwg.mxu0
    %v6678 = vsel %vm3998, %v5776, 0
    %v6681 = vsel %vm3998, %v5777, 0
    %6683 = vmatprep.subr.mxu0 0.0
    %6684 = vmatpush1.msra.mxu0 %v3857
    %6685 = vmatprep.subr.mxu0 0.0
    %6686 = vmatpush1.msra.mxu0 %v3993
    %6687 = vmatprep.subr.mxu0 0.0
    %6688 = vmatpush1.msra.mxu0 0.0
    %6689 = vmatprep.subr.mxu0 0.0
    %6690 = vmatpush1.msra.mxu0 0.0
    %6691 = vmatprep.subr.mxu0 0.0
    %6692 = vmatpush1.msra.mxu0 0.0
    %6693 = vmatprep.subr.mxu0 0.0
    %6694 = vmatpush1.msra.mxu0 0.0
    %6695 = vmatprep.subr.mxu0 0.0
    %6696 = vmatpush1.msra.mxu0 0.0
    %6697 = vmatprep.subr.mxu0 0.0
    %6698 = vmatpush1.msra.mxu0 0.0
    %6699 = vmatprep.subr.mxu0 0.0
    %6700 = vmatpush1.msra.mxu0 0.0
    %6701 = vmatprep.subr.mxu0 0.0
    %6702 = vmatpush1.msra.mxu0 0.0
    %6703 = vmatprep.subr.mxu0 0.0
    %6704 = vmatpush1.msra.mxu0 0.0
    %6705 = vmatprep.subr.mxu0 0.0
    %6706 = vmatpush1.msra.mxu0 0.0
    %6707 = vmatprep.subr.mxu0 0.0
    %6708 = vmatpush1.msra.mxu0 0.0
    %6709 = vmatprep.subr.mxu0 0.0
    %6710 = vmatpush1.msra.mxu0 0.0
    %6711 = vmatprep.subr.mxu0 0.0
    %6712 = vmatpush1.msra.mxu0 0.0
    %6713 = vmatprep.subr.mxu0 0.0
    %6714 = vmatpush1.msra.mxu0 0.0
    %6715 = vmatprep.subr.mxu0 0.0
    %6716 = vmatpush1.msra.mxu0 0.0
    %6717 = vmatprep.subr.mxu0 0.0
    %6718 = vmatpush1.msra.mxu0 0.0
    %6719 = vmatprep.subr.mxu0 0.0
    %6720 = vmatpush1.msra.mxu0 0.0
    %6721 = vmatprep.subr.mxu0 0.0
    %6722 = vmatpush1.msra.mxu0 0.0
    %6723 = vmatprep.subr.mxu0 0.0
    %6724 = vmatpush1.msra.mxu0 0.0
    %6725 = vmatprep.subr.mxu0 0.0
    %6726 = vmatpush1.msra.mxu0 0.0
    %6727 = vmatprep.subr.mxu0 0.0
    %6728 = vmatpush1.msra.mxu0 0.0
    %6729 = vmatprep.subr.mxu0 0.0
    %6730 = vmatpush1.msra.mxu0 0.0
    %6731 = vmatprep.subr.mxu0 0.0
    %6732 = vmatpush1.msra.mxu0 0.0
    %6733 = vmatprep.subr.mxu0 0.0
    %6734 = vmatpush1.msra.mxu0 0.0
    %6735 = vmatprep.subr.mxu0 0.0
    %6736 = vmatpush1.msra.mxu0 0.0
    %6737 = vmatprep.subr.mxu0 0.0
    %6738 = vmatpush1.msra.mxu0 0.0
    %6739 = vmatprep.subr.mxu0 0.0
    %6740 = vmatpush1.msra.mxu0 0.0
    %6741 = vmatprep.subr.mxu0 0.0
    %6742 = vmatpush1.msra.mxu0 0.0
    %6743 = vmatprep.subr.mxu0 0.0
    %6744 = vmatpush1.msra.mxu0 0.0
    %6745 = vmatprep.subr.mxu0 0.0
    %6746 = vmatpush1.msra.mxu0 0.0
    %6747 = vmatprep.mubr.f32.mxu0 0.0
    %6748 = vmatmul.mubr.f32.gmra.mrb[0].mxu0 %v6678
    %v6749 = vpop.f32.mrb[0].mxu0
    %v6750 = vadd.f32 0.0, %v6749
    %v6751 = vpop.f32.mrb[0].mxu0
    %6752 = vmatprep.mubr.f32.mxu0 0.0
    %6753 = vmatmul.mubr.f32.gmra.mrb[0].mxu0 %v6681
    %v6754 = vpop.f32.mrb[0].mxu0
    %v6755 = vadd.f32 0.0, %v6754
    %v6756 = vpop.f32.mrb[0].mxu0
    %6757 = vdwg.mxu0
    %v6759 = vsel %vm3998, %v5778, 0
    %v6762 = vsel %vm3998, %v5779, 0
    %6764 = vmatprep.subr.mxu0 0.0
    %6765 = vmatpush1.msra.mxu0 %v3858
    %6766 = vmatprep.subr.mxu0 0.0
    %6767 = vmatpush1.msra.mxu0 %v3994
    %6768 = vmatprep.subr.mxu0 0.0
    %6769 = vmatpush1.msra.mxu0 0.0
    %6770 = vmatprep.subr.mxu0 0.0
    %6771 = vmatpush1.msra.mxu0 0.0
    %6772 = vmatprep.subr.mxu0 0.0
    %6773 = vmatpush1.msra.mxu0 0.0
    %6774 = vmatprep.subr.mxu0 0.0
    %6775 = vmatpush1.msra.mxu0 0.0
    %6776 = vmatprep.subr.mxu0 0.0
    %6777 = vmatpush1.msra.mxu0 0.0
    %6778 = vmatprep.subr.mxu0 0.0
    %6779 = vmatpush1.msra.mxu0 0.0
    %6780 = vmatprep.subr.mxu0 0.0
    %6781 = vmatpush1.msra.mxu0 0.0
    %6782 = vmatprep.subr.mxu0 0.0
    %6783 = vmatpush1.msra.mxu0 0.0
    %6784 = vmatprep.subr.mxu0 0.0
    %6785 = vmatpush1.msra.mxu0 0.0
    %6786 = vmatprep.subr.mxu0 0.0
    %6787 = vmatpush1.msra.mxu0 0.0
    %6788 = vmatprep.subr.mxu0 0.0
    %6789 = vmatpush1.msra.mxu0 0.0
    %6790 = vmatprep.subr.mxu0 0.0
    %6791 = vmatpush1.msra.mxu0 0.0
    %6792 = vmatprep.subr.mxu0 0.0
    %6793 = vmatpush1.msra.mxu0 0.0
    %6794 = vmatprep.subr.mxu0 0.0
    %6795 = vmatpush1.msra.mxu0 0.0
    %6796 = vmatprep.subr.mxu0 0.0
    %6797 = vmatpush1.msra.mxu0 0.0
    %6798 = vmatprep.subr.mxu0 0.0
    %6799 = vmatpush1.msra.mxu0 0.0
    %6800 = vmatprep.subr.mxu0 0.0
    %6801 = vmatpush1.msra.mxu0 0.0
    %6802 = vmatprep.subr.mxu0 0.0
    %6803 = vmatpush1.msra.mxu0 0.0
    %6804 = vmatprep.subr.mxu0 0.0
    %6805 = vmatpush1.msra.mxu0 0.0
    %6806 = vmatprep.subr.mxu0 0.0
    %6807 = vmatpush1.msra.mxu0 0.0
    %6808 = vmatprep.subr.mxu0 0.0
    %6809 = vmatpush1.msra.mxu0 0.0
    %6810 = vmatprep.subr.mxu0 0.0
    %6811 = vmatpush1.msra.mxu0 0.0
    %6812 = vmatprep.subr.mxu0 0.0
    %6813 = vmatpush1.msra.mxu0 0.0
    %6814 = vmatprep.subr.mxu0 0.0
    %6815 = vmatpush1.msra.mxu0 0.0
    %6816 = vmatprep.subr.mxu0 0.0
    %6817 = vmatpush1.msra.mxu0 0.0
    %6818 = vmatprep.subr.mxu0 0.0
    %6819 = vmatpush1.msra.mxu0 0.0
    %6820 = vmatprep.subr.mxu0 0.0
    %6821 = vmatpush1.msra.mxu0 0.0
    %6822 = vmatprep.subr.mxu0 0.0
    %6823 = vmatpush1.msra.mxu0 0.0
    %6824 = vmatprep.subr.mxu0 0.0
    %6825 = vmatpush1.msra.mxu0 0.0
    %6826 = vmatprep.subr.mxu0 0.0
    %6827 = vmatpush1.msra.mxu0 0.0
    %6828 = vmatprep.mubr.f32.mxu0 0.0
    %6829 = vmatmul.mubr.f32.gmra.mrb[0].mxu0 %v6759
    %v6830 = vpop.f32.mrb[0].mxu0
    %v6831 = vadd.f32 0.0, %v6830
    %v6832 = vpop.f32.mrb[0].mxu0
    %6833 = vmatprep.mubr.f32.mxu0 0.0
    %6834 = vmatmul.mubr.f32.gmra.mrb[0].mxu0 %v6762
    %v6835 = vpop.f32.mrb[0].mxu0
    %v6836 = vadd.f32 0.0, %v6835
    %v6837 = vpop.f32.mrb[0].mxu0
    %6838 = vdwg.mxu0
    %v6840 = vsel %vm3998, %v5780, 0
    %v6843 = vsel %vm3998, %v5781, 0
    %6845 = vmatprep.subr.mxu0 0.0
    %6846 = vmatpush1.msra.mxu0 %v3859
    %6847 = vmatprep.subr.mxu0 0.0
    %6848 = vmatpush1.msra.mxu0 %v3995
    %6849 = vmatprep.subr.mxu0 0.0
    %6850 = vmatpush1.msra.mxu0 0.0
    %6851 = vmatprep.subr.mxu0 0.0
    %6852 = vmatpush1.msra.mxu0 0.0
    %6853 = vmatprep.subr.mxu0 0.0
    %6854 = vmatpush1.msra.mxu0 0.0
    %6855 = vmatprep.subr.mxu0 0.0
    %6856 = vmatpush1.msra.mxu0 0.0
    %6857 = vmatprep.subr.mxu0 0.0
    %6858 = vmatpush1.msra.mxu0 0.0
    %6859 = vmatprep.subr.mxu0 0.0
    %6860 = vmatpush1.msra.mxu0 0.0
    %6861 = vmatprep.subr.mxu0 0.0
    %6862 = vmatpush1.msra.mxu0 0.0
    %6863 = vmatprep.subr.mxu0 0.0
    %6864 = vmatpush1.msra.mxu0 0.0
    %6865 = vmatprep.subr.mxu0 0.0
    %6866 = vmatpush1.msra.mxu0 0.0
    %6867 = vmatprep.subr.mxu0 0.0
    %6868 = vmatpush1.msra.mxu0 0.0
    %6869 = vmatprep.subr.mxu0 0.0
    %6870 = vmatpush1.msra.mxu0 0.0
    %6871 = vmatprep.subr.mxu0 0.0
    %6872 = vmatpush1.msra.mxu0 0.0
    %6873 = vmatprep.subr.mxu0 0.0
    %6874 = vmatpush1.msra.mxu0 0.0
    %6875 = vmatprep.subr.mxu0 0.0
    %6876 = vmatpush1.msra.mxu0 0.0
    %6877 = vmatprep.subr.mxu0 0.0
    %6878 = vmatpush1.msra.mxu0 0.0
    %6879 = vmatprep.subr.mxu0 0.0
    %6880 = vmatpush1.msra.mxu0 0.0
    %6881 = vmatprep.subr.mxu0 0.0
    %6882 = vmatpush1.msra.mxu0 0.0
    %6883 = vmatprep.subr.mxu0 0.0
    %6884 = vmatpush1.msra.mxu0 0.0
    %6885 = vmatprep.subr.mxu0 0.0
    %6886 = vmatpush1.msra.mxu0 0.0
    %6887 = vmatprep.subr.mxu0 0.0
    %6888 = vmatpush1.msra.mxu0 0.0
    %6889 = vmatprep.subr.mxu0 0.0
    %6890 = vmatpush1.msra.mxu0 0.0
    %6891 = vmatprep.subr.mxu0 0.0
    %6892 = vmatpush1.msra.mxu0 0.0
    %6893 = vmatprep.subr.mxu0 0.0
    %6894 = vmatpush1.msra.mxu0 0.0
    %6895 = vmatprep.subr.mxu0 0.0
    %6896 = vmatpush1.msra.mxu0 0.0
    %6897 = vmatprep.subr.mxu0 0.0
    %6898 = vmatpush1.msra.mxu0 0.0
    %6899 = vmatprep.subr.mxu0 0.0
    %6900 = vmatpush1.msra.mxu0 0.0
    %6901 = vmatprep.subr.mxu0 0.0
    %6902 = vmatpush1.msra.mxu0 0.0
    %6903 = vmatprep.subr.mxu0 0.0
    %6904 = vmatpush1.msra.mxu0 0.0
    %6905 = vmatprep.subr.mxu0 0.0
    %6906 = vmatpush1.msra.mxu0 0.0
    %6907 = vmatprep.subr.mxu0 0.0
    %6908 = vmatpush1.msra.mxu0 0.0
    %6909 = vmatprep.mubr.f32.mxu0 0.0
    %6910 = vmatmul.mubr.f32.gmra.mrb[0].mxu0 %v6840
    %v6911 = vpop.f32.mrb[0].mxu0
    %v6912 = vadd.f32 0.0, %v6911
    %v6913 = vpop.f32.mrb[0].mxu0
    %6914 = vmatprep.mubr.f32.mxu0 0.0
    %6915 = vmatmul.mubr.f32.gmra.mrb[0].mxu0 %v6843
    %v6916 = vpop.f32.mrb[0].mxu0
    %v6917 = vadd.f32 0.0, %v6916
    %v6918 = vpop.f32.mrb[0].mxu0
    %6919 = vdwg.mxu0
    %v6921 = vsel %vm3998, %v5782, 0
    %v6924 = vsel %vm3998, %v5783, 0
    %6926 = vmatprep.subr.mxu0 0.0
    %6927 = vmatpush1.msra.mxu0 %v3860
    %6928 = vmatprep.subr.mxu0 0.0
    %6929 = vmatpush1.msra.mxu0 %v3996
    %6930 = vmatprep.subr.mxu0 0.0
    %6931 = vmatpush1.msra.mxu0 0.0
    %6932 = vmatprep.subr.mxu0 0.0
    %6933 = vmatpush1.msra.mxu0 0.0
    %6934 = vmatprep.subr.mxu0 0.0
    %6935 = vmatpush1.msra.mxu0 0.0
    %6936 = vmatprep.subr.mxu0 0.0
    %6937 = vmatpush1.msra.mxu0 0.0
    %6938 = vmatprep.subr.mxu0 0.0
    %6939 = vmatpush1.msra.mxu0 0.0
    %6940 = vmatprep.subr.mxu0 0.0
    %6941 = vmatpush1.msra.mxu0 0.0
    %6942 = vmatprep.subr.mxu0 0.0
    %6943 = vmatpush1.msra.mxu0 0.0
    %6944 = vmatprep.subr.mxu0 0.0
    %6945 = vmatpush1.msra.mxu0 0.0
    %6946 = vmatprep.subr.mxu0 0.0
    %6947 = vmatpush1.msra.mxu0 0.0
    %6948 = vmatprep.subr.mxu0 0.0
    %6949 = vmatpush1.msra.mxu0 0.0
    %6950 = vmatprep.subr.mxu0 0.0
    %6951 = vmatpush1.msra.mxu0 0.0
    %6952 = vmatprep.subr.mxu0 0.0
    %6953 = vmatpush1.msra.mxu0 0.0
    %6954 = vmatprep.subr.mxu0 0.0
    %6955 = vmatpush1.msra.mxu0 0.0
    %6956 = vmatprep.subr.mxu0 0.0
    %6957 = vmatpush1.msra.mxu0 0.0
    %6958 = vmatprep.subr.mxu0 0.0
    %6959 = vmatpush1.msra.mxu0 0.0
    %6960 = vmatprep.subr.mxu0 0.0
    %6961 = vmatpush1.msra.mxu0 0.0
    %6962 = vmatprep.subr.mxu0 0.0
    %6963 = vmatpush1.msra.mxu0 0.0
    %6964 = vmatprep.subr.mxu0 0.0
    %6965 = vmatpush1.msra.mxu0 0.0
    %6966 = vmatprep.subr.mxu0 0.0
    %6967 = vmatpush1.msra.mxu0 0.0
    %6968 = vmatprep.subr.mxu0 0.0
    %6969 = vmatpush1.msra.mxu0 0.0
    %6970 = vmatprep.subr.mxu0 0.0
    %6971 = vmatpush1.msra.mxu0 0.0
    %6972 = vmatprep.subr.mxu0 0.0
    %6973 = vmatpush1.msra.mxu0 0.0
    %6974 = vmatprep.subr.mxu0 0.0
    %6975 = vmatpush1.msra.mxu0 0.0
    %6976 = vmatprep.subr.mxu0 0.0
    %6977 = vmatpush1.msra.mxu0 0.0
    %6978 = vmatprep.subr.mxu0 0.0
    %6979 = vmatpush1.msra.mxu0 0.0
    %6980 = vmatprep.subr.mxu0 0.0
    %6981 = vmatpush1.msra.mxu0 0.0
    %6982 = vmatprep.subr.mxu0 0.0
    %6983 = vmatpush1.msra.mxu0 0.0
    %6984 = vmatprep.subr.mxu0 0.0
    %6985 = vmatpush1.msra.mxu0 0.0
    %6986 = vmatprep.subr.mxu0 0.0
    %6987 = vmatpush1.msra.mxu0 0.0
    %6988 = vmatprep.subr.mxu0 0.0
    %6989 = vmatpush1.msra.mxu0 0.0
    %6990 = vmatprep.mubr.f32.mxu0 0.0
    %6991 = vmatmul.mubr.f32.gmra.mrb[0].mxu0 %v6921
    %v6992 = vpop.f32.mrb[0].mxu0
    %v6993 = vadd.f32 0.0, %v6992
    %v6994 = vpop.f32.mrb[0].mxu0
    %6995 = vmatprep.mubr.f32.mxu0 0.0
    %6996 = vmatmul.mubr.f32.gmra.mrb[0].mxu0 %v6924
    %v6997 = vpop.f32.mrb[0].mxu0
    %v6998 = vadd.f32 0.0, %v6997
    %v6999 = vpop.f32.mrb[0].mxu0
    %7000 = vdwg.mxu0
    %v7002 = vsel %vm3998, %v5784, 0
    %v7005 = vsel %vm3998, %v5785, 0
    %7007 = vmatprep.subr.mxu0 0.0
    %7008 = vmatpush1.msra.mxu0 %v3861
    %7009 = vmatprep.subr.mxu0 0.0
    %7010 = vmatpush1.msra.mxu0 %v3997
    %7011 = vmatprep.subr.mxu0 0.0
    %7012 = vmatpush1.msra.mxu0 0.0
    %7013 = vmatprep.subr.mxu0 0.0
    %7014 = vmatpush1.msra.mxu0 0.0
    %7015 = vmatprep.subr.mxu0 0.0
    %7016 = vmatpush1.msra.mxu0 0.0
    %7017 = vmatprep.subr.mxu0 0.0
    %7018 = vmatpush1.msra.mxu0 0.0
    %7019 = vmatprep.subr.mxu0 0.0
    %7020 = vmatpush1.msra.mxu0 0.0
    %7021 = vmatprep.subr.mxu0 0.0
    %7022 = vmatpush1.msra.mxu0 0.0
    %7023 = vmatprep.subr.mxu0 0.0
    %7024 = vmatpush1.msra.mxu0 0.0
    %7025 = vmatprep.subr.mxu0 0.0
    %7026 = vmatpush1.msra.mxu0 0.0
    %7027 = vmatprep.subr.mxu0 0.0
    %7028 = vmatpush1.msra.mxu0 0.0
    %7029 = vmatprep.subr.mxu0 0.0
    %7030 = vmatpush1.msra.mxu0 0.0
    %7031 = vmatprep.subr.mxu0 0.0
    %7032 = vmatpush1.msra.mxu0 0.0
    %7033 = vmatprep.subr.mxu0 0.0
    %7034 = vmatpush1.msra.mxu0 0.0
    %7035 = vmatprep.subr.mxu0 0.0
    %7036 = vmatpush1.msra.mxu0 0.0
    %7037 = vmatprep.subr.mxu0 0.0
    %7038 = vmatpush1.msra.mxu0 0.0
    %7039 = vmatprep.subr.mxu0 0.0
    %7040 = vmatpush1.msra.mxu0 0.0
    %7041 = vmatprep.subr.mxu0 0.0
    %7042 = vmatpush1.msra.mxu0 0.0
    %7043 = vmatprep.subr.mxu0 0.0
    %7044 = vmatpush1.msra.mxu0 0.0
    %7045 = vmatprep.subr.mxu0 0.0
    %7046 = vmatpush1.msra.mxu0 0.0
    %7047 = vmatprep.subr.mxu0 0.0
    %7048 = vmatpush1.msra.mxu0 0.0
    %7049 = vmatprep.subr.mxu0 0.0
    %7050 = vmatpush1.msra.mxu0 0.0
    %7051 = vmatprep.subr.mxu0 0.0
    %7052 = vmatpush1.msra.mxu0 0.0
    %7053 = vmatprep.subr.mxu0 0.0
    %7054 = vmatpush1.msra.mxu0 0.0
    %7055 = vmatprep.subr.mxu0 0.0
    %7056 = vmatpush1.msra.mxu0 0.0
    %7057 = vmatprep.subr.mxu0 0.0
    %7058 = vmatpush1.msra.mxu0 0.0
    %7059 = vmatprep.subr.mxu0 0.0
    %7060 = vmatpush1.msra.mxu0 0.0
    %7061 = vmatprep.subr.mxu0 0.0
    %7062 = vmatpush1.msra.mxu0 0.0
    %7063 = vmatprep.subr.mxu0 0.0
    %7064 = vmatpush1.msra.mxu0 0.0
    %7065 = vmatprep.subr.mxu0 0.0
    %7066 = vmatpush1.msra.mxu0 0.0
    %7067 = vmatprep.subr.mxu0 0.0
    %7068 = vmatpush1.msra.mxu0 0.0
    %7069 = vmatprep.subr.mxu0 0.0
    %7070 = vmatpush1.msra.mxu0 0.0
    %7071 = vmatprep.mubr.f32.mxu0 0.0
    %7072 = vmatmul.mubr.f32.gmra.mrb[0].mxu0 %v7002
    %v7073 = vpop.f32.mrb[0].mxu0
    %v7074 = vadd.f32 0.0, %v7073
    %v7075 = vpop.f32.mrb[0].mxu0
    %7076 = vmatprep.mubr.f32.mxu0 0.0
    %7077 = vmatmul.mubr.f32.gmra.mrb[0].mxu0 %v7005
    %v7078 = vpop.f32.mrb[0].mxu0
    %v7079 = vadd.f32 0.0, %v7078
    %v7080 = vpop.f32.mrb[0].mxu0
    %7081 = vdwg.mxu0
    %v7082 = vcombine.low %v5859, %v6021
    %v7083 = vcombine.high %v5859, %v6021
    %v7085 = vunpack.c.l.s4 1983009808
    %v7086 = vunpack.c.0.s8 %v7085
    %v7087 = vlaneseq
    %v7088 = vshrl.u32 %v7087, 7
    %v7089 = vsub.s32 %v7086, %v7088
    %v7090 = vrot.slane %v7082, %v7089
    %v7092 = vunpack.c.l.s4 1983009808
    %v7093 = vunpack.c.0.s8 %v7092
    %v7094 = vlaneseq
    %v7095 = vshrl.u32 %v7094, 7
    %v7096 = vsub.s32 %v7093, %v7095
    %v7097 = vrot.slane %v7083, %v7096
    %v7098 = vcombine.low %v5940, %v6102
    %v7099 = vcombine.high %v5940, %v6102
    %v7101 = vunpack.c.l.s4 1983009808
    %v7102 = vunpack.c.0.s8 %v7101
    %v7103 = vlaneseq
    %v7104 = vshrl.u32 %v7103, 7
    %v7105 = vsub.s32 %v7102, %v7104
    %v7106 = vrot.slane %v7098, %v7105
    %v7108 = vunpack.c.l.s4 1983009808
    %v7109 = vunpack.c.0.s8 %v7108
    %v7110 = vlaneseq
    %v7111 = vshrl.u32 %v7110, 7
    %v7112 = vsub.s32 %v7109, %v7111
    %v7113 = vrot.slane %v7099, %v7112
    %v7114 = vcombine.low %v6183, %v6345
    %v7115 = vcombine.high %v6183, %v6345
    %v7117 = vunpack.c.l.s4 1983009808
    %v7118 = vunpack.c.0.s8 %v7117
    %v7119 = vlaneseq
    %v7120 = vshrl.u32 %v7119, 7
    %v7121 = vsub.s32 %v7118, %v7120
    %v7122 = vrot.slane %v7114, %v7121
    %v7124 = vunpack.c.l.s4 1983009808
    %v7125 = vunpack.c.0.s8 %v7124
    %v7126 = vlaneseq
    %v7127 = vshrl.u32 %v7126, 7
    %v7128 = vsub.s32 %v7125, %v7127
    %v7129 = vrot.slane %v7115, %v7128
    %v7130 = vcombine.low %v6264, %v6426
    %v7131 = vcombine.high %v6264, %v6426
    %v7133 = vunpack.c.l.s4 1983009808
    %v7134 = vunpack.c.0.s8 %v7133
    %v7135 = vlaneseq
    %v7136 = vshrl.u32 %v7135, 7
    %v7137 = vsub.s32 %v7134, %v7136
    %v7138 = vrot.slane %v7130, %v7137
    %v7140 = vunpack.c.l.s4 1983009808
    %v7141 = vunpack.c.0.s8 %v7140
    %v7142 = vlaneseq
    %v7143 = vshrl.u32 %v7142, 7
    %v7144 = vsub.s32 %v7141, %v7143
    %v7145 = vrot.slane %v7131, %v7144
    %v7146 = vcombine.low %v7090, %v7106
    %v7147 = vcombine.high %v7090, %v7106
    %v7149 = vunpack.c.l.s4 1934713408
    %v7150 = vunpack.c.0.s8 %v7149
    %v7151 = vlaneseq
    %v7152 = vshrl.u32 %v7151, 7
    %v7153 = vsub.s32 %v7150, %v7152
    %v7154 = vrot.slane %v7146, %v7153
    %v7156 = vunpack.c.l.s4 1934713408
    %v7157 = vunpack.c.0.s8 %v7156
    %v7158 = vlaneseq
    %v7159 = vshrl.u32 %v7158, 7
    %v7160 = vsub.s32 %v7157, %v7159
    %v7161 = vrot.slane %v7147, %v7160
    %v7162 = vcombine.low %v7097, %v7113
    %v7163 = vcombine.high %v7097, %v7113
    %v7165 = vunpack.c.l.s4 1934713408
    %v7166 = vunpack.c.0.s8 %v7165
    %v7167 = vlaneseq
    %v7168 = vshrl.u32 %v7167, 7
    %v7169 = vsub.s32 %v7166, %v7168
    %v7170 = vrot.slane %v7162, %v7169
    %v7172 = vunpack.c.l.s4 1934713408
    %v7173 = vunpack.c.0.s8 %v7172
    %v7174 = vlaneseq
    %v7175 = vshrl.u32 %v7174, 7
    %v7176 = vsub.s32 %v7173, %v7175
    %v7177 = vrot.slane %v7163, %v7176
    %v7178 = vcombine.low %v7122, %v7138
    %v7179 = vcombine.high %v7122, %v7138
    %v7181 = vunpack.c.l.s4 1934713408
    %v7182 = vunpack.c.0.s8 %v7181
    %v7183 = vlaneseq
    %v7184 = vshrl.u32 %v7183, 7
    %v7185 = vsub.s32 %v7182, %v7184
    %v7186 = vrot.slane %v7178, %v7185
    %v7188 = vunpack.c.l.s4 1934713408
    %v7189 = vunpack.c.0.s8 %v7188
    %v7190 = vlaneseq
    %v7191 = vshrl.u32 %v7190, 7
    %v7192 = vsub.s32 %v7189, %v7191
    %v7193 = vrot.slane %v7179, %v7192
    %v7194 = vcombine.low %v7129, %v7145
    %v7195 = vcombine.high %v7129, %v7145
    %v7197 = vunpack.c.l.s4 1934713408
    %v7198 = vunpack.c.0.s8 %v7197
    %v7199 = vlaneseq
    %v7200 = vshrl.u32 %v7199, 7
    %v7201 = vsub.s32 %v7198, %v7200
    %v7202 = vrot.slane %v7194, %v7201
    %v7204 = vunpack.c.l.s4 1934713408
    %v7205 = vunpack.c.0.s8 %v7204
    %v7206 = vlaneseq
    %v7207 = vshrl.u32 %v7206, 7
    %v7208 = vsub.s32 %v7205, %v7207
    %v7209 = vrot.slane %v7195, %v7208
    %v7210 = vcombine.low %v7154, %v7186
    %v7211 = vcombine.high %v7154, %v7186
    %v7212 = vcombine.low %v7161, %v7193
    %v7213 = vcombine.high %v7161, %v7193
    %v7214 = vcombine.low %v7170, %v7202
    %v7215 = vcombine.high %v7170, %v7202
    %v7216 = vcombine.low %v7177, %v7209
    %v7217 = vcombine.high %v7177, %v7209
    %v7218 = vcombine.low %v5864, %v6026
    %v7219 = vcombine.high %v5864, %v6026
    %v7221 = vunpack.c.l.s4 1983009808
    %v7222 = vunpack.c.0.s8 %v7221
    %v7223 = vlaneseq
    %v7224 = vshrl.u32 %v7223, 7
    %v7225 = vsub.s32 %v7222, %v7224
    %v7226 = vrot.slane %v7218, %v7225
    %v7228 = vunpack.c.l.s4 1983009808
    %v7229 = vunpack.c.0.s8 %v7228
    %v7230 = vlaneseq
    %v7231 = vshrl.u32 %v7230, 7
    %v7232 = vsub.s32 %v7229, %v7231
    %v7233 = vrot.slane %v7219, %v7232
    %v7234 = vcombine.low %v5945, %v6107
    %v7235 = vcombine.high %v5945, %v6107
    %v7237 = vunpack.c.l.s4 1983009808
    %v7238 = vunpack.c.0.s8 %v7237
    %v7239 = vlaneseq
    %v7240 = vshrl.u32 %v7239, 7
    %v7241 = vsub.s32 %v7238, %v7240
    %v7242 = vrot.slane %v7234, %v7241
    %v7244 = vunpack.c.l.s4 1983009808
    %v7245 = vunpack.c.0.s8 %v7244
    %v7246 = vlaneseq
    %v7247 = vshrl.u32 %v7246, 7
    %v7248 = vsub.s32 %v7245, %v7247
    %v7249 = vrot.slane %v7235, %v7248
    %v7250 = vcombine.low %v6188, %v6350
    %v7251 = vcombine.high %v6188, %v6350
    %v7253 = vunpack.c.l.s4 1983009808
    %v7254 = vunpack.c.0.s8 %v7253
    %v7255 = vlaneseq
    %v7256 = vshrl.u32 %v7255, 7
    %v7257 = vsub.s32 %v7254, %v7256
    %v7258 = vrot.slane %v7250, %v7257
    %v7260 = vunpack.c.l.s4 1983009808
    %v7261 = vunpack.c.0.s8 %v7260
    %v7262 = vlaneseq
    %v7263 = vshrl.u32 %v7262, 7
    %v7264 = vsub.s32 %v7261, %v7263
    %v7265 = vrot.slane %v7251, %v7264
    %v7266 = vcombine.low %v6269, %v6431
    %v7267 = vcombine.high %v6269, %v6431
    %v7269 = vunpack.c.l.s4 1983009808
    %v7270 = vunpack.c.0.s8 %v7269
    %v7271 = vlaneseq
    %v7272 = vshrl.u32 %v7271, 7
    %v7273 = vsub.s32 %v7270, %v7272
    %v7274 = vrot.slane %v7266, %v7273
    %v7276 = vunpack.c.l.s4 1983009808
    %v7277 = vunpack.c.0.s8 %v7276
    %v7278 = vlaneseq
    %v7279 = vshrl.u32 %v7278, 7
    %v7280 = vsub.s32 %v7277, %v7279
    %v7281 = vrot.slane %v7267, %v7280
    %v7282 = vcombine.low %v7226, %v7242
    %v7283 = vcombine.high %v7226, %v7242
    %v7285 = vunpack.c.l.s4 1934713408
    %v7286 = vunpack.c.0.s8 %v7285
    %v7287 = vlaneseq
    %v7288 = vshrl.u32 %v7287, 7
    %v7289 = vsub.s32 %v7286, %v7288
    %v7290 = vrot.slane %v7282, %v7289
    %v7292 = vunpack.c.l.s4 1934713408
    %v7293 = vunpack.c.0.s8 %v7292
    %v7294 = vlaneseq
    %v7295 = vshrl.u32 %v7294, 7
    %v7296 = vsub.s32 %v7293, %v7295
    %v7297 = vrot.slane %v7283, %v7296
    %v7298 = vcombine.low %v7233, %v7249
    %v7299 = vcombine.high %v7233, %v7249
    %v7301 = vunpack.c.l.s4 1934713408
    %v7302 = vunpack.c.0.s8 %v7301
    %v7303 = vlaneseq
    %v7304 = vshrl.u32 %v7303, 7
    %v7305 = vsub.s32 %v7302, %v7304
    %v7306 = vrot.slane %v7298, %v7305
    %v7308 = vunpack.c.l.s4 1934713408
    %v7309 = vunpack.c.0.s8 %v7308
    %v7310 = vlaneseq
    %v7311 = vshrl.u32 %v7310, 7
    %v7312 = vsub.s32 %v7309, %v7311
    %v7313 = vrot.slane %v7299, %v7312
    %v7314 = vcombine.low %v7258, %v7274
    %v7315 = vcombine.high %v7258, %v7274
    %v7317 = vunpack.c.l.s4 1934713408
    %v7318 = vunpack.c.0.s8 %v7317
    %v7319 = vlaneseq
    %v7320 = vshrl.u32 %v7319, 7
    %v7321 = vsub.s32 %v7318, %v7320
    %v7322 = vrot.slane %v7314, %v7321
    %v7324 = vunpack.c.l.s4 1934713408
    %v7325 = vunpack.c.0.s8 %v7324
    %v7326 = vlaneseq
    %v7327 = vshrl.u32 %v7326, 7
    %v7328 = vsub.s32 %v7325, %v7327
    %v7329 = vrot.slane %v7315, %v7328
    %v7330 = vcombine.low %v7265, %v7281
    %v7331 = vcombine.high %v7265, %v7281
    %v7333 = vunpack.c.l.s4 1934713408
    %v7334 = vunpack.c.0.s8 %v7333
    %v7335 = vlaneseq
    %v7336 = vshrl.u32 %v7335, 7
    %v7337 = vsub.s32 %v7334, %v7336
    %v7338 = vrot.slane %v7330, %v7337
    %v7340 = vunpack.c.l.s4 1934713408
    %v7341 = vunpack.c.0.s8 %v7340
    %v7342 = vlaneseq
    %v7343 = vshrl.u32 %v7342, 7
    %v7344 = vsub.s32 %v7341, %v7343
    %v7345 = vrot.slane %v7331, %v7344
    %v7346 = vcombine.low %v7290, %v7322
    %v7347 = vcombine.high %v7290, %v7322
    %v7348 = vcombine.low %v7297, %v7329
    %v7349 = vcombine.high %v7297, %v7329
    %v7350 = vcombine.low %v7306, %v7338
    %v7351 = vcombine.high %v7306, %v7338
    %v7352 = vcombine.low %v7313, %v7345
    %v7353 = vcombine.high %v7313, %v7345
    %v7354 = vcombine.low %v6507, %v6669
    %v7355 = vcombine.high %v6507, %v6669
    %v7357 = vunpack.c.l.s4 1983009808
    %v7358 = vunpack.c.0.s8 %v7357
    %v7359 = vlaneseq
    %v7360 = vshrl.u32 %v7359, 7
    %v7361 = vsub.s32 %v7358, %v7360
    %v7362 = vrot.slane %v7354, %v7361
    %v7364 = vunpack.c.l.s4 1983009808
    %v7365 = vunpack.c.0.s8 %v7364
    %v7366 = vlaneseq
    %v7367 = vshrl.u32 %v7366, 7
    %v7368 = vsub.s32 %v7365, %v7367
    %v7369 = vrot.slane %v7355, %v7368
    %v7370 = vcombine.low %v6588, %v6750
    %v7371 = vcombine.high %v6588, %v6750
    %v7373 = vunpack.c.l.s4 1983009808
    %v7374 = vunpack.c.0.s8 %v7373
    %v7375 = vlaneseq
    %v7376 = vshrl.u32 %v7375, 7
    %v7377 = vsub.s32 %v7374, %v7376
    %v7378 = vrot.slane %v7370, %v7377
    %v7380 = vunpack.c.l.s4 1983009808
    %v7381 = vunpack.c.0.s8 %v7380
    %v7382 = vlaneseq
    %v7383 = vshrl.u32 %v7382, 7
    %v7384 = vsub.s32 %v7381, %v7383
    %v7385 = vrot.slane %v7371, %v7384
    %v7386 = vcombine.low %v6831, %v6993
    %v7387 = vcombine.high %v6831, %v6993
    %v7389 = vunpack.c.l.s4 1983009808
    %v7390 = vunpack.c.0.s8 %v7389
    %v7391 = vlaneseq
    %v7392 = vshrl.u32 %v7391, 7
    %v7393 = vsub.s32 %v7390, %v7392
    %v7394 = vrot.slane %v7386, %v7393
    %v7396 = vunpack.c.l.s4 1983009808
    %v7397 = vunpack.c.0.s8 %v7396
    %v7398 = vlaneseq
    %v7399 = vshrl.u32 %v7398, 7
    %v7400 = vsub.s32 %v7397, %v7399
    %v7401 = vrot.slane %v7387, %v7400
    %v7402 = vcombine.low %v6912, %v7074
    %v7403 = vcombine.high %v6912, %v7074
    %v7405 = vunpack.c.l.s4 1983009808
    %v7406 = vunpack.c.0.s8 %v7405
    %v7407 = vlaneseq
    %v7408 = vshrl.u32 %v7407, 7
    %v7409 = vsub.s32 %v7406, %v7408
    %v7410 = vrot.slane %v7402, %v7409
    %v7412 = vunpack.c.l.s4 1983009808
    %v7413 = vunpack.c.0.s8 %v7412
    %v7414 = vlaneseq
    %v7415 = vshrl.u32 %v7414, 7
    %v7416 = vsub.s32 %v7413, %v7415
    %v7417 = vrot.slane %v7403, %v7416
    %v7418 = vcombine.low %v7362, %v7378
    %v7419 = vcombine.high %v7362, %v7378
    %v7421 = vunpack.c.l.s4 1934713408
    %v7422 = vunpack.c.0.s8 %v7421
    %v7423 = vlaneseq
    %v7424 = vshrl.u32 %v7423, 7
    %v7425 = vsub.s32 %v7422, %v7424
    %v7426 = vrot.slane %v7418, %v7425
    %v7428 = vunpack.c.l.s4 1934713408
    %v7429 = vunpack.c.0.s8 %v7428
    %v7430 = vlaneseq
    %v7431 = vshrl.u32 %v7430, 7
    %v7432 = vsub.s32 %v7429, %v7431
    %v7433 = vrot.slane %v7419, %v7432
    %v7434 = vcombine.low %v7369, %v7385
    %v7435 = vcombine.high %v7369, %v7385
    %v7437 = vunpack.c.l.s4 1934713408
    %v7438 = vunpack.c.0.s8 %v7437
    %v7439 = vlaneseq
    %v7440 = vshrl.u32 %v7439, 7
    %v7441 = vsub.s32 %v7438, %v7440
    %v7442 = vrot.slane %v7434, %v7441
    %v7444 = vunpack.c.l.s4 1934713408
    %v7445 = vunpack.c.0.s8 %v7444
    %v7446 = vlaneseq
    %v7447 = vshrl.u32 %v7446, 7
    %v7448 = vsub.s32 %v7445, %v7447
    %v7449 = vrot.slane %v7435, %v7448
    %v7450 = vcombine.low %v7394, %v7410
    %v7451 = vcombine.high %v7394, %v7410
    %v7453 = vunpack.c.l.s4 1934713408
    %v7454 = vunpack.c.0.s8 %v7453
    %v7455 = vlaneseq
    %v7456 = vshrl.u32 %v7455, 7
    %v7457 = vsub.s32 %v7454, %v7456
    %v7458 = vrot.slane %v7450, %v7457
    %v7460 = vunpack.c.l.s4 1934713408
    %v7461 = vunpack.c.0.s8 %v7460
    %v7462 = vlaneseq
    %v7463 = vshrl.u32 %v7462, 7
    %v7464 = vsub.s32 %v7461, %v7463
    %v7465 = vrot.slane %v7451, %v7464
    %v7466 = vcombine.low %v7401, %v7417
    %v7467 = vcombine.high %v7401, %v7417
    %v7469 = vunpack.c.l.s4 1934713408
    %v7470 = vunpack.c.0.s8 %v7469
    %v7471 = vlaneseq
    %v7472 = vshrl.u32 %v7471, 7
    %v7473 = vsub.s32 %v7470, %v7472
    %v7474 = vrot.slane %v7466, %v7473
    %v7476 = vunpack.c.l.s4 1934713408
    %v7477 = vunpack.c.0.s8 %v7476
    %v7478 = vlaneseq
    %v7479 = vshrl.u32 %v7478, 7
    %v7480 = vsub.s32 %v7477, %v7479
    %v7481 = vrot.slane %v7467, %v7480
    %v7482 = vcombine.low %v7426, %v7458
    %v7483 = vcombine.high %v7426, %v7458
    %v7484 = vcombine.low %v7433, %v7465
    %v7485 = vcombine.high %v7433, %v7465
    %v7486 = vcombine.low %v7442, %v7474
    %v7487 = vcombine.high %v7442, %v7474
    %v7488 = vcombine.low %v7449, %v7481
    %v7489 = vcombine.high %v7449, %v7481
    %v7490 = vcombine.low %v6512, %v6674
    %v7491 = vcombine.high %v6512, %v6674
    %v7493 = vunpack.c.l.s4 1983009808
    %v7494 = vunpack.c.0.s8 %v7493
    %v7495 = vlaneseq
    %v7496 = vshrl.u32 %v7495, 7
    %v7497 = vsub.s32 %v7494, %v7496
    %v7498 = vrot.slane %v7490, %v7497
    %v7500 = vunpack.c.l.s4 1983009808
    %v7501 = vunpack.c.0.s8 %v7500
    %v7502 = vlaneseq
    %v7503 = vshrl.u32 %v7502, 7
    %v7504 = vsub.s32 %v7501, %v7503
    %v7505 = vrot.slane %v7491, %v7504
    %v7506 = vcombine.low %v6593, %v6755
    %v7507 = vcombine.high %v6593, %v6755
    %v7509 = vunpack.c.l.s4 1983009808
    %v7510 = vunpack.c.0.s8 %v7509
    %v7511 = vlaneseq
    %v7512 = vshrl.u32 %v7511, 7
    %v7513 = vsub.s32 %v7510, %v7512
    %v7514 = vrot.slane %v7506, %v7513
    %v7516 = vunpack.c.l.s4 1983009808
    %v7517 = vunpack.c.0.s8 %v7516
    %v7518 = vlaneseq
    %v7519 = vshrl.u32 %v7518, 7
    %v7520 = vsub.s32 %v7517, %v7519
    %v7521 = vrot.slane %v7507, %v7520
    %v7522 = vcombine.low %v6836, %v6998
    %v7523 = vcombine.high %v6836, %v6998
    %v7525 = vunpack.c.l.s4 1983009808
    %v7526 = vunpack.c.0.s8 %v7525
    %v7527 = vlaneseq
    %v7528 = vshrl.u32 %v7527, 7
    %v7529 = vsub.s32 %v7526, %v7528
    %v7530 = vrot.slane %v7522, %v7529
    %v7532 = vunpack.c.l.s4 1983009808
    %v7533 = vunpack.c.0.s8 %v7532
    %v7534 = vlaneseq
    %v7535 = vshrl.u32 %v7534, 7
    %v7536 = vsub.s32 %v7533, %v7535
    %v7537 = vrot.slane %v7523, %v7536
    %v7538 = vcombine.low %v6917, %v7079
    %v7539 = vcombine.high %v6917, %v7079
    %v7541 = vunpack.c.l.s4 1983009808
    %v7542 = vunpack.c.0.s8 %v7541
    %v7543 = vlaneseq
    %v7544 = vshrl.u32 %v7543, 7
    %v7545 = vsub.s32 %v7542, %v7544
    %v7546 = vrot.slane %v7538, %v7545
    %v7548 = vunpack.c.l.s4 1983009808
    %v7549 = vunpack.c.0.s8 %v7548
    %v7550 = vlaneseq
    %v7551 = vshrl.u32 %v7550, 7
    %v7552 = vsub.s32 %v7549, %v7551
    %v7553 = vrot.slane %v7539, %v7552
    %v7554 = vcombine.low %v7498, %v7514
    %v7555 = vcombine.high %v7498, %v7514
    %v7557 = vunpack.c.l.s4 1934713408
    %v7558 = vunpack.c.0.s8 %v7557
    %v7559 = vlaneseq
    %v7560 = vshrl.u32 %v7559, 7
    %v7561 = vsub.s32 %v7558, %v7560
    %v7562 = vrot.slane %v7554, %v7561
    %v7564 = vunpack.c.l.s4 1934713408
    %v7565 = vunpack.c.0.s8 %v7564
    %v7566 = vlaneseq
    %v7567 = vshrl.u32 %v7566, 7
    %v7568 = vsub.s32 %v7565, %v7567
    %v7569 = vrot.slane %v7555, %v7568
    %v7570 = vcombine.low %v7505, %v7521
    %v7571 = vcombine.high %v7505, %v7521
    %v7573 = vunpack.c.l.s4 1934713408
    %v7574 = vunpack.c.0.s8 %v7573
    %v7575 = vlaneseq
    %v7576 = vshrl.u32 %v7575, 7
    %v7577 = vsub.s32 %v7574, %v7576
    %v7578 = vrot.slane %v7570, %v7577
    %v7580 = vunpack.c.l.s4 1934713408
    %v7581 = vunpack.c.0.s8 %v7580
    %v7582 = vlaneseq
    %v7583 = vshrl.u32 %v7582, 7
    %v7584 = vsub.s32 %v7581, %v7583
    %v7585 = vrot.slane %v7571, %v7584
    %v7586 = vcombine.low %v7530, %v7546
    %v7587 = vcombine.high %v7530, %v7546
    %v7589 = vunpack.c.l.s4 1934713408
    %v7590 = vunpack.c.0.s8 %v7589
    %v7591 = vlaneseq
    %v7592 = vshrl.u32 %v7591, 7
    %v7593 = vsub.s32 %v7590, %v7592
    %v7594 = vrot.slane %v7586, %v7593
    %v7596 = vunpack.c.l.s4 1934713408
    %v7597 = vunpack.c.0.s8 %v7596
    %v7598 = vlaneseq
    %v7599 = vshrl.u32 %v7598, 7
    %v7600 = vsub.s32 %v7597, %v7599
    %v7601 = vrot.slane %v7587, %v7600
    %v7602 = vcombine.low %v7537, %v7553
    %v7603 = vcombine.high %v7537, %v7553
    %v7605 = vunpack.c.l.s4 1934713408
    %v7606 = vunpack.c.0.s8 %v7605
    %v7607 = vlaneseq
    %v7608 = vshrl.u32 %v7607, 7
    %v7609 = vsub.s32 %v7606, %v7608
    %v7610 = vrot.slane %v7602, %v7609
    %v7612 = vunpack.c.l.s4 1934713408
    %v7613 = vunpack.c.0.s8 %v7612
    %v7614 = vlaneseq
    %v7615 = vshrl.u32 %v7614, 7
    %v7616 = vsub.s32 %v7613, %v7615
    %v7617 = vrot.slane %v7603, %v7616
    %v7618 = vcombine.low %v7562, %v7594
    %v7619 = vcombine.high %v7562, %v7594
    %v7620 = vcombine.low %v7569, %v7601
    %v7621 = vcombine.high %v7569, %v7601
    %v7622 = vcombine.low %v7578, %v7610
    %v7623 = vcombine.high %v7578, %v7610
    %v7624 = vcombine.low %v7585, %v7617
    %v7625 = vcombine.high %v7585, %v7617
    %v7626 = vcombine.low %v7210, %v7212
    %v7627 = vcombine.high %v7210, %v7212
    %v7629 = vunpack.c.l.s4 1983009808
    %v7630 = vunpack.c.0.s8 %v7629
    %v7631 = vlaneseq
    %v7632 = vshrl.u32 %v7631, 7
    %v7633 = vsub.s32 %v7630, %v7632
    %v7634 = vrot.slane %v7626, %v7633
    %v7636 = vunpack.c.l.s4 1983009808
    %v7637 = vunpack.c.0.s8 %v7636
    %v7638 = vlaneseq
    %v7639 = vshrl.u32 %v7638, 7
    %v7640 = vsub.s32 %v7637, %v7639
    %v7641 = vrot.slane %v7627, %v7640
    %v7642 = vcombine.low %v7211, %v7213
    %v7643 = vcombine.high %v7211, %v7213
    %v7645 = vunpack.c.l.s4 1983009808
    %v7646 = vunpack.c.0.s8 %v7645
    %v7647 = vlaneseq
    %v7648 = vshrl.u32 %v7647, 7
    %v7649 = vsub.s32 %v7646, %v7648
    %v7650 = vrot.slane %v7642, %v7649
    %v7652 = vunpack.c.l.s4 1983009808
    %v7653 = vunpack.c.0.s8 %v7652
    %v7654 = vlaneseq
    %v7655 = vshrl.u32 %v7654, 7
    %v7656 = vsub.s32 %v7653, %v7655
    %v7657 = vrot.slane %v7643, %v7656
    %v7658 = vcombine.low %v7214, %v7216
    %v7659 = vcombine.high %v7214, %v7216
    %v7661 = vunpack.c.l.s4 1983009808
    %v7662 = vunpack.c.0.s8 %v7661
    %v7663 = vlaneseq
    %v7664 = vshrl.u32 %v7663, 7
    %v7665 = vsub.s32 %v7662, %v7664
    %v7666 = vrot.slane %v7658, %v7665
    %v7668 = vunpack.c.l.s4 1983009808
    %v7669 = vunpack.c.0.s8 %v7668
    %v7670 = vlaneseq
    %v7671 = vshrl.u32 %v7670, 7
    %v7672 = vsub.s32 %v7669, %v7671
    %v7673 = vrot.slane %v7659, %v7672
    %v7674 = vcombine.low %v7215, %v7217
    %v7675 = vcombine.high %v7215, %v7217
    %v7677 = vunpack.c.l.s4 1983009808
    %v7678 = vunpack.c.0.s8 %v7677
    %v7679 = vlaneseq
    %v7680 = vshrl.u32 %v7679, 7
    %v7681 = vsub.s32 %v7678, %v7680
    %v7682 = vrot.slane %v7674, %v7681
    %v7684 = vunpack.c.l.s4 1983009808
    %v7685 = vunpack.c.0.s8 %v7684
    %v7686 = vlaneseq
    %v7687 = vshrl.u32 %v7686, 7
    %v7688 = vsub.s32 %v7685, %v7687
    %v7689 = vrot.slane %v7675, %v7688
    %v7690 = vcombine.low %v7634, %v7650
    %v7691 = vcombine.high %v7634, %v7650
    %v7693 = vunpack.c.l.s4 1934713408
    %v7694 = vunpack.c.0.s8 %v7693
    %v7695 = vlaneseq
    %v7696 = vshrl.u32 %v7695, 7
    %v7697 = vsub.s32 %v7694, %v7696
    %v7698 = vrot.slane %v7690, %v7697
    %v7700 = vunpack.c.l.s4 1934713408
    %v7701 = vunpack.c.0.s8 %v7700
    %v7702 = vlaneseq
    %v7703 = vshrl.u32 %v7702, 7
    %v7704 = vsub.s32 %v7701, %v7703
    %v7705 = vrot.slane %v7691, %v7704
    %v7706 = vcombine.low %v7641, %v7657
    %v7707 = vcombine.high %v7641, %v7657
    %v7709 = vunpack.c.l.s4 1934713408
    %v7710 = vunpack.c.0.s8 %v7709
    %v7711 = vlaneseq
    %v7712 = vshrl.u32 %v7711, 7
    %v7713 = vsub.s32 %v7710, %v7712
    %v7714 = vrot.slane %v7706, %v7713
    %v7716 = vunpack.c.l.s4 1934713408
    %v7717 = vunpack.c.0.s8 %v7716
    %v7718 = vlaneseq
    %v7719 = vshrl.u32 %v7718, 7
    %v7720 = vsub.s32 %v7717, %v7719
    %v7721 = vrot.slane %v7707, %v7720
    %v7722 = vcombine.low %v7666, %v7682
    %v7723 = vcombine.high %v7666, %v7682
    %v7725 = vunpack.c.l.s4 1934713408
    %v7726 = vunpack.c.0.s8 %v7725
    %v7727 = vlaneseq
    %v7728 = vshrl.u32 %v7727, 7
    %v7729 = vsub.s32 %v7726, %v7728
    %v7730 = vrot.slane %v7722, %v7729
    %v7732 = vunpack.c.l.s4 1934713408
    %v7733 = vunpack.c.0.s8 %v7732
    %v7734 = vlaneseq
    %v7735 = vshrl.u32 %v7734, 7
    %v7736 = vsub.s32 %v7733, %v7735
    %v7737 = vrot.slane %v7723, %v7736
    %v7738 = vcombine.low %v7673, %v7689
    %v7739 = vcombine.high %v7673, %v7689
    %v7741 = vunpack.c.l.s4 1934713408
    %v7742 = vunpack.c.0.s8 %v7741
    %v7743 = vlaneseq
    %v7744 = vshrl.u32 %v7743, 7
    %v7745 = vsub.s32 %v7742, %v7744
    %v7746 = vrot.slane %v7738, %v7745
    %v7748 = vunpack.c.l.s4 1934713408
    %v7749 = vunpack.c.0.s8 %v7748
    %v7750 = vlaneseq
    %v7751 = vshrl.u32 %v7750, 7
    %v7752 = vsub.s32 %v7749, %v7751
    %v7753 = vrot.slane %v7739, %v7752
    %v7754 = vcombine.low %v7698, %v7730
    %v7755 = vcombine.high %v7698, %v7730
    %v7756 = vcombine.low %v7705, %v7737
    %v7757 = vcombine.high %v7705, %v7737
    %v7758 = vcombine.low %v7714, %v7746
    %v7759 = vcombine.high %v7714, %v7746
    %v7760 = vcombine.low %v7721, %v7753
    %v7761 = vcombine.high %v7721, %v7753
    %v7762 = vcombine.low %v7346, %v7348
    %v7763 = vcombine.high %v7346, %v7348
    %v7765 = vunpack.c.l.s4 1983009808
    %v7766 = vunpack.c.0.s8 %v7765
    %v7767 = vlaneseq
    %v7768 = vshrl.u32 %v7767, 7
    %v7769 = vsub.s32 %v7766, %v7768
    %v7770 = vrot.slane %v7762, %v7769
    %v7772 = vunpack.c.l.s4 1983009808
    %v7773 = vunpack.c.0.s8 %v7772
    %v7774 = vlaneseq
    %v7775 = vshrl.u32 %v7774, 7
    %v7776 = vsub.s32 %v7773, %v7775
    %v7777 = vrot.slane %v7763, %v7776
    %v7778 = vcombine.low %v7347, %v7349
    %v7779 = vcombine.high %v7347, %v7349
    %v7781 = vunpack.c.l.s4 1983009808
    %v7782 = vunpack.c.0.s8 %v7781
    %v7783 = vlaneseq
    %v7784 = vshrl.u32 %v7783, 7
    %v7785 = vsub.s32 %v7782, %v7784
    %v7786 = vrot.slane %v7778, %v7785
    %v7788 = vunpack.c.l.s4 1983009808
    %v7789 = vunpack.c.0.s8 %v7788
    %v7790 = vlaneseq
    %v7791 = vshrl.u32 %v7790, 7
    %v7792 = vsub.s32 %v7789, %v7791
    %v7793 = vrot.slane %v7779, %v7792
    %v7794 = vcombine.low %v7350, %v7352
    %v7795 = vcombine.high %v7350, %v7352
    %v7797 = vunpack.c.l.s4 1983009808
    %v7798 = vunpack.c.0.s8 %v7797
    %v7799 = vlaneseq
    %v7800 = vshrl.u32 %v7799, 7
    %v7801 = vsub.s32 %v7798, %v7800
    %v7802 = vrot.slane %v7794, %v7801
    %v7804 = vunpack.c.l.s4 1983009808
    %v7805 = vunpack.c.0.s8 %v7804
    %v7806 = vlaneseq
    %v7807 = vshrl.u32 %v7806, 7
    %v7808 = vsub.s32 %v7805, %v7807
    %v7809 = vrot.slane %v7795, %v7808
    %v7810 = vcombine.low %v7351, %v7353
    %v7811 = vcombine.high %v7351, %v7353
    %v7813 = vunpack.c.l.s4 1983009808
    %v7814 = vunpack.c.0.s8 %v7813
    %v7815 = vlaneseq
    %v7816 = vshrl.u32 %v7815, 7
    %v7817 = vsub.s32 %v7814, %v7816
    %v7818 = vrot.slane %v7810, %v7817
    %v7820 = vunpack.c.l.s4 1983009808
    %v7821 = vunpack.c.0.s8 %v7820
    %v7822 = vlaneseq
    %v7823 = vshrl.u32 %v7822, 7
    %v7824 = vsub.s32 %v7821, %v7823
    %v7825 = vrot.slane %v7811, %v7824
    %v7826 = vcombine.low %v7770, %v7786
    %v7827 = vcombine.high %v7770, %v7786
    %v7829 = vunpack.c.l.s4 1934713408
    %v7830 = vunpack.c.0.s8 %v7829
    %v7831 = vlaneseq
    %v7832 = vshrl.u32 %v7831, 7
    %v7833 = vsub.s32 %v7830, %v7832
    %v7834 = vrot.slane %v7826, %v7833
    %v7836 = vunpack.c.l.s4 1934713408
    %v7837 = vunpack.c.0.s8 %v7836
    %v7838 = vlaneseq
    %v7839 = vshrl.u32 %v7838, 7
    %v7840 = vsub.s32 %v7837, %v7839
    %v7841 = vrot.slane %v7827, %v7840
    %v7842 = vcombine.low %v7777, %v7793
    %v7843 = vcombine.high %v7777, %v7793
    %v7845 = vunpack.c.l.s4 1934713408
    %v7846 = vunpack.c.0.s8 %v7845
    %v7847 = vlaneseq
    %v7848 = vshrl.u32 %v7847, 7
    %v7849 = vsub.s32 %v7846, %v7848
    %v7850 = vrot.slane %v7842, %v7849
    %v7852 = vunpack.c.l.s4 1934713408
    %v7853 = vunpack.c.0.s8 %v7852
    %v7854 = vlaneseq
    %v7855 = vshrl.u32 %v7854, 7
    %v7856 = vsub.s32 %v7853, %v7855
    %v7857 = vrot.slane %v7843, %v7856
    %v7858 = vcombine.low %v7802, %v7818
    %v7859 = vcombine.high %v7802, %v7818
    %v7861 = vunpack.c.l.s4 1934713408
    %v7862 = vunpack.c.0.s8 %v7861
    %v7863 = vlaneseq
    %v7864 = vshrl.u32 %v7863, 7
    %v7865 = vsub.s32 %v7862, %v7864
    %v7866 = vrot.slane %v7858, %v7865
    %v7868 = vunpack.c.l.s4 1934713408
    %v7869 = vunpack.c.0.s8 %v7868
    %v7870 = vlaneseq
    %v7871 = vshrl.u32 %v7870, 7
    %v7872 = vsub.s32 %v7869, %v7871
    %v7873 = vrot.slane %v7859, %v7872
    %v7874 = vcombine.low %v7809, %v7825
    %v7875 = vcombine.high %v7809, %v7825
    %v7877 = vunpack.c.l.s4 1934713408
    %v7878 = vunpack.c.0.s8 %v7877
    %v7879 = vlaneseq
    %v7880 = vshrl.u32 %v7879, 7
    %v7881 = vsub.s32 %v7878, %v7880
    %v7882 = vrot.slane %v7874, %v7881
    %v7884 = vunpack.c.l.s4 1934713408
    %v7885 = vunpack.c.0.s8 %v7884
    %v7886 = vlaneseq
    %v7887 = vshrl.u32 %v7886, 7
    %v7888 = vsub.s32 %v7885, %v7887
    %v7889 = vrot.slane %v7875, %v7888
    %v7890 = vcombine.low %v7834, %v7866
    %v7891 = vcombine.high %v7834, %v7866
    %v7892 = vcombine.low %v7841, %v7873
    %v7893 = vcombine.high %v7841, %v7873
    %v7894 = vcombine.low %v7850, %v7882
    %v7895 = vcombine.high %v7850, %v7882
    %v7896 = vcombine.low %v7857, %v7889
    %v7897 = vcombine.high %v7857, %v7889
    %v7898 = vcombine.low %v7482, %v7484
    %v7899 = vcombine.high %v7482, %v7484
    %v7901 = vunpack.c.l.s4 1983009808
    %v7902 = vunpack.c.0.s8 %v7901
    %v7903 = vlaneseq
    %v7904 = vshrl.u32 %v7903, 7
    %v7905 = vsub.s32 %v7902, %v7904
    %v7906 = vrot.slane %v7898, %v7905
    %v7908 = vunpack.c.l.s4 1983009808
    %v7909 = vunpack.c.0.s8 %v7908
    %v7910 = vlaneseq
    %v7911 = vshrl.u32 %v7910, 7
    %v7912 = vsub.s32 %v7909, %v7911
    %v7913 = vrot.slane %v7899, %v7912
    %v7914 = vcombine.low %v7483, %v7485
    %v7915 = vcombine.high %v7483, %v7485
    %v7917 = vunpack.c.l.s4 1983009808
    %v7918 = vunpack.c.0.s8 %v7917
    %v7919 = vlaneseq
    %v7920 = vshrl.u32 %v7919, 7
    %v7921 = vsub.s32 %v7918, %v7920
    %v7922 = vrot.slane %v7914, %v7921
    %v7924 = vunpack.c.l.s4 1983009808
    %v7925 = vunpack.c.0.s8 %v7924
    %v7926 = vlaneseq
    %v7927 = vshrl.u32 %v7926, 7
    %v7928 = vsub.s32 %v7925, %v7927
    %v7929 = vrot.slane %v7915, %v7928
    %v7930 = vcombine.low %v7486, %v7488
    %v7931 = vcombine.high %v7486, %v7488
    %v7933 = vunpack.c.l.s4 1983009808
    %v7934 = vunpack.c.0.s8 %v7933
    %v7935 = vlaneseq
    %v7936 = vshrl.u32 %v7935, 7
    %v7937 = vsub.s32 %v7934, %v7936
    %v7938 = vrot.slane %v7930, %v7937
    %v7940 = vunpack.c.l.s4 1983009808
    %v7941 = vunpack.c.0.s8 %v7940
    %v7942 = vlaneseq
    %v7943 = vshrl.u32 %v7942, 7
    %v7944 = vsub.s32 %v7941, %v7943
    %v7945 = vrot.slane %v7931, %v7944
    %v7946 = vcombine.low %v7487, %v7489
    %v7947 = vcombine.high %v7487, %v7489
    %v7949 = vunpack.c.l.s4 1983009808
    %v7950 = vunpack.c.0.s8 %v7949
    %v7951 = vlaneseq
    %v7952 = vshrl.u32 %v7951, 7
    %v7953 = vsub.s32 %v7950, %v7952
    %v7954 = vrot.slane %v7946, %v7953
    %v7956 = vunpack.c.l.s4 1983009808
    %v7957 = vunpack.c.0.s8 %v7956
    %v7958 = vlaneseq
    %v7959 = vshrl.u32 %v7958, 7
    %v7960 = vsub.s32 %v7957, %v7959
    %v7961 = vrot.slane %v7947, %v7960
    %v7962 = vcombine.low %v7906, %v7922
    %v7963 = vcombine.high %v7906, %v7922
    %v7965 = vunpack.c.l.s4 1934713408
    %v7966 = vunpack.c.0.s8 %v7965
    %v7967 = vlaneseq
    %v7968 = vshrl.u32 %v7967, 7
    %v7969 = vsub.s32 %v7966, %v7968
    %v7970 = vrot.slane %v7962, %v7969
    %v7972 = vunpack.c.l.s4 1934713408
    %v7973 = vunpack.c.0.s8 %v7972
    %v7974 = vlaneseq
    %v7975 = vshrl.u32 %v7974, 7
    %v7976 = vsub.s32 %v7973, %v7975
    %v7977 = vrot.slane %v7963, %v7976
    %v7978 = vcombine.low %v7913, %v7929
    %v7979 = vcombine.high %v7913, %v7929
    %v7981 = vunpack.c.l.s4 1934713408
    %v7982 = vunpack.c.0.s8 %v7981
    %v7983 = vlaneseq
    %v7984 = vshrl.u32 %v7983, 7
    %v7985 = vsub.s32 %v7982, %v7984
    %v7986 = vrot.slane %v7978, %v7985
    %v7988 = vunpack.c.l.s4 1934713408
    %v7989 = vunpack.c.0.s8 %v7988
    %v7990 = vlaneseq
    %v7991 = vshrl.u32 %v7990, 7
    %v7992 = vsub.s32 %v7989, %v7991
    %v7993 = vrot.slane %v7979, %v7992
    %v7994 = vcombine.low %v7938, %v7954
    %v7995 = vcombine.high %v7938, %v7954
    %v7997 = vunpack.c.l.s4 1934713408
    %v7998 = vunpack.c.0.s8 %v7997
    %v7999 = vlaneseq
    %v8000 = vshrl.u32 %v7999, 7
    %v8001 = vsub.s32 %v7998, %v8000
    %v8002 = vrot.slane %v7994, %v8001
    %v8004 = vunpack.c.l.s4 1934713408
    %v8005 = vunpack.c.0.s8 %v8004
    %v8006 = vlaneseq
    %v8007 = vshrl.u32 %v8006, 7
    %v8008 = vsub.s32 %v8005, %v8007
    %v8009 = vrot.slane %v7995, %v8008
    %v8010 = vcombine.low %v7945, %v7961
    %v8011 = vcombine.high %v7945, %v7961
    %v8013 = vunpack.c.l.s4 1934713408
    %v8014 = vunpack.c.0.s8 %v8013
    %v8015 = vlaneseq
    %v8016 = vshrl.u32 %v8015, 7
    %v8017 = vsub.s32 %v8014, %v8016
    %v8018 = vrot.slane %v8010, %v8017
    %v8020 = vunpack.c.l.s4 1934713408
    %v8021 = vunpack.c.0.s8 %v8020
    %v8022 = vlaneseq
    %v8023 = vshrl.u32 %v8022, 7
    %v8024 = vsub.s32 %v8021, %v8023
    %v8025 = vrot.slane %v8011, %v8024
    %v8026 = vcombine.low %v7970, %v8002
    %v8027 = vcombine.high %v7970, %v8002
    %v8028 = vcombine.low %v7977, %v8009
    %v8029 = vcombine.high %v7977, %v8009
    %v8030 = vcombine.low %v7986, %v8018
    %v8031 = vcombine.high %v7986, %v8018
    %v8032 = vcombine.low %v7993, %v8025
    %v8033 = vcombine.high %v7993, %v8025
    %v8034 = vcombine.low %v7618, %v7620
    %v8035 = vcombine.high %v7618, %v7620
    %v8037 = vunpack.c.l.s4 1983009808
    %v8038 = vunpack.c.0.s8 %v8037
    %v8039 = vlaneseq
    %v8040 = vshrl.u32 %v8039, 7
    %v8041 = vsub.s32 %v8038, %v8040
    %v8042 = vrot.slane %v8034, %v8041
    %v8044 = vunpack.c.l.s4 1983009808
    %v8045 = vunpack.c.0.s8 %v8044
    %v8046 = vlaneseq
    %v8047 = vshrl.u32 %v8046, 7
    %v8048 = vsub.s32 %v8045, %v8047
    %v8049 = vrot.slane %v8035, %v8048
    %v8050 = vcombine.low %v7619, %v7621
    %v8051 = vcombine.high %v7619, %v7621
    %v8053 = vunpack.c.l.s4 1983009808
    %v8054 = vunpack.c.0.s8 %v8053
    %v8055 = vlaneseq
    %v8056 = vshrl.u32 %v8055, 7
    %v8057 = vsub.s32 %v8054, %v8056
    %v8058 = vrot.slane %v8050, %v8057
    %v8060 = vunpack.c.l.s4 1983009808
    %v8061 = vunpack.c.0.s8 %v8060
    %v8062 = vlaneseq
    %v8063 = vshrl.u32 %v8062, 7
    %v8064 = vsub.s32 %v8061, %v8063
    %v8065 = vrot.slane %v8051, %v8064
    %v8066 = vcombine.low %v7622, %v7624
    %v8067 = vcombine.high %v7622, %v7624
    %v8069 = vunpack.c.l.s4 1983009808
    %v8070 = vunpack.c.0.s8 %v8069
    %v8071 = vlaneseq
    %v8072 = vshrl.u32 %v8071, 7
    %v8073 = vsub.s32 %v8070, %v8072
    %v8074 = vrot.slane %v8066, %v8073
    %v8076 = vunpack.c.l.s4 1983009808
    %v8077 = vunpack.c.0.s8 %v8076
    %v8078 = vlaneseq
    %v8079 = vshrl.u32 %v8078, 7
    %v8080 = vsub.s32 %v8077, %v8079
    %v8081 = vrot.slane %v8067, %v8080
    %v8082 = vcombine.low %v7623, %v7625
    %v8083 = vcombine.high %v7623, %v7625
    %v8085 = vunpack.c.l.s4 1983009808
    %v8086 = vunpack.c.0.s8 %v8085
    %v8087 = vlaneseq
    %v8088 = vshrl.u32 %v8087, 7
    %v8089 = vsub.s32 %v8086, %v8088
    %v8090 = vrot.slane %v8082, %v8089
    %v8092 = vunpack.c.l.s4 1983009808
    %v8093 = vunpack.c.0.s8 %v8092
    %v8094 = vlaneseq
    %v8095 = vshrl.u32 %v8094, 7
    %v8096 = vsub.s32 %v8093, %v8095
    %v8097 = vrot.slane %v8083, %v8096
    %v8098 = vcombine.low %v8042, %v8058
    %v8099 = vcombine.high %v8042, %v8058
    %v8101 = vunpack.c.l.s4 1934713408
    %v8102 = vunpack.c.0.s8 %v8101
    %v8103 = vlaneseq
    %v8104 = vshrl.u32 %v8103, 7
    %v8105 = vsub.s32 %v8102, %v8104
    %v8106 = vrot.slane %v8098, %v8105
    %v8108 = vunpack.c.l.s4 1934713408
    %v8109 = vunpack.c.0.s8 %v8108
    %v8110 = vlaneseq
    %v8111 = vshrl.u32 %v8110, 7
    %v8112 = vsub.s32 %v8109, %v8111
    %v8113 = vrot.slane %v8099, %v8112
    %v8114 = vcombine.low %v8049, %v8065
    %v8115 = vcombine.high %v8049, %v8065
    %v8117 = vunpack.c.l.s4 1934713408
    %v8118 = vunpack.c.0.s8 %v8117
    %v8119 = vlaneseq
    %v8120 = vshrl.u32 %v8119, 7
    %v8121 = vsub.s32 %v8118, %v8120
    %v8122 = vrot.slane %v8114, %v8121
    %v8124 = vunpack.c.l.s4 1934713408
    %v8125 = vunpack.c.0.s8 %v8124
    %v8126 = vlaneseq
    %v8127 = vshrl.u32 %v8126, 7
    %v8128 = vsub.s32 %v8125, %v8127
    %v8129 = vrot.slane %v8115, %v8128
    %v8130 = vcombine.low %v8074, %v8090
    %v8131 = vcombine.high %v8074, %v8090
    %v8133 = vunpack.c.l.s4 1934713408
    %v8134 = vunpack.c.0.s8 %v8133
    %v8135 = vlaneseq
    %v8136 = vshrl.u32 %v8135, 7
    %v8137 = vsub.s32 %v8134, %v8136
    %v8138 = vrot.slane %v8130, %v8137
    %v8140 = vunpack.c.l.s4 1934713408
    %v8141 = vunpack.c.0.s8 %v8140
    %v8142 = vlaneseq
    %v8143 = vshrl.u32 %v8142, 7
    %v8144 = vsub.s32 %v8141, %v8143
    %v8145 = vrot.slane %v8131, %v8144
    %v8146 = vcombine.low %v8081, %v8097
    %v8147 = vcombine.high %v8081, %v8097
    %v8149 = vunpack.c.l.s4 1934713408
    %v8150 = vunpack.c.0.s8 %v8149
    %v8151 = vlaneseq
    %v8152 = vshrl.u32 %v8151, 7
    %v8153 = vsub.s32 %v8150, %v8152
    %v8154 = vrot.slane %v8146, %v8153
    %v8156 = vunpack.c.l.s4 1934713408
    %v8157 = vunpack.c.0.s8 %v8156
    %v8158 = vlaneseq
    %v8159 = vshrl.u32 %v8158, 7
    %v8160 = vsub.s32 %v8157, %v8159
    %v8161 = vrot.slane %v8147, %v8160
    %v8162 = vcombine.low %v8106, %v8138
    %v8163 = vcombine.high %v8106, %v8138
    %v8164 = vcombine.low %v8113, %v8145
    %v8165 = vcombine.high %v8113, %v8145
    %v8166 = vcombine.low %v8122, %v8154
    %v8167 = vcombine.high %v8122, %v8154
    %v8168 = vcombine.low %v8129, %v8161
    %v8169 = vcombine.high %v8129, %v8161
    %8174 = vrot.lane.b32.xlu0 %v7755, 16
    %v8175 = vpop.permute.xlu0 %8174
    %8176 = vrot.lane.b32.xlu0 %v7891, 16
    %v8177 = vpop.permute.xlu0 %8176
    %8178 = vrot.lane.b32.xlu0 %v8027, 16
    %v8179 = vpop.permute.xlu0 %8178
    %8180 = vrot.lane.b32.xlu0 %v8163, 16
    %v8181 = vpop.permute.xlu0 %8180
    %8190 = vrot.lane.b32.xlu0 %v7756, 32
    %v8191 = vpop.permute.xlu0 %8190
    %8192 = vrot.lane.b32.xlu0 %v7892, 32
    %v8193 = vpop.permute.xlu0 %8192
    %8194 = vrot.lane.b32.xlu0 %v8028, 32
    %v8195 = vpop.permute.xlu0 %8194
    %8196 = vrot.lane.b32.xlu0 %v8164, 32
    %v8197 = vpop.permute.xlu0 %8196
    %8206 = vrot.lane.b32.xlu0 %v7757, 48
    %v8207 = vpop.permute.xlu0 %8206
    %8208 = vrot.lane.b32.xlu0 %v7893, 48
    %v8209 = vpop.permute.xlu0 %8208
    %8210 = vrot.lane.b32.xlu0 %v8029, 48
    %v8211 = vpop.permute.xlu0 %8210
    %8212 = vrot.lane.b32.xlu0 %v8165, 48
    %v8213 = vpop.permute.xlu0 %8212
    %8222 = vrot.lane.b32.xlu0 %v7758, 64
    %v8223 = vpop.permute.xlu0 %8222
    %8224 = vrot.lane.b32.xlu0 %v7894, 64
    %v8225 = vpop.permute.xlu0 %8224
    %8226 = vrot.lane.b32.xlu0 %v8030, 64
    %v8227 = vpop.permute.xlu0 %8226
    %8228 = vrot.lane.b32.xlu0 %v8166, 64
    %v8229 = vpop.permute.xlu0 %8228
    %8238 = vrot.lane.b32.xlu0 %v7759, 80
    %v8239 = vpop.permute.xlu0 %8238
    %8240 = vrot.lane.b32.xlu0 %v7895, 80
    %v8241 = vpop.permute.xlu0 %8240
    %8242 = vrot.lane.b32.xlu0 %v8031, 80
    %v8243 = vpop.permute.xlu0 %8242
    %8244 = vrot.lane.b32.xlu0 %v8167, 80
    %v8245 = vpop.permute.xlu0 %8244
    %8254 = vrot.lane.b32.xlu0 %v7760, 96
    %v8255 = vpop.permute.xlu0 %8254
    %8256 = vrot.lane.b32.xlu0 %v7896, 96
    %v8257 = vpop.permute.xlu0 %8256
    %8258 = vrot.lane.b32.xlu0 %v8032, 96
    %v8259 = vpop.permute.xlu0 %8258
    %8260 = vrot.lane.b32.xlu0 %v8168, 96
    %v8261 = vpop.permute.xlu0 %8260
    %8270 = vrot.lane.b32.xlu0 %v7761, 112
    %v8271 = vpop.permute.xlu0 %8270
    %8272 = vrot.lane.b32.xlu0 %v7897, 112
    %v8273 = vpop.permute.xlu0 %8272
    %8274 = vrot.lane.b32.xlu0 %v8033, 112
    %v8275 = vpop.permute.xlu0 %8274
    %8276 = vrot.lane.b32.xlu0 %v8169, 112
    %v8277 = vpop.permute.xlu0 %8276
    %v8282 = vsel %vm3998, %v7754, %v8175
    %v8283 = vsel %vm3998, %v7890, %v8177
    %v8284 = vsel %vm3998, %v8026, %v8179
    %v8285 = vsel %vm3998, %v8162, %v8181
    %vm8286 = vcmask 261120
    %v8287 = vsel %vm8286, %v8282, %v8191
    %v8288 = vsel %vm8286, %v8283, %v8193
    %v8289 = vsel %vm8286, %v8284, %v8195
    %v8290 = vsel %vm8286, %v8285, %v8197
    %vm8291 = vcmask 392192
    %v8292 = vsel %vm8291, %v8287, %v8207
    %v8293 = vsel %vm8291, %v8288, %v8209
    %v8294 = vsel %vm8291, %v8289, %v8211
    %v8295 = vsel %vm8291, %v8290, %v8213
    %vm8296 = vcmask 523264
    %v8297 = vsel %vm8296, %v8292, %v8223
    %v8298 = vsel %vm8296, %v8293, %v8225
    %v8299 = vsel %vm8296, %v8294, %v8227
    %v8300 = vsel %vm8296, %v8295, %v8229
    %vm8301 = vcmask 654336
    %v8302 = vsel %vm8301, %v8297, %v8239
    %v8303 = vsel %vm8301, %v8298, %v8241
    %v8304 = vsel %vm8301, %v8299, %v8243
    %v8305 = vsel %vm8301, %v8300, %v8245
    %vm8306 = vcmask 785408
    %v8307 = vsel %vm8306, %v8302, %v8255
    %v8308 = vsel %vm8306, %v8303, %v8257
    %v8309 = vsel %vm8306, %v8304, %v8259
    %v8310 = vsel %vm8306, %v8305, %v8261
    %vm8311 = vcmask 916480
    %v8312 = vsel %vm8311, %v8307, %v8271
    %v8313 = vsel %vm8311, %v8308, %v8273
    %v8314 = vsel %vm8311, %v8309, %v8275
    %v8315 = vsel %vm8311, %v8310, %v8277
    %v8316 = vld [vmem:[#allocation13] sm:$0xff]
    %v8317 = vld [vmem:[#allocation13 + $0x8] sm:$0xff]
    %v8318 = vld [vmem:[#allocation13 + $0x10] sm:$0xff]
    %v8319 = vld [vmem:[#allocation13 + $0x18] sm:$0xff]
    %v8320 = vld [vmem:[#allocation13 + $0x20] sm:$0xff]
    %v8321 = vld [vmem:[#allocation13 + $0x28] sm:$0xff]
    %v8322 = vld [vmem:[#allocation13 + $0x30] sm:$0xff]
    %v8323 = vld [vmem:[#allocation13 + $0x38] sm:$0xff]
    %v8324 = vld [vmem:[#allocation13 + $0x40] sm:$0xff]
    %v8325 = vld [vmem:[#allocation13 + $0x48] sm:$0xff]
    %v8326 = vld [vmem:[#allocation13 + $0x50] sm:$0xff]
    %v8327 = vld [vmem:[#allocation13 + $0x58] sm:$0xff]
    %v8328 = vld [vmem:[#allocation13 + $0x60] sm:$0xff]
    %v8329 = vld [vmem:[#allocation13 + $0x68] sm:$0xff]
    %v8330 = vld [vmem:[#allocation13 + $0x70] sm:$0xff]
    %v8331 = vld [vmem:[#allocation13 + $0x78] sm:$0xff]
    %v8332 = vld [vmem:[%s10] sm:$0x1]
    %v8334 = vlaneseq
    %v8335 = vshrl.u32 %v8334, 7
    %v8336 = vsub.s32 0, %v8335
    %v8337 = vrot.slane %v8332, %v8336
    %8339 = vmatprep.subr.mxu0 0.0
    %8340 = vmatpush1.msra.mxu0 %v8316
    %8341 = vmatprep.subr.mxu0 0.0
    %8342 = vmatpush1.msra.mxu0 %v8317
    %8343 = vmatprep.subr.mxu0 0.0
    %8344 = vmatpush1.msra.mxu0 %v8318
    %8345 = vmatprep.subr.mxu0 0.0
    %8346 = vmatpush1.msra.mxu0 %v8319
    %8347 = vmatprep.subr.mxu0 0.0
    %8348 = vmatpush1.msra.mxu0 %v8320
    %8349 = vmatprep.subr.mxu0 0.0
    %8350 = vmatpush1.msra.mxu0 %v8321
    %8351 = vmatprep.subr.mxu0 0.0
    %8352 = vmatpush1.msra.mxu0 %v8322
    %8353 = vmatprep.subr.mxu0 0.0
    %8354 = vmatpush1.msra.mxu0 %v8323
    %8355 = vmatprep.subr.mxu0 0.0
    %8356 = vmatpush1.msra.mxu0 %v8324
    %8357 = vmatprep.subr.mxu0 0.0
    %8358 = vmatpush1.msra.mxu0 %v8325
    %8359 = vmatprep.subr.mxu0 0.0
    %8360 = vmatpush1.msra.mxu0 %v8326
    %8361 = vmatprep.subr.mxu0 0.0
    %8362 = vmatpush1.msra.mxu0 %v8327
    %8363 = vmatprep.subr.mxu0 0.0
    %8364 = vmatpush1.msra.mxu0 %v8328
    %8365 = vmatprep.subr.mxu0 0.0
    %8366 = vmatpush1.msra.mxu0 %v8329
    %8367 = vmatprep.subr.mxu0 0.0
    %8368 = vmatpush1.msra.mxu0 %v8330
    %8369 = vmatprep.subr.mxu0 0.0
    %8370 = vmatpush1.msra.mxu0 %v8331
    %8371 = vmatprep.subr.mxu0 0.0
    %8372 = vmatpush1.msra.mxu0 0.0
    %8373 = vmatprep.subr.mxu0 0.0
    %8374 = vmatpush1.msra.mxu0 0.0
    %8375 = vmatprep.subr.mxu0 0.0
    %8376 = vmatpush1.msra.mxu0 0.0
    %8377 = vmatprep.subr.mxu0 0.0
    %8378 = vmatpush1.msra.mxu0 0.0
    %8379 = vmatprep.subr.mxu0 0.0
    %8380 = vmatpush1.msra.mxu0 0.0
    %8381 = vmatprep.subr.mxu0 0.0
    %8382 = vmatpush1.msra.mxu0 0.0
    %8383 = vmatprep.subr.mxu0 0.0
    %8384 = vmatpush1.msra.mxu0 0.0
    %8385 = vmatprep.subr.mxu0 0.0
    %8386 = vmatpush1.msra.mxu0 0.0
    %8387 = vmatprep.subr.mxu0 0.0
    %8388 = vmatpush1.msra.mxu0 0.0
    %8389 = vmatprep.subr.mxu0 0.0
    %8390 = vmatpush1.msra.mxu0 0.0
    %8391 = vmatprep.subr.mxu0 0.0
    %8392 = vmatpush1.msra.mxu0 0.0
    %8393 = vmatprep.subr.mxu0 0.0
    %8394 = vmatpush1.msra.mxu0 0.0
    %8395 = vmatprep.subr.mxu0 0.0
    %8396 = vmatpush1.msra.mxu0 0.0
    %8397 = vmatprep.subr.mxu0 0.0
    %8398 = vmatpush1.msra.mxu0 0.0
    %8399 = vmatprep.subr.mxu0 0.0
    %8400 = vmatpush1.msra.mxu0 0.0
    %8401 = vmatprep.subr.mxu0 0.0
    %8402 = vmatpush1.msra.mxu0 0.0
    %8403 = vmatprep.mubr.f32.mxu0 0.0
    %8404 = vmatmul.mubr.f32.gmra.mrb[0].mxu0 %v8312
    %v8405 = vpop.f32.mrb[0].mxu0
    %v8406 = vadd.f32 %v8337, %v8405
    %v8407 = vpop.f32.mrb[0].mxu0
    %8408 = vmatprep.mubr.f32.mxu0 0.0
    %8409 = vmatmul.mubr.f32.gmra.mrb[0].mxu0 %v8313
    %v8410 = vpop.f32.mrb[0].mxu0
    %v8411 = vadd.f32 %v8337, %v8410
    %v8412 = vpop.f32.mrb[0].mxu0
    %8413 = vmatprep.mubr.f32.mxu0 0.0
    %8414 = vmatmul.mubr.f32.gmra.mrb[0].mxu0 %v8314
    %v8415 = vpop.f32.mrb[0].mxu0
    %v8416 = vadd.f32 %v8337, %v8415
    %v8417 = vpop.f32.mrb[0].mxu0
    %8418 = vmatprep.mubr.f32.mxu0 0.0
    %8419 = vmatmul.mubr.f32.gmra.mrb[0].mxu0 %v8315
    %v8420 = vpop.f32.mrb[0].mxu0
    %v8421 = vadd.f32 %v8337, %v8420
    %v8422 = vpop.f32.mrb[0].mxu0
    %8423 = vdwg.mxu0
    %8424 = vst [vmem:[#allocation14] sm:$0xff] %v8406
    %8425 = vst [vmem:[#allocation14 + $0x8] sm:$0xff] %v8411
    %8426 = vst [vmem:[#allocation14 + $0x10] sm:$0xff] %v8416
    %8427 = vst [vmem:[#allocation14 + $0x18] sm:$0xff] %v8421
    // Predicated region
    $region74: #{tpu_custom_call.1} parent=1 // pred_check
      _
    $region75: #{tpu_custom_call.1} parent=1 // pred_check_branch
      %8429 = sbr.rel (0) target = $region77
    $region76: #{tpu_custom_call.1} parent=1 // pred_region
      %s8431 = ssub.s32 512, 512
      %8432 = vsyncadd [#allocation4], %s8431
      %s8433 = sshll.u32 [#allocation14], 4
      %s8434 = int_to_ptr.vmem [resolvable:$true] %s8433
      %8439 = dma.vmem_to_hbm [thread:$0]  %s8434, 512, %s11, [#allocation4], 128, 128, 8
    $region77: #{tpu_custom_call.1} parent=1 // pred_fallthru
      _
    // Predicated region
    $region78: #{tpu_custom_call.1} parent=1 // pred_check
      _
    $region79: #{tpu_custom_call.1} parent=1 // pred_check_branch
      %8441 = sbr.rel (0) target = $region81
    $region80: #{tpu_custom_call.1} parent=1 // pred_region
      %8442 = dma.done [#allocation4], 512
    $region81: #{tpu_custom_call.1} parent=1 // pred_fallthru
      _
    %8443 = vsyncpa [#allocation3], 1
    %8444 = vsyncpa [#allocation6], 1
    %8445 = vsyncpa [#allocation9], 1
    %8446 = vsyncpa [#allocation12], 1
    %8447 = vsyncpa [#allocation4], 1

</llo_original>
